<compile_context>
chip_gen: v7x
topology: tpu7x:2x2x1
jax: 0.10.0
libtpu: 0.0.40
codegen_flags: <defaults>
</compile_context>

<pallas_src>
import functools
import math

import jax
import jax.numpy as jnp
from jax.experimental import pallas as pl
from jax.experimental.pallas import tpu as pltpu

GN_EPS = 1e-5


# ---------------------------------------------------------------------------
# Fused per-pass kernel (one grid step per batch element).
# ---------------------------------------------------------------------------
def _pass_kernel(x_ref, bands_ref, bias_ref, gam_ref, bet_ref,
                 m1_ref, b1_ref, m2_ref, b2_ref, help_ref,
                 out_ref, score_ref, pad_ref, *, H, W, C, eps):
    WC = W * C
    f32 = jnp.float32

    # Zero the two H-padding rows (tiny; interior is always overwritten).  The W
    # zero-padding is folded into the banded conv weights, so no lane padding.
    zrow = jnp.zeros((1, WC), f32)
    pad_ref[0:1, :] = zrow
    pad_ref[H + 1:H + 2, :] = zrow

    def put(v):                                # write conv input into the padded scratch
        pad_ref[1:H + 1, :] = v

    def conv(ci):                              # 3x3 conv == 3 banded matmuls (one per dy)
        acc = jnp.dot(pad_ref[0:H, :], bands_ref[ci, 0], preferred_element_type=f32)
        acc = acc + jnp.dot(pad_ref[1:H + 1, :], bands_ref[ci, 1], preferred_element_type=f32)
        acc = acc + jnp.dot(pad_ref[2:H + 2, :], bands_ref[ci, 2], preferred_element_type=f32)
        return acc

    def gn_silu(y, gi):                        # GroupNorm (biased var) + SiLU
        s1 = jnp.sum(y, axis=0, keepdims=True)           # (1, WC) sublane reduce
        s2 = jnp.sum(y * y, axis=0, keepdims=True)
        gm = jnp.dot(jnp.concatenate([s1, s2], axis=0),  # single (2,WC)@(WC,WC) matmul
                     help_ref[0], preferred_element_type=f32)
        mean = gm[0:1, :]
        var = gm[1:2, :] - mean * mean
        z = (y - mean) * jax.lax.rsqrt(var + eps) * gam_ref[gi:gi + 1, :] \
            + bet_ref[gi:gi + 1, :]
        return z * jax.nn.sigmoid(z)

    x = x_ref[...]                             # (H, WC) current features for this pass
    cur = x

    # ---- self-reflection layers: (conv -> GN -> SiLU) x2 + residual, depth 3 ----
    for l in range(3):
        put(cur)
        h = gn_silu(conv(2 * l) + bias_ref[2 * l:2 * l + 1, :], 2 * l)
        put(h)
        h = gn_silu(conv(2 * l + 1) + bias_ref[2 * l + 1:2 * l + 2, :], 2 * l + 1)
        cur = h + cur
    refl = cur                                 # reflected features

    # ---- overall coherence head: 1x1 conv -> SiLU -> 1x1 conv -> sigmoid --------
    hmid = jnp.dot(refl, m1_ref[...], preferred_element_type=f32) + b1_ref[...]
    hmid = hmid * jax.nn.sigmoid(hmid)
    overall = jax.nn.sigmoid(
        jnp.dot(hmid, m2_ref[...], preferred_element_type=f32) + b2_ref[...])
    # (H, WC): per-pixel value replicated across the C lanes of each pixel block.

    # ---- structural coherence: circular gradients on register values ------------
    prev_w = jnp.concatenate([refl[:, WC - C:], refl[:, :WC - C]], axis=1)  # x[w-1 mod W]
    prev_h = jnp.concatenate([refl[H - 1:H, :], refl[:H - 1, :]], axis=0)   # x[h-1 mod H]
    gx = refl - prev_w
    gy = refl - prev_h
    gmag = jnp.sqrt(gx * gx + gy * gy)
    gmu = jnp.dot(gmag, help_ref[1], preferred_element_type=f32)            # chan mean / pixel
    gdev = gmag - gmu
    unbias = float(C) / float(max(C - 1, 1))                                # torch.std unbiased
    gvar = jnp.dot(gdev * gdev, help_ref[1], preferred_element_type=f32) * unbias
    struct = 1.0 / (1.0 + jnp.sqrt(gvar))

    # ---- semantic coherence (3x3 zero-padded box filter) + correction conv #1 ---
    put(refl)
    rowsum = pad_ref[0:H, :] + pad_ref[1:H + 1, :] + pad_ref[2:H + 2, :]
    c1_pre = conv(6) + bias_ref[6:7, :]                   # correction head conv #1 (same pad)
    local_mean = jnp.dot(rowsum, help_ref[2], preferred_element_type=f32)   # box/9
    d = refl - local_mean
    d = d * d
    put(d)
    rowsum2 = pad_ref[0:H, :] + pad_ref[1:H + 1, :] + pad_ref[2:H + 2, :]
    local_var_cm = jnp.dot(rowsum2, help_ref[3], preferred_element_type=f32)  # box/9 + chan mean
    sem = 1.0 / (1.0 + local_var_cm)

    mean_coh = (sem + struct + overall) * (1.0 / 3.0)     # (H, WC), replicated over C
    s = jnp.sum(mean_coh, axis=1, keepdims=True)
    s = jnp.sum(s, axis=0, keepdims=True)
    score_ref[...] = s * (1.0 / float(H * WC))            # per-batch mean coherence

    # ---- correction head conv #2 + coherence weighting --------------------------
    c1 = gn_silu(c1_pre, 6)
    put(c1)
    corr = conv(7) + bias_ref[7:8, :]
    wcorr = corr * (1.0 - mean_coh)

    # ---- refinement net on cat([features, corrections]) (split-half convs) ------
    put(x)
    acc = conv(8)                                          # features half of conv(2C->C)
    put(wcorr)
    acc = acc + conv(9) + bias_ref[8:9, :]                 # corrections half
    r = gn_silu(acc, 7)
    put(r)
    r = gn_silu(conv(10) + bias_ref[9:10, :], 8)
    put(r)
    r = conv(11) + bias_ref[10:11, :]

    out_ref[...] = x + r                                   # residual with pass input


# ---------------------------------------------------------------------------
# pallas_call wrapper (one fused call per refinement pass).
# ---------------------------------------------------------------------------
def _broadcast_spec(shape):
    nd = len(shape)
    return pl.BlockSpec(shape, lambda n, _nd=nd: (0,) * _nd)


_PACK_ORDER = ("bands", "biases", "gammas", "betas", "m1", "b1", "m2", "b2", "helpers")


def _fused_pass(x, packed, *, H, W, C):
    B = x.shape[0]
    WC = W * C
    act_spec = pl.BlockSpec((None, H, WC), lambda n: (n, 0, 0))
    kernel = functools.partial(_pass_kernel, H=H, W=W, C=C, eps=GN_EPS)
    operands = [packed[k] for k in _PACK_ORDER]
    refined, score = pl.pallas_call(
        kernel,
        out_shape=(jax.ShapeDtypeStruct((B, H, WC), jnp.float32),
                   jax.ShapeDtypeStruct((B, 1, 1), jnp.float32)),
        grid=(B,),
        in_specs=[act_spec] + [_broadcast_spec(o.shape) for o in operands],
        out_specs=(act_spec, pl.BlockSpec((None, 1, 1), lambda n: (n, 0, 0))),
        scratch_shapes=[pltpu.VMEM((H + 2, WC), jnp.float32)],
        compiler_params=pltpu.CompilerParams(dimension_semantics=("parallel",)),
    )(x, *operands)
    return refined, score


# ---------------------------------------------------------------------------
# Device-side multi-pass loop (no per-pass host sync).
# ---------------------------------------------------------------------------
@functools.partial(jax.jit,
                   static_argnames=("H", "W", "C", "max_passes", "threshold"))
def _refinement_loop(x, packed, H, W, C, max_passes, threshold):
    def cond(st):
        return st["keep"]

    def body(st):
        refined, sc = _fused_pass(st["cur"], packed, H=H, W=W, C=C)
        score = jnp.mean(sc)
        plateau = jnp.logical_and(st["it"] >= 1, (score - st["score"]) < 0.01)
        cont = jnp.logical_and(score < threshold, st["pass_num"] < max_passes)
        cont = jnp.logical_and(cont, jnp.logical_not(plateau))
        return dict(cur=jnp.where(cont, refined, st["cur"]),
                    pass_num=st["pass_num"] + cont.astype(jnp.int32),
                    score=score,
                    hist=st["hist"].at[st["it"]].set(score),
                    it=st["it"] + 1,
                    keep=cont)

    init = dict(cur=x, pass_num=jnp.int32(0), score=jnp.float32(0.0),
                hist=jnp.zeros((max_passes + 1,), jnp.float32),
                it=jnp.int32(0), keep=jnp.asarray(True))
    fin = jax.lax.while_loop(cond, body, init)
    return fin["cur"], fin["pass_num"], fin["score"], fin["hist"], fin["it"]


# ---------------------------------------------------------------------------
# Parameter init (PyTorch-equivalent shapes) + host-side packing to kernel form.
# ---------------------------------------------------------------------------
def init_raw_params(key, C):
    Ch = max(C // 2, 1)
    ki = iter(jax.random.split(key, 64))

    def conv_p(cin, cout, k):
        fan = cin * k * k
        w = jax.random.normal(next(ki), (cout, cin, k, k), jnp.float32) / math.sqrt(fan)
        b = 0.01 * jax.random.normal(next(ki), (cout,), jnp.float32)
        return w, b

    raw = {"reflection": []}
    for _ in range(3):
        layer = []
        for _ in range(2):
            w, b = conv_p(C, C, 3)
            layer.append(dict(w=w, b=b,
                              gamma=jnp.ones((C,), jnp.float32),
                              beta=jnp.zeros((C,), jnp.float32)))
        raw["reflection"].append(layer)
    w1, b1 = conv_p(C, Ch, 1)
    w2, b2 = conv_p(Ch, 1, 1)
    raw["coherence"] = dict(w1=w1, b1=b1, w2=w2, b2=b2)
    cw1, cb1 = conv_p(C, C, 3)
    cw2, cb2 = conv_p(C, C, 3)
    raw["correction"] = dict(w1=cw1, b1=cb1, w2=cw2, b2=cb2,
                             gamma=jnp.ones((C,), jnp.float32),
                             beta=jnp.zeros((C,), jnp.float32))
    fw1, fb1 = conv_p(2 * C, C, 3)
    fw2, fb2 = conv_p(C, C, 3)
    fw3, fb3 = conv_p(C, C, 3)
    raw["refinement"] = dict(w1=fw1, b1=fb1, g1=jnp.ones((C,), jnp.float32),
                             be1=jnp.zeros((C,), jnp.float32),
                             w2=fw2, b2=fb2, g2=jnp.ones((C,), jnp.float32),
                             be2=jnp.zeros((C,), jnp.float32),
                             w3=fw3, b3=fb3)
    return raw


def pack_params(raw, H, W, C):
    """Fold 3x3-conv dx taps (+ W zero padding), GroupNorm group masks, 1x1 convs
    and box filters into lane-dense (W*C, W*C)-style matrices, host-side, once."""
    G = min(8, C) if C >= 8 else 1
    assert C % G == 0
    cpg = C // G

    shifts = [jnp.eye(W, k=1 - dx, dtype=jnp.float32) for dx in range(3)]

    def band(w):  # w: (Cout, Cin, 3, 3) torch layout -> (3, W*Cin, W*Cout)
        out = []
        for dy in range(3):
            b = None
            for dx in range(3):
                m = jnp.kron(shifts[dx], w[:, :, dy, dx].T)
                b = m if b is None else b + m
            out.append(b)
        return jnp.stack(out)

    def tile_c(v):  # (Cout,) -> (1, W*Cout), pixel-major / channel-minor
        return jnp.tile(v, (W,)).reshape(1, -1)

    bands, biases, gammas, betas = [], [], [], []
    for layer in raw["reflection"]:
        for cv in layer:
            bands.append(band(cv["w"]))
            biases.append(tile_c(cv["b"]))
            gammas.append(tile_c(cv["gamma"]))
            betas.append(tile_c(cv["beta"]))
    cr = raw["correction"]
    bands += [band(cr["w1"]), band(cr["w2"])]
    biases += [tile_c(cr["b1"]), tile_c(cr["b2"])]
    gammas.append(tile_c(cr["gamma"]))
    betas.append(tile_c(cr["beta"]))
    rf = raw["refinement"]
    bands += [band(rf["w1"][:, :C]), band(rf["w1"][:, C:]),
              band(rf["w2"]), band(rf["w3"])]
    biases += [tile_c(rf["b1"]), tile_c(rf["b2"]), tile_c(rf["b3"])]
    gammas += [tile_c(rf["g1"]), tile_c(rf["g2"])]
    betas += [tile_c(rf["be1"]), tile_c(rf["be2"])]

    # coherence head 1x1 convs as block-diagonal lane matmuls
    co = raw["coherence"]
    eye_w = jnp.eye(W, dtype=jnp.float32)
    m1 = jnp.kron(eye_w, co["w1"][:, :, 0, 0].T)                          # (WC, W*Ch)
    b1 = tile_c(co["b1"])
    w2m = co["w2"][:, :, 0, 0].T                                          # (Ch, 1)
    m2 = jnp.kron(eye_w, w2m @ jnp.ones((1, C), jnp.float32))             # (W*Ch, WC)
    b2 = co["b2"].reshape(1, 1)

    # helper matrices: [group-mean (n_inv folded), per-pixel channel mean,
    #                   depthwise 3-tap box/9, box/9 @ channel-mean]
    cid = jnp.arange(C) // cpg
    gmask = (cid[:, None] == cid[None, :]).astype(jnp.float32)
    rg_mean = jnp.kron(jnp.ones((W, W), jnp.float32), gmask) / float(H * W * cpg)
    pcm = jnp.kron(eye_w, jnp.ones((C, C), jnp.float32) / float(C))
    bbox = None
    for dx in range(3):
        m = jnp.kron(shifts[dx], jnp.eye(C, dtype=jnp.float32))
        bbox = m if bbox is None else bbox + m
    bbox_m = bbox / 9.0
    helpers = jnp.stack([rg_mean, pcm, bbox_m, bbox_m @ pcm])

    return dict(bands=jnp.stack(bands),                 # (12, 3, WC, WC)
                biases=jnp.concatenate(biases, axis=0), # (11, WC)
                gammas=jnp.concatenate(gammas, axis=0), # (9, WC)
                betas=jnp.concatenate(betas, axis=0),   # (9, WC)
                m1=m1, b1=b1, m2=m2, b2=b2, helpers=helpers)


# ---------------------------------------------------------------------------
# Module-level forward.
# ---------------------------------------------------------------------------
def multi_pass_refinement(x_nchw, packed, *, max_passes=3, coherence_threshold=0.8):
    B, C, H, W = x_nchw.shape
    # NCHW -> lane-dense (B, H, W*C): pixel-major, channel-minor along lanes.
    x_ld = jnp.transpose(x_nchw, (0, 2, 3, 1)).reshape(B, H, W * C)
    cur, passes, score, hist, iters = _refinement_loop(
        x_ld, packed, H=H, W=W, C=C,
        max_passes=int(max_passes), threshold=float(coherence_threshold))
    final = jnp.transpose(cur.reshape(B, H, W, C), (0, 3, 1, 2))
    n_iter = int(iters)
    # TODO(synk): per-pass feature tensors / full reflection_result dicts are not
    # retained (device-side loop; dropped per perf guidance) — only scores kept.
    history = [dict(pass_num=i, coherence_score=float(hist[i])) for i in range(n_iter)]
    return dict(final_features=final,
                initial_features=x_nchw,
                refinement_history=history,
                total_passes=int(passes) + 1,
                final_coherence=float(score))


if __name__ == "__main__":
    key = jax.random.PRNGKey(0)
    B, C, H, W = 2, 8, 16, 16
    kx, kp = jax.random.split(key)
    x = jax.random.normal(kx, (B, C, H, W), jnp.float32)     # PyTorch-style NCHW
    raw = init_raw_params(kp, C)
    packed = pack_params(raw, H, W, C)

    result = multi_pass_refinement(x, packed, max_passes=3, coherence_threshold=0.8)
    jax.block_until_ready(result["final_features"])
    assert result["final_features"].shape == (B, C, H, W)
    assert 1 <= result["total_passes"] <= 4
    print("KERNEL_OK")
</pallas_src>

<mosaic_0001>
module attributes {stable_mosaic.version = 11 : i64} {
  func.func @_pass_kernel(%arg0: i32, %arg1: memref<1x16x128xf32, #tpu.memory_space<vmem>>, %arg2: memref<12x3x128x128xf32, #tpu.memory_space<vmem>>, %arg3: memref<11x128xf32, #tpu.memory_space<vmem>>, %arg4: memref<9x128xf32, #tpu.memory_space<vmem>>, %arg5: memref<9x128xf32, #tpu.memory_space<vmem>>, %arg6: memref<128x64xf32, #tpu.memory_space<vmem>>, %arg7: memref<1x64xf32, #tpu.memory_space<vmem>>, %arg8: memref<64x128xf32, #tpu.memory_space<vmem>>, %arg9: memref<1x1xf32, #tpu.memory_space<vmem>>, %arg10: memref<4x128x128xf32, #tpu.memory_space<vmem>>, %arg11: memref<1x16x128xf32, #tpu.memory_space<vmem>>, %arg12: memref<1x1x1xf32, #tpu.memory_space<vmem>>, %arg13: memref<18x128xf32, #tpu.memory_space<vmem>>) attributes {dimension_semantics = [#tpu.dimension_semantics<parallel>], iteration_bounds = array<i64: 2>, scalar_prefetch = 0 : i64, scratch_operands = 1 : i64, tpu.core_type = #tpu.core_type<tc>, window_params = [{transform_indices = @transform_0, window_bounds = array<i64: 1, 16, 128>}, {pipeline_mode = #tpu.pipeline_mode<synchronous>, transform_indices = @transform_1, window_bounds = array<i64: 12, 3, 128, 128>}, {pipeline_mode = #tpu.pipeline_mode<synchronous>, transform_indices = @transform_2, window_bounds = array<i64: 11, 128>}, {pipeline_mode = #tpu.pipeline_mode<synchronous>, transform_indices = @transform_3, window_bounds = array<i64: 9, 128>}, {pipeline_mode = #tpu.pipeline_mode<synchronous>, transform_indices = @transform_4, window_bounds = array<i64: 9, 128>}, {pipeline_mode = #tpu.pipeline_mode<synchronous>, transform_indices = @transform_5, window_bounds = array<i64: 128, 64>}, {pipeline_mode = #tpu.pipeline_mode<synchronous>, transform_indices = @transform_6, window_bounds = array<i64: 1, 64>}, {pipeline_mode = #tpu.pipeline_mode<synchronous>, transform_indices = @transform_7, window_bounds = array<i64: 64, 128>}, {pipeline_mode = #tpu.pipeline_mode<synchronous>, transform_indices = @transform_8, window_bounds = array<i64: 1, 1>}, {pipeline_mode = #tpu.pipeline_mode<synchronous>, transform_indices = @transform_9, window_bounds = array<i64: 4, 128, 128>}, {transform_indices = @transform_10, window_bounds = array<i64: 1, 16, 128>}, {transform_indices = @transform_11, window_bounds = array<i64: 1, 1, 1>}]} {
    %cst = arith.constant 0.000000e+00 : f32
    %0 = vector.broadcast %cst : f32 to vector<1x128xf32>
    %c0 = arith.constant 0 : index
    %c0_0 = arith.constant 0 : index
    %1 = vector.load %arg13[%c0, %c0_0] : memref<18x128xf32, #tpu.memory_space<vmem>>, vector<1x128xf32>
    tpu.vector_store %arg13[%c0, %c0_0], %0 {strides = array<i32>} : memref<18x128xf32, #tpu.memory_space<vmem>>, vector<1x128xf32>,
    %c17 = arith.constant 17 : index
    %c0_1 = arith.constant 0 : index
    %2 = vector.load %arg13[%c17, %c0_1] : memref<18x128xf32, #tpu.memory_space<vmem>>, vector<1x128xf32>
    tpu.vector_store %arg13[%c17, %c0_1], %0 {strides = array<i32>} : memref<18x128xf32, #tpu.memory_space<vmem>>, vector<1x128xf32>,
    %c0_2 = arith.constant 0 : index
    %c0_3 = arith.constant 0 : index
    %c0_4 = arith.constant 0 : index
    %3 = vector.load %arg1[%c0_2, %c0_3, %c0_4] : memref<1x16x128xf32, #tpu.memory_space<vmem>>, vector<1x16x128xf32>
    %4 = vector.shape_cast %3 : vector<1x16x128xf32> to vector<16x128xf32>
    %c1 = arith.constant 1 : index
    %c0_5 = arith.constant 0 : index
    %5 = vector.load %arg13[%c1, %c0_5] : memref<18x128xf32, #tpu.memory_space<vmem>>, vector<16x128xf32>
    tpu.vector_store %arg13[%c1, %c0_5], %4 {strides = array<i32>} : memref<18x128xf32, #tpu.memory_space<vmem>>, vector<16x128xf32>,
    %c0_6 = arith.constant 0 : index
    %c0_7 = arith.constant 0 : index
    %6 = vector.load %arg13[%c0_6, %c0_7] : memref<18x128xf32, #tpu.memory_space<vmem>>, vector<16x128xf32>
    %c0_8 = arith.constant 0 : index
    %c0_9 = arith.constant 0 : index
    %c0_10 = arith.constant 0 : index
    %c0_11 = arith.constant 0 : index
    %7 = vector.load %arg2[%c0_8, %c0_9, %c0_10, %c0_11] : memref<12x3x128x128xf32, #tpu.memory_space<vmem>>, vector<1x1x128x128xf32>
    %8 = vector.shape_cast %7 : vector<1x1x128x128xf32> to vector<128x128xf32>
    %cst_12 = arith.constant dense<0.000000e+00> : vector<16x128xf32>
    %9 = tpu.matmul %6, %8, %cst_12 {dimension_numbers = #tpu.dot_dimension_numbers<[1], [0], [0], [1], [0, 0, 1, 1], [], []>} : vector<16x128xf32>, vector<128x128xf32>, vector<16x128xf32> -> vector<16x128xf32>
    %c1_13 = arith.constant 1 : index
    %c0_14 = arith.constant 0 : index
    %10 = vector.load %arg13[%c1_13, %c0_14] : memref<18x128xf32, #tpu.memory_space<vmem>>, vector<16x128xf32>
    %c0_15 = arith.constant 0 : index
    %c1_16 = arith.constant 1 : index
    %c0_17 = arith.constant 0 : index
    %c0_18 = arith.constant 0 : index
    %11 = vector.load %arg2[%c0_15, %c1_16, %c0_17, %c0_18] : memref<12x3x128x128xf32, #tpu.memory_space<vmem>>, vector<1x1x128x128xf32>
    %12 = vector.shape_cast %11 : vector<1x1x128x128xf32> to vector<128x128xf32>
    %cst_19 = arith.constant dense<0.000000e+00> : vector<16x128xf32>
    %13 = tpu.matmul %10, %12, %cst_19 {dimension_numbers = #tpu.dot_dimension_numbers<[1], [0], [0], [1], [0, 0, 1, 1], [], []>} : vector<16x128xf32>, vector<128x128xf32>, vector<16x128xf32> -> vector<16x128xf32>
    %14 = arith.addf %9, %13 : vector<16x128xf32>
    %c2 = arith.constant 2 : index
    %c0_20 = arith.constant 0 : index
    %15 = vector.load %arg13[%c2, %c0_20] : memref<18x128xf32, #tpu.memory_space<vmem>>, vector<16x128xf32>
    %c0_21 = arith.constant 0 : index
    %c2_22 = arith.constant 2 : index
    %c0_23 = arith.constant 0 : index
    %c0_24 = arith.constant 0 : index
    %16 = vector.load %arg2[%c0_21, %c2_22, %c0_23, %c0_24] : memref<12x3x128x128xf32, #tpu.memory_space<vmem>>, vector<1x1x128x128xf32>
    %17 = vector.shape_cast %16 : vector<1x1x128x128xf32> to vector<128x128xf32>
    %cst_25 = arith.constant dense<0.000000e+00> : vector<16x128xf32>
    %18 = tpu.matmul %15, %17, %cst_25 {dimension_numbers = #tpu.dot_dimension_numbers<[1], [0], [0], [1], [0, 0, 1, 1], [], []>} : vector<16x128xf32>, vector<128x128xf32>, vector<16x128xf32> -> vector<16x128xf32>
    %19 = arith.addf %14, %18 : vector<16x128xf32>
    %c0_26 = arith.constant 0 : index
    %c0_27 = arith.constant 0 : index
    %20 = vector.load %arg3[%c0_26, %c0_27] : memref<11x128xf32, #tpu.memory_space<vmem>>, vector<1x128xf32>
    %21 = vector.broadcast %20 : vector<1x128xf32> to vector<16x128xf32>
    %22 = arith.addf %19, %21 : vector<16x128xf32>
    %cst_28 = arith.constant dense<0.000000e+00> : vector<128xf32>
    %23 = vector.multi_reduction <add>, %22, %cst_28 [0] : vector<16x128xf32> to vector<128xf32>
    %24 = vector.shape_cast %23 : vector<128xf32> to vector<1x128xf32>
    %25 = arith.mulf %22, %22 : vector<16x128xf32>
    %cst_29 = arith.constant dense<0.000000e+00> : vector<128xf32>
    %26 = vector.multi_reduction <add>, %25, %cst_29 [0] : vector<16x128xf32> to vector<128xf32>
    %27 = vector.shape_cast %26 : vector<128xf32> to vector<1x128xf32>
    %28 = tpu.concatenate %24, %27 in 0 : vector<1x128xf32>, vector<1x128xf32> -> vector<2x128xf32>
    %c0_30 = arith.constant 0 : index
    %c0_31 = arith.constant 0 : index
    %c0_32 = arith.constant 0 : index
    %29 = vector.load %arg10[%c0_30, %c0_31, %c0_32] : memref<4x128x128xf32, #tpu.memory_space<vmem>>, vector<1x128x128xf32>
    %30 = vector.shape_cast %29 : vector<1x128x128xf32> to vector<128x128xf32>
    %cst_33 = arith.constant dense<0.000000e+00> : vector<2x128xf32>
    %31 = tpu.matmul %28, %30, %cst_33 {dimension_numbers = #tpu.dot_dimension_numbers<[1], [0], [0], [1], [0, 0, 1, 1], [], []>} : vector<2x128xf32>, vector<128x128xf32>, vector<2x128xf32> -> vector<2x128xf32>
    %32 = vector.extract_strided_slice %31 {offsets = [0, 0], sizes = [1, 128], strides = [1, 1]} : vector<2x128xf32> to vector<1x128xf32>
    %33 = vector.extract_strided_slice %31 {offsets = [1, 0], sizes = [1, 128], strides = [1, 1]} : vector<2x128xf32> to vector<1x128xf32>
    %34 = arith.mulf %32, %32 : vector<1x128xf32>
    %35 = arith.subf %33, %34 : vector<1x128xf32>
    %36 = vector.broadcast %32 : vector<1x128xf32> to vector<16x128xf32>
    %37 = arith.subf %22, %36 : vector<16x128xf32>
    %cst_34 = arith.constant 9.99999974E-6 : f32
    %38 = vector.broadcast %cst_34 : f32 to vector<1x128xf32>
    %39 = arith.addf %35, %38 : vector<1x128xf32>
    %40 = math.rsqrt %39 : vector<1x128xf32>
    %41 = vector.broadcast %40 : vector<1x128xf32> to vector<16x128xf32>
    %42 = arith.mulf %37, %41 : vector<16x128xf32>
    %c0_35 = arith.constant 0 : index
    %c0_36 = arith.constant 0 : index
    %43 = vector.load %arg4[%c0_35, %c0_36] : memref<9x128xf32, #tpu.memory_space<vmem>>, vector<1x128xf32>
    %44 = vector.broadcast %43 : vector<1x128xf32> to vector<16x128xf32>
    %45 = arith.mulf %42, %44 : vector<16x128xf32>
    %c0_37 = arith.constant 0 : index
    %c0_38 = arith.constant 0 : index
    %46 = vector.load %arg5[%c0_37, %c0_38] : memref<9x128xf32, #tpu.memory_space<vmem>>, vector<1x128xf32>
    %47 = vector.broadcast %46 : vector<1x128xf32> to vector<16x128xf32>
    %48 = arith.addf %45, %47 : vector<16x128xf32>
    %49 = arith.negf %48 : vector<16x128xf32>
    %50 = math.exp %49 : vector<16x128xf32>
    %cst_39 = arith.constant 1.000000e+00 : f32
    %51 = vector.broadcast %cst_39 : f32 to vector<16x128xf32>
    %52 = arith.addf %51, %50 : vector<16x128xf32>
    %53 = arith.divf %51, %52 : vector<16x128xf32>
    %54 = arith.mulf %48, %53 : vector<16x128xf32>
    %c1_40 = arith.constant 1 : index
    %c0_41 = arith.constant 0 : index
    %55 = vector.load %arg13[%c1_40, %c0_41] : memref<18x128xf32, #tpu.memory_space<vmem>>, vector<16x128xf32>
    tpu.vector_store %arg13[%c1_40, %c0_41], %54 {strides = array<i32>} : memref<18x128xf32, #tpu.memory_space<vmem>>, vector<16x128xf32>,
    %c0_42 = arith.constant 0 : index
    %c0_43 = arith.constant 0 : index
    %56 = vector.load %arg13[%c0_42, %c0_43] : memref<18x128xf32, #tpu.memory_space<vmem>>, vector<16x128xf32>
    %c1_44 = arith.constant 1 : index
    %c0_45 = arith.constant 0 : index
    %c0_46 = arith.constant 0 : index
    %c0_47 = arith.constant 0 : index
    %57 = vector.load %arg2[%c1_44, %c0_45, %c0_46, %c0_47] : memref<12x3x128x128xf32, #tpu.memory_space<vmem>>, vector<1x1x128x128xf32>
    %58 = vector.shape_cast %57 : vector<1x1x128x128xf32> to vector<128x128xf32>
    %cst_48 = arith.constant dense<0.000000e+00> : vector<16x128xf32>
    %59 = tpu.matmul %56, %58, %cst_48 {dimension_numbers = #tpu.dot_dimension_numbers<[1], [0], [0], [1], [0, 0, 1, 1], [], []>} : vector<16x128xf32>, vector<128x128xf32>, vector<16x128xf32> -> vector<16x128xf32>
    %c1_49 = arith.constant 1 : index
    %c0_50 = arith.constant 0 : index
    %60 = vector.load %arg13[%c1_49, %c0_50] : memref<18x128xf32, #tpu.memory_space<vmem>>, vector<16x128xf32>
    %c1_51 = arith.constant 1 : index
    %c1_52 = arith.constant 1 : index
    %c0_53 = arith.constant 0 : index
    %c0_54 = arith.constant 0 : index
    %61 = vector.load %arg2[%c1_51, %c1_52, %c0_53, %c0_54] : memref<12x3x128x128xf32, #tpu.memory_space<vmem>>, vector<1x1x128x128xf32>
    %62 = vector.shape_cast %61 : vector<1x1x128x128xf32> to vector<128x128xf32>
    %cst_55 = arith.constant dense<0.000000e+00> : vector<16x128xf32>
    %63 = tpu.matmul %60, %62, %cst_55 {dimension_numbers = #tpu.dot_dimension_numbers<[1], [0], [0], [1], [0, 0, 1, 1], [], []>} : vector<16x128xf32>, vector<128x128xf32>, vector<16x128xf32> -> vector<16x128xf32>
    %64 = arith.addf %59, %63 : vector<16x128xf32>
    %c2_56 = arith.constant 2 : index
    %c0_57 = arith.constant 0 : index
    %65 = vector.load %arg13[%c2_56, %c0_57] : memref<18x128xf32, #tpu.memory_space<vmem>>, vector<16x128xf32>
    %c1_58 = arith.constant 1 : index
    %c2_59 = arith.constant 2 : index
    %c0_60 = arith.constant 0 : index
    %c0_61 = arith.constant 0 : index
    %66 = vector.load %arg2[%c1_58, %c2_59, %c0_60, %c0_61] : memref<12x3x128x128xf32, #tpu.memory_space<vmem>>, vector<1x1x128x128xf32>
    %67 = vector.shape_cast %66 : vector<1x1x128x128xf32> to vector<128x128xf32>
    %cst_62 = arith.constant dense<0.000000e+00> : vector<16x128xf32>
    %68 = tpu.matmul %65, %67, %cst_62 {dimension_numbers = #tpu.dot_dimension_numbers<[1], [0], [0], [1], [0, 0, 1, 1], [], []>} : vector<16x128xf32>, vector<128x128xf32>, vector<16x128xf32> -> vector<16x128xf32>
    %69 = arith.addf %64, %68 : vector<16x128xf32>
    %c1_63 = arith.constant 1 : index
    %c0_64 = arith.constant 0 : index
    %70 = vector.load %arg3[%c1_63, %c0_64] : memref<11x128xf32, #tpu.memory_space<vmem>>, vector<1x128xf32>
    %71 = vector.broadcast %70 : vector<1x128xf32> to vector<16x128xf32>
    %72 = arith.addf %69, %71 : vector<16x128xf32>
    %cst_65 = arith.constant dense<0.000000e+00> : vector<128xf32>
    %73 = vector.multi_reduction <add>, %72, %cst_65 [0] : vector<16x128xf32> to vector<128xf32>
    %74 = vector.shape_cast %73 : vector<128xf32> to vector<1x128xf32>
    %75 = arith.mulf %72, %72 : vector<16x128xf32>
    %cst_66 = arith.constant dense<0.000000e+00> : vector<128xf32>
    %76 = vector.multi_reduction <add>, %75, %cst_66 [0] : vector<16x128xf32> to vector<128xf32>
    %77 = vector.shape_cast %76 : vector<128xf32> to vector<1x128xf32>
    %78 = tpu.concatenate %74, %77 in 0 : vector<1x128xf32>, vector<1x128xf32> -> vector<2x128xf32>
    %c0_67 = arith.constant 0 : index
    %c0_68 = arith.constant 0 : index
    %c0_69 = arith.constant 0 : index
    %79 = vector.load %arg10[%c0_67, %c0_68, %c0_69] : memref<4x128x128xf32, #tpu.memory_space<vmem>>, vector<1x128x128xf32>
    %80 = vector.shape_cast %79 : vector<1x128x128xf32> to vector<128x128xf32>
    %cst_70 = arith.constant dense<0.000000e+00> : vector<2x128xf32>
    %81 = tpu.matmul %78, %80, %cst_70 {dimension_numbers = #tpu.dot_dimension_numbers<[1], [0], [0], [1], [0, 0, 1, 1], [], []>} : vector<2x128xf32>, vector<128x128xf32>, vector<2x128xf32> -> vector<2x128xf32>
    %82 = vector.extract_strided_slice %81 {offsets = [0, 0], sizes = [1, 128], strides = [1, 1]} : vector<2x128xf32> to vector<1x128xf32>
    %83 = vector.extract_strided_slice %81 {offsets = [1, 0], sizes = [1, 128], strides = [1, 1]} : vector<2x128xf32> to vector<1x128xf32>
    %84 = arith.mulf %82, %82 : vector<1x128xf32>
    %85 = arith.subf %83, %84 : vector<1x128xf32>
    %86 = vector.broadcast %82 : vector<1x128xf32> to vector<16x128xf32>
    %87 = arith.subf %72, %86 : vector<16x128xf32>
    %cst_71 = arith.constant 9.99999974E-6 : f32
    %88 = vector.broadcast %cst_71 : f32 to vector<1x128xf32>
    %89 = arith.addf %85, %88 : vector<1x128xf32>
    %90 = math.rsqrt %89 : vector<1x128xf32>
    %91 = vector.broadcast %90 : vector<1x128xf32> to vector<16x128xf32>
    %92 = arith.mulf %87, %91 : vector<16x128xf32>
    %c1_72 = arith.constant 1 : index
    %c0_73 = arith.constant 0 : index
    %93 = vector.load %arg4[%c1_72, %c0_73] : memref<9x128xf32, #tpu.memory_space<vmem>>, vector<1x128xf32>
    %94 = vector.broadcast %93 : vector<1x128xf32> to vector<16x128xf32>
    %95 = arith.mulf %92, %94 : vector<16x128xf32>
    %c1_74 = arith.constant 1 : index
    %c0_75 = arith.constant 0 : index
    %96 = vector.load %arg5[%c1_74, %c0_75] : memref<9x128xf32, #tpu.memory_space<vmem>>, vector<1x128xf32>
    %97 = vector.broadcast %96 : vector<1x128xf32> to vector<16x128xf32>
    %98 = arith.addf %95, %97 : vector<16x128xf32>
    %99 = arith.negf %98 : vector<16x128xf32>
    %100 = math.exp %99 : vector<16x128xf32>
    %cst_76 = arith.constant 1.000000e+00 : f32
    %101 = vector.broadcast %cst_76 : f32 to vector<16x128xf32>
    %102 = arith.addf %101, %100 : vector<16x128xf32>
    %103 = arith.divf %101, %102 : vector<16x128xf32>
    %104 = arith.mulf %98, %103 : vector<16x128xf32>
    %105 = arith.addf %104, %4 : vector<16x128xf32>
    %c1_77 = arith.constant 1 : index
    %c0_78 = arith.constant 0 : index
    %106 = vector.load %arg13[%c1_77, %c0_78] : memref<18x128xf32, #tpu.memory_space<vmem>>, vector<16x128xf32>
    tpu.vector_store %arg13[%c1_77, %c0_78], %105 {strides = array<i32>} : memref<18x128xf32, #tpu.memory_space<vmem>>, vector<16x128xf32>,
    %c0_79 = arith.constant 0 : index
    %c0_80 = arith.constant 0 : index
    %107 = vector.load %arg13[%c0_79, %c0_80] : memref<18x128xf32, #tpu.memory_space<vmem>>, vector<16x128xf32>
    %c2_81 = arith.constant 2 : index
    %c0_82 = arith.constant 0 : index
    %c0_83 = arith.constant 0 : index
    %c0_84 = arith.constant 0 : index
    %108 = vector.load %arg2[%c2_81, %c0_82, %c0_83, %c0_84] : memref<12x3x128x128xf32, #tpu.memory_space<vmem>>, vector<1x1x128x128xf32>
    %109 = vector.shape_cast %108 : vector<1x1x128x128xf32> to vector<128x128xf32>
    %cst_85 = arith.constant dense<0.000000e+00> : vector<16x128xf32>
    %110 = tpu.matmul %107, %109, %cst_85 {dimension_numbers = #tpu.dot_dimension_numbers<[1], [0], [0], [1], [0, 0, 1, 1], [], []>} : vector<16x128xf32>, vector<128x128xf32>, vector<16x128xf32> -> vector<16x128xf32>
    %c1_86 = arith.constant 1 : index
    %c0_87 = arith.constant 0 : index
    %111 = vector.load %arg13[%c1_86, %c0_87] : memref<18x128xf32, #tpu.memory_space<vmem>>, vector<16x128xf32>
    %c2_88 = arith.constant 2 : index
    %c1_89 = arith.constant 1 : index
    %c0_90 = arith.constant 0 : index
    %c0_91 = arith.constant 0 : index
    %112 = vector.load %arg2[%c2_88, %c1_89, %c0_90, %c0_91] : memref<12x3x128x128xf32, #tpu.memory_space<vmem>>, vector<1x1x128x128xf32>
    %113 = vector.shape_cast %112 : vector<1x1x128x128xf32> to vector<128x128xf32>
    %cst_92 = arith.constant dense<0.000000e+00> : vector<16x128xf32>
    %114 = tpu.matmul %111, %113, %cst_92 {dimension_numbers = #tpu.dot_dimension_numbers<[1], [0], [0], [1], [0, 0, 1, 1], [], []>} : vector<16x128xf32>, vector<128x128xf32>, vector<16x128xf32> -> vector<16x128xf32>
    %115 = arith.addf %110, %114 : vector<16x128xf32>
    %c2_93 = arith.constant 2 : index
    %c0_94 = arith.constant 0 : index
    %116 = vector.load %arg13[%c2_93, %c0_94] : memref<18x128xf32, #tpu.memory_space<vmem>>, vector<16x128xf32>
    %c2_95 = arith.constant 2 : index
    %c2_96 = arith.constant 2 : index
    %c0_97 = arith.constant 0 : index
    %c0_98 = arith.constant 0 : index
    %117 = vector.load %arg2[%c2_95, %c2_96, %c0_97, %c0_98] : memref<12x3x128x128xf32, #tpu.memory_space<vmem>>, vector<1x1x128x128xf32>
    %118 = vector.shape_cast %117 : vector<1x1x128x128xf32> to vector<128x128xf32>
    %cst_99 = arith.constant dense<0.000000e+00> : vector<16x128xf32>
    %119 = tpu.matmul %116, %118, %cst_99 {dimension_numbers = #tpu.dot_dimension_numbers<[1], [0], [0], [1], [0, 0, 1, 1], [], []>} : vector<16x128xf32>, vector<128x128xf32>, vector<16x128xf32> -> vector<16x128xf32>
    %120 = arith.addf %115, %119 : vector<16x128xf32>
    %c2_100 = arith.constant 2 : index
    %c0_101 = arith.constant 0 : index
    %121 = vector.load %arg3[%c2_100, %c0_101] : memref<11x128xf32, #tpu.memory_space<vmem>>, vector<1x128xf32>
    %122 = vector.broadcast %121 : vector<1x128xf32> to vector<16x128xf32>
    %123 = arith.addf %120, %122 : vector<16x128xf32>
    %cst_102 = arith.constant dense<0.000000e+00> : vector<128xf32>
    %124 = vector.multi_reduction <add>, %123, %cst_102 [0] : vector<16x128xf32> to vector<128xf32>
    %125 = vector.shape_cast %124 : vector<128xf32> to vector<1x128xf32>
    %126 = arith.mulf %123, %123 : vector<16x128xf32>
    %cst_103 = arith.constant dense<0.000000e+00> : vector<128xf32>
    %127 = vector.multi_reduction <add>, %126, %cst_103 [0] : vector<16x128xf32> to vector<128xf32>
    %128 = vector.shape_cast %127 : vector<128xf32> to vector<1x128xf32>
    %129 = tpu.concatenate %125, %128 in 0 : vector<1x128xf32>, vector<1x128xf32> -> vector<2x128xf32>
    %c0_104 = arith.constant 0 : index
    %c0_105 = arith.constant 0 : index
    %c0_106 = arith.constant 0 : index
    %130 = vector.load %arg10[%c0_104, %c0_105, %c0_106] : memref<4x128x128xf32, #tpu.memory_space<vmem>>, vector<1x128x128xf32>
    %131 = vector.shape_cast %130 : vector<1x128x128xf32> to vector<128x128xf32>
    %cst_107 = arith.constant dense<0.000000e+00> : vector<2x128xf32>
    %132 = tpu.matmul %129, %131, %cst_107 {dimension_numbers = #tpu.dot_dimension_numbers<[1], [0], [0], [1], [0, 0, 1, 1], [], []>} : vector<2x128xf32>, vector<128x128xf32>, vector<2x128xf32> -> vector<2x128xf32>
    %133 = vector.extract_strided_slice %132 {offsets = [0, 0], sizes = [1, 128], strides = [1, 1]} : vector<2x128xf32> to vector<1x128xf32>
    %134 = vector.extract_strided_slice %132 {offsets = [1, 0], sizes = [1, 128], strides = [1, 1]} : vector<2x128xf32> to vector<1x128xf32>
    %135 = arith.mulf %133, %133 : vector<1x128xf32>
    %136 = arith.subf %134, %135 : vector<1x128xf32>
    %137 = vector.broadcast %133 : vector<1x128xf32> to vector<16x128xf32>
    %138 = arith.subf %123, %137 : vector<16x128xf32>
    %cst_108 = arith.constant 9.99999974E-6 : f32
    %139 = vector.broadcast %cst_108 : f32 to vector<1x128xf32>
    %140 = arith.addf %136, %139 : vector<1x128xf32>
    %141 = math.rsqrt %140 : vector<1x128xf32>
    %142 = vector.broadcast %141 : vector<1x128xf32> to vector<16x128xf32>
    %143 = arith.mulf %138, %142 : vector<16x128xf32>
    %c2_109 = arith.constant 2 : index
    %c0_110 = arith.constant 0 : index
    %144 = vector.load %arg4[%c2_109, %c0_110] : memref<9x128xf32, #tpu.memory_space<vmem>>, vector<1x128xf32>
    %145 = vector.broadcast %144 : vector<1x128xf32> to vector<16x128xf32>
    %146 = arith.mulf %143, %145 : vector<16x128xf32>
    %c2_111 = arith.constant 2 : index
    %c0_112 = arith.constant 0 : index
    %147 = vector.load %arg5[%c2_111, %c0_112] : memref<9x128xf32, #tpu.memory_space<vmem>>, vector<1x128xf32>
    %148 = vector.broadcast %147 : vector<1x128xf32> to vector<16x128xf32>
    %149 = arith.addf %146, %148 : vector<16x128xf32>
    %150 = arith.negf %149 : vector<16x128xf32>
    %151 = math.exp %150 : vector<16x128xf32>
    %cst_113 = arith.constant 1.000000e+00 : f32
    %152 = vector.broadcast %cst_113 : f32 to vector<16x128xf32>
    %153 = arith.addf %152, %151 : vector<16x128xf32>
    %154 = arith.divf %152, %153 : vector<16x128xf32>
    %155 = arith.mulf %149, %154 : vector<16x128xf32>
    %c1_114 = arith.constant 1 : index
    %c0_115 = arith.constant 0 : index
    %156 = vector.load %arg13[%c1_114, %c0_115] : memref<18x128xf32, #tpu.memory_space<vmem>>, vector<16x128xf32>
    tpu.vector_store %arg13[%c1_114, %c0_115], %155 {strides = array<i32>} : memref<18x128xf32, #tpu.memory_space<vmem>>, vector<16x128xf32>,
    %c0_116 = arith.constant 0 : index
    %c0_117 = arith.constant 0 : index
    %157 = vector.load %arg13[%c0_116, %c0_117] : memref<18x128xf32, #tpu.memory_space<vmem>>, vector<16x128xf32>
    %c3 = arith.constant 3 : index
    %c0_118 = arith.constant 0 : index
    %c0_119 = arith.constant 0 : index
    %c0_120 = arith.constant 0 : index
    %158 = vector.load %arg2[%c3, %c0_118, %c0_119, %c0_120] : memref<12x3x128x128xf32, #tpu.memory_space<vmem>>, vector<1x1x128x128xf32>
    %159 = vector.shape_cast %158 : vector<1x1x128x128xf32> to vector<128x128xf32>
    %cst_121 = arith.constant dense<0.000000e+00> : vector<16x128xf32>
    %160 = tpu.matmul %157, %159, %cst_121 {dimension_numbers = #tpu.dot_dimension_numbers<[1], [0], [0], [1], [0, 0, 1, 1], [], []>} : vector<16x128xf32>, vector<128x128xf32>, vector<16x128xf32> -> vector<16x128xf32>
    %c1_122 = arith.constant 1 : index
    %c0_123 = arith.constant 0 : index
    %161 = vector.load %arg13[%c1_122, %c0_123] : memref<18x128xf32, #tpu.memory_space<vmem>>, vector<16x128xf32>
    %c3_124 = arith.constant 3 : index
    %c1_125 = arith.constant 1 : index
    %c0_126 = arith.constant 0 : index
    %c0_127 = arith.constant 0 : index
    %162 = vector.load %arg2[%c3_124, %c1_125, %c0_126, %c0_127] : memref<12x3x128x128xf32, #tpu.memory_space<vmem>>, vector<1x1x128x128xf32>
    %163 = vector.shape_cast %162 : vector<1x1x128x128xf32> to vector<128x128xf32>
    %cst_128 = arith.constant dense<0.000000e+00> : vector<16x128xf32>
    %164 = tpu.matmul %161, %163, %cst_128 {dimension_numbers = #tpu.dot_dimension_numbers<[1], [0], [0], [1], [0, 0, 1, 1], [], []>} : vector<16x128xf32>, vector<128x128xf32>, vector<16x128xf32> -> vector<16x128xf32>
    %165 = arith.addf %160, %164 : vector<16x128xf32>
    %c2_129 = arith.constant 2 : index
    %c0_130 = arith.constant 0 : index
    %166 = vector.load %arg13[%c2_129, %c0_130] : memref<18x128xf32, #tpu.memory_space<vmem>>, vector<16x128xf32>
    %c3_131 = arith.constant 3 : index
    %c2_132 = arith.constant 2 : index
    %c0_133 = arith.constant 0 : index
    %c0_134 = arith.constant 0 : index
    %167 = vector.load %arg2[%c3_131, %c2_132, %c0_133, %c0_134] : memref<12x3x128x128xf32, #tpu.memory_space<vmem>>, vector<1x1x128x128xf32>
    %168 = vector.shape_cast %167 : vector<1x1x128x128xf32> to vector<128x128xf32>
    %cst_135 = arith.constant dense<0.000000e+00> : vector<16x128xf32>
    %169 = tpu.matmul %166, %168, %cst_135 {dimension_numbers = #tpu.dot_dimension_numbers<[1], [0], [0], [1], [0, 0, 1, 1], [], []>} : vector<16x128xf32>, vector<128x128xf32>, vector<16x128xf32> -> vector<16x128xf32>
    %170 = arith.addf %165, %169 : vector<16x128xf32>
    %c3_136 = arith.constant 3 : index
    %c0_137 = arith.constant 0 : index
    %171 = vector.load %arg3[%c3_136, %c0_137] : memref<11x128xf32, #tpu.memory_space<vmem>>, vector<1x128xf32>
    %172 = vector.broadcast %171 : vector<1x128xf32> to vector<16x128xf32>
    %173 = arith.addf %170, %172 : vector<16x128xf32>
    %cst_138 = arith.constant dense<0.000000e+00> : vector<128xf32>
    %174 = vector.multi_reduction <add>, %173, %cst_138 [0] : vector<16x128xf32> to vector<128xf32>
    %175 = vector.shape_cast %174 : vector<128xf32> to vector<1x128xf32>
    %176 = arith.mulf %173, %173 : vector<16x128xf32>
    %cst_139 = arith.constant dense<0.000000e+00> : vector<128xf32>
    %177 = vector.multi_reduction <add>, %176, %cst_139 [0] : vector<16x128xf32> to vector<128xf32>
    %178 = vector.shape_cast %177 : vector<128xf32> to vector<1x128xf32>
    %179 = tpu.concatenate %175, %178 in 0 : vector<1x128xf32>, vector<1x128xf32> -> vector<2x128xf32>
    %c0_140 = arith.constant 0 : index
    %c0_141 = arith.constant 0 : index
    %c0_142 = arith.constant 0 : index
    %180 = vector.load %arg10[%c0_140, %c0_141, %c0_142] : memref<4x128x128xf32, #tpu.memory_space<vmem>>, vector<1x128x128xf32>
    %181 = vector.shape_cast %180 : vector<1x128x128xf32> to vector<128x128xf32>
    %cst_143 = arith.constant dense<0.000000e+00> : vector<2x128xf32>
    %182 = tpu.matmul %179, %181, %cst_143 {dimension_numbers = #tpu.dot_dimension_numbers<[1], [0], [0], [1], [0, 0, 1, 1], [], []>} : vector<2x128xf32>, vector<128x128xf32>, vector<2x128xf32> -> vector<2x128xf32>
    %183 = vector.extract_strided_slice %182 {offsets = [0, 0], sizes = [1, 128], strides = [1, 1]} : vector<2x128xf32> to vector<1x128xf32>
    %184 = vector.extract_strided_slice %182 {offsets = [1, 0], sizes = [1, 128], strides = [1, 1]} : vector<2x128xf32> to vector<1x128xf32>
    %185 = arith.mulf %183, %183 : vector<1x128xf32>
    %186 = arith.subf %184, %185 : vector<1x128xf32>
    %187 = vector.broadcast %183 : vector<1x128xf32> to vector<16x128xf32>
    %188 = arith.subf %173, %187 : vector<16x128xf32>
    %cst_144 = arith.constant 9.99999974E-6 : f32
    %189 = vector.broadcast %cst_144 : f32 to vector<1x128xf32>
    %190 = arith.addf %186, %189 : vector<1x128xf32>
    %191 = math.rsqrt %190 : vector<1x128xf32>
    %192 = vector.broadcast %191 : vector<1x128xf32> to vector<16x128xf32>
    %193 = arith.mulf %188, %192 : vector<16x128xf32>
    %c3_145 = arith.constant 3 : index
    %c0_146 = arith.constant 0 : index
    %194 = vector.load %arg4[%c3_145, %c0_146] : memref<9x128xf32, #tpu.memory_space<vmem>>, vector<1x128xf32>
    %195 = vector.broadcast %194 : vector<1x128xf32> to vector<16x128xf32>
    %196 = arith.mulf %193, %195 : vector<16x128xf32>
    %c3_147 = arith.constant 3 : index
    %c0_148 = arith.constant 0 : index
    %197 = vector.load %arg5[%c3_147, %c0_148] : memref<9x128xf32, #tpu.memory_space<vmem>>, vector<1x128xf32>
    %198 = vector.broadcast %197 : vector<1x128xf32> to vector<16x128xf32>
    %199 = arith.addf %196, %198 : vector<16x128xf32>
    %200 = arith.negf %199 : vector<16x128xf32>
    %201 = math.exp %200 : vector<16x128xf32>
    %cst_149 = arith.constant 1.000000e+00 : f32
    %202 = vector.broadcast %cst_149 : f32 to vector<16x128xf32>
    %203 = arith.addf %202, %201 : vector<16x128xf32>
    %204 = arith.divf %202, %203 : vector<16x128xf32>
    %205 = arith.mulf %199, %204 : vector<16x128xf32>
    %206 = arith.addf %205, %105 : vector<16x128xf32>
    %c1_150 = arith.constant 1 : index
    %c0_151 = arith.constant 0 : index
    %207 = vector.load %arg13[%c1_150, %c0_151] : memref<18x128xf32, #tpu.memory_space<vmem>>, vector<16x128xf32>
    tpu.vector_store %arg13[%c1_150, %c0_151], %206 {strides = array<i32>} : memref<18x128xf32, #tpu.memory_space<vmem>>, vector<16x128xf32>,
    %c0_152 = arith.constant 0 : index
    %c0_153 = arith.constant 0 : index
    %208 = vector.load %arg13[%c0_152, %c0_153] : memref<18x128xf32, #tpu.memory_space<vmem>>, vector<16x128xf32>
    %c4 = arith.constant 4 : index
    %c0_154 = arith.constant 0 : index
    %c0_155 = arith.constant 0 : index
    %c0_156 = arith.constant 0 : index
    %209 = vector.load %arg2[%c4, %c0_154, %c0_155, %c0_156] : memref<12x3x128x128xf32, #tpu.memory_space<vmem>>, vector<1x1x128x128xf32>
    %210 = vector.shape_cast %209 : vector<1x1x128x128xf32> to vector<128x128xf32>
    %cst_157 = arith.constant dense<0.000000e+00> : vector<16x128xf32>
    %211 = tpu.matmul %208, %210, %cst_157 {dimension_numbers = #tpu.dot_dimension_numbers<[1], [0], [0], [1], [0, 0, 1, 1], [], []>} : vector<16x128xf32>, vector<128x128xf32>, vector<16x128xf32> -> vector<16x128xf32>
    %c1_158 = arith.constant 1 : index
    %c0_159 = arith.constant 0 : index
    %212 = vector.load %arg13[%c1_158, %c0_159] : memref<18x128xf32, #tpu.memory_space<vmem>>, vector<16x128xf32>
    %c4_160 = arith.constant 4 : index
    %c1_161 = arith.constant 1 : index
    %c0_162 = arith.constant 0 : index
    %c0_163 = arith.constant 0 : index
    %213 = vector.load %arg2[%c4_160, %c1_161, %c0_162, %c0_163] : memref<12x3x128x128xf32, #tpu.memory_space<vmem>>, vector<1x1x128x128xf32>
    %214 = vector.shape_cast %213 : vector<1x1x128x128xf32> to vector<128x128xf32>
    %cst_164 = arith.constant dense<0.000000e+00> : vector<16x128xf32>
    %215 = tpu.matmul %212, %214, %cst_164 {dimension_numbers = #tpu.dot_dimension_numbers<[1], [0], [0], [1], [0, 0, 1, 1], [], []>} : vector<16x128xf32>, vector<128x128xf32>, vector<16x128xf32> -> vector<16x128xf32>
    %216 = arith.addf %211, %215 : vector<16x128xf32>
    %c2_165 = arith.constant 2 : index
    %c0_166 = arith.constant 0 : index
    %217 = vector.load %arg13[%c2_165, %c0_166] : memref<18x128xf32, #tpu.memory_space<vmem>>, vector<16x128xf32>
    %c4_167 = arith.constant 4 : index
    %c2_168 = arith.constant 2 : index
    %c0_169 = arith.constant 0 : index
    %c0_170 = arith.constant 0 : index
    %218 = vector.load %arg2[%c4_167, %c2_168, %c0_169, %c0_170] : memref<12x3x128x128xf32, #tpu.memory_space<vmem>>, vector<1x1x128x128xf32>
    %219 = vector.shape_cast %218 : vector<1x1x128x128xf32> to vector<128x128xf32>
    %cst_171 = arith.constant dense<0.000000e+00> : vector<16x128xf32>
    %220 = tpu.matmul %217, %219, %cst_171 {dimension_numbers = #tpu.dot_dimension_numbers<[1], [0], [0], [1], [0, 0, 1, 1], [], []>} : vector<16x128xf32>, vector<128x128xf32>, vector<16x128xf32> -> vector<16x128xf32>
    %221 = arith.addf %216, %220 : vector<16x128xf32>
    %c4_172 = arith.constant 4 : index
    %c0_173 = arith.constant 0 : index
    %222 = vector.load %arg3[%c4_172, %c0_173] : memref<11x128xf32, #tpu.memory_space<vmem>>, vector<1x128xf32>
    %223 = vector.broadcast %222 : vector<1x128xf32> to vector<16x128xf32>
    %224 = arith.addf %221, %223 : vector<16x128xf32>
    %cst_174 = arith.constant dense<0.000000e+00> : vector<128xf32>
    %225 = vector.multi_reduction <add>, %224, %cst_174 [0] : vector<16x128xf32> to vector<128xf32>
    %226 = vector.shape_cast %225 : vector<128xf32> to vector<1x128xf32>
    %227 = arith.mulf %224, %224 : vector<16x128xf32>
    %cst_175 = arith.constant dense<0.000000e+00> : vector<128xf32>
    %228 = vector.multi_reduction <add>, %227, %cst_175 [0] : vector<16x128xf32> to vector<128xf32>
    %229 = vector.shape_cast %228 : vector<128xf32> to vector<1x128xf32>
    %230 = tpu.concatenate %226, %229 in 0 : vector<1x128xf32>, vector<1x128xf32> -> vector<2x128xf32>
    %c0_176 = arith.constant 0 : index
    %c0_177 = arith.constant 0 : index
    %c0_178 = arith.constant 0 : index
    %231 = vector.load %arg10[%c0_176, %c0_177, %c0_178] : memref<4x128x128xf32, #tpu.memory_space<vmem>>, vector<1x128x128xf32>
    %232 = vector.shape_cast %231 : vector<1x128x128xf32> to vector<128x128xf32>
    %cst_179 = arith.constant dense<0.000000e+00> : vector<2x128xf32>
    %233 = tpu.matmul %230, %232, %cst_179 {dimension_numbers = #tpu.dot_dimension_numbers<[1], [0], [0], [1], [0, 0, 1, 1], [], []>} : vector<2x128xf32>, vector<128x128xf32>, vector<2x128xf32> -> vector<2x128xf32>
    %234 = vector.extract_strided_slice %233 {offsets = [0, 0], sizes = [1, 128], strides = [1, 1]} : vector<2x128xf32> to vector<1x128xf32>
    %235 = vector.extract_strided_slice %233 {offsets = [1, 0], sizes = [1, 128], strides = [1, 1]} : vector<2x128xf32> to vector<1x128xf32>
    %236 = arith.mulf %234, %234 : vector<1x128xf32>
    %237 = arith.subf %235, %236 : vector<1x128xf32>
    %238 = vector.broadcast %234 : vector<1x128xf32> to vector<16x128xf32>
    %239 = arith.subf %224, %238 : vector<16x128xf32>
    %cst_180 = arith.constant 9.99999974E-6 : f32
    %240 = vector.broadcast %cst_180 : f32 to vector<1x128xf32>
    %241 = arith.addf %237, %240 : vector<1x128xf32>
    %242 = math.rsqrt %241 : vector<1x128xf32>
    %243 = vector.broadcast %242 : vector<1x128xf32> to vector<16x128xf32>
    %244 = arith.mulf %239, %243 : vector<16x128xf32>
    %c4_181 = arith.constant 4 : index
    %c0_182 = arith.constant 0 : index
    %245 = vector.load %arg4[%c4_181, %c0_182] : memref<9x128xf32, #tpu.memory_space<vmem>>, vector<1x128xf32>
    %246 = vector.broadcast %245 : vector<1x128xf32> to vector<16x128xf32>
    %247 = arith.mulf %244, %246 : vector<16x128xf32>
    %c4_183 = arith.constant 4 : index
    %c0_184 = arith.constant 0 : index
    %248 = vector.load %arg5[%c4_183, %c0_184] : memref<9x128xf32, #tpu.memory_space<vmem>>, vector<1x128xf32>
    %249 = vector.broadcast %248 : vector<1x128xf32> to vector<16x128xf32>
    %250 = arith.addf %247, %249 : vector<16x128xf32>
    %251 = arith.negf %250 : vector<16x128xf32>
    %252 = math.exp %251 : vector<16x128xf32>
    %cst_185 = arith.constant 1.000000e+00 : f32
    %253 = vector.broadcast %cst_185 : f32 to vector<16x128xf32>
    %254 = arith.addf %253, %252 : vector<16x128xf32>
    %255 = arith.divf %253, %254 : vector<16x128xf32>
    %256 = arith.mulf %250, %255 : vector<16x128xf32>
    %c1_186 = arith.constant 1 : index
    %c0_187 = arith.constant 0 : index
    %257 = vector.load %arg13[%c1_186, %c0_187] : memref<18x128xf32, #tpu.memory_space<vmem>>, vector<16x128xf32>
    tpu.vector_store %arg13[%c1_186, %c0_187], %256 {strides = array<i32>} : memref<18x128xf32, #tpu.memory_space<vmem>>, vector<16x128xf32>,
    %c0_188 = arith.constant 0 : index
    %c0_189 = arith.constant 0 : index
    %258 = vector.load %arg13[%c0_188, %c0_189] : memref<18x128xf32, #tpu.memory_space<vmem>>, vector<16x128xf32>
    %c5 = arith.constant 5 : index
    %c0_190 = arith.constant 0 : index
    %c0_191 = arith.constant 0 : index
    %c0_192 = arith.constant 0 : index
    %259 = vector.load %arg2[%c5, %c0_190, %c0_191, %c0_192] : memref<12x3x128x128xf32, #tpu.memory_space<vmem>>, vector<1x1x128x128xf32>
    %260 = vector.shape_cast %259 : vector<1x1x128x128xf32> to vector<128x128xf32>
    %cst_193 = arith.constant dense<0.000000e+00> : vector<16x128xf32>
    %261 = tpu.matmul %258, %260, %cst_193 {dimension_numbers = #tpu.dot_dimension_numbers<[1], [0], [0], [1], [0, 0, 1, 1], [], []>} : vector<16x128xf32>, vector<128x128xf32>, vector<16x128xf32> -> vector<16x128xf32>
    %c1_194 = arith.constant 1 : index
    %c0_195 = arith.constant 0 : index
    %262 = vector.load %arg13[%c1_194, %c0_195] : memref<18x128xf32, #tpu.memory_space<vmem>>, vector<16x128xf32>
    %c5_196 = arith.constant 5 : index
    %c1_197 = arith.constant 1 : index
    %c0_198 = arith.constant 0 : index
    %c0_199 = arith.constant 0 : index
    %263 = vector.load %arg2[%c5_196, %c1_197, %c0_198, %c0_199] : memref<12x3x128x128xf32, #tpu.memory_space<vmem>>, vector<1x1x128x128xf32>
    %264 = vector.shape_cast %263 : vector<1x1x128x128xf32> to vector<128x128xf32>
    %cst_200 = arith.constant dense<0.000000e+00> : vector<16x128xf32>
    %265 = tpu.matmul %262, %264, %cst_200 {dimension_numbers = #tpu.dot_dimension_numbers<[1], [0], [0], [1], [0, 0, 1, 1], [], []>} : vector<16x128xf32>, vector<128x128xf32>, vector<16x128xf32> -> vector<16x128xf32>
    %266 = arith.addf %261, %265 : vector<16x128xf32>
    %c2_201 = arith.constant 2 : index
    %c0_202 = arith.constant 0 : index
    %267 = vector.load %arg13[%c2_201, %c0_202] : memref<18x128xf32, #tpu.memory_space<vmem>>, vector<16x128xf32>
    %c5_203 = arith.constant 5 : index
    %c2_204 = arith.constant 2 : index
    %c0_205 = arith.constant 0 : index
    %c0_206 = arith.constant 0 : index
    %268 = vector.load %arg2[%c5_203, %c2_204, %c0_205, %c0_206] : memref<12x3x128x128xf32, #tpu.memory_space<vmem>>, vector<1x1x128x128xf32>
    %269 = vector.shape_cast %268 : vector<1x1x128x128xf32> to vector<128x128xf32>
    %cst_207 = arith.constant dense<0.000000e+00> : vector<16x128xf32>
    %270 = tpu.matmul %267, %269, %cst_207 {dimension_numbers = #tpu.dot_dimension_numbers<[1], [0], [0], [1], [0, 0, 1, 1], [], []>} : vector<16x128xf32>, vector<128x128xf32>, vector<16x128xf32> -> vector<16x128xf32>
    %271 = arith.addf %266, %270 : vector<16x128xf32>
    %c5_208 = arith.constant 5 : index
    %c0_209 = arith.constant 0 : index
    %272 = vector.load %arg3[%c5_208, %c0_209] : memref<11x128xf32, #tpu.memory_space<vmem>>, vector<1x128xf32>
    %273 = vector.broadcast %272 : vector<1x128xf32> to vector<16x128xf32>
    %274 = arith.addf %271, %273 : vector<16x128xf32>
    %cst_210 = arith.constant dense<0.000000e+00> : vector<128xf32>
    %275 = vector.multi_reduction <add>, %274, %cst_210 [0] : vector<16x128xf32> to vector<128xf32>
    %276 = vector.shape_cast %275 : vector<128xf32> to vector<1x128xf32>
    %277 = arith.mulf %274, %274 : vector<16x128xf32>
    %cst_211 = arith.constant dense<0.000000e+00> : vector<128xf32>
    %278 = vector.multi_reduction <add>, %277, %cst_211 [0] : vector<16x128xf32> to vector<128xf32>
    %279 = vector.shape_cast %278 : vector<128xf32> to vector<1x128xf32>
    %280 = tpu.concatenate %276, %279 in 0 : vector<1x128xf32>, vector<1x128xf32> -> vector<2x128xf32>
    %c0_212 = arith.constant 0 : index
    %c0_213 = arith.constant 0 : index
    %c0_214 = arith.constant 0 : index
    %281 = vector.load %arg10[%c0_212, %c0_213, %c0_214] : memref<4x128x128xf32, #tpu.memory_space<vmem>>, vector<1x128x128xf32>
    %282 = vector.shape_cast %281 : vector<1x128x128xf32> to vector<128x128xf32>
    %cst_215 = arith.constant dense<0.000000e+00> : vector<2x128xf32>
    %283 = tpu.matmul %280, %282, %cst_215 {dimension_numbers = #tpu.dot_dimension_numbers<[1], [0], [0], [1], [0, 0, 1, 1], [], []>} : vector<2x128xf32>, vector<128x128xf32>, vector<2x128xf32> -> vector<2x128xf32>
    %284 = vector.extract_strided_slice %283 {offsets = [0, 0], sizes = [1, 128], strides = [1, 1]} : vector<2x128xf32> to vector<1x128xf32>
    %285 = vector.extract_strided_slice %283 {offsets = [1, 0], sizes = [1, 128], strides = [1, 1]} : vector<2x128xf32> to vector<1x128xf32>
    %286 = arith.mulf %284, %284 : vector<1x128xf32>
    %287 = arith.subf %285, %286 : vector<1x128xf32>
    %288 = vector.broadcast %284 : vector<1x128xf32> to vector<16x128xf32>
    %289 = arith.subf %274, %288 : vector<16x128xf32>
    %cst_216 = arith.constant 9.99999974E-6 : f32
    %290 = vector.broadcast %cst_216 : f32 to vector<1x128xf32>
    %291 = arith.addf %287, %290 : vector<1x128xf32>
    %292 = math.rsqrt %291 : vector<1x128xf32>
    %293 = vector.broadcast %292 : vector<1x128xf32> to vector<16x128xf32>
    %294 = arith.mulf %289, %293 : vector<16x128xf32>
    %c5_217 = arith.constant 5 : index
    %c0_218 = arith.constant 0 : index
    %295 = vector.load %arg4[%c5_217, %c0_218] : memref<9x128xf32, #tpu.memory_space<vmem>>, vector<1x128xf32>
    %296 = vector.broadcast %295 : vector<1x128xf32> to vector<16x128xf32>
    %297 = arith.mulf %294, %296 : vector<16x128xf32>
    %c5_219 = arith.constant 5 : index
    %c0_220 = arith.constant 0 : index
    %298 = vector.load %arg5[%c5_219, %c0_220] : memref<9x128xf32, #tpu.memory_space<vmem>>, vector<1x128xf32>
    %299 = vector.broadcast %298 : vector<1x128xf32> to vector<16x128xf32>
    %300 = arith.addf %297, %299 : vector<16x128xf32>
    %301 = arith.negf %300 : vector<16x128xf32>
    %302 = math.exp %301 : vector<16x128xf32>
    %cst_221 = arith.constant 1.000000e+00 : f32
    %303 = vector.broadcast %cst_221 : f32 to vector<16x128xf32>
    %304 = arith.addf %303, %302 : vector<16x128xf32>
    %305 = arith.divf %303, %304 : vector<16x128xf32>
    %306 = arith.mulf %300, %305 : vector<16x128xf32>
    %307 = arith.addf %306, %206 : vector<16x128xf32>
    %c0_222 = arith.constant 0 : index
    %c0_223 = arith.constant 0 : index
    %308 = vector.load %arg6[%c0_222, %c0_223] : memref<128x64xf32, #tpu.memory_space<vmem>>, vector<128x64xf32>
    %cst_224 = arith.constant dense<0.000000e+00> : vector<16x64xf32>
    %309 = tpu.matmul %307, %308, %cst_224 {dimension_numbers = #tpu.dot_dimension_numbers<[1], [0], [0], [1], [0, 0, 1, 1], [], []>} : vector<16x128xf32>, vector<128x64xf32>, vector<16x64xf32> -> vector<16x64xf32>
    %c0_225 = arith.constant 0 : index
    %c0_226 = arith.constant 0 : index
    %310 = vector.load %arg7[%c0_225, %c0_226] : memref<1x64xf32, #tpu.memory_space<vmem>>, vector<1x64xf32>
    %311 = vector.broadcast %310 : vector<1x64xf32> to vector<16x64xf32>
    %312 = arith.addf %309, %311 : vector<16x64xf32>
    %313 = arith.negf %312 : vector<16x64xf32>
    %314 = math.exp %313 : vector<16x64xf32>
    %cst_227 = arith.constant 1.000000e+00 : f32
    %315 = vector.broadcast %cst_227 : f32 to vector<16x64xf32>
    %316 = arith.addf %315, %314 : vector<16x64xf32>
    %317 = arith.divf %315, %316 : vector<16x64xf32>
    %318 = arith.mulf %312, %317 : vector<16x64xf32>
    %c0_228 = arith.constant 0 : index
    %c0_229 = arith.constant 0 : index
    %319 = vector.load %arg8[%c0_228, %c0_229] : memref<64x128xf32, #tpu.memory_space<vmem>>, vector<64x128xf32>
    %cst_230 = arith.constant dense<0.000000e+00> : vector<16x128xf32>
    %320 = tpu.matmul %318, %319, %cst_230 {dimension_numbers = #tpu.dot_dimension_numbers<[1], [0], [0], [1], [0, 0, 1, 1], [], []>} : vector<16x64xf32>, vector<64x128xf32>, vector<16x128xf32> -> vector<16x128xf32>
    %c0_231 = arith.constant 0 : index
    %c0_232 = arith.constant 0 : index
    %321 = vector.load %arg9[%c0_231, %c0_232] : memref<1x1xf32, #tpu.memory_space<vmem>>, vector<1x1xf32>
    %322 = vector.broadcast %321 : vector<1x1xf32> to vector<16x128xf32>
    %323 = arith.addf %320, %322 : vector<16x128xf32>
    %324 = arith.negf %323 : vector<16x128xf32>
    %325 = math.exp %324 : vector<16x128xf32>
    %cst_233 = arith.constant 1.000000e+00 : f32
    %326 = vector.broadcast %cst_233 : f32 to vector<16x128xf32>
    %327 = arith.addf %326, %325 : vector<16x128xf32>
    %328 = arith.divf %326, %327 : vector<16x128xf32>
    %329 = vector.extract_strided_slice %307 {offsets = [0, 120], sizes = [16, 8], strides = [1, 1]} : vector<16x128xf32> to vector<16x8xf32>
    %330 = vector.extract_strided_slice %307 {offsets = [0, 0], sizes = [16, 120], strides = [1, 1]} : vector<16x128xf32> to vector<16x120xf32>
    %331 = tpu.concatenate %329, %330 in 1 : vector<16x8xf32>, vector<16x120xf32> -> vector<16x128xf32>
    %332 = vector.extract_strided_slice %307 {offsets = [15, 0], sizes = [1, 128], strides = [1, 1]} : vector<16x128xf32> to vector<1x128xf32>
    %333 = vector.extract_strided_slice %307 {offsets = [0, 0], sizes = [15, 128], strides = [1, 1]} : vector<16x128xf32> to vector<15x128xf32>
    %334 = tpu.concatenate %332, %333 in 0 : vector<1x128xf32>, vector<15x128xf32> -> vector<16x128xf32>
    %335 = arith.subf %307, %331 : vector<16x128xf32>
    %336 = arith.subf %307, %334 : vector<16x128xf32>
    %337 = arith.mulf %335, %335 : vector<16x128xf32>
    %338 = arith.mulf %336, %336 : vector<16x128xf32>
    %339 = arith.addf %337, %338 : vector<16x128xf32>
    %340 = math.sqrt %339 : vector<16x128xf32>
    %c1_234 = arith.constant 1 : index
    %c0_235 = arith.constant 0 : index
    %c0_236 = arith.constant 0 : index
    %341 = vector.load %arg10[%c1_234, %c0_235, %c0_236] : memref<4x128x128xf32, #tpu.memory_space<vmem>>, vector<1x128x128xf32>
    %342 = vector.shape_cast %341 : vector<1x128x128xf32> to vector<128x128xf32>
    %cst_237 = arith.constant dense<0.000000e+00> : vector<16x128xf32>
    %343 = tpu.matmul %340, %342, %cst_237 {dimension_numbers = #tpu.dot_dimension_numbers<[1], [0], [0], [1], [0, 0, 1, 1], [], []>} : vector<16x128xf32>, vector<128x128xf32>, vector<16x128xf32> -> vector<16x128xf32>
    %344 = arith.subf %340, %343 : vector<16x128xf32>
    %345 = arith.mulf %344, %344 : vector<16x128xf32>
    %c1_238 = arith.constant 1 : index
    %c0_239 = arith.constant 0 : index
    %c0_240 = arith.constant 0 : index
    %346 = vector.load %arg10[%c1_238, %c0_239, %c0_240] : memref<4x128x128xf32, #tpu.memory_space<vmem>>, vector<1x128x128xf32>
    %347 = vector.shape_cast %346 : vector<1x128x128xf32> to vector<128x128xf32>
    %cst_241 = arith.constant dense<0.000000e+00> : vector<16x128xf32>
    %348 = tpu.matmul %345, %347, %cst_241 {dimension_numbers = #tpu.dot_dimension_numbers<[1], [0], [0], [1], [0, 0, 1, 1], [], []>} : vector<16x128xf32>, vector<128x128xf32>, vector<16x128xf32> -> vector<16x128xf32>
    %cst_242 = arith.constant 1.14285719 : f32
    %349 = vector.broadcast %cst_242 : f32 to vector<16x128xf32>
    %350 = arith.mulf %348, %349 : vector<16x128xf32>
    %351 = math.sqrt %350 : vector<16x128xf32>
    %cst_243 = arith.constant 1.000000e+00 : f32
    %352 = vector.broadcast %cst_243 : f32 to vector<16x128xf32>
    %353 = arith.addf %352, %351 : vector<16x128xf32>
    %cst_244 = arith.constant 1.000000e+00 : f32
    %354 = vector.broadcast %cst_244 : f32 to vector<16x128xf32>
    %355 = arith.divf %354, %353 : vector<16x128xf32>
    %c1_245 = arith.constant 1 : index
    %c0_246 = arith.constant 0 : index
    %356 = vector.load %arg13[%c1_245, %c0_246] : memref<18x128xf32, #tpu.memory_space<vmem>>, vector<16x128xf32>
    tpu.vector_store %arg13[%c1_245, %c0_246], %307 {strides = array<i32>} : memref<18x128xf32, #tpu.memory_space<vmem>>, vector<16x128xf32>,
    %c0_247 = arith.constant 0 : index
    %c0_248 = arith.constant 0 : index
    %357 = vector.load %arg13[%c0_247, %c0_248] : memref<18x128xf32, #tpu.memory_space<vmem>>, vector<16x128xf32>
    %c1_249 = arith.constant 1 : index
    %c0_250 = arith.constant 0 : index
    %358 = vector.load %arg13[%c1_249, %c0_250] : memref<18x128xf32, #tpu.memory_space<vmem>>, vector<16x128xf32>
    %359 = arith.addf %357, %358 : vector<16x128xf32>
    %c2_251 = arith.constant 2 : index
    %c0_252 = arith.constant 0 : index
    %360 = vector.load %arg13[%c2_251, %c0_252] : memref<18x128xf32, #tpu.memory_space<vmem>>, vector<16x128xf32>
    %361 = arith.addf %359, %360 : vector<16x128xf32>
    %c0_253 = arith.constant 0 : index
    %c0_254 = arith.constant 0 : index
    %362 = vector.load %arg13[%c0_253, %c0_254] : memref<18x128xf32, #tpu.memory_space<vmem>>, vector<16x128xf32>
    %c6 = arith.constant 6 : index
    %c0_255 = arith.constant 0 : index
    %c0_256 = arith.constant 0 : index
    %c0_257 = arith.constant 0 : index
    %363 = vector.load %arg2[%c6, %c0_255, %c0_256, %c0_257] : memref<12x3x128x128xf32, #tpu.memory_space<vmem>>, vector<1x1x128x128xf32>
    %364 = vector.shape_cast %363 : vector<1x1x128x128xf32> to vector<128x128xf32>
    %cst_258 = arith.constant dense<0.000000e+00> : vector<16x128xf32>
    %365 = tpu.matmul %362, %364, %cst_258 {dimension_numbers = #tpu.dot_dimension_numbers<[1], [0], [0], [1], [0, 0, 1, 1], [], []>} : vector<16x128xf32>, vector<128x128xf32>, vector<16x128xf32> -> vector<16x128xf32>
    %c1_259 = arith.constant 1 : index
    %c0_260 = arith.constant 0 : index
    %366 = vector.load %arg13[%c1_259, %c0_260] : memref<18x128xf32, #tpu.memory_space<vmem>>, vector<16x128xf32>
    %c6_261 = arith.constant 6 : index
    %c1_262 = arith.constant 1 : index
    %c0_263 = arith.constant 0 : index
    %c0_264 = arith.constant 0 : index
    %367 = vector.load %arg2[%c6_261, %c1_262, %c0_263, %c0_264] : memref<12x3x128x128xf32, #tpu.memory_space<vmem>>, vector<1x1x128x128xf32>
    %368 = vector.shape_cast %367 : vector<1x1x128x128xf32> to vector<128x128xf32>
    %cst_265 = arith.constant dense<0.000000e+00> : vector<16x128xf32>
    %369 = tpu.matmul %366, %368, %cst_265 {dimension_numbers = #tpu.dot_dimension_numbers<[1], [0], [0], [1], [0, 0, 1, 1], [], []>} : vector<16x128xf32>, vector<128x128xf32>, vector<16x128xf32> -> vector<16x128xf32>
    %370 = arith.addf %365, %369 : vector<16x128xf32>
    %c2_266 = arith.constant 2 : index
    %c0_267 = arith.constant 0 : index
    %371 = vector.load %arg13[%c2_266, %c0_267] : memref<18x128xf32, #tpu.memory_space<vmem>>, vector<16x128xf32>
    %c6_268 = arith.constant 6 : index
    %c2_269 = arith.constant 2 : index
    %c0_270 = arith.constant 0 : index
    %c0_271 = arith.constant 0 : index
    %372 = vector.load %arg2[%c6_268, %c2_269, %c0_270, %c0_271] : memref<12x3x128x128xf32, #tpu.memory_space<vmem>>, vector<1x1x128x128xf32>
    %373 = vector.shape_cast %372 : vector<1x1x128x128xf32> to vector<128x128xf32>
    %cst_272 = arith.constant dense<0.000000e+00> : vector<16x128xf32>
    %374 = tpu.matmul %371, %373, %cst_272 {dimension_numbers = #tpu.dot_dimension_numbers<[1], [0], [0], [1], [0, 0, 1, 1], [], []>} : vector<16x128xf32>, vector<128x128xf32>, vector<16x128xf32> -> vector<16x128xf32>
    %375 = arith.addf %370, %374 : vector<16x128xf32>
    %c6_273 = arith.constant 6 : index
    %c0_274 = arith.constant 0 : index
    %376 = vector.load %arg3[%c6_273, %c0_274] : memref<11x128xf32, #tpu.memory_space<vmem>>, vector<1x128xf32>
    %377 = vector.broadcast %376 : vector<1x128xf32> to vector<16x128xf32>
    %378 = arith.addf %375, %377 : vector<16x128xf32>
    %c2_275 = arith.constant 2 : index
    %c0_276 = arith.constant 0 : index
    %c0_277 = arith.constant 0 : index
    %379 = vector.load %arg10[%c2_275, %c0_276, %c0_277] : memref<4x128x128xf32, #tpu.memory_space<vmem>>, vector<1x128x128xf32>
    %380 = vector.shape_cast %379 : vector<1x128x128xf32> to vector<128x128xf32>
    %cst_278 = arith.constant dense<0.000000e+00> : vector<16x128xf32>
    %381 = tpu.matmul %361, %380, %cst_278 {dimension_numbers = #tpu.dot_dimension_numbers<[1], [0], [0], [1], [0, 0, 1, 1], [], []>} : vector<16x128xf32>, vector<128x128xf32>, vector<16x128xf32> -> vector<16x128xf32>
    %382 = arith.subf %307, %381 : vector<16x128xf32>
    %383 = arith.mulf %382, %382 : vector<16x128xf32>
    %c1_279 = arith.constant 1 : index
    %c0_280 = arith.constant 0 : index
    %384 = vector.load %arg13[%c1_279, %c0_280] : memref<18x128xf32, #tpu.memory_space<vmem>>, vector<16x128xf32>
    tpu.vector_store %arg13[%c1_279, %c0_280], %383 {strides = array<i32>} : memref<18x128xf32, #tpu.memory_space<vmem>>, vector<16x128xf32>,
    %c0_281 = arith.constant 0 : index
    %c0_282 = arith.constant 0 : index
    %385 = vector.load %arg13[%c0_281, %c0_282] : memref<18x128xf32, #tpu.memory_space<vmem>>, vector<16x128xf32>
    %c1_283 = arith.constant 1 : index
    %c0_284 = arith.constant 0 : index
    %386 = vector.load %arg13[%c1_283, %c0_284] : memref<18x128xf32, #tpu.memory_space<vmem>>, vector<16x128xf32>
    %387 = arith.addf %385, %386 : vector<16x128xf32>
    %c2_285 = arith.constant 2 : index
    %c0_286 = arith.constant 0 : index
    %388 = vector.load %arg13[%c2_285, %c0_286] : memref<18x128xf32, #tpu.memory_space<vmem>>, vector<16x128xf32>
    %389 = arith.addf %387, %388 : vector<16x128xf32>
    %c3_287 = arith.constant 3 : index
    %c0_288 = arith.constant 0 : index
    %c0_289 = arith.constant 0 : index
    %390 = vector.load %arg10[%c3_287, %c0_288, %c0_289] : memref<4x128x128xf32, #tpu.memory_space<vmem>>, vector<1x128x128xf32>
    %391 = vector.shape_cast %390 : vector<1x128x128xf32> to vector<128x128xf32>
    %cst_290 = arith.constant dense<0.000000e+00> : vector<16x128xf32>
    %392 = tpu.matmul %389, %391, %cst_290 {dimension_numbers = #tpu.dot_dimension_numbers<[1], [0], [0], [1], [0, 0, 1, 1], [], []>} : vector<16x128xf32>, vector<128x128xf32>, vector<16x128xf32> -> vector<16x128xf32>
    %cst_291 = arith.constant 1.000000e+00 : f32
    %393 = vector.broadcast %cst_291 : f32 to vector<16x128xf32>
    %394 = arith.addf %393, %392 : vector<16x128xf32>
    %cst_292 = arith.constant 1.000000e+00 : f32
    %395 = vector.broadcast %cst_292 : f32 to vector<16x128xf32>
    %396 = arith.divf %395, %394 : vector<16x128xf32>
    %397 = arith.addf %396, %355 : vector<16x128xf32>
    %398 = arith.addf %397, %328 : vector<16x128xf32>
    %cst_293 = arith.constant 0.333333343 : f32
    %399 = vector.broadcast %cst_293 : f32 to vector<16x128xf32>
    %400 = arith.mulf %398, %399 : vector<16x128xf32>
    %cst_294 = arith.constant dense<0.000000e+00> : vector<16xf32>
    %401 = vector.multi_reduction <add>, %400, %cst_294 [1] : vector<16x128xf32> to vector<16xf32>
    %402 = vector.shape_cast %401 : vector<16xf32> to vector<16x1xf32>
    %cst_295 = arith.constant dense<0.000000e+00> : vector<1xf32>
    %403 = vector.multi_reduction <add>, %402, %cst_295 [0] : vector<16x1xf32> to vector<1xf32>
    %404 = vector.shape_cast %403 : vector<1xf32> to vector<1x1xf32>
    %cst_296 = arith.constant 4.8828125E-4 : f32
    %405 = vector.broadcast %cst_296 : f32 to vector<1x1xf32>
    %406 = arith.mulf %404, %405 : vector<1x1xf32>
    %c0_297 = arith.constant 0 : index
    %c0_298 = arith.constant 0 : index
    %c0_299 = arith.constant 0 : index
    %407 = vector.load %arg12[%c0_297, %c0_298, %c0_299] : memref<1x1x1xf32, #tpu.memory_space<vmem>>, vector<1x1x1xf32>
    %408 = vector.shape_cast %407 : vector<1x1x1xf32> to vector<1x1xf32>
    %409 = vector.shape_cast %406 : vector<1x1xf32> to vector<1x1x1xf32>
    tpu.vector_store %arg12[%c0_297, %c0_298, %c0_299], %409 {strides = array<i32>} : memref<1x1x1xf32, #tpu.memory_space<vmem>>, vector<1x1x1xf32>,
    %cst_300 = arith.constant dense<0.000000e+00> : vector<128xf32>
    %410 = vector.multi_reduction <add>, %378, %cst_300 [0] : vector<16x128xf32> to vector<128xf32>
    %411 = vector.shape_cast %410 : vector<128xf32> to vector<1x128xf32>
    %412 = arith.mulf %378, %378 : vector<16x128xf32>
    %cst_301 = arith.constant dense<0.000000e+00> : vector<128xf32>
    %413 = vector.multi_reduction <add>, %412, %cst_301 [0] : vector<16x128xf32> to vector<128xf32>
    %414 = vector.shape_cast %413 : vector<128xf32> to vector<1x128xf32>
    %415 = tpu.concatenate %411, %414 in 0 : vector<1x128xf32>, vector<1x128xf32> -> vector<2x128xf32>
    %c0_302 = arith.constant 0 : index
    %c0_303 = arith.constant 0 : index
    %c0_304 = arith.constant 0 : index
    %416 = vector.load %arg10[%c0_302, %c0_303, %c0_304] : memref<4x128x128xf32, #tpu.memory_space<vmem>>, vector<1x128x128xf32>
    %417 = vector.shape_cast %416 : vector<1x128x128xf32> to vector<128x128xf32>
    %cst_305 = arith.constant dense<0.000000e+00> : vector<2x128xf32>
    %418 = tpu.matmul %415, %417, %cst_305 {dimension_numbers = #tpu.dot_dimension_numbers<[1], [0], [0], [1], [0, 0, 1, 1], [], []>} : vector<2x128xf32>, vector<128x128xf32>, vector<2x128xf32> -> vector<2x128xf32>
    %419 = vector.extract_strided_slice %418 {offsets = [0, 0], sizes = [1, 128], strides = [1, 1]} : vector<2x128xf32> to vector<1x128xf32>
    %420 = vector.extract_strided_slice %418 {offsets = [1, 0], sizes = [1, 128], strides = [1, 1]} : vector<2x128xf32> to vector<1x128xf32>
    %421 = arith.mulf %419, %419 : vector<1x128xf32>
    %422 = arith.subf %420, %421 : vector<1x128xf32>
    %423 = vector.broadcast %419 : vector<1x128xf32> to vector<16x128xf32>
    %424 = arith.subf %378, %423 : vector<16x128xf32>
    %cst_306 = arith.constant 9.99999974E-6 : f32
    %425 = vector.broadcast %cst_306 : f32 to vector<1x128xf32>
    %426 = arith.addf %422, %425 : vector<1x128xf32>
    %427 = math.rsqrt %426 : vector<1x128xf32>
    %428 = vector.broadcast %427 : vector<1x128xf32> to vector<16x128xf32>
    %429 = arith.mulf %424, %428 : vector<16x128xf32>
    %c6_307 = arith.constant 6 : index
    %c0_308 = arith.constant 0 : index
    %430 = vector.load %arg4[%c6_307, %c0_308] : memref<9x128xf32, #tpu.memory_space<vmem>>, vector<1x128xf32>
    %431 = vector.broadcast %430 : vector<1x128xf32> to vector<16x128xf32>
    %432 = arith.mulf %429, %431 : vector<16x128xf32>
    %c6_309 = arith.constant 6 : index
    %c0_310 = arith.constant 0 : index
    %433 = vector.load %arg5[%c6_309, %c0_310] : memref<9x128xf32, #tpu.memory_space<vmem>>, vector<1x128xf32>
    %434 = vector.broadcast %433 : vector<1x128xf32> to vector<16x128xf32>
    %435 = arith.addf %432, %434 : vector<16x128xf32>
    %436 = arith.negf %435 : vector<16x128xf32>
    %437 = math.exp %436 : vector<16x128xf32>
    %cst_311 = arith.constant 1.000000e+00 : f32
    %438 = vector.broadcast %cst_311 : f32 to vector<16x128xf32>
    %439 = arith.addf %438, %437 : vector<16x128xf32>
    %440 = arith.divf %438, %439 : vector<16x128xf32>
    %441 = arith.mulf %435, %440 : vector<16x128xf32>
    %c1_312 = arith.constant 1 : index
    %c0_313 = arith.constant 0 : index
    %442 = vector.load %arg13[%c1_312, %c0_313] : memref<18x128xf32, #tpu.memory_space<vmem>>, vector<16x128xf32>
    tpu.vector_store %arg13[%c1_312, %c0_313], %441 {strides = array<i32>} : memref<18x128xf32, #tpu.memory_space<vmem>>, vector<16x128xf32>,
    %c0_314 = arith.constant 0 : index
    %c0_315 = arith.constant 0 : index
    %443 = vector.load %arg13[%c0_314, %c0_315] : memref<18x128xf32, #tpu.memory_space<vmem>>, vector<16x128xf32>
    %c7 = arith.constant 7 : index
    %c0_316 = arith.constant 0 : index
    %c0_317 = arith.constant 0 : index
    %c0_318 = arith.constant 0 : index
    %444 = vector.load %arg2[%c7, %c0_316, %c0_317, %c0_318] : memref<12x3x128x128xf32, #tpu.memory_space<vmem>>, vector<1x1x128x128xf32>
    %445 = vector.shape_cast %444 : vector<1x1x128x128xf32> to vector<128x128xf32>
    %cst_319 = arith.constant dense<0.000000e+00> : vector<16x128xf32>
    %446 = tpu.matmul %443, %445, %cst_319 {dimension_numbers = #tpu.dot_dimension_numbers<[1], [0], [0], [1], [0, 0, 1, 1], [], []>} : vector<16x128xf32>, vector<128x128xf32>, vector<16x128xf32> -> vector<16x128xf32>
    %c1_320 = arith.constant 1 : index
    %c0_321 = arith.constant 0 : index
    %447 = vector.load %arg13[%c1_320, %c0_321] : memref<18x128xf32, #tpu.memory_space<vmem>>, vector<16x128xf32>
    %c7_322 = arith.constant 7 : index
    %c1_323 = arith.constant 1 : index
    %c0_324 = arith.constant 0 : index
    %c0_325 = arith.constant 0 : index
    %448 = vector.load %arg2[%c7_322, %c1_323, %c0_324, %c0_325] : memref<12x3x128x128xf32, #tpu.memory_space<vmem>>, vector<1x1x128x128xf32>
    %449 = vector.shape_cast %448 : vector<1x1x128x128xf32> to vector<128x128xf32>
    %cst_326 = arith.constant dense<0.000000e+00> : vector<16x128xf32>
    %450 = tpu.matmul %447, %449, %cst_326 {dimension_numbers = #tpu.dot_dimension_numbers<[1], [0], [0], [1], [0, 0, 1, 1], [], []>} : vector<16x128xf32>, vector<128x128xf32>, vector<16x128xf32> -> vector<16x128xf32>
    %451 = arith.addf %446, %450 : vector<16x128xf32>
    %c2_327 = arith.constant 2 : index
    %c0_328 = arith.constant 0 : index
    %452 = vector.load %arg13[%c2_327, %c0_328] : memref<18x128xf32, #tpu.memory_space<vmem>>, vector<16x128xf32>
    %c7_329 = arith.constant 7 : index
    %c2_330 = arith.constant 2 : index
    %c0_331 = arith.constant 0 : index
    %c0_332 = arith.constant 0 : index
    %453 = vector.load %arg2[%c7_329, %c2_330, %c0_331, %c0_332] : memref<12x3x128x128xf32, #tpu.memory_space<vmem>>, vector<1x1x128x128xf32>
    %454 = vector.shape_cast %453 : vector<1x1x128x128xf32> to vector<128x128xf32>
    %cst_333 = arith.constant dense<0.000000e+00> : vector<16x128xf32>
    %455 = tpu.matmul %452, %454, %cst_333 {dimension_numbers = #tpu.dot_dimension_numbers<[1], [0], [0], [1], [0, 0, 1, 1], [], []>} : vector<16x128xf32>, vector<128x128xf32>, vector<16x128xf32> -> vector<16x128xf32>
    %456 = arith.addf %451, %455 : vector<16x128xf32>
    %c7_334 = arith.constant 7 : index
    %c0_335 = arith.constant 0 : index
    %457 = vector.load %arg3[%c7_334, %c0_335] : memref<11x128xf32, #tpu.memory_space<vmem>>, vector<1x128xf32>
    %458 = vector.broadcast %457 : vector<1x128xf32> to vector<16x128xf32>
    %459 = arith.addf %456, %458 : vector<16x128xf32>
    %cst_336 = arith.constant 1.000000e+00 : f32
    %460 = vector.broadcast %cst_336 : f32 to vector<16x128xf32>
    %461 = arith.subf %460, %400 : vector<16x128xf32>
    %462 = arith.mulf %459, %461 : vector<16x128xf32>
    %c1_337 = arith.constant 1 : index
    %c0_338 = arith.constant 0 : index
    %463 = vector.load %arg13[%c1_337, %c0_338] : memref<18x128xf32, #tpu.memory_space<vmem>>, vector<16x128xf32>
    tpu.vector_store %arg13[%c1_337, %c0_338], %4 {strides = array<i32>} : memref<18x128xf32, #tpu.memory_space<vmem>>, vector<16x128xf32>,
    %c0_339 = arith.constant 0 : index
    %c0_340 = arith.constant 0 : index
    %464 = vector.load %arg13[%c0_339, %c0_340] : memref<18x128xf32, #tpu.memory_space<vmem>>, vector<16x128xf32>
    %c8 = arith.constant 8 : index
    %c0_341 = arith.constant 0 : index
    %c0_342 = arith.constant 0 : index
    %c0_343 = arith.constant 0 : index
    %465 = vector.load %arg2[%c8, %c0_341, %c0_342, %c0_343] : memref<12x3x128x128xf32, #tpu.memory_space<vmem>>, vector<1x1x128x128xf32>
    %466 = vector.shape_cast %465 : vector<1x1x128x128xf32> to vector<128x128xf32>
    %cst_344 = arith.constant dense<0.000000e+00> : vector<16x128xf32>
    %467 = tpu.matmul %464, %466, %cst_344 {dimension_numbers = #tpu.dot_dimension_numbers<[1], [0], [0], [1], [0, 0, 1, 1], [], []>} : vector<16x128xf32>, vector<128x128xf32>, vector<16x128xf32> -> vector<16x128xf32>
    %c1_345 = arith.constant 1 : index
    %c0_346 = arith.constant 0 : index
    %468 = vector.load %arg13[%c1_345, %c0_346] : memref<18x128xf32, #tpu.memory_space<vmem>>, vector<16x128xf32>
    %c8_347 = arith.constant 8 : index
    %c1_348 = arith.constant 1 : index
    %c0_349 = arith.constant 0 : index
    %c0_350 = arith.constant 0 : index
    %469 = vector.load %arg2[%c8_347, %c1_348, %c0_349, %c0_350] : memref<12x3x128x128xf32, #tpu.memory_space<vmem>>, vector<1x1x128x128xf32>
    %470 = vector.shape_cast %469 : vector<1x1x128x128xf32> to vector<128x128xf32>
    %cst_351 = arith.constant dense<0.000000e+00> : vector<16x128xf32>
    %471 = tpu.matmul %468, %470, %cst_351 {dimension_numbers = #tpu.dot_dimension_numbers<[1], [0], [0], [1], [0, 0, 1, 1], [], []>} : vector<16x128xf32>, vector<128x128xf32>, vector<16x128xf32> -> vector<16x128xf32>
    %472 = arith.addf %467, %471 : vector<16x128xf32>
    %c2_352 = arith.constant 2 : index
    %c0_353 = arith.constant 0 : index
    %473 = vector.load %arg13[%c2_352, %c0_353] : memref<18x128xf32, #tpu.memory_space<vmem>>, vector<16x128xf32>
    %c8_354 = arith.constant 8 : index
    %c2_355 = arith.constant 2 : index
    %c0_356 = arith.constant 0 : index
    %c0_357 = arith.constant 0 : index
    %474 = vector.load %arg2[%c8_354, %c2_355, %c0_356, %c0_357] : memref<12x3x128x128xf32, #tpu.memory_space<vmem>>, vector<1x1x128x128xf32>
    %475 = vector.shape_cast %474 : vector<1x1x128x128xf32> to vector<128x128xf32>
    %cst_358 = arith.constant dense<0.000000e+00> : vector<16x128xf32>
    %476 = tpu.matmul %473, %475, %cst_358 {dimension_numbers = #tpu.dot_dimension_numbers<[1], [0], [0], [1], [0, 0, 1, 1], [], []>} : vector<16x128xf32>, vector<128x128xf32>, vector<16x128xf32> -> vector<16x128xf32>
    %477 = arith.addf %472, %476 : vector<16x128xf32>
    %c1_359 = arith.constant 1 : index
    %c0_360 = arith.constant 0 : index
    %478 = vector.load %arg13[%c1_359, %c0_360] : memref<18x128xf32, #tpu.memory_space<vmem>>, vector<16x128xf32>
    tpu.vector_store %arg13[%c1_359, %c0_360], %462 {strides = array<i32>} : memref<18x128xf32, #tpu.memory_space<vmem>>, vector<16x128xf32>,
    %c0_361 = arith.constant 0 : index
    %c0_362 = arith.constant 0 : index
    %479 = vector.load %arg13[%c0_361, %c0_362] : memref<18x128xf32, #tpu.memory_space<vmem>>, vector<16x128xf32>
    %c9 = arith.constant 9 : index
    %c0_363 = arith.constant 0 : index
    %c0_364 = arith.constant 0 : index
    %c0_365 = arith.constant 0 : index
    %480 = vector.load %arg2[%c9, %c0_363, %c0_364, %c0_365] : memref<12x3x128x128xf32, #tpu.memory_space<vmem>>, vector<1x1x128x128xf32>
    %481 = vector.shape_cast %480 : vector<1x1x128x128xf32> to vector<128x128xf32>
    %cst_366 = arith.constant dense<0.000000e+00> : vector<16x128xf32>
    %482 = tpu.matmul %479, %481, %cst_366 {dimension_numbers = #tpu.dot_dimension_numbers<[1], [0], [0], [1], [0, 0, 1, 1], [], []>} : vector<16x128xf32>, vector<128x128xf32>, vector<16x128xf32> -> vector<16x128xf32>
    %c1_367 = arith.constant 1 : index
    %c0_368 = arith.constant 0 : index
    %483 = vector.load %arg13[%c1_367, %c0_368] : memref<18x128xf32, #tpu.memory_space<vmem>>, vector<16x128xf32>
    %c9_369 = arith.constant 9 : index
    %c1_370 = arith.constant 1 : index
    %c0_371 = arith.constant 0 : index
    %c0_372 = arith.constant 0 : index
    %484 = vector.load %arg2[%c9_369, %c1_370, %c0_371, %c0_372] : memref<12x3x128x128xf32, #tpu.memory_space<vmem>>, vector<1x1x128x128xf32>
    %485 = vector.shape_cast %484 : vector<1x1x128x128xf32> to vector<128x128xf32>
    %cst_373 = arith.constant dense<0.000000e+00> : vector<16x128xf32>
    %486 = tpu.matmul %483, %485, %cst_373 {dimension_numbers = #tpu.dot_dimension_numbers<[1], [0], [0], [1], [0, 0, 1, 1], [], []>} : vector<16x128xf32>, vector<128x128xf32>, vector<16x128xf32> -> vector<16x128xf32>
    %487 = arith.addf %482, %486 : vector<16x128xf32>
    %c2_374 = arith.constant 2 : index
    %c0_375 = arith.constant 0 : index
    %488 = vector.load %arg13[%c2_374, %c0_375] : memref<18x128xf32, #tpu.memory_space<vmem>>, vector<16x128xf32>
    %c9_376 = arith.constant 9 : index
    %c2_377 = arith.constant 2 : index
    %c0_378 = arith.constant 0 : index
    %c0_379 = arith.constant 0 : index
    %489 = vector.load %arg2[%c9_376, %c2_377, %c0_378, %c0_379] : memref<12x3x128x128xf32, #tpu.memory_space<vmem>>, vector<1x1x128x128xf32>
    %490 = vector.shape_cast %489 : vector<1x1x128x128xf32> to vector<128x128xf32>
    %cst_380 = arith.constant dense<0.000000e+00> : vector<16x128xf32>
    %491 = tpu.matmul %488, %490, %cst_380 {dimension_numbers = #tpu.dot_dimension_numbers<[1], [0], [0], [1], [0, 0, 1, 1], [], []>} : vector<16x128xf32>, vector<128x128xf32>, vector<16x128xf32> -> vector<16x128xf32>
    %492 = arith.addf %487, %491 : vector<16x128xf32>
    %493 = arith.addf %477, %492 : vector<16x128xf32>
    %c8_381 = arith.constant 8 : index
    %c0_382 = arith.constant 0 : index
    %494 = vector.load %arg3[%c8_381, %c0_382] : memref<11x128xf32, #tpu.memory_space<vmem>>, vector<1x128xf32>
    %495 = vector.broadcast %494 : vector<1x128xf32> to vector<16x128xf32>
    %496 = arith.addf %493, %495 : vector<16x128xf32>
    %cst_383 = arith.constant dense<0.000000e+00> : vector<128xf32>
    %497 = vector.multi_reduction <add>, %496, %cst_383 [0] : vector<16x128xf32> to vector<128xf32>
    %498 = vector.shape_cast %497 : vector<128xf32> to vector<1x128xf32>
    %499 = arith.mulf %496, %496 : vector<16x128xf32>
    %cst_384 = arith.constant dense<0.000000e+00> : vector<128xf32>
    %500 = vector.multi_reduction <add>, %499, %cst_384 [0] : vector<16x128xf32> to vector<128xf32>
    %501 = vector.shape_cast %500 : vector<128xf32> to vector<1x128xf32>
    %502 = tpu.concatenate %498, %501 in 0 : vector<1x128xf32>, vector<1x128xf32> -> vector<2x128xf32>
    %c0_385 = arith.constant 0 : index
    %c0_386 = arith.constant 0 : index
    %c0_387 = arith.constant 0 : index
    %503 = vector.load %arg10[%c0_385, %c0_386, %c0_387] : memref<4x128x128xf32, #tpu.memory_space<vmem>>, vector<1x128x128xf32>
    %504 = vector.shape_cast %503 : vector<1x128x128xf32> to vector<128x128xf32>
    %cst_388 = arith.constant dense<0.000000e+00> : vector<2x128xf32>
    %505 = tpu.matmul %502, %504, %cst_388 {dimension_numbers = #tpu.dot_dimension_numbers<[1], [0], [0], [1], [0, 0, 1, 1], [], []>} : vector<2x128xf32>, vector<128x128xf32>, vector<2x128xf32> -> vector<2x128xf32>
    %506 = vector.extract_strided_slice %505 {offsets = [0, 0], sizes = [1, 128], strides = [1, 1]} : vector<2x128xf32> to vector<1x128xf32>
    %507 = vector.extract_strided_slice %505 {offsets = [1, 0], sizes = [1, 128], strides = [1, 1]} : vector<2x128xf32> to vector<1x128xf32>
    %508 = arith.mulf %506, %506 : vector<1x128xf32>
    %509 = arith.subf %507, %508 : vector<1x128xf32>
    %510 = vector.broadcast %506 : vector<1x128xf32> to vector<16x128xf32>
    %511 = arith.subf %496, %510 : vector<16x128xf32>
    %cst_389 = arith.constant 9.99999974E-6 : f32
    %512 = vector.broadcast %cst_389 : f32 to vector<1x128xf32>
    %513 = arith.addf %509, %512 : vector<1x128xf32>
    %514 = math.rsqrt %513 : vector<1x128xf32>
    %515 = vector.broadcast %514 : vector<1x128xf32> to vector<16x128xf32>
    %516 = arith.mulf %511, %515 : vector<16x128xf32>
    %c7_390 = arith.constant 7 : index
    %c0_391 = arith.constant 0 : index
    %517 = vector.load %arg4[%c7_390, %c0_391] : memref<9x128xf32, #tpu.memory_space<vmem>>, vector<1x128xf32>
    %518 = vector.broadcast %517 : vector<1x128xf32> to vector<16x128xf32>
    %519 = arith.mulf %516, %518 : vector<16x128xf32>
    %c7_392 = arith.constant 7 : index
    %c0_393 = arith.constant 0 : index
    %520 = vector.load %arg5[%c7_392, %c0_393] : memref<9x128xf32, #tpu.memory_space<vmem>>, vector<1x128xf32>
    %521 = vector.broadcast %520 : vector<1x128xf32> to vector<16x128xf32>
    %522 = arith.addf %519, %521 : vector<16x128xf32>
    %523 = arith.negf %522 : vector<16x128xf32>
    %524 = math.exp %523 : vector<16x128xf32>
    %cst_394 = arith.constant 1.000000e+00 : f32
    %525 = vector.broadcast %cst_394 : f32 to vector<16x128xf32>
    %526 = arith.addf %525, %524 : vector<16x128xf32>
    %527 = arith.divf %525, %526 : vector<16x128xf32>
    %528 = arith.mulf %522, %527 : vector<16x128xf32>
    %c1_395 = arith.constant 1 : index
    %c0_396 = arith.constant 0 : index
    %529 = vector.load %arg13[%c1_395, %c0_396] : memref<18x128xf32, #tpu.memory_space<vmem>>, vector<16x128xf32>
    tpu.vector_store %arg13[%c1_395, %c0_396], %528 {strides = array<i32>} : memref<18x128xf32, #tpu.memory_space<vmem>>, vector<16x128xf32>,
    %c0_397 = arith.constant 0 : index
    %c0_398 = arith.constant 0 : index
    %530 = vector.load %arg13[%c0_397, %c0_398] : memref<18x128xf32, #tpu.memory_space<vmem>>, vector<16x128xf32>
    %c10 = arith.constant 10 : index
    %c0_399 = arith.constant 0 : index
    %c0_400 = arith.constant 0 : index
    %c0_401 = arith.constant 0 : index
    %531 = vector.load %arg2[%c10, %c0_399, %c0_400, %c0_401] : memref<12x3x128x128xf32, #tpu.memory_space<vmem>>, vector<1x1x128x128xf32>
    %532 = vector.shape_cast %531 : vector<1x1x128x128xf32> to vector<128x128xf32>
    %cst_402 = arith.constant dense<0.000000e+00> : vector<16x128xf32>
    %533 = tpu.matmul %530, %532, %cst_402 {dimension_numbers = #tpu.dot_dimension_numbers<[1], [0], [0], [1], [0, 0, 1, 1], [], []>} : vector<16x128xf32>, vector<128x128xf32>, vector<16x128xf32> -> vector<16x128xf32>
    %c1_403 = arith.constant 1 : index
    %c0_404 = arith.constant 0 : index
    %534 = vector.load %arg13[%c1_403, %c0_404] : memref<18x128xf32, #tpu.memory_space<vmem>>, vector<16x128xf32>
    %c10_405 = arith.constant 10 : index
    %c1_406 = arith.constant 1 : index
    %c0_407 = arith.constant 0 : index
    %c0_408 = arith.constant 0 : index
    %535 = vector.load %arg2[%c10_405, %c1_406, %c0_407, %c0_408] : memref<12x3x128x128xf32, #tpu.memory_space<vmem>>, vector<1x1x128x128xf32>
    %536 = vector.shape_cast %535 : vector<1x1x128x128xf32> to vector<128x128xf32>
    %cst_409 = arith.constant dense<0.000000e+00> : vector<16x128xf32>
    %537 = tpu.matmul %534, %536, %cst_409 {dimension_numbers = #tpu.dot_dimension_numbers<[1], [0], [0], [1], [0, 0, 1, 1], [], []>} : vector<16x128xf32>, vector<128x128xf32>, vector<16x128xf32> -> vector<16x128xf32>
    %538 = arith.addf %533, %537 : vector<16x128xf32>
    %c2_410 = arith.constant 2 : index
    %c0_411 = arith.constant 0 : index
    %539 = vector.load %arg13[%c2_410, %c0_411] : memref<18x128xf32, #tpu.memory_space<vmem>>, vector<16x128xf32>
    %c10_412 = arith.constant 10 : index
    %c2_413 = arith.constant 2 : index
    %c0_414 = arith.constant 0 : index
    %c0_415 = arith.constant 0 : index
    %540 = vector.load %arg2[%c10_412, %c2_413, %c0_414, %c0_415] : memref<12x3x128x128xf32, #tpu.memory_space<vmem>>, vector<1x1x128x128xf32>
    %541 = vector.shape_cast %540 : vector<1x1x128x128xf32> to vector<128x128xf32>
    %cst_416 = arith.constant dense<0.000000e+00> : vector<16x128xf32>
    %542 = tpu.matmul %539, %541, %cst_416 {dimension_numbers = #tpu.dot_dimension_numbers<[1], [0], [0], [1], [0, 0, 1, 1], [], []>} : vector<16x128xf32>, vector<128x128xf32>, vector<16x128xf32> -> vector<16x128xf32>
    %543 = arith.addf %538, %542 : vector<16x128xf32>
    %c9_417 = arith.constant 9 : index
    %c0_418 = arith.constant 0 : index
    %544 = vector.load %arg3[%c9_417, %c0_418] : memref<11x128xf32, #tpu.memory_space<vmem>>, vector<1x128xf32>
    %545 = vector.broadcast %544 : vector<1x128xf32> to vector<16x128xf32>
    %546 = arith.addf %543, %545 : vector<16x128xf32>
    %cst_419 = arith.constant dense<0.000000e+00> : vector<128xf32>
    %547 = vector.multi_reduction <add>, %546, %cst_419 [0] : vector<16x128xf32> to vector<128xf32>
    %548 = vector.shape_cast %547 : vector<128xf32> to vector<1x128xf32>
    %549 = arith.mulf %546, %546 : vector<16x128xf32>
    %cst_420 = arith.constant dense<0.000000e+00> : vector<128xf32>
    %550 = vector.multi_reduction <add>, %549, %cst_420 [0] : vector<16x128xf32> to vector<128xf32>
    %551 = vector.shape_cast %550 : vector<128xf32> to vector<1x128xf32>
    %552 = tpu.concatenate %548, %551 in 0 : vector<1x128xf32>, vector<1x128xf32> -> vector<2x128xf32>
    %c0_421 = arith.constant 0 : index
    %c0_422 = arith.constant 0 : index
    %c0_423 = arith.constant 0 : index
    %553 = vector.load %arg10[%c0_421, %c0_422, %c0_423] : memref<4x128x128xf32, #tpu.memory_space<vmem>>, vector<1x128x128xf32>
    %554 = vector.shape_cast %553 : vector<1x128x128xf32> to vector<128x128xf32>
    %cst_424 = arith.constant dense<0.000000e+00> : vector<2x128xf32>
    %555 = tpu.matmul %552, %554, %cst_424 {dimension_numbers = #tpu.dot_dimension_numbers<[1], [0], [0], [1], [0, 0, 1, 1], [], []>} : vector<2x128xf32>, vector<128x128xf32>, vector<2x128xf32> -> vector<2x128xf32>
    %556 = vector.extract_strided_slice %555 {offsets = [0, 0], sizes = [1, 128], strides = [1, 1]} : vector<2x128xf32> to vector<1x128xf32>
    %557 = vector.extract_strided_slice %555 {offsets = [1, 0], sizes = [1, 128], strides = [1, 1]} : vector<2x128xf32> to vector<1x128xf32>
    %558 = arith.mulf %556, %556 : vector<1x128xf32>
    %559 = arith.subf %557, %558 : vector<1x128xf32>
    %560 = vector.broadcast %556 : vector<1x128xf32> to vector<16x128xf32>
    %561 = arith.subf %546, %560 : vector<16x128xf32>
    %cst_425 = arith.constant 9.99999974E-6 : f32
    %562 = vector.broadcast %cst_425 : f32 to vector<1x128xf32>
    %563 = arith.addf %559, %562 : vector<1x128xf32>
    %564 = math.rsqrt %563 : vector<1x128xf32>
    %565 = vector.broadcast %564 : vector<1x128xf32> to vector<16x128xf32>
    %566 = arith.mulf %561, %565 : vector<16x128xf32>
    %c8_426 = arith.constant 8 : index
    %c0_427 = arith.constant 0 : index
    %567 = vector.load %arg4[%c8_426, %c0_427] : memref<9x128xf32, #tpu.memory_space<vmem>>, vector<1x128xf32>
    %568 = vector.broadcast %567 : vector<1x128xf32> to vector<16x128xf32>
    %569 = arith.mulf %566, %568 : vector<16x128xf32>
    %c8_428 = arith.constant 8 : index
    %c0_429 = arith.constant 0 : index
    %570 = vector.load %arg5[%c8_428, %c0_429] : memref<9x128xf32, #tpu.memory_space<vmem>>, vector<1x128xf32>
    %571 = vector.broadcast %570 : vector<1x128xf32> to vector<16x128xf32>
    %572 = arith.addf %569, %571 : vector<16x128xf32>
    %573 = arith.negf %572 : vector<16x128xf32>
    %574 = math.exp %573 : vector<16x128xf32>
    %cst_430 = arith.constant 1.000000e+00 : f32
    %575 = vector.broadcast %cst_430 : f32 to vector<16x128xf32>
    %576 = arith.addf %575, %574 : vector<16x128xf32>
    %577 = arith.divf %575, %576 : vector<16x128xf32>
    %578 = arith.mulf %572, %577 : vector<16x128xf32>
    %c1_431 = arith.constant 1 : index
    %c0_432 = arith.constant 0 : index
    %579 = vector.load %arg13[%c1_431, %c0_432] : memref<18x128xf32, #tpu.memory_space<vmem>>, vector<16x128xf32>
    tpu.vector_store %arg13[%c1_431, %c0_432], %578 {strides = array<i32>} : memref<18x128xf32, #tpu.memory_space<vmem>>, vector<16x128xf32>,
    %c0_433 = arith.constant 0 : index
    %c0_434 = arith.constant 0 : index
    %580 = vector.load %arg13[%c0_433, %c0_434] : memref<18x128xf32, #tpu.memory_space<vmem>>, vector<16x128xf32>
    %c11 = arith.constant 11 : index
    %c0_435 = arith.constant 0 : index
    %c0_436 = arith.constant 0 : index
    %c0_437 = arith.constant 0 : index
    %581 = vector.load %arg2[%c11, %c0_435, %c0_436, %c0_437] : memref<12x3x128x128xf32, #tpu.memory_space<vmem>>, vector<1x1x128x128xf32>
    %582 = vector.shape_cast %581 : vector<1x1x128x128xf32> to vector<128x128xf32>
    %cst_438 = arith.constant dense<0.000000e+00> : vector<16x128xf32>
    %583 = tpu.matmul %580, %582, %cst_438 {dimension_numbers = #tpu.dot_dimension_numbers<[1], [0], [0], [1], [0, 0, 1, 1], [], []>} : vector<16x128xf32>, vector<128x128xf32>, vector<16x128xf32> -> vector<16x128xf32>
    %c1_439 = arith.constant 1 : index
    %c0_440 = arith.constant 0 : index
    %584 = vector.load %arg13[%c1_439, %c0_440] : memref<18x128xf32, #tpu.memory_space<vmem>>, vector<16x128xf32>
    %c11_441 = arith.constant 11 : index
    %c1_442 = arith.constant 1 : index
    %c0_443 = arith.constant 0 : index
    %c0_444 = arith.constant 0 : index
    %585 = vector.load %arg2[%c11_441, %c1_442, %c0_443, %c0_444] : memref<12x3x128x128xf32, #tpu.memory_space<vmem>>, vector<1x1x128x128xf32>
    %586 = vector.shape_cast %585 : vector<1x1x128x128xf32> to vector<128x128xf32>
    %cst_445 = arith.constant dense<0.000000e+00> : vector<16x128xf32>
    %587 = tpu.matmul %584, %586, %cst_445 {dimension_numbers = #tpu.dot_dimension_numbers<[1], [0], [0], [1], [0, 0, 1, 1], [], []>} : vector<16x128xf32>, vector<128x128xf32>, vector<16x128xf32> -> vector<16x128xf32>
    %588 = arith.addf %583, %587 : vector<16x128xf32>
    %c2_446 = arith.constant 2 : index
    %c0_447 = arith.constant 0 : index
    %589 = vector.load %arg13[%c2_446, %c0_447] : memref<18x128xf32, #tpu.memory_space<vmem>>, vector<16x128xf32>
    %c11_448 = arith.constant 11 : index
    %c2_449 = arith.constant 2 : index
    %c0_450 = arith.constant 0 : index
    %c0_451 = arith.constant 0 : index
    %590 = vector.load %arg2[%c11_448, %c2_449, %c0_450, %c0_451] : memref<12x3x128x128xf32, #tpu.memory_space<vmem>>, vector<1x1x128x128xf32>
    %591 = vector.shape_cast %590 : vector<1x1x128x128xf32> to vector<128x128xf32>
    %cst_452 = arith.constant dense<0.000000e+00> : vector<16x128xf32>
    %592 = tpu.matmul %589, %591, %cst_452 {dimension_numbers = #tpu.dot_dimension_numbers<[1], [0], [0], [1], [0, 0, 1, 1], [], []>} : vector<16x128xf32>, vector<128x128xf32>, vector<16x128xf32> -> vector<16x128xf32>
    %593 = arith.addf %588, %592 : vector<16x128xf32>
    %c10_453 = arith.constant 10 : index
    %c0_454 = arith.constant 0 : index
    %594 = vector.load %arg3[%c10_453, %c0_454] : memref<11x128xf32, #tpu.memory_space<vmem>>, vector<1x128xf32>
    %595 = vector.broadcast %594 : vector<1x128xf32> to vector<16x128xf32>
    %596 = arith.addf %593, %595 : vector<16x128xf32>
    %597 = arith.addf %4, %596 : vector<16x128xf32>
    %c0_455 = arith.constant 0 : index
    %c0_456 = arith.constant 0 : index
    %c0_457 = arith.constant 0 : index
    %598 = vector.load %arg11[%c0_455, %c0_456, %c0_457] : memref<1x16x128xf32, #tpu.memory_space<vmem>>, vector<1x16x128xf32>
    %599 = vector.shape_cast %598 : vector<1x16x128xf32> to vector<16x128xf32>
    %600 = vector.shape_cast %597 : vector<16x128xf32> to vector<1x16x128xf32>
    tpu.vector_store %arg11[%c0_455, %c0_456, %c0_457], %600 {strides = array<i32>} : memref<1x16x128xf32, #tpu.memory_space<vmem>>, vector<1x16x128xf32>,
    return
  }
  func.func @transform_0(%arg0: i32) -> (i32, i32, i32) {
    %c0_i32 = arith.constant 0 : i32
    %c0_i32_0 = arith.constant 0 : i32
    %c0_i32_1 = arith.constant 0 : i32
    return %arg0, %c0_i32, %c0_i32_0 : i32, i32, i32
  }
  func.func @transform_1(%arg0: i32) -> (i32, i32, i32, i32) {
    %c0_i32 = arith.constant 0 : i32
    %c0_i32_0 = arith.constant 0 : i32
    %c0_i32_1 = arith.constant 0 : i32
    %c0_i32_2 = arith.constant 0 : i32
    %c0_i32_3 = arith.constant 0 : i32
    return %c0_i32, %c0_i32_0, %c0_i32_1, %c0_i32_2 : i32, i32, i32, i32
  }
  func.func @transform_2(%arg0: i32) -> (i32, i32) {
    %c0_i32 = arith.constant 0 : i32
    %c0_i32_0 = arith.constant 0 : i32
    %c0_i32_1 = arith.constant 0 : i32
    return %c0_i32, %c0_i32_0 : i32, i32
  }
  func.func @transform_3(%arg0: i32) -> (i32, i32) {
    %c0_i32 = arith.constant 0 : i32
    %c0_i32_0 = arith.constant 0 : i32
    %c0_i32_1 = arith.constant 0 : i32
    return %c0_i32, %c0_i32_0 : i32, i32
  }
  func.func @transform_4(%arg0: i32) -> (i32, i32) {
    %c0_i32 = arith.constant 0 : i32
    %c0_i32_0 = arith.constant 0 : i32
    %c0_i32_1 = arith.constant 0 : i32
    return %c0_i32, %c0_i32_0 : i32, i32
  }
  func.func @transform_5(%arg0: i32) -> (i32, i32) {
    %c0_i32 = arith.constant 0 : i32
    %c0_i32_0 = arith.constant 0 : i32
    %c0_i32_1 = arith.constant 0 : i32
    return %c0_i32, %c0_i32_0 : i32, i32
  }
  func.func @transform_6(%arg0: i32) -> (i32, i32) {
    %c0_i32 = arith.constant 0 : i32
    %c0_i32_0 = arith.constant 0 : i32
    %c0_i32_1 = arith.constant 0 : i32
    return %c0_i32, %c0_i32_0 : i32, i32
  }
  func.func @transform_7(%arg0: i32) -> (i32, i32) {
    %c0_i32 = arith.constant 0 : i32
    %c0_i32_0 = arith.constant 0 : i32
    %c0_i32_1 = arith.constant 0 : i32
    return %c0_i32, %c0_i32_0 : i32, i32
  }
  func.func @transform_8(%arg0: i32) -> (i32, i32) {
    %c0_i32 = arith.constant 0 : i32
    %c0_i32_0 = arith.constant 0 : i32
    %c0_i32_1 = arith.constant 0 : i32
    return %c0_i32, %c0_i32_0 : i32, i32
  }
  func.func @transform_9(%arg0: i32) -> (i32, i32, i32) {
    %c0_i32 = arith.constant 0 : i32
    %c0_i32_0 = arith.constant 0 : i32
    %c0_i32_1 = arith.constant 0 : i32
    %c0_i32_2 = arith.constant 0 : i32
    return %c0_i32, %c0_i32_0, %c0_i32_1 : i32, i32, i32
  }
  func.func @transform_10(%arg0: i32) -> (i32, i32, i32) {
    %c0_i32 = arith.constant 0 : i32
    %c0_i32_0 = arith.constant 0 : i32
    %c0_i32_1 = arith.constant 0 : i32
    return %arg0, %c0_i32, %c0_i32_0 : i32, i32, i32
  }
  func.func @transform_11(%arg0: i32) -> (i32, i32, i32) {
    %c0_i32 = arith.constant 0 : i32
    %c0_i32_0 = arith.constant 0 : i32
    %c0_i32_1 = arith.constant 0 : i32
    return %arg0, %c0_i32, %c0_i32_0 : i32, i32, i32
  }
}

</mosaic_0001>

<llo_original>
// kernel: body.3
$region0: #{body.3}
  #allocation0 [shape = 'u32[]', space=smem, size = 0x4, offset = 0x4, fixed_abs, tag = 'smem constant byte address 0x4 - core index']
  #allocation1 [shape = 'u32[144,128]{1,0:T(1,128)}', space=vmem, size = 0x12000, scoped, tag = 'internal scratch']
  #allocation2 [shape = 'f32[18,128]{1,0:T(8,128)}', space=vmem, size = 0x3000, scoped, tag = 'scratch operand']
  #allocation3 [shape = 'f32[1,1]{1,0:T(1,128)S(1)}', space=vmem, size = 0x200, scoped, tag = 'scoped memory for body.3']
  %s0 = inlined_call_operand.vmem [shape: f32[2,16,128], index: 0, kind: input, shape index: {}]
  %s1 = inlined_call_operand.hbm [shape: f32[12,3,128,128], index: 1, kind: input, shape index: {}]
  %s2 = inlined_call_operand.hbm [shape: f32[11,128], index: 2, kind: input, shape index: {}]
  %s3 = inlined_call_operand.hbm [shape: f32[9,128], index: 3, kind: input, shape index: {}]
  %s4 = inlined_call_operand.hbm [shape: f32[9,128], index: 4, kind: input, shape index: {}]
  %s5 = inlined_call_operand.vmem [shape: f32[128,64], index: 5, kind: input, shape index: {}]
  %s6 = inlined_call_operand.hbm [shape: f32[1,64], index: 6, kind: input, shape index: {}]
  %s7 = inlined_call_operand.hbm [shape: f32[64,128], index: 7, kind: input, shape index: {}]
  %s8 = inlined_call_operand.<no memory space> [shape: f32[1,1], index: 8, kind: input, shape index: {}]
  %s9 = inlined_call_operand.hbm [shape: f32[4,128,128], index: 9, kind: input, shape index: {}]
  %s10 = inlined_call_operand.vmem [shape: f32[2,16,128], index: 10, kind: output, shape index: {0}]
  %s11 = inlined_call_operand.vmem [shape: f32[2,1,1], index: 11, kind: output, shape index: {1}]
  %12 = xla_tuple %s10, %s11
  %s13 = sld [smem:[#allocation0]]
  $region109: #{body.3} parent=0
    _
  %s15 = ssub.s32 1, %s13
  %s16 = scalar_select 0, %s15, %s13
  %v17 = vstv %s8
  %18 = vst [vmem:[#allocation3] sm:$0x1] %v17
  $region1: #{body.3} parent=0
    #allocation4 [shape = 'u8[2359296]{0}', space=vmem, size = 0x240000, scoped, tag = 'input window, operand 1, single buffered']
    #allocation5 [shape = 's32[2]{0}', space=sflag, size = 0x8, scoped, tag = 'scoped memory for body.3']
    #allocation6 [shape = 'u8[8192]{0}', space=vmem, size = 0x2000, scoped, tag = 'input window, operand 2, single buffered']
    #allocation7 [shape = 's32[1]{0}', space=sflag, size = 0x4, scoped, tag = 'scoped memory for body.3']
    #allocation8 [shape = 'u8[8192]{0}', space=vmem, size = 0x2000, scoped, tag = 'input window, operand 3, single buffered']
    #allocation9 [shape = 'u8[8192]{0}', space=vmem, size = 0x2000, scoped, tag = 'input window, operand 4, single buffered']
    #allocation10 [shape = 's32[1]{0}', space=sflag, size = 0x4, scoped, tag = 'scoped memory for body.3']
    #allocation11 [shape = 'u8[512]{0}', space=vmem, size = 0x400, scoped, tag = 'input window, operand 6, single buffered']
    #allocation12 [shape = 'u8[32768]{0}', space=vmem, size = 0x8000, scoped, tag = 'input window, operand 7, single buffered']
    #allocation13 [shape = 's32[1]{0}', space=sflag, size = 0x4, scoped, tag = 'scoped memory for body.3']
    #allocation14 [shape = 'u8[262144]{0}', space=vmem, size = 0x40000, scoped, tag = 'input window, operand 9, single buffered']
    %19 = vsyncpa [#allocation5], 0
    %20 = vsyncpa [#allocation7], 0
    %21 = vsyncpa [#allocation10], 0
    %22 = vsyncpa [#allocation13], 0
    loop: start=0, step=1, limit=4
    $region2: #{body.3} parent=1 // loop_pre_header
      _
    $region3: #{body.3} parent=1 // loop_header
      %s24 = sphi 0, %s28
      %p25 = scmp.ge.s32.totalorder %s24, 4
      %s34 = sphi 0, %s36
      %s37 = sphi 0, %s34
      %s38 = sphi 0, %s37
      %s54 = sphi 0, %s38
      %s58 = sphi 0, %s58
      %s60 = sphi 0, %s58
      %s61 = sphi 0, %s60
      %s75 = sphi 0, %s61
      %s79 = sphi 0, %s79
      %s81 = sphi 0, %s79
      %s82 = sphi 0, %s81
      %s96 = sphi 0, %s82
      %s100 = sphi 0, %s100
      %s102 = sphi 0, %s100
      %s103 = sphi 0, %s102
      %s117 = sphi 0, %s103
      %s121 = sphi 0, %s121
      %s123 = sphi 0, %s121
      %s124 = sphi 0, %s123
      %s138 = sphi 0, %s124
      %s142 = sphi 0, %s142
      %s144 = sphi 0, %s142
      %s145 = sphi 0, %s144
      %s159 = sphi 0, %s145
      %s163 = sphi 0, %s163
      %s165 = sphi 0, %s163
      %s166 = sphi 0, %s165
      %s180 = sphi 0, %s166
      %s184 = sphi 0, %s184
      %s186 = sphi 0, %s184
      %s187 = sphi 0, %s186
      %s201 = sphi 0, %s187
      %s205 = sphi 0, %s205
      %s207 = sphi 0, %s205
      %s208 = sphi 0, %s207
      %s222 = sphi 0, %s208
      %s226 = sphi 0, %s226
      %s228 = sphi 0, %s226
      %s229 = sphi 0, %s228
      %s243 = sphi 0, %s229
      %s249 = sphi 0, %s251
      %s252 = sphi 0, %s249
      %s253 = sphi 0, %s252
      %s269 = sphi 0, %s253
      %s275 = sphi 0, %s277
      %s278 = sphi 0, %s275
      %s279 = sphi 0, %s278
      %s295 = sphi 0, %s279
    $region4: #{body.3} parent=1 // loop_header_branch
      %27 = sbr.rel (%p25) target = $region8
    $region5: #{body.3} parent=1 // loop_body
      %s29 = ssub.s32 %s24, 1
      %s30 = ssub.s32 %s24, 2
      %s31 = sadd.s32 %s24, 1
      %s32 = ssub.s32 %s24, %s31
      %p33 = scmp.eq.s32.totalorder %s32, 0
      %s35 = sadd.s32 %s34, 1
      %s36 = scalar_select %p33, %s34, %s35
      %p39 = pneg %p33
      %p40 = scmp.eq.s32.totalorder %s24, 1
      %p41 = por %p39, %p40
      %p42 = scmp.ne.s32.totalorder %s34, %s37
      %p43 = scmp.eq.s32.totalorder %s24, 0
      %p44 = por %p42, %p43
      %p45 = scmp.ne.s32.totalorder %s34, %s37
      %p46 = scmp.eq.s32.totalorder %s29, 1
      %p47 = por %p45, %p46
      %p48 = scmp.ne.s32.totalorder %s37, %s38
      %p49 = scmp.eq.s32.totalorder %s29, 0
      %p50 = por %p48, %p49
      %p51 = scmp.ne.s32.totalorder %s37, %s38
      %p52 = scmp.eq.s32.totalorder %s30, 1
      %p53 = por %p51, %p52
      %p55 = scmp.ne.s32.totalorder %s38, %s54
      %p56 = scmp.eq.s32.totalorder %s30, 0
      %p57 = por %p55, %p56
      %s59 = sadd.s32 %s58, 1
      %p62 = scmp.eq.s32.totalorder %s24, 1
      %p63 = scmp.ne.s32.totalorder %s58, %s60
      %p64 = scmp.eq.s32.totalorder %s24, 0
      %p65 = por %p63, %p64
      %p66 = scmp.ne.s32.totalorder %s58, %s60
      %p67 = scmp.eq.s32.totalorder %s29, 1
      %p68 = por %p66, %p67
      %p69 = scmp.ne.s32.totalorder %s60, %s61
      %p70 = scmp.eq.s32.totalorder %s29, 0
      %p71 = por %p69, %p70
      %p72 = scmp.ne.s32.totalorder %s60, %s61
      %p73 = scmp.eq.s32.totalorder %s30, 1
      %p74 = por %p72, %p73
      %p76 = scmp.ne.s32.totalorder %s61, %s75
      %p77 = scmp.eq.s32.totalorder %s30, 0
      %p78 = por %p76, %p77
      %s80 = sadd.s32 %s79, 1
      %p83 = scmp.eq.s32.totalorder %s24, 1
      %p84 = scmp.ne.s32.totalorder %s79, %s81
      %p85 = scmp.eq.s32.totalorder %s24, 0
      %p86 = por %p84, %p85
      %p87 = scmp.ne.s32.totalorder %s79, %s81
      %p88 = scmp.eq.s32.totalorder %s29, 1
      %p89 = por %p87, %p88
      %p90 = scmp.ne.s32.totalorder %s81, %s82
      %p91 = scmp.eq.s32.totalorder %s29, 0
      %p92 = por %p90, %p91
      %p93 = scmp.ne.s32.totalorder %s81, %s82
      %p94 = scmp.eq.s32.totalorder %s30, 1
      %p95 = por %p93, %p94
      %p97 = scmp.ne.s32.totalorder %s82, %s96
      %p98 = scmp.eq.s32.totalorder %s30, 0
      %p99 = por %p97, %p98
      %s101 = sadd.s32 %s100, 1
      %p104 = scmp.eq.s32.totalorder %s24, 1
      %p105 = scmp.ne.s32.totalorder %s100, %s102
      %p106 = scmp.eq.s32.totalorder %s24, 0
      %p107 = por %p105, %p106
      %p108 = scmp.ne.s32.totalorder %s100, %s102
      %p109 = scmp.eq.s32.totalorder %s29, 1
      %p110 = por %p108, %p109
      %p111 = scmp.ne.s32.totalorder %s102, %s103
      %p112 = scmp.eq.s32.totalorder %s29, 0
      %p113 = por %p111, %p112
      %p114 = scmp.ne.s32.totalorder %s102, %s103
      %p115 = scmp.eq.s32.totalorder %s30, 1
      %p116 = por %p114, %p115
      %p118 = scmp.ne.s32.totalorder %s103, %s117
      %p119 = scmp.eq.s32.totalorder %s30, 0
      %p120 = por %p118, %p119
      %s122 = sadd.s32 %s121, 1
      %p125 = scmp.eq.s32.totalorder %s24, 1
      %p126 = scmp.ne.s32.totalorder %s121, %s123
      %p127 = scmp.eq.s32.totalorder %s24, 0
      %p128 = por %p126, %p127
      %p129 = scmp.ne.s32.totalorder %s121, %s123
      %p130 = scmp.eq.s32.totalorder %s29, 1
      %p131 = por %p129, %p130
      %p132 = scmp.ne.s32.totalorder %s123, %s124
      %p133 = scmp.eq.s32.totalorder %s29, 0
      %p134 = por %p132, %p133
      %p135 = scmp.ne.s32.totalorder %s123, %s124
      %p136 = scmp.eq.s32.totalorder %s30, 1
      %p137 = por %p135, %p136
      %p139 = scmp.ne.s32.totalorder %s124, %s138
      %p140 = scmp.eq.s32.totalorder %s30, 0
      %p141 = por %p139, %p140
      %s143 = sadd.s32 %s142, 1
      %p146 = scmp.eq.s32.totalorder %s24, 1
      %p147 = scmp.ne.s32.totalorder %s142, %s144
      %p148 = scmp.eq.s32.totalorder %s24, 0
      %p149 = por %p147, %p148
      %p150 = scmp.ne.s32.totalorder %s142, %s144
      %p151 = scmp.eq.s32.totalorder %s29, 1
      %p152 = por %p150, %p151
      %p153 = scmp.ne.s32.totalorder %s144, %s145
      %p154 = scmp.eq.s32.totalorder %s29, 0
      %p155 = por %p153, %p154
      %p156 = scmp.ne.s32.totalorder %s144, %s145
      %p157 = scmp.eq.s32.totalorder %s30, 1
      %p158 = por %p156, %p157
      %p160 = scmp.ne.s32.totalorder %s145, %s159
      %p161 = scmp.eq.s32.totalorder %s30, 0
      %p162 = por %p160, %p161
      %s164 = sadd.s32 %s163, 1
      %p167 = scmp.eq.s32.totalorder %s24, 1
      %p168 = scmp.ne.s32.totalorder %s163, %s165
      %p169 = scmp.eq.s32.totalorder %s24, 0
      %p170 = por %p168, %p169
      %p171 = scmp.ne.s32.totalorder %s163, %s165
      %p172 = scmp.eq.s32.totalorder %s29, 1
      %p173 = por %p171, %p172
      %p174 = scmp.ne.s32.totalorder %s165, %s166
      %p175 = scmp.eq.s32.totalorder %s29, 0
      %p176 = por %p174, %p175
      %p177 = scmp.ne.s32.totalorder %s165, %s166
      %p178 = scmp.eq.s32.totalorder %s30, 1
      %p179 = por %p177, %p178
      %p181 = scmp.ne.s32.totalorder %s166, %s180
      %p182 = scmp.eq.s32.totalorder %s30, 0
      %p183 = por %p181, %p182
      %s185 = sadd.s32 %s184, 1
      %p188 = scmp.eq.s32.totalorder %s24, 1
      %p189 = scmp.ne.s32.totalorder %s184, %s186
      %p190 = scmp.eq.s32.totalorder %s24, 0
      %p191 = por %p189, %p190
      %p192 = scmp.ne.s32.totalorder %s184, %s186
      %p193 = scmp.eq.s32.totalorder %s29, 1
      %p194 = por %p192, %p193
      %p195 = scmp.ne.s32.totalorder %s186, %s187
      %p196 = scmp.eq.s32.totalorder %s29, 0
      %p197 = por %p195, %p196
      %p198 = scmp.ne.s32.totalorder %s186, %s187
      %p199 = scmp.eq.s32.totalorder %s30, 1
      %p200 = por %p198, %p199
      %p202 = scmp.ne.s32.totalorder %s187, %s201
      %p203 = scmp.eq.s32.totalorder %s30, 0
      %p204 = por %p202, %p203
      %s206 = sadd.s32 %s205, 1
      %p209 = scmp.eq.s32.totalorder %s24, 1
      %p210 = scmp.ne.s32.totalorder %s205, %s207
      %p211 = scmp.eq.s32.totalorder %s24, 0
      %p212 = por %p210, %p211
      %p213 = scmp.ne.s32.totalorder %s205, %s207
      %p214 = scmp.eq.s32.totalorder %s29, 1
      %p215 = por %p213, %p214
      %p216 = scmp.ne.s32.totalorder %s207, %s208
      %p217 = scmp.eq.s32.totalorder %s29, 0
      %p218 = por %p216, %p217
      %p219 = scmp.ne.s32.totalorder %s207, %s208
      %p220 = scmp.eq.s32.totalorder %s30, 1
      %p221 = por %p219, %p220
      %p223 = scmp.ne.s32.totalorder %s208, %s222
      %p224 = scmp.eq.s32.totalorder %s30, 0
      %p225 = por %p223, %p224
      %s227 = sadd.s32 %s226, 1
      %p230 = scmp.eq.s32.totalorder %s24, 1
      %p231 = scmp.ne.s32.totalorder %s226, %s228
      %p232 = scmp.eq.s32.totalorder %s24, 0
      %p233 = por %p231, %p232
      %p234 = scmp.ne.s32.totalorder %s226, %s228
      %p235 = scmp.eq.s32.totalorder %s29, 1
      %p236 = por %p234, %p235
      %p237 = scmp.ne.s32.totalorder %s228, %s229
      %p238 = scmp.eq.s32.totalorder %s29, 0
      %p239 = por %p237, %p238
      %p240 = scmp.ne.s32.totalorder %s228, %s229
      %p241 = scmp.eq.s32.totalorder %s30, 1
      %p242 = por %p240, %p241
      %p244 = scmp.ne.s32.totalorder %s229, %s243
      %p245 = scmp.eq.s32.totalorder %s30, 0
      %p246 = por %p244, %p245
      %s247 = ssub.s32 %s24, %s31
      %p248 = scmp.eq.s32.totalorder %s247, 0
      %s250 = sadd.s32 %s249, 1
      %s251 = scalar_select %p248, %s249, %s250
      %p254 = pneg %p248
      %p255 = scmp.eq.s32.totalorder %s24, 1
      %p256 = por %p254, %p255
      %p257 = scmp.ne.s32.totalorder %s249, %s252
      %p258 = scmp.eq.s32.totalorder %s24, 0
      %p259 = por %p257, %p258
      %p260 = scmp.ne.s32.totalorder %s249, %s252
      %p261 = scmp.eq.s32.totalorder %s29, 1
      %p262 = por %p260, %p261
      %p263 = scmp.ne.s32.totalorder %s252, %s253
      %p264 = scmp.eq.s32.totalorder %s29, 0
      %p265 = por %p263, %p264
      %p266 = scmp.ne.s32.totalorder %s252, %s253
      %p267 = scmp.eq.s32.totalorder %s30, 1
      %p268 = por %p266, %p267
      %p270 = scmp.ne.s32.totalorder %s253, %s269
      %p271 = scmp.eq.s32.totalorder %s30, 0
      %p272 = por %p270, %p271
      %s273 = ssub.s32 %s24, %s31
      %p274 = scmp.eq.s32.totalorder %s273, 0
      %s276 = sadd.s32 %s275, 1
      %s277 = scalar_select %p274, %s275, %s276
      %p280 = pneg %p274
      %p281 = scmp.eq.s32.totalorder %s24, 1
      %p282 = por %p280, %p281
      %p283 = scmp.ne.s32.totalorder %s275, %s278
      %p284 = scmp.eq.s32.totalorder %s24, 0
      %p285 = por %p283, %p284
      %p286 = scmp.ne.s32.totalorder %s275, %s278
      %p287 = scmp.eq.s32.totalorder %s29, 1
      %p288 = por %p286, %p287
      %p289 = scmp.ne.s32.totalorder %s278, %s279
      %p290 = scmp.eq.s32.totalorder %s29, 0
      %p291 = por %p289, %p290
      %p292 = scmp.ne.s32.totalorder %s278, %s279
      %p293 = scmp.eq.s32.totalorder %s30, 1
      %p294 = por %p292, %p293
      %p296 = scmp.ne.s32.totalorder %s279, %s295
      %p297 = scmp.eq.s32.totalorder %s30, 0
      %p298 = por %p296, %p297
      %p299 = scmp.le.s32.totalorder 1, %s24
      %p300 = scmp.lt.s32.totalorder %s24, 3
      %p301 = pnand %p299, %p300
      %p302 = pneg %p301
      // Predicated region
      $region9: #{body.3} parent=5 // pred_check
        _
      $region10: #{body.3} parent=5 // pred_check_branch
        %304 = sbr.rel (%p301) target = $region12
      $region11: #{body.3} parent=5 // pred_region
        %s305 = ssub.s32 %s24, 1
        // Predicated region
        $region13: #{body.3} parent=11 // pred_check
          %p306 = pneg %p71
        $region14: #{body.3} parent=11 // pred_check_branch
          %308 = sbr.rel (%p306) target = $region16
        $region15: #{body.3} parent=11 // pred_region
          %s310 = ssub.s32 73728, 73728
          %311 = vsyncadd [#allocation5], %s310
          %s312 = sshll.u32 [#allocation4], 4
          %s313 = int_to_ptr.vmem [resolvable:$true] %s312
          %318 = dma.hbm_to_vmem [thread:$0]  %s1, 73728, %s313, [#allocation5], 128, 128, 8
        $region16: #{body.3} parent=11 // pred_fallthru
          _
        // Predicated region
        $region17: #{body.3} parent=11 // pred_check
          %p319 = pneg %p92
        $region18: #{body.3} parent=11 // pred_check_branch
          %321 = sbr.rel (%p319) target = $region20
        $region19: #{body.3} parent=11 // pred_region
          %s323 = ssub.s32 256, 256
          %324 = vsyncadd [#allocation7], %s323
          %s325 = sshll.u32 [#allocation6], 4
          %s326 = int_to_ptr.vmem [resolvable:$true] %s325
          %331 = dma.hbm_to_vmem [thread:$0]  %s2, 256, %s326, [#allocation7], 128, 128, 8
        $region20: #{body.3} parent=11 // pred_fallthru
          _
        // Predicated region
        $region21: #{body.3} parent=11 // pred_check
          %p332 = pneg %p113
        $region22: #{body.3} parent=11 // pred_check_branch
          %334 = sbr.rel (%p332) target = $region24
        $region23: #{body.3} parent=11 // pred_region
          %s336 = ssub.s32 256, 256
          %337 = vsyncadd [#allocation7], %s336
          %s338 = sshll.u32 [#allocation8], 4
          %s339 = int_to_ptr.vmem [resolvable:$true] %s338
          %344 = dma.hbm_to_vmem [thread:$0]  %s3, 256, %s339, [#allocation7], 128, 128, 8
        $region24: #{body.3} parent=11 // pred_fallthru
          _
        // Predicated region
        $region25: #{body.3} parent=11 // pred_check
          %p345 = pneg %p134
        $region26: #{body.3} parent=11 // pred_check_branch
          %347 = sbr.rel (%p345) target = $region28
        $region27: #{body.3} parent=11 // pred_region
          %s349 = ssub.s32 256, 256
          %350 = vsyncadd [#allocation10], %s349
          %s351 = sshll.u32 [#allocation9], 4
          %s352 = int_to_ptr.vmem [resolvable:$true] %s351
          %357 = dma.hbm_to_vmem [thread:$0]  %s4, 256, %s352, [#allocation10], 128, 128, 8
        $region28: #{body.3} parent=11 // pred_fallthru
          _
        // Predicated region
        $region29: #{body.3} parent=11 // pred_check
          %p358 = pneg %p155
        $region30: #{body.3} parent=11 // pred_check_branch
          %360 = sbr.rel (%p358) target = $region32
        $region31: #{body.3} parent=11 // pred_region
          _
        $region32: #{body.3} parent=11 // pred_fallthru
          _
        // Predicated region
        $region33: #{body.3} parent=11 // pred_check
          %p361 = pneg %p176
        $region34: #{body.3} parent=11 // pred_check_branch
          %363 = sbr.rel (%p361) target = $region36
        $region35: #{body.3} parent=11 // pred_region
          %s365 = ssub.s32 16, 16
          %366 = vsyncadd [#allocation10], %s365
          %s368 = sshll.u32 [#allocation11], 4
          %s369 = int_to_ptr.vmem [resolvable:$true] %s368
          %371 = dma.hbm_to_vmem [thread:$0]  %s6, 16, %s369, [#allocation10]
        $region36: #{body.3} parent=11 // pred_fallthru
          _
        // Predicated region
        $region37: #{body.3} parent=11 // pred_check
          %p372 = pneg %p197
        $region38: #{body.3} parent=11 // pred_check_branch
          %374 = sbr.rel (%p372) target = $region40
        $region39: #{body.3} parent=11 // pred_region
          %s376 = ssub.s32 1024, 1024
          %377 = vsyncadd [#allocation13], %s376
          %s378 = sshll.u32 [#allocation12], 4
          %s379 = int_to_ptr.vmem [resolvable:$true] %s378
          %384 = dma.hbm_to_vmem [thread:$0]  %s7, 1024, %s379, [#allocation13], 128, 128, 8
        $region40: #{body.3} parent=11 // pred_fallthru
          _
        // Predicated region
        $region41: #{body.3} parent=11 // pred_check
          %p385 = pneg %p218
        $region42: #{body.3} parent=11 // pred_check_branch
          %387 = sbr.rel (%p385) target = $region44
        $region43: #{body.3} parent=11 // pred_region
          _
        $region44: #{body.3} parent=11 // pred_fallthru
          _
        // Predicated region
        $region45: #{body.3} parent=11 // pred_check
          %p388 = pneg %p239
        $region46: #{body.3} parent=11 // pred_check_branch
          %390 = sbr.rel (%p388) target = $region48
        $region47: #{body.3} parent=11 // pred_region
          %s392 = ssub.s32 8192, 8192
          %393 = vsyncadd [#allocation13], %s392
          %s394 = sshll.u32 [#allocation14], 4
          %s395 = int_to_ptr.vmem [resolvable:$true] %s394
          %400 = dma.hbm_to_vmem [thread:$0]  %s9, 8192, %s395, [#allocation13], 128, 128, 8
        $region48: #{body.3} parent=11 // pred_fallthru
          _
      $region12: #{body.3} parent=5 // pred_fallthru
        _
      %p401 = scmp.lt.s32.totalorder %s24, 2
      // Predicated region
      $region49: #{body.3} parent=5 // pred_check
        %p402 = pneg %p401
      $region50: #{body.3} parent=5 // pred_check_branch
        %404 = sbr.rel (%p402) target = $region52
      $region51: #{body.3} parent=5 // pred_region
        // Predicated region
        $region53: #{body.3} parent=51 // pred_check
          %p405 = pneg %p44
        $region54: #{body.3} parent=51 // pred_check_branch
          %407 = sbr.rel (%p405) target = $region56
        $region55: #{body.3} parent=51 // pred_region
          %p408 = scmp.lt.s32.totalorder %s24, 1
          %s409 = scalar_select %p408, %s24, 1
          %s410 = smul.addr %s409, 2
          %s411 = smul.addr %s410, 8
          %s412 = scalar_lea.vmem %s0, %s411
        $region56: #{body.3} parent=51 // pred_fallthru
          _
      $region52: #{body.3} parent=5 // pred_fallthru
        _
      %p413 = scmp.le.s32.totalorder 1, %s24
      %p414 = scmp.lt.s32.totalorder %s24, 3
      %p415 = pnand %p413, %p414
      %p416 = pneg %p415
      // Predicated region
      $region57: #{body.3} parent=5 // pred_check
        _
      $region58: #{body.3} parent=5 // pred_check_branch
        %418 = sbr.rel (%p415) target = $region60
      $region59: #{body.3} parent=5 // pred_region
        %s419 = ssub.s32 %s24, 1
        // Predicated region
        $region61: #{body.3} parent=59 // pred_check
          %p420 = pneg %p71
        $region62: #{body.3} parent=59 // pred_check_branch
          %422 = sbr.rel (%p420) target = $region64
        $region63: #{body.3} parent=59 // pred_region
          %423 = dma.done [#allocation5], 73728
        $region64: #{body.3} parent=59 // pred_fallthru
          _
        // Predicated region
        $region65: #{body.3} parent=59 // pred_check
          %p424 = pneg %p92
        $region66: #{body.3} parent=59 // pred_check_branch
          %426 = sbr.rel (%p424) target = $region68
        $region67: #{body.3} parent=59 // pred_region
          %427 = dma.done [#allocation7], 256
        $region68: #{body.3} parent=59 // pred_fallthru
          _
        // Predicated region
        $region69: #{body.3} parent=59 // pred_check
          %p428 = pneg %p113
        $region70: #{body.3} parent=59 // pred_check_branch
          %430 = sbr.rel (%p428) target = $region72
        $region71: #{body.3} parent=59 // pred_region
          %431 = dma.done [#allocation7], 256
        $region72: #{body.3} parent=59 // pred_fallthru
          _
        // Predicated region
        $region73: #{body.3} parent=59 // pred_check
          %p432 = pneg %p134
        $region74: #{body.3} parent=59 // pred_check_branch
          %434 = sbr.rel (%p432) target = $region76
        $region75: #{body.3} parent=59 // pred_region
          %435 = dma.done [#allocation10], 256
        $region76: #{body.3} parent=59 // pred_fallthru
          _
        // Predicated region
        $region77: #{body.3} parent=59 // pred_check
          %p436 = pneg %p176
        $region78: #{body.3} parent=59 // pred_check_branch
          %438 = sbr.rel (%p436) target = $region80
        $region79: #{body.3} parent=59 // pred_region
          %439 = dma.done [#allocation10], 16
        $region80: #{body.3} parent=59 // pred_fallthru
          _
        // Predicated region
        $region81: #{body.3} parent=59 // pred_check
          %p440 = pneg %p197
        $region82: #{body.3} parent=59 // pred_check_branch
          %442 = sbr.rel (%p440) target = $region84
        $region83: #{body.3} parent=59 // pred_region
          %443 = dma.done [#allocation13], 1024
        $region84: #{body.3} parent=59 // pred_fallthru
          _
        // Predicated region
        $region85: #{body.3} parent=59 // pred_check
          %p444 = pneg %p239
        $region86: #{body.3} parent=59 // pred_check_branch
          %446 = sbr.rel (%p444) target = $region88
        $region87: #{body.3} parent=59 // pred_region
          %447 = dma.done [#allocation13], 8192
        $region88: #{body.3} parent=59 // pred_fallthru
          _
        %p448 = scmp.lt.s32.totalorder %s29, 1
        %s449 = scalar_select %p448, %s29, 1
        %s450 = smul.addr %s449, 2
        %s451 = smul.addr %s450, 8
        %s452 = scalar_lea.vmem %s0, %s451
        %p453 = pneg %p50
        %p454 = pneg %p47
        %p455 = pneg %p71
        %p456 = pneg %p68
        %p457 = pneg %p92
        %p458 = pneg %p89
        %p459 = pneg %p113
        %p460 = pneg %p110
        %p461 = pneg %p134
        %p462 = pneg %p131
        %p463 = pneg %p155
        %p464 = pneg %p152
        %p465 = pneg %p176
        %p466 = pneg %p173
        %p467 = pneg %p197
        %p468 = pneg %p194
        %p469 = pneg %p218
        %p470 = pneg %p215
        %p471 = pneg %p239
        %p472 = pneg %p236
        %p473 = pneg %p265
        %p474 = pneg %p262
        %p475 = scmp.lt.s32.totalorder %s29, 1
        %s476 = scalar_select %p475, %s29, 1
        %s477 = smul.addr %s476, 2
        %s478 = smul.addr %s477, 8
        %s479 = scalar_lea.vmem %s10, %s478
        %p480 = pneg %p291
        %p481 = pneg %p288
        %p482 = scmp.lt.s32.totalorder %s29, 1
        %s483 = scalar_select %p482, %s29, 1
        %s484 = scalar_lea.vmem %s11, %s483
        %p485 = scmp.lt.s32.totalorder %s29, 1
        %s486 = scalar_select %p485, %s29, 1
        %s487 = smul.addr %s486, 2
        %s488 = smul.addr %s487, 8
        %s489 = scalar_lea.vmem %s0, %s488
        %p490 = scmp.lt.s32.totalorder %s29, 1
        %s491 = scalar_select %p490, %s29, 1
        %s492 = smul.addr %s491, 2
        %s493 = smul.addr %s492, 8
        %s494 = scalar_lea.vmem %s10, %s493
        %p495 = scmp.lt.s32.totalorder %s29, 1
        %s496 = scalar_select %p495, %s29, 1
        %s497 = scalar_lea.vmem %s11, %s496
        %498 = vst [vmem:[#allocation2] sm:$0x1] 0.0
        %499 = vst [vmem:[#allocation2 + $0x11] sm:$0x1] 0.0
        %v500 = vld [vmem:[%s489] sm:$0xff]
        %v501 = vld [vmem:[%s489 + $0x8] sm:$0xff]
        %502 = vst [vmem:[#allocation2 + $0x1] sm:$0xff] %v500
        %503 = vst [vmem:[#allocation2 + $0x9] sm:$0xff] %v501
        %v504 = vld [vmem:[#allocation2] sm:$0xff]
        %v505 = vld [vmem:[#allocation2 + $0x8] sm:$0xff]
        %v506 = vld [vmem:[#allocation4] sm:$0xff]
        %v507 = vld [vmem:[#allocation4 + $0x8] sm:$0xff]
        %v508 = vld [vmem:[#allocation4 + $0x10] sm:$0xff]
        %v509 = vld [vmem:[#allocation4 + $0x18] sm:$0xff]
        %v510 = vld [vmem:[#allocation4 + $0x20] sm:$0xff]
        %v511 = vld [vmem:[#allocation4 + $0x28] sm:$0xff]
        %v512 = vld [vmem:[#allocation4 + $0x30] sm:$0xff]
        %v513 = vld [vmem:[#allocation4 + $0x38] sm:$0xff]
        %v514 = vld [vmem:[#allocation4 + $0x40] sm:$0xff]
        %v515 = vld [vmem:[#allocation4 + $0x48] sm:$0xff]
        %v516 = vld [vmem:[#allocation4 + $0x50] sm:$0xff]
        %v517 = vld [vmem:[#allocation4 + $0x58] sm:$0xff]
        %v518 = vld [vmem:[#allocation4 + $0x60] sm:$0xff]
        %v519 = vld [vmem:[#allocation4 + $0x68] sm:$0xff]
        %v520 = vld [vmem:[#allocation4 + $0x70] sm:$0xff]
        %v521 = vld [vmem:[#allocation4 + $0x78] sm:$0xff]
        %v522 = vld [vmem:[#allocation2 + $0x1] sm:$0xff]
        %v523 = vld [vmem:[#allocation2 + $0x9] sm:$0xff]
        %s524 = scalar_lea.vmem [#allocation4], 128
        %v525 = vld [vmem:[%s524] sm:$0xff]
        %v526 = vld [vmem:[%s524 + $0x8] sm:$0xff]
        %v527 = vld [vmem:[%s524 + $0x10] sm:$0xff]
        %v528 = vld [vmem:[%s524 + $0x18] sm:$0xff]
        %v529 = vld [vmem:[%s524 + $0x20] sm:$0xff]
        %v530 = vld [vmem:[%s524 + $0x28] sm:$0xff]
        %v531 = vld [vmem:[%s524 + $0x30] sm:$0xff]
        %v532 = vld [vmem:[%s524 + $0x38] sm:$0xff]
        %v533 = vld [vmem:[%s524 + $0x40] sm:$0xff]
        %v534 = vld [vmem:[%s524 + $0x48] sm:$0xff]
        %v535 = vld [vmem:[%s524 + $0x50] sm:$0xff]
        %v536 = vld [vmem:[%s524 + $0x58] sm:$0xff]
        %v537 = vld [vmem:[%s524 + $0x60] sm:$0xff]
        %v538 = vld [vmem:[%s524 + $0x68] sm:$0xff]
        %v539 = vld [vmem:[%s524 + $0x70] sm:$0xff]
        %v540 = vld [vmem:[%s524 + $0x78] sm:$0xff]
        %541 = vmatprep.subr.mxu0 0.0
        %542 = vmatpush1.msra.mxu0 %v525
        %543 = vmatprep.subr.mxu0 0.0
        %544 = vmatpush1.msra.mxu0 %v526
        %545 = vmatprep.subr.mxu0 0.0
        %546 = vmatpush1.msra.mxu0 %v527
        %547 = vmatprep.subr.mxu0 0.0
        %548 = vmatpush1.msra.mxu0 %v528
        %549 = vmatprep.subr.mxu0 0.0
        %550 = vmatpush1.msra.mxu0 %v529
        %551 = vmatprep.subr.mxu0 0.0
        %552 = vmatpush1.msra.mxu0 %v530
        %553 = vmatprep.subr.mxu0 0.0
        %554 = vmatpush1.msra.mxu0 %v531
        %555 = vmatprep.subr.mxu0 0.0
        %556 = vmatpush1.msra.mxu0 %v532
        %557 = vmatprep.subr.mxu0 0.0
        %558 = vmatpush1.msra.mxu0 %v533
        %559 = vmatprep.subr.mxu0 0.0
        %560 = vmatpush1.msra.mxu0 %v534
        %561 = vmatprep.subr.mxu0 0.0
        %562 = vmatpush1.msra.mxu0 %v535
        %563 = vmatprep.subr.mxu0 0.0
        %564 = vmatpush1.msra.mxu0 %v536
        %565 = vmatprep.subr.mxu0 0.0
        %566 = vmatpush1.msra.mxu0 %v537
        %567 = vmatprep.subr.mxu0 0.0
        %568 = vmatpush1.msra.mxu0 %v538
        %569 = vmatprep.subr.mxu0 0.0
        %570 = vmatpush1.msra.mxu0 %v539
        %571 = vmatprep.subr.mxu0 0.0
        %572 = vmatpush1.msra.mxu0 %v540
        %573 = vmatprep.subr.mxu0 0.0
        %574 = vmatpush1.msra.mxu0 0.0
        %575 = vmatprep.subr.mxu0 0.0
        %576 = vmatpush1.msra.mxu0 0.0
        %577 = vmatprep.subr.mxu0 0.0
        %578 = vmatpush1.msra.mxu0 0.0
        %579 = vmatprep.subr.mxu0 0.0
        %580 = vmatpush1.msra.mxu0 0.0
        %581 = vmatprep.subr.mxu0 0.0
        %582 = vmatpush1.msra.mxu0 0.0
        %583 = vmatprep.subr.mxu0 0.0
        %584 = vmatpush1.msra.mxu0 0.0
        %585 = vmatprep.subr.mxu0 0.0
        %586 = vmatpush1.msra.mxu0 0.0
        %587 = vmatprep.subr.mxu0 0.0
        %588 = vmatpush1.msra.mxu0 0.0
        %589 = vmatprep.subr.mxu0 0.0
        %590 = vmatpush1.msra.mxu0 0.0
        %591 = vmatprep.subr.mxu0 0.0
        %592 = vmatpush1.msra.mxu0 0.0
        %593 = vmatprep.subr.mxu0 0.0
        %594 = vmatpush1.msra.mxu0 0.0
        %595 = vmatprep.subr.mxu0 0.0
        %596 = vmatpush1.msra.mxu0 0.0
        %597 = vmatprep.subr.mxu0 0.0
        %598 = vmatpush1.msra.mxu0 0.0
        %599 = vmatprep.subr.mxu0 0.0
        %600 = vmatpush1.msra.mxu0 0.0
        %601 = vmatprep.subr.mxu0 0.0
        %602 = vmatpush1.msra.mxu0 0.0
        %603 = vmatprep.subr.mxu0 0.0
        %604 = vmatpush1.msra.mxu0 0.0
        %605 = vmatprep.mubr.f32.mxu0 0.0
        %606 = vmatmul.mubr.f32.gmra.mrb[0].mxu0 %v522
        %v607 = vpop.f32.mrb[0].mxu0
        %v608 = vadd.f32 0.0, %v607
        %v609 = vpop.f32.mrb[0].mxu0
        %610 = vmatprep.mubr.f32.mxu0 0.0
        %611 = vmatmul.mubr.f32.gmra.mrb[0].mxu0 %v523
        %v612 = vpop.f32.mrb[0].mxu0
        %v613 = vadd.f32 0.0, %v612
        %v614 = vpop.f32.mrb[0].mxu0
        %615 = vdwg.mxu0
        %616 = vmatprep.subr.mxu0 0.0
        %617 = vmatpush1.msra.mxu0 %v506
        %618 = vmatprep.subr.mxu0 0.0
        %619 = vmatpush1.msra.mxu0 %v507
        %620 = vmatprep.subr.mxu0 0.0
        %621 = vmatpush1.msra.mxu0 %v508
        %622 = vmatprep.subr.mxu0 0.0
        %623 = vmatpush1.msra.mxu0 %v509
        %624 = vmatprep.subr.mxu0 0.0
        %625 = vmatpush1.msra.mxu0 %v510
        %626 = vmatprep.subr.mxu0 0.0
        %627 = vmatpush1.msra.mxu0 %v511
        %628 = vmatprep.subr.mxu0 0.0
        %629 = vmatpush1.msra.mxu0 %v512
        %630 = vmatprep.subr.mxu0 0.0
        %631 = vmatpush1.msra.mxu0 %v513
        %632 = vmatprep.subr.mxu0 0.0
        %633 = vmatpush1.msra.mxu0 %v514
        %634 = vmatprep.subr.mxu0 0.0
        %635 = vmatpush1.msra.mxu0 %v515
        %636 = vmatprep.subr.mxu0 0.0
        %637 = vmatpush1.msra.mxu0 %v516
        %638 = vmatprep.subr.mxu0 0.0
        %639 = vmatpush1.msra.mxu0 %v517
        %640 = vmatprep.subr.mxu0 0.0
        %641 = vmatpush1.msra.mxu0 %v518
        %642 = vmatprep.subr.mxu0 0.0
        %643 = vmatpush1.msra.mxu0 %v519
        %644 = vmatprep.subr.mxu0 0.0
        %645 = vmatpush1.msra.mxu0 %v520
        %646 = vmatprep.subr.mxu0 0.0
        %647 = vmatpush1.msra.mxu0 %v521
        %648 = vmatprep.subr.mxu0 0.0
        %649 = vmatpush1.msra.mxu0 0.0
        %650 = vmatprep.subr.mxu0 0.0
        %651 = vmatpush1.msra.mxu0 0.0
        %652 = vmatprep.subr.mxu0 0.0
        %653 = vmatpush1.msra.mxu0 0.0
        %654 = vmatprep.subr.mxu0 0.0
        %655 = vmatpush1.msra.mxu0 0.0
        %656 = vmatprep.subr.mxu0 0.0
        %657 = vmatpush1.msra.mxu0 0.0
        %658 = vmatprep.subr.mxu0 0.0
        %659 = vmatpush1.msra.mxu0 0.0
        %660 = vmatprep.subr.mxu0 0.0
        %661 = vmatpush1.msra.mxu0 0.0
        %662 = vmatprep.subr.mxu0 0.0
        %663 = vmatpush1.msra.mxu0 0.0
        %664 = vmatprep.subr.mxu0 0.0
        %665 = vmatpush1.msra.mxu0 0.0
        %666 = vmatprep.subr.mxu0 0.0
        %667 = vmatpush1.msra.mxu0 0.0
        %668 = vmatprep.subr.mxu0 0.0
        %669 = vmatpush1.msra.mxu0 0.0
        %670 = vmatprep.subr.mxu0 0.0
        %671 = vmatpush1.msra.mxu0 0.0
        %672 = vmatprep.subr.mxu0 0.0
        %673 = vmatpush1.msra.mxu0 0.0
        %674 = vmatprep.subr.mxu0 0.0
        %675 = vmatpush1.msra.mxu0 0.0
        %676 = vmatprep.subr.mxu0 0.0
        %677 = vmatpush1.msra.mxu0 0.0
        %678 = vmatprep.subr.mxu0 0.0
        %679 = vmatpush1.msra.mxu0 0.0
        %680 = vmatprep.mubr.f32.mxu0 0.0
        %681 = vmatmul.mubr.f32.gmra.mrb[0].mxu0 %v504
        %v682 = vpop.f32.mrb[0].mxu0
        %v683 = vadd.f32 %v608, %v682
        %v684 = vpop.f32.mrb[0].mxu0
        %685 = vmatprep.mubr.f32.mxu0 0.0
        %686 = vmatmul.mubr.f32.gmra.mrb[0].mxu0 %v505
        %v687 = vpop.f32.mrb[0].mxu0
        %v688 = vadd.f32 %v613, %v687
        %v689 = vpop.f32.mrb[0].mxu0
        %690 = vdwg.mxu0
        %v691 = vld [vmem:[#allocation2 + $0x2] sm:$0xff]
        %v692 = vld [vmem:[#allocation2 + $0xa] sm:$0xff]
        %s693 = scalar_lea.vmem [#allocation4], 256
        %v694 = vld [vmem:[%s693] sm:$0xff]
        %v695 = vld [vmem:[%s693 + $0x8] sm:$0xff]
        %v696 = vld [vmem:[%s693 + $0x10] sm:$0xff]
        %v697 = vld [vmem:[%s693 + $0x18] sm:$0xff]
        %v698 = vld [vmem:[%s693 + $0x20] sm:$0xff]
        %v699 = vld [vmem:[%s693 + $0x28] sm:$0xff]
        %v700 = vld [vmem:[%s693 + $0x30] sm:$0xff]
        %v701 = vld [vmem:[%s693 + $0x38] sm:$0xff]
        %v702 = vld [vmem:[%s693 + $0x40] sm:$0xff]
        %v703 = vld [vmem:[%s693 + $0x48] sm:$0xff]
        %v704 = vld [vmem:[%s693 + $0x50] sm:$0xff]
        %v705 = vld [vmem:[%s693 + $0x58] sm:$0xff]
        %v706 = vld [vmem:[%s693 + $0x60] sm:$0xff]
        %v707 = vld [vmem:[%s693 + $0x68] sm:$0xff]
        %v708 = vld [vmem:[%s693 + $0x70] sm:$0xff]
        %v709 = vld [vmem:[%s693 + $0x78] sm:$0xff]
        %710 = vmatprep.subr.mxu0 0.0
        %711 = vmatpush1.msra.mxu0 %v694
        %712 = vmatprep.subr.mxu0 0.0
        %713 = vmatpush1.msra.mxu0 %v695
        %714 = vmatprep.subr.mxu0 0.0
        %715 = vmatpush1.msra.mxu0 %v696
        %716 = vmatprep.subr.mxu0 0.0
        %717 = vmatpush1.msra.mxu0 %v697
        %718 = vmatprep.subr.mxu0 0.0
        %719 = vmatpush1.msra.mxu0 %v698
        %720 = vmatprep.subr.mxu0 0.0
        %721 = vmatpush1.msra.mxu0 %v699
        %722 = vmatprep.subr.mxu0 0.0
        %723 = vmatpush1.msra.mxu0 %v700
        %724 = vmatprep.subr.mxu0 0.0
        %725 = vmatpush1.msra.mxu0 %v701
        %726 = vmatprep.subr.mxu0 0.0
        %727 = vmatpush1.msra.mxu0 %v702
        %728 = vmatprep.subr.mxu0 0.0
        %729 = vmatpush1.msra.mxu0 %v703
        %730 = vmatprep.subr.mxu0 0.0
        %731 = vmatpush1.msra.mxu0 %v704
        %732 = vmatprep.subr.mxu0 0.0
        %733 = vmatpush1.msra.mxu0 %v705
        %734 = vmatprep.subr.mxu0 0.0
        %735 = vmatpush1.msra.mxu0 %v706
        %736 = vmatprep.subr.mxu0 0.0
        %737 = vmatpush1.msra.mxu0 %v707
        %738 = vmatprep.subr.mxu0 0.0
        %739 = vmatpush1.msra.mxu0 %v708
        %740 = vmatprep.subr.mxu0 0.0
        %741 = vmatpush1.msra.mxu0 %v709
        %742 = vmatprep.subr.mxu0 0.0
        %743 = vmatpush1.msra.mxu0 0.0
        %744 = vmatprep.subr.mxu0 0.0
        %745 = vmatpush1.msra.mxu0 0.0
        %746 = vmatprep.subr.mxu0 0.0
        %747 = vmatpush1.msra.mxu0 0.0
        %748 = vmatprep.subr.mxu0 0.0
        %749 = vmatpush1.msra.mxu0 0.0
        %750 = vmatprep.subr.mxu0 0.0
        %751 = vmatpush1.msra.mxu0 0.0
        %752 = vmatprep.subr.mxu0 0.0
        %753 = vmatpush1.msra.mxu0 0.0
        %754 = vmatprep.subr.mxu0 0.0
        %755 = vmatpush1.msra.mxu0 0.0
        %756 = vmatprep.subr.mxu0 0.0
        %757 = vmatpush1.msra.mxu0 0.0
        %758 = vmatprep.subr.mxu0 0.0
        %759 = vmatpush1.msra.mxu0 0.0
        %760 = vmatprep.subr.mxu0 0.0
        %761 = vmatpush1.msra.mxu0 0.0
        %762 = vmatprep.subr.mxu0 0.0
        %763 = vmatpush1.msra.mxu0 0.0
        %764 = vmatprep.subr.mxu0 0.0
        %765 = vmatpush1.msra.mxu0 0.0
        %766 = vmatprep.subr.mxu0 0.0
        %767 = vmatpush1.msra.mxu0 0.0
        %768 = vmatprep.subr.mxu0 0.0
        %769 = vmatpush1.msra.mxu0 0.0
        %770 = vmatprep.subr.mxu0 0.0
        %771 = vmatpush1.msra.mxu0 0.0
        %772 = vmatprep.subr.mxu0 0.0
        %773 = vmatpush1.msra.mxu0 0.0
        %774 = vmatprep.mubr.f32.mxu0 0.0
        %775 = vmatmul.mubr.f32.gmra.mrb[0].mxu0 %v691
        %v776 = vpop.f32.mrb[0].mxu0
        %v777 = vadd.f32 0.0, %v776
        %v778 = vpop.f32.mrb[0].mxu0
        %779 = vmatprep.mubr.f32.mxu0 0.0
        %780 = vmatmul.mubr.f32.gmra.mrb[0].mxu0 %v692
        %v781 = vpop.f32.mrb[0].mxu0
        %v782 = vadd.f32 0.0, %v781
        %v783 = vpop.f32.mrb[0].mxu0
        %784 = vdwg.mxu0
        %v785 = vadd.f32 %v683, %v777
        %v786 = vadd.f32 %v688, %v782
        %v787 = vld [vmem:[#allocation6] sm:$0x1]
        %v788 = vlaneseq
        %v789 = vshrl.u32 %v788, 7
        %v790 = vsub.s32 0, %v789
        %v791 = vrot.slane %v787, %v790
        %v792 = vadd.f32 %v785, %v791
        %v793 = vadd.f32 %v786, %v791
        %v794 = vadd.f32 %v792, %v793
        %v795 = vrot.slane %v794, 4
        %v796 = vadd.f32 %v794, %v795
        %v797 = vrot.slane %v796, 2
        %v798 = vadd.f32 %v796, %v797
        %v799 = vrot.slane %v798, 1
        %v800 = vadd.f32 %v798, %v799
        %v801 = vmul.f32 %v792, %v792
        %v802 = vmul.f32 %v793, %v793
        %v803 = vadd.f32 %v801, %v802
        %v804 = vrot.slane %v803, 4
        %v805 = vadd.f32 %v803, %v804
        %v806 = vrot.slane %v805, 2
        %v807 = vadd.f32 %v805, %v806
        %v808 = vrot.slane %v807, 1
        %v809 = vadd.f32 %v807, %v808
        %vm810 = vcmask 1040384
        %v811 = vsel %vm810, %v800, %v809
        %v812 = vld [vmem:[#allocation14] sm:$0xff]
        %v813 = vld [vmem:[#allocation14 + $0x8] sm:$0xff]
        %v814 = vld [vmem:[#allocation14 + $0x10] sm:$0xff]
        %v815 = vld [vmem:[#allocation14 + $0x18] sm:$0xff]
        %v816 = vld [vmem:[#allocation14 + $0x20] sm:$0xff]
        %v817 = vld [vmem:[#allocation14 + $0x28] sm:$0xff]
        %v818 = vld [vmem:[#allocation14 + $0x30] sm:$0xff]
        %v819 = vld [vmem:[#allocation14 + $0x38] sm:$0xff]
        %v820 = vld [vmem:[#allocation14 + $0x40] sm:$0xff]
        %v821 = vld [vmem:[#allocation14 + $0x48] sm:$0xff]
        %v822 = vld [vmem:[#allocation14 + $0x50] sm:$0xff]
        %v823 = vld [vmem:[#allocation14 + $0x58] sm:$0xff]
        %v824 = vld [vmem:[#allocation14 + $0x60] sm:$0xff]
        %v825 = vld [vmem:[#allocation14 + $0x68] sm:$0xff]
        %v826 = vld [vmem:[#allocation14 + $0x70] sm:$0xff]
        %v827 = vld [vmem:[#allocation14 + $0x78] sm:$0xff]
        %828 = vmatprep.subr.mxu0 0.0
        %829 = vmatpush1.msra.mxu0 %v812
        %830 = vmatprep.subr.mxu0 0.0
        %831 = vmatpush1.msra.mxu0 %v813
        %832 = vmatprep.subr.mxu0 0.0
        %833 = vmatpush1.msra.mxu0 %v814
        %834 = vmatprep.subr.mxu0 0.0
        %835 = vmatpush1.msra.mxu0 %v815
        %836 = vmatprep.subr.mxu0 0.0
        %837 = vmatpush1.msra.mxu0 %v816
        %838 = vmatprep.subr.mxu0 0.0
        %839 = vmatpush1.msra.mxu0 %v817
        %840 = vmatprep.subr.mxu0 0.0
        %841 = vmatpush1.msra.mxu0 %v818
        %842 = vmatprep.subr.mxu0 0.0
        %843 = vmatpush1.msra.mxu0 %v819
        %844 = vmatprep.subr.mxu0 0.0
        %845 = vmatpush1.msra.mxu0 %v820
        %846 = vmatprep.subr.mxu0 0.0
        %847 = vmatpush1.msra.mxu0 %v821
        %848 = vmatprep.subr.mxu0 0.0
        %849 = vmatpush1.msra.mxu0 %v822
        %850 = vmatprep.subr.mxu0 0.0
        %851 = vmatpush1.msra.mxu0 %v823
        %852 = vmatprep.subr.mxu0 0.0
        %853 = vmatpush1.msra.mxu0 %v824
        %854 = vmatprep.subr.mxu0 0.0
        %855 = vmatpush1.msra.mxu0 %v825
        %856 = vmatprep.subr.mxu0 0.0
        %857 = vmatpush1.msra.mxu0 %v826
        %858 = vmatprep.subr.mxu0 0.0
        %859 = vmatpush1.msra.mxu0 %v827
        %860 = vmatprep.subr.mxu0 0.0
        %861 = vmatpush1.msra.mxu0 0.0
        %862 = vmatprep.subr.mxu0 0.0
        %863 = vmatpush1.msra.mxu0 0.0
        %864 = vmatprep.subr.mxu0 0.0
        %865 = vmatpush1.msra.mxu0 0.0
        %866 = vmatprep.subr.mxu0 0.0
        %867 = vmatpush1.msra.mxu0 0.0
        %868 = vmatprep.subr.mxu0 0.0
        %869 = vmatpush1.msra.mxu0 0.0
        %870 = vmatprep.subr.mxu0 0.0
        %871 = vmatpush1.msra.mxu0 0.0
        %872 = vmatprep.subr.mxu0 0.0
        %873 = vmatpush1.msra.mxu0 0.0
        %874 = vmatprep.subr.mxu0 0.0
        %875 = vmatpush1.msra.mxu0 0.0
        %876 = vmatprep.subr.mxu0 0.0
        %877 = vmatpush1.msra.mxu0 0.0
        %878 = vmatprep.subr.mxu0 0.0
        %879 = vmatpush1.msra.mxu0 0.0
        %880 = vmatprep.subr.mxu0 0.0
        %881 = vmatpush1.msra.mxu0 0.0
        %882 = vmatprep.subr.mxu0 0.0
        %883 = vmatpush1.msra.mxu0 0.0
        %884 = vmatprep.subr.mxu0 0.0
        %885 = vmatpush1.msra.mxu0 0.0
        %886 = vmatprep.subr.mxu0 0.0
        %887 = vmatpush1.msra.mxu0 0.0
        %888 = vmatprep.subr.mxu0 0.0
        %889 = vmatpush1.msra.mxu0 0.0
        %890 = vmatprep.subr.mxu0 0.0
        %891 = vmatpush1.msra.mxu0 0.0
        %892 = vmatprep.mubr.f32.mxu0 0.0
        %893 = vmatmul.mubr.f32.gmra.mrb[0].mxu0 %v811
        %v894 = vpop.f32.mrb[0].mxu0
        %v895 = vadd.f32 0.0, %v894
        %v896 = vpop.f32.mrb[0].mxu0
        %897 = vdwg.mxu0
        %v898 = vmul.f32 %v895, %v895
        %v900 = vrot.slane %v898, 7
        %v902 = vsub.f32 %v895, %v900
        %v903 = vlaneseq
        %v904 = vshrl.u32 %v903, 7
        %v905 = vsub.s32 0, %v904
        %v906 = vrot.slane %v895, %v905
        %v907 = vsub.f32 %v792, %v906
        %v908 = vsub.f32 %v793, %v906
        %v909 = vadd.f32 %v902, 1e-05
        %v910 = vrsqrt.pop %v909
        %v911 = vlaneseq
        %v912 = vshrl.u32 %v911, 7
        %v913 = vsub.s32 1, %v912
        %v914 = vrot.slane %v910, %v913
        %v915 = vmul.f32 %v907, %v914
        %v916 = vmul.f32 %v908, %v914
        %v917 = vld [vmem:[#allocation8] sm:$0x1]
        %v918 = vlaneseq
        %v919 = vshrl.u32 %v918, 7
        %v920 = vsub.s32 0, %v919
        %v921 = vrot.slane %v917, %v920
        %v922 = vmul.f32 %v915, %v921
        %v923 = vmul.f32 %v916, %v921
        %v924 = vld [vmem:[#allocation9] sm:$0x1]
        %v925 = vlaneseq
        %v926 = vshrl.u32 %v925, 7
        %v927 = vsub.s32 0, %v926
        %v928 = vrot.slane %v924, %v927
        %v929 = vadd.f32 %v922, %v928
        %v930 = vadd.f32 %v923, %v928
        %v931 = vxor.u32 %v929, 2147483648
        %v932 = vxor.u32 %v930, 2147483648
        %v933 = vmul.f32 %v931, 1.442695
        %v934 = vpow.pop %v933
        %v935 = vmul.f32 %v932, 1.442695
        %v936 = vpow.pop %v935
        %v937 = vadd.f32 %v934, 1.0
        %v938 = vadd.f32 %v936, 1.0
        %v939 = vrcp.pop %v937
        %v940 = vmul.f32 1.0, %v939
        %v941 = vrcp.pop %v938
        %v942 = vmul.f32 1.0, %v941
        %v943 = vmul.f32 %v929, %v940
        %v944 = vmul.f32 %v930, %v942
        %945 = vst [vmem:[#allocation2 + $0x1] sm:$0xff] %v943
        %946 = vst [vmem:[#allocation2 + $0x9] sm:$0xff] %v944
        %v947 = vld [vmem:[#allocation2] sm:$0xff]
        %v948 = vld [vmem:[#allocation2 + $0x8] sm:$0xff]
        %s949 = scalar_lea.vmem [#allocation4], 384
        %v950 = vld [vmem:[%s949] sm:$0xff]
        %v951 = vld [vmem:[%s949 + $0x8] sm:$0xff]
        %v952 = vld [vmem:[%s949 + $0x10] sm:$0xff]
        %v953 = vld [vmem:[%s949 + $0x18] sm:$0xff]
        %v954 = vld [vmem:[%s949 + $0x20] sm:$0xff]
        %v955 = vld [vmem:[%s949 + $0x28] sm:$0xff]
        %v956 = vld [vmem:[%s949 + $0x30] sm:$0xff]
        %v957 = vld [vmem:[%s949 + $0x38] sm:$0xff]
        %v958 = vld [vmem:[%s949 + $0x40] sm:$0xff]
        %v959 = vld [vmem:[%s949 + $0x48] sm:$0xff]
        %v960 = vld [vmem:[%s949 + $0x50] sm:$0xff]
        %v961 = vld [vmem:[%s949 + $0x58] sm:$0xff]
        %v962 = vld [vmem:[%s949 + $0x60] sm:$0xff]
        %v963 = vld [vmem:[%s949 + $0x68] sm:$0xff]
        %v964 = vld [vmem:[%s949 + $0x70] sm:$0xff]
        %v965 = vld [vmem:[%s949 + $0x78] sm:$0xff]
        %v966 = vld [vmem:[#allocation2 + $0x1] sm:$0xff]
        %v967 = vld [vmem:[#allocation2 + $0x9] sm:$0xff]
        %s968 = scalar_lea.vmem [#allocation4], 512
        %v969 = vld [vmem:[%s968] sm:$0xff]
        %v970 = vld [vmem:[%s968 + $0x8] sm:$0xff]
        %v971 = vld [vmem:[%s968 + $0x10] sm:$0xff]
        %v972 = vld [vmem:[%s968 + $0x18] sm:$0xff]
        %v973 = vld [vmem:[%s968 + $0x20] sm:$0xff]
        %v974 = vld [vmem:[%s968 + $0x28] sm:$0xff]
        %v975 = vld [vmem:[%s968 + $0x30] sm:$0xff]
        %v976 = vld [vmem:[%s968 + $0x38] sm:$0xff]
        %v977 = vld [vmem:[%s968 + $0x40] sm:$0xff]
        %v978 = vld [vmem:[%s968 + $0x48] sm:$0xff]
        %v979 = vld [vmem:[%s968 + $0x50] sm:$0xff]
        %v980 = vld [vmem:[%s968 + $0x58] sm:$0xff]
        %v981 = vld [vmem:[%s968 + $0x60] sm:$0xff]
        %v982 = vld [vmem:[%s968 + $0x68] sm:$0xff]
        %v983 = vld [vmem:[%s968 + $0x70] sm:$0xff]
        %v984 = vld [vmem:[%s968 + $0x78] sm:$0xff]
        %985 = vmatprep.subr.mxu0 0.0
        %986 = vmatpush1.msra.mxu0 %v969
        %987 = vmatprep.subr.mxu0 0.0
        %988 = vmatpush1.msra.mxu0 %v970
        %989 = vmatprep.subr.mxu0 0.0
        %990 = vmatpush1.msra.mxu0 %v971
        %991 = vmatprep.subr.mxu0 0.0
        %992 = vmatpush1.msra.mxu0 %v972
        %993 = vmatprep.subr.mxu0 0.0
        %994 = vmatpush1.msra.mxu0 %v973
        %995 = vmatprep.subr.mxu0 0.0
        %996 = vmatpush1.msra.mxu0 %v974
        %997 = vmatprep.subr.mxu0 0.0
        %998 = vmatpush1.msra.mxu0 %v975
        %999 = vmatprep.subr.mxu0 0.0
        %1000 = vmatpush1.msra.mxu0 %v976
        %1001 = vmatprep.subr.mxu0 0.0
        %1002 = vmatpush1.msra.mxu0 %v977
        %1003 = vmatprep.subr.mxu0 0.0
        %1004 = vmatpush1.msra.mxu0 %v978
        %1005 = vmatprep.subr.mxu0 0.0
        %1006 = vmatpush1.msra.mxu0 %v979
        %1007 = vmatprep.subr.mxu0 0.0
        %1008 = vmatpush1.msra.mxu0 %v980
        %1009 = vmatprep.subr.mxu0 0.0
        %1010 = vmatpush1.msra.mxu0 %v981
        %1011 = vmatprep.subr.mxu0 0.0
        %1012 = vmatpush1.msra.mxu0 %v982
        %1013 = vmatprep.subr.mxu0 0.0
        %1014 = vmatpush1.msra.mxu0 %v983
        %1015 = vmatprep.subr.mxu0 0.0
        %1016 = vmatpush1.msra.mxu0 %v984
        %1017 = vmatprep.subr.mxu0 0.0
        %1018 = vmatpush1.msra.mxu0 0.0
        %1019 = vmatprep.subr.mxu0 0.0
        %1020 = vmatpush1.msra.mxu0 0.0
        %1021 = vmatprep.subr.mxu0 0.0
        %1022 = vmatpush1.msra.mxu0 0.0
        %1023 = vmatprep.subr.mxu0 0.0
        %1024 = vmatpush1.msra.mxu0 0.0
        %1025 = vmatprep.subr.mxu0 0.0
        %1026 = vmatpush1.msra.mxu0 0.0
        %1027 = vmatprep.subr.mxu0 0.0
        %1028 = vmatpush1.msra.mxu0 0.0
        %1029 = vmatprep.subr.mxu0 0.0
        %1030 = vmatpush1.msra.mxu0 0.0
        %1031 = vmatprep.subr.mxu0 0.0
        %1032 = vmatpush1.msra.mxu0 0.0
        %1033 = vmatprep.subr.mxu0 0.0
        %1034 = vmatpush1.msra.mxu0 0.0
        %1035 = vmatprep.subr.mxu0 0.0
        %1036 = vmatpush1.msra.mxu0 0.0
        %1037 = vmatprep.subr.mxu0 0.0
        %1038 = vmatpush1.msra.mxu0 0.0
        %1039 = vmatprep.subr.mxu0 0.0
        %1040 = vmatpush1.msra.mxu0 0.0
        %1041 = vmatprep.subr.mxu0 0.0
        %1042 = vmatpush1.msra.mxu0 0.0
        %1043 = vmatprep.subr.mxu0 0.0
        %1044 = vmatpush1.msra.mxu0 0.0
        %1045 = vmatprep.subr.mxu0 0.0
        %1046 = vmatpush1.msra.mxu0 0.0
        %1047 = vmatprep.subr.mxu0 0.0
        %1048 = vmatpush1.msra.mxu0 0.0
        %1049 = vmatprep.mubr.f32.mxu0 0.0
        %1050 = vmatmul.mubr.f32.gmra.mrb[0].mxu0 %v966
        %v1051 = vpop.f32.mrb[0].mxu0
        %v1052 = vadd.f32 0.0, %v1051
        %v1053 = vpop.f32.mrb[0].mxu0
        %1054 = vmatprep.mubr.f32.mxu0 0.0
        %1055 = vmatmul.mubr.f32.gmra.mrb[0].mxu0 %v967
        %v1056 = vpop.f32.mrb[0].mxu0
        %v1057 = vadd.f32 0.0, %v1056
        %v1058 = vpop.f32.mrb[0].mxu0
        %1059 = vdwg.mxu0
        %1060 = vmatprep.subr.mxu0 0.0
        %1061 = vmatpush1.msra.mxu0 %v950
        %1062 = vmatprep.subr.mxu0 0.0
        %1063 = vmatpush1.msra.mxu0 %v951
        %1064 = vmatprep.subr.mxu0 0.0
        %1065 = vmatpush1.msra.mxu0 %v952
        %1066 = vmatprep.subr.mxu0 0.0
        %1067 = vmatpush1.msra.mxu0 %v953
        %1068 = vmatprep.subr.mxu0 0.0
        %1069 = vmatpush1.msra.mxu0 %v954
        %1070 = vmatprep.subr.mxu0 0.0
        %1071 = vmatpush1.msra.mxu0 %v955
        %1072 = vmatprep.subr.mxu0 0.0
        %1073 = vmatpush1.msra.mxu0 %v956
        %1074 = vmatprep.subr.mxu0 0.0
        %1075 = vmatpush1.msra.mxu0 %v957
        %1076 = vmatprep.subr.mxu0 0.0
        %1077 = vmatpush1.msra.mxu0 %v958
        %1078 = vmatprep.subr.mxu0 0.0
        %1079 = vmatpush1.msra.mxu0 %v959
        %1080 = vmatprep.subr.mxu0 0.0
        %1081 = vmatpush1.msra.mxu0 %v960
        %1082 = vmatprep.subr.mxu0 0.0
        %1083 = vmatpush1.msra.mxu0 %v961
        %1084 = vmatprep.subr.mxu0 0.0
        %1085 = vmatpush1.msra.mxu0 %v962
        %1086 = vmatprep.subr.mxu0 0.0
        %1087 = vmatpush1.msra.mxu0 %v963
        %1088 = vmatprep.subr.mxu0 0.0
        %1089 = vmatpush1.msra.mxu0 %v964
        %1090 = vmatprep.subr.mxu0 0.0
        %1091 = vmatpush1.msra.mxu0 %v965
        %1092 = vmatprep.subr.mxu0 0.0
        %1093 = vmatpush1.msra.mxu0 0.0
        %1094 = vmatprep.subr.mxu0 0.0
        %1095 = vmatpush1.msra.mxu0 0.0
        %1096 = vmatprep.subr.mxu0 0.0
        %1097 = vmatpush1.msra.mxu0 0.0
        %1098 = vmatprep.subr.mxu0 0.0
        %1099 = vmatpush1.msra.mxu0 0.0
        %1100 = vmatprep.subr.mxu0 0.0
        %1101 = vmatpush1.msra.mxu0 0.0
        %1102 = vmatprep.subr.mxu0 0.0
        %1103 = vmatpush1.msra.mxu0 0.0
        %1104 = vmatprep.subr.mxu0 0.0
        %1105 = vmatpush1.msra.mxu0 0.0
        %1106 = vmatprep.subr.mxu0 0.0
        %1107 = vmatpush1.msra.mxu0 0.0
        %1108 = vmatprep.subr.mxu0 0.0
        %1109 = vmatpush1.msra.mxu0 0.0
        %1110 = vmatprep.subr.mxu0 0.0
        %1111 = vmatpush1.msra.mxu0 0.0
        %1112 = vmatprep.subr.mxu0 0.0
        %1113 = vmatpush1.msra.mxu0 0.0
        %1114 = vmatprep.subr.mxu0 0.0
        %1115 = vmatpush1.msra.mxu0 0.0
        %1116 = vmatprep.subr.mxu0 0.0
        %1117 = vmatpush1.msra.mxu0 0.0
        %1118 = vmatprep.subr.mxu0 0.0
        %1119 = vmatpush1.msra.mxu0 0.0
        %1120 = vmatprep.subr.mxu0 0.0
        %1121 = vmatpush1.msra.mxu0 0.0
        %1122 = vmatprep.subr.mxu0 0.0
        %1123 = vmatpush1.msra.mxu0 0.0
        %1124 = vmatprep.mubr.f32.mxu0 0.0
        %1125 = vmatmul.mubr.f32.gmra.mrb[0].mxu0 %v947
        %v1126 = vpop.f32.mrb[0].mxu0
        %v1127 = vadd.f32 %v1052, %v1126
        %v1128 = vpop.f32.mrb[0].mxu0
        %1129 = vmatprep.mubr.f32.mxu0 0.0
        %1130 = vmatmul.mubr.f32.gmra.mrb[0].mxu0 %v948
        %v1131 = vpop.f32.mrb[0].mxu0
        %v1132 = vadd.f32 %v1057, %v1131
        %v1133 = vpop.f32.mrb[0].mxu0
        %1134 = vdwg.mxu0
        %v1135 = vld [vmem:[#allocation2 + $0x2] sm:$0xff]
        %v1136 = vld [vmem:[#allocation2 + $0xa] sm:$0xff]
        %s1137 = scalar_lea.vmem [#allocation4], 640
        %v1138 = vld [vmem:[%s1137] sm:$0xff]
        %v1139 = vld [vmem:[%s1137 + $0x8] sm:$0xff]
        %v1140 = vld [vmem:[%s1137 + $0x10] sm:$0xff]
        %v1141 = vld [vmem:[%s1137 + $0x18] sm:$0xff]
        %v1142 = vld [vmem:[%s1137 + $0x20] sm:$0xff]
        %v1143 = vld [vmem:[%s1137 + $0x28] sm:$0xff]
        %v1144 = vld [vmem:[%s1137 + $0x30] sm:$0xff]
        %v1145 = vld [vmem:[%s1137 + $0x38] sm:$0xff]
        %v1146 = vld [vmem:[%s1137 + $0x40] sm:$0xff]
        %v1147 = vld [vmem:[%s1137 + $0x48] sm:$0xff]
        %v1148 = vld [vmem:[%s1137 + $0x50] sm:$0xff]
        %v1149 = vld [vmem:[%s1137 + $0x58] sm:$0xff]
        %v1150 = vld [vmem:[%s1137 + $0x60] sm:$0xff]
        %v1151 = vld [vmem:[%s1137 + $0x68] sm:$0xff]
        %v1152 = vld [vmem:[%s1137 + $0x70] sm:$0xff]
        %v1153 = vld [vmem:[%s1137 + $0x78] sm:$0xff]
        %1154 = vmatprep.subr.mxu0 0.0
        %1155 = vmatpush1.msra.mxu0 %v1138
        %1156 = vmatprep.subr.mxu0 0.0
        %1157 = vmatpush1.msra.mxu0 %v1139
        %1158 = vmatprep.subr.mxu0 0.0
        %1159 = vmatpush1.msra.mxu0 %v1140
        %1160 = vmatprep.subr.mxu0 0.0
        %1161 = vmatpush1.msra.mxu0 %v1141
        %1162 = vmatprep.subr.mxu0 0.0
        %1163 = vmatpush1.msra.mxu0 %v1142
        %1164 = vmatprep.subr.mxu0 0.0
        %1165 = vmatpush1.msra.mxu0 %v1143
        %1166 = vmatprep.subr.mxu0 0.0
        %1167 = vmatpush1.msra.mxu0 %v1144
        %1168 = vmatprep.subr.mxu0 0.0
        %1169 = vmatpush1.msra.mxu0 %v1145
        %1170 = vmatprep.subr.mxu0 0.0
        %1171 = vmatpush1.msra.mxu0 %v1146
        %1172 = vmatprep.subr.mxu0 0.0
        %1173 = vmatpush1.msra.mxu0 %v1147
        %1174 = vmatprep.subr.mxu0 0.0
        %1175 = vmatpush1.msra.mxu0 %v1148
        %1176 = vmatprep.subr.mxu0 0.0
        %1177 = vmatpush1.msra.mxu0 %v1149
        %1178 = vmatprep.subr.mxu0 0.0
        %1179 = vmatpush1.msra.mxu0 %v1150
        %1180 = vmatprep.subr.mxu0 0.0
        %1181 = vmatpush1.msra.mxu0 %v1151
        %1182 = vmatprep.subr.mxu0 0.0
        %1183 = vmatpush1.msra.mxu0 %v1152
        %1184 = vmatprep.subr.mxu0 0.0
        %1185 = vmatpush1.msra.mxu0 %v1153
        %1186 = vmatprep.subr.mxu0 0.0
        %1187 = vmatpush1.msra.mxu0 0.0
        %1188 = vmatprep.subr.mxu0 0.0
        %1189 = vmatpush1.msra.mxu0 0.0
        %1190 = vmatprep.subr.mxu0 0.0
        %1191 = vmatpush1.msra.mxu0 0.0
        %1192 = vmatprep.subr.mxu0 0.0
        %1193 = vmatpush1.msra.mxu0 0.0
        %1194 = vmatprep.subr.mxu0 0.0
        %1195 = vmatpush1.msra.mxu0 0.0
        %1196 = vmatprep.subr.mxu0 0.0
        %1197 = vmatpush1.msra.mxu0 0.0
        %1198 = vmatprep.subr.mxu0 0.0
        %1199 = vmatpush1.msra.mxu0 0.0
        %1200 = vmatprep.subr.mxu0 0.0
        %1201 = vmatpush1.msra.mxu0 0.0
        %1202 = vmatprep.subr.mxu0 0.0
        %1203 = vmatpush1.msra.mxu0 0.0
        %1204 = vmatprep.subr.mxu0 0.0
        %1205 = vmatpush1.msra.mxu0 0.0
        %1206 = vmatprep.subr.mxu0 0.0
        %1207 = vmatpush1.msra.mxu0 0.0
        %1208 = vmatprep.subr.mxu0 0.0
        %1209 = vmatpush1.msra.mxu0 0.0
        %1210 = vmatprep.subr.mxu0 0.0
        %1211 = vmatpush1.msra.mxu0 0.0
        %1212 = vmatprep.subr.mxu0 0.0
        %1213 = vmatpush1.msra.mxu0 0.0
        %1214 = vmatprep.subr.mxu0 0.0
        %1215 = vmatpush1.msra.mxu0 0.0
        %1216 = vmatprep.subr.mxu0 0.0
        %1217 = vmatpush1.msra.mxu0 0.0
        %1218 = vmatprep.mubr.f32.mxu0 0.0
        %1219 = vmatmul.mubr.f32.gmra.mrb[0].mxu0 %v1135
        %v1220 = vpop.f32.mrb[0].mxu0
        %v1221 = vadd.f32 0.0, %v1220
        %v1222 = vpop.f32.mrb[0].mxu0
        %1223 = vmatprep.mubr.f32.mxu0 0.0
        %1224 = vmatmul.mubr.f32.gmra.mrb[0].mxu0 %v1136
        %v1225 = vpop.f32.mrb[0].mxu0
        %v1226 = vadd.f32 0.0, %v1225
        %v1227 = vpop.f32.mrb[0].mxu0
        %1228 = vdwg.mxu0
        %v1229 = vadd.f32 %v1127, %v1221
        %v1230 = vadd.f32 %v1132, %v1226
        %v1231 = vld [vmem:[#allocation6 + $0x1] sm:$0x1]
        %v1232 = vlaneseq
        %v1233 = vshrl.u32 %v1232, 7
        %v1234 = vsub.s32 0, %v1233
        %v1235 = vrot.slane %v1231, %v1234
        %v1236 = vadd.f32 %v1229, %v1235
        %v1237 = vadd.f32 %v1230, %v1235
        %v1238 = vadd.f32 %v1236, %v1237
        %v1239 = vrot.slane %v1238, 4
        %v1240 = vadd.f32 %v1238, %v1239
        %v1241 = vrot.slane %v1240, 2
        %v1242 = vadd.f32 %v1240, %v1241
        %v1243 = vrot.slane %v1242, 1
        %v1244 = vadd.f32 %v1242, %v1243
        %v1245 = vmul.f32 %v1236, %v1236
        %v1246 = vmul.f32 %v1237, %v1237
        %v1247 = vadd.f32 %v1245, %v1246
        %v1248 = vrot.slane %v1247, 4
        %v1249 = vadd.f32 %v1247, %v1248
        %v1250 = vrot.slane %v1249, 2
        %v1251 = vadd.f32 %v1249, %v1250
        %v1252 = vrot.slane %v1251, 1
        %v1253 = vadd.f32 %v1251, %v1252
        %v1254 = vsel %vm810, %v1244, %v1253
        %v1255 = vld [vmem:[#allocation14] sm:$0xff]
        %v1256 = vld [vmem:[#allocation14 + $0x8] sm:$0xff]
        %v1257 = vld [vmem:[#allocation14 + $0x10] sm:$0xff]
        %v1258 = vld [vmem:[#allocation14 + $0x18] sm:$0xff]
        %v1259 = vld [vmem:[#allocation14 + $0x20] sm:$0xff]
        %v1260 = vld [vmem:[#allocation14 + $0x28] sm:$0xff]
        %v1261 = vld [vmem:[#allocation14 + $0x30] sm:$0xff]
        %v1262 = vld [vmem:[#allocation14 + $0x38] sm:$0xff]
        %v1263 = vld [vmem:[#allocation14 + $0x40] sm:$0xff]
        %v1264 = vld [vmem:[#allocation14 + $0x48] sm:$0xff]
        %v1265 = vld [vmem:[#allocation14 + $0x50] sm:$0xff]
        %v1266 = vld [vmem:[#allocation14 + $0x58] sm:$0xff]
        %v1267 = vld [vmem:[#allocation14 + $0x60] sm:$0xff]
        %v1268 = vld [vmem:[#allocation14 + $0x68] sm:$0xff]
        %v1269 = vld [vmem:[#allocation14 + $0x70] sm:$0xff]
        %v1270 = vld [vmem:[#allocation14 + $0x78] sm:$0xff]
        %1271 = vmatprep.subr.mxu0 0.0
        %1272 = vmatpush1.msra.mxu0 %v1255
        %1273 = vmatprep.subr.mxu0 0.0
        %1274 = vmatpush1.msra.mxu0 %v1256
        %1275 = vmatprep.subr.mxu0 0.0
        %1276 = vmatpush1.msra.mxu0 %v1257
        %1277 = vmatprep.subr.mxu0 0.0
        %1278 = vmatpush1.msra.mxu0 %v1258
        %1279 = vmatprep.subr.mxu0 0.0
        %1280 = vmatpush1.msra.mxu0 %v1259
        %1281 = vmatprep.subr.mxu0 0.0
        %1282 = vmatpush1.msra.mxu0 %v1260
        %1283 = vmatprep.subr.mxu0 0.0
        %1284 = vmatpush1.msra.mxu0 %v1261
        %1285 = vmatprep.subr.mxu0 0.0
        %1286 = vmatpush1.msra.mxu0 %v1262
        %1287 = vmatprep.subr.mxu0 0.0
        %1288 = vmatpush1.msra.mxu0 %v1263
        %1289 = vmatprep.subr.mxu0 0.0
        %1290 = vmatpush1.msra.mxu0 %v1264
        %1291 = vmatprep.subr.mxu0 0.0
        %1292 = vmatpush1.msra.mxu0 %v1265
        %1293 = vmatprep.subr.mxu0 0.0
        %1294 = vmatpush1.msra.mxu0 %v1266
        %1295 = vmatprep.subr.mxu0 0.0
        %1296 = vmatpush1.msra.mxu0 %v1267
        %1297 = vmatprep.subr.mxu0 0.0
        %1298 = vmatpush1.msra.mxu0 %v1268
        %1299 = vmatprep.subr.mxu0 0.0
        %1300 = vmatpush1.msra.mxu0 %v1269
        %1301 = vmatprep.subr.mxu0 0.0
        %1302 = vmatpush1.msra.mxu0 %v1270
        %1303 = vmatprep.subr.mxu0 0.0
        %1304 = vmatpush1.msra.mxu0 0.0
        %1305 = vmatprep.subr.mxu0 0.0
        %1306 = vmatpush1.msra.mxu0 0.0
        %1307 = vmatprep.subr.mxu0 0.0
        %1308 = vmatpush1.msra.mxu0 0.0
        %1309 = vmatprep.subr.mxu0 0.0
        %1310 = vmatpush1.msra.mxu0 0.0
        %1311 = vmatprep.subr.mxu0 0.0
        %1312 = vmatpush1.msra.mxu0 0.0
        %1313 = vmatprep.subr.mxu0 0.0
        %1314 = vmatpush1.msra.mxu0 0.0
        %1315 = vmatprep.subr.mxu0 0.0
        %1316 = vmatpush1.msra.mxu0 0.0
        %1317 = vmatprep.subr.mxu0 0.0
        %1318 = vmatpush1.msra.mxu0 0.0
        %1319 = vmatprep.subr.mxu0 0.0
        %1320 = vmatpush1.msra.mxu0 0.0
        %1321 = vmatprep.subr.mxu0 0.0
        %1322 = vmatpush1.msra.mxu0 0.0
        %1323 = vmatprep.subr.mxu0 0.0
        %1324 = vmatpush1.msra.mxu0 0.0
        %1325 = vmatprep.subr.mxu0 0.0
        %1326 = vmatpush1.msra.mxu0 0.0
        %1327 = vmatprep.subr.mxu0 0.0
        %1328 = vmatpush1.msra.mxu0 0.0
        %1329 = vmatprep.subr.mxu0 0.0
        %1330 = vmatpush1.msra.mxu0 0.0
        %1331 = vmatprep.subr.mxu0 0.0
        %1332 = vmatpush1.msra.mxu0 0.0
        %1333 = vmatprep.subr.mxu0 0.0
        %1334 = vmatpush1.msra.mxu0 0.0
        %1335 = vmatprep.mubr.f32.mxu0 0.0
        %1336 = vmatmul.mubr.f32.gmra.mrb[0].mxu0 %v1254
        %v1337 = vpop.f32.mrb[0].mxu0
        %v1338 = vadd.f32 0.0, %v1337
        %v1339 = vpop.f32.mrb[0].mxu0
        %1340 = vdwg.mxu0
        %v1341 = vmul.f32 %v1338, %v1338
        %v1343 = vrot.slane %v1341, 7
        %v1345 = vsub.f32 %v1338, %v1343
        %v1346 = vlaneseq
        %v1347 = vshrl.u32 %v1346, 7
        %v1348 = vsub.s32 0, %v1347
        %v1349 = vrot.slane %v1338, %v1348
        %v1350 = vsub.f32 %v1236, %v1349
        %v1351 = vsub.f32 %v1237, %v1349
        %v1352 = vadd.f32 %v1345, 1e-05
        %v1353 = vrsqrt.pop %v1352
        %v1354 = vlaneseq
        %v1355 = vshrl.u32 %v1354, 7
        %v1356 = vsub.s32 1, %v1355
        %v1357 = vrot.slane %v1353, %v1356
        %v1358 = vmul.f32 %v1350, %v1357
        %v1359 = vmul.f32 %v1351, %v1357
        %v1360 = vld [vmem:[#allocation8 + $0x1] sm:$0x1]
        %v1361 = vlaneseq
        %v1362 = vshrl.u32 %v1361, 7
        %v1363 = vsub.s32 0, %v1362
        %v1364 = vrot.slane %v1360, %v1363
        %v1365 = vmul.f32 %v1358, %v1364
        %v1366 = vmul.f32 %v1359, %v1364
        %v1367 = vld [vmem:[#allocation9 + $0x1] sm:$0x1]
        %v1368 = vlaneseq
        %v1369 = vshrl.u32 %v1368, 7
        %v1370 = vsub.s32 0, %v1369
        %v1371 = vrot.slane %v1367, %v1370
        %v1372 = vadd.f32 %v1365, %v1371
        %v1373 = vadd.f32 %v1366, %v1371
        %v1374 = vxor.u32 %v1372, 2147483648
        %v1375 = vxor.u32 %v1373, 2147483648
        %v1376 = vmul.f32 %v1374, 1.442695
        %v1377 = vpow.pop %v1376
        %v1378 = vmul.f32 %v1375, 1.442695
        %v1379 = vpow.pop %v1378
        %v1380 = vadd.f32 %v1377, 1.0
        %v1381 = vadd.f32 %v1379, 1.0
        %v1382 = vrcp.pop %v1380
        %v1383 = vmul.f32 1.0, %v1382
        %v1384 = vrcp.pop %v1381
        %v1385 = vmul.f32 1.0, %v1384
        %v1386 = vmul.f32 %v1372, %v1383
        %v1387 = vmul.f32 %v1373, %v1385
        %v1388 = vadd.f32 %v1386, %v500
        %v1389 = vadd.f32 %v1387, %v501
        %1390 = vst [vmem:[#allocation2 + $0x1] sm:$0xff] %v1388
        %1391 = vst [vmem:[#allocation2 + $0x9] sm:$0xff] %v1389
        %v1392 = vld [vmem:[#allocation2] sm:$0xff]
        %v1393 = vld [vmem:[#allocation2 + $0x8] sm:$0xff]
        %s1394 = scalar_lea.vmem [#allocation4], 768
        %v1395 = vld [vmem:[%s1394] sm:$0xff]
        %v1396 = vld [vmem:[%s1394 + $0x8] sm:$0xff]
        %v1397 = vld [vmem:[%s1394 + $0x10] sm:$0xff]
        %v1398 = vld [vmem:[%s1394 + $0x18] sm:$0xff]
        %v1399 = vld [vmem:[%s1394 + $0x20] sm:$0xff]
        %v1400 = vld [vmem:[%s1394 + $0x28] sm:$0xff]
        %v1401 = vld [vmem:[%s1394 + $0x30] sm:$0xff]
        %v1402 = vld [vmem:[%s1394 + $0x38] sm:$0xff]
        %v1403 = vld [vmem:[%s1394 + $0x40] sm:$0xff]
        %v1404 = vld [vmem:[%s1394 + $0x48] sm:$0xff]
        %v1405 = vld [vmem:[%s1394 + $0x50] sm:$0xff]
        %v1406 = vld [vmem:[%s1394 + $0x58] sm:$0xff]
        %v1407 = vld [vmem:[%s1394 + $0x60] sm:$0xff]
        %v1408 = vld [vmem:[%s1394 + $0x68] sm:$0xff]
        %v1409 = vld [vmem:[%s1394 + $0x70] sm:$0xff]
        %v1410 = vld [vmem:[%s1394 + $0x78] sm:$0xff]
        %v1411 = vld [vmem:[#allocation2 + $0x1] sm:$0xff]
        %v1412 = vld [vmem:[#allocation2 + $0x9] sm:$0xff]
        %s1413 = scalar_lea.vmem [#allocation4], 896
        %v1414 = vld [vmem:[%s1413] sm:$0xff]
        %v1415 = vld [vmem:[%s1413 + $0x8] sm:$0xff]
        %v1416 = vld [vmem:[%s1413 + $0x10] sm:$0xff]
        %v1417 = vld [vmem:[%s1413 + $0x18] sm:$0xff]
        %v1418 = vld [vmem:[%s1413 + $0x20] sm:$0xff]
        %v1419 = vld [vmem:[%s1413 + $0x28] sm:$0xff]
        %v1420 = vld [vmem:[%s1413 + $0x30] sm:$0xff]
        %v1421 = vld [vmem:[%s1413 + $0x38] sm:$0xff]
        %v1422 = vld [vmem:[%s1413 + $0x40] sm:$0xff]
        %v1423 = vld [vmem:[%s1413 + $0x48] sm:$0xff]
        %v1424 = vld [vmem:[%s1413 + $0x50] sm:$0xff]
        %v1425 = vld [vmem:[%s1413 + $0x58] sm:$0xff]
        %v1426 = vld [vmem:[%s1413 + $0x60] sm:$0xff]
        %v1427 = vld [vmem:[%s1413 + $0x68] sm:$0xff]
        %v1428 = vld [vmem:[%s1413 + $0x70] sm:$0xff]
        %v1429 = vld [vmem:[%s1413 + $0x78] sm:$0xff]
        %1430 = vmatprep.subr.mxu0 0.0
        %1431 = vmatpush1.msra.mxu0 %v1414
        %1432 = vmatprep.subr.mxu0 0.0
        %1433 = vmatpush1.msra.mxu0 %v1415
        %1434 = vmatprep.subr.mxu0 0.0
        %1435 = vmatpush1.msra.mxu0 %v1416
        %1436 = vmatprep.subr.mxu0 0.0
        %1437 = vmatpush1.msra.mxu0 %v1417
        %1438 = vmatprep.subr.mxu0 0.0
        %1439 = vmatpush1.msra.mxu0 %v1418
        %1440 = vmatprep.subr.mxu0 0.0
        %1441 = vmatpush1.msra.mxu0 %v1419
        %1442 = vmatprep.subr.mxu0 0.0
        %1443 = vmatpush1.msra.mxu0 %v1420
        %1444 = vmatprep.subr.mxu0 0.0
        %1445 = vmatpush1.msra.mxu0 %v1421
        %1446 = vmatprep.subr.mxu0 0.0
        %1447 = vmatpush1.msra.mxu0 %v1422
        %1448 = vmatprep.subr.mxu0 0.0
        %1449 = vmatpush1.msra.mxu0 %v1423
        %1450 = vmatprep.subr.mxu0 0.0
        %1451 = vmatpush1.msra.mxu0 %v1424
        %1452 = vmatprep.subr.mxu0 0.0
        %1453 = vmatpush1.msra.mxu0 %v1425
        %1454 = vmatprep.subr.mxu0 0.0
        %1455 = vmatpush1.msra.mxu0 %v1426
        %1456 = vmatprep.subr.mxu0 0.0
        %1457 = vmatpush1.msra.mxu0 %v1427
        %1458 = vmatprep.subr.mxu0 0.0
        %1459 = vmatpush1.msra.mxu0 %v1428
        %1460 = vmatprep.subr.mxu0 0.0
        %1461 = vmatpush1.msra.mxu0 %v1429
        %1462 = vmatprep.subr.mxu0 0.0
        %1463 = vmatpush1.msra.mxu0 0.0
        %1464 = vmatprep.subr.mxu0 0.0
        %1465 = vmatpush1.msra.mxu0 0.0
        %1466 = vmatprep.subr.mxu0 0.0
        %1467 = vmatpush1.msra.mxu0 0.0
        %1468 = vmatprep.subr.mxu0 0.0
        %1469 = vmatpush1.msra.mxu0 0.0
        %1470 = vmatprep.subr.mxu0 0.0
        %1471 = vmatpush1.msra.mxu0 0.0
        %1472 = vmatprep.subr.mxu0 0.0
        %1473 = vmatpush1.msra.mxu0 0.0
        %1474 = vmatprep.subr.mxu0 0.0
        %1475 = vmatpush1.msra.mxu0 0.0
        %1476 = vmatprep.subr.mxu0 0.0
        %1477 = vmatpush1.msra.mxu0 0.0
        %1478 = vmatprep.subr.mxu0 0.0
        %1479 = vmatpush1.msra.mxu0 0.0
        %1480 = vmatprep.subr.mxu0 0.0
        %1481 = vmatpush1.msra.mxu0 0.0
        %1482 = vmatprep.subr.mxu0 0.0
        %1483 = vmatpush1.msra.mxu0 0.0
        %1484 = vmatprep.subr.mxu0 0.0
        %1485 = vmatpush1.msra.mxu0 0.0
        %1486 = vmatprep.subr.mxu0 0.0
        %1487 = vmatpush1.msra.mxu0 0.0
        %1488 = vmatprep.subr.mxu0 0.0
        %1489 = vmatpush1.msra.mxu0 0.0
        %1490 = vmatprep.subr.mxu0 0.0
        %1491 = vmatpush1.msra.mxu0 0.0
        %1492 = vmatprep.subr.mxu0 0.0
        %1493 = vmatpush1.msra.mxu0 0.0
        %1494 = vmatprep.mubr.f32.mxu0 0.0
        %1495 = vmatmul.mubr.f32.gmra.mrb[0].mxu0 %v1411
        %v1496 = vpop.f32.mrb[0].mxu0
        %v1497 = vadd.f32 0.0, %v1496
        %v1498 = vpop.f32.mrb[0].mxu0
        %1499 = vmatprep.mubr.f32.mxu0 0.0
        %1500 = vmatmul.mubr.f32.gmra.mrb[0].mxu0 %v1412
        %v1501 = vpop.f32.mrb[0].mxu0
        %v1502 = vadd.f32 0.0, %v1501
        %v1503 = vpop.f32.mrb[0].mxu0
        %1504 = vdwg.mxu0
        %1505 = vmatprep.subr.mxu0 0.0
        %1506 = vmatpush1.msra.mxu0 %v1395
        %1507 = vmatprep.subr.mxu0 0.0
        %1508 = vmatpush1.msra.mxu0 %v1396
        %1509 = vmatprep.subr.mxu0 0.0
        %1510 = vmatpush1.msra.mxu0 %v1397
        %1511 = vmatprep.subr.mxu0 0.0
        %1512 = vmatpush1.msra.mxu0 %v1398
        %1513 = vmatprep.subr.mxu0 0.0
        %1514 = vmatpush1.msra.mxu0 %v1399
        %1515 = vmatprep.subr.mxu0 0.0
        %1516 = vmatpush1.msra.mxu0 %v1400
        %1517 = vmatprep.subr.mxu0 0.0
        %1518 = vmatpush1.msra.mxu0 %v1401
        %1519 = vmatprep.subr.mxu0 0.0
        %1520 = vmatpush1.msra.mxu0 %v1402
        %1521 = vmatprep.subr.mxu0 0.0
        %1522 = vmatpush1.msra.mxu0 %v1403
        %1523 = vmatprep.subr.mxu0 0.0
        %1524 = vmatpush1.msra.mxu0 %v1404
        %1525 = vmatprep.subr.mxu0 0.0
        %1526 = vmatpush1.msra.mxu0 %v1405
        %1527 = vmatprep.subr.mxu0 0.0
        %1528 = vmatpush1.msra.mxu0 %v1406
        %1529 = vmatprep.subr.mxu0 0.0
        %1530 = vmatpush1.msra.mxu0 %v1407
        %1531 = vmatprep.subr.mxu0 0.0
        %1532 = vmatpush1.msra.mxu0 %v1408
        %1533 = vmatprep.subr.mxu0 0.0
        %1534 = vmatpush1.msra.mxu0 %v1409
        %1535 = vmatprep.subr.mxu0 0.0
        %1536 = vmatpush1.msra.mxu0 %v1410
        %1537 = vmatprep.subr.mxu0 0.0
        %1538 = vmatpush1.msra.mxu0 0.0
        %1539 = vmatprep.subr.mxu0 0.0
        %1540 = vmatpush1.msra.mxu0 0.0
        %1541 = vmatprep.subr.mxu0 0.0
        %1542 = vmatpush1.msra.mxu0 0.0
        %1543 = vmatprep.subr.mxu0 0.0
        %1544 = vmatpush1.msra.mxu0 0.0
        %1545 = vmatprep.subr.mxu0 0.0
        %1546 = vmatpush1.msra.mxu0 0.0
        %1547 = vmatprep.subr.mxu0 0.0
        %1548 = vmatpush1.msra.mxu0 0.0
        %1549 = vmatprep.subr.mxu0 0.0
        %1550 = vmatpush1.msra.mxu0 0.0
        %1551 = vmatprep.subr.mxu0 0.0
        %1552 = vmatpush1.msra.mxu0 0.0
        %1553 = vmatprep.subr.mxu0 0.0
        %1554 = vmatpush1.msra.mxu0 0.0
        %1555 = vmatprep.subr.mxu0 0.0
        %1556 = vmatpush1.msra.mxu0 0.0
        %1557 = vmatprep.subr.mxu0 0.0
        %1558 = vmatpush1.msra.mxu0 0.0
        %1559 = vmatprep.subr.mxu0 0.0
        %1560 = vmatpush1.msra.mxu0 0.0
        %1561 = vmatprep.subr.mxu0 0.0
        %1562 = vmatpush1.msra.mxu0 0.0
        %1563 = vmatprep.subr.mxu0 0.0
        %1564 = vmatpush1.msra.mxu0 0.0
        %1565 = vmatprep.subr.mxu0 0.0
        %1566 = vmatpush1.msra.mxu0 0.0
        %1567 = vmatprep.subr.mxu0 0.0
        %1568 = vmatpush1.msra.mxu0 0.0
        %1569 = vmatprep.mubr.f32.mxu0 0.0
        %1570 = vmatmul.mubr.f32.gmra.mrb[0].mxu0 %v1392
        %v1571 = vpop.f32.mrb[0].mxu0
        %v1572 = vadd.f32 %v1497, %v1571
        %v1573 = vpop.f32.mrb[0].mxu0
        %1574 = vmatprep.mubr.f32.mxu0 0.0
        %1575 = vmatmul.mubr.f32.gmra.mrb[0].mxu0 %v1393
        %v1576 = vpop.f32.mrb[0].mxu0
        %v1577 = vadd.f32 %v1502, %v1576
        %v1578 = vpop.f32.mrb[0].mxu0
        %1579 = vdwg.mxu0
        %v1580 = vld [vmem:[#allocation2 + $0x2] sm:$0xff]
        %v1581 = vld [vmem:[#allocation2 + $0xa] sm:$0xff]
        %s1582 = scalar_lea.vmem [#allocation4], 1024
        %v1583 = vld [vmem:[%s1582] sm:$0xff]
        %v1584 = vld [vmem:[%s1582 + $0x8] sm:$0xff]
        %v1585 = vld [vmem:[%s1582 + $0x10] sm:$0xff]
        %v1586 = vld [vmem:[%s1582 + $0x18] sm:$0xff]
        %v1587 = vld [vmem:[%s1582 + $0x20] sm:$0xff]
        %v1588 = vld [vmem:[%s1582 + $0x28] sm:$0xff]
        %v1589 = vld [vmem:[%s1582 + $0x30] sm:$0xff]
        %v1590 = vld [vmem:[%s1582 + $0x38] sm:$0xff]
        %v1591 = vld [vmem:[%s1582 + $0x40] sm:$0xff]
        %v1592 = vld [vmem:[%s1582 + $0x48] sm:$0xff]
        %v1593 = vld [vmem:[%s1582 + $0x50] sm:$0xff]
        %v1594 = vld [vmem:[%s1582 + $0x58] sm:$0xff]
        %v1595 = vld [vmem:[%s1582 + $0x60] sm:$0xff]
        %v1596 = vld [vmem:[%s1582 + $0x68] sm:$0xff]
        %v1597 = vld [vmem:[%s1582 + $0x70] sm:$0xff]
        %v1598 = vld [vmem:[%s1582 + $0x78] sm:$0xff]
        %1599 = vmatprep.subr.mxu0 0.0
        %1600 = vmatpush1.msra.mxu0 %v1583
        %1601 = vmatprep.subr.mxu0 0.0
        %1602 = vmatpush1.msra.mxu0 %v1584
        %1603 = vmatprep.subr.mxu0 0.0
        %1604 = vmatpush1.msra.mxu0 %v1585
        %1605 = vmatprep.subr.mxu0 0.0
        %1606 = vmatpush1.msra.mxu0 %v1586
        %1607 = vmatprep.subr.mxu0 0.0
        %1608 = vmatpush1.msra.mxu0 %v1587
        %1609 = vmatprep.subr.mxu0 0.0
        %1610 = vmatpush1.msra.mxu0 %v1588
        %1611 = vmatprep.subr.mxu0 0.0
        %1612 = vmatpush1.msra.mxu0 %v1589
        %1613 = vmatprep.subr.mxu0 0.0
        %1614 = vmatpush1.msra.mxu0 %v1590
        %1615 = vmatprep.subr.mxu0 0.0
        %1616 = vmatpush1.msra.mxu0 %v1591
        %1617 = vmatprep.subr.mxu0 0.0
        %1618 = vmatpush1.msra.mxu0 %v1592
        %1619 = vmatprep.subr.mxu0 0.0
        %1620 = vmatpush1.msra.mxu0 %v1593
        %1621 = vmatprep.subr.mxu0 0.0
        %1622 = vmatpush1.msra.mxu0 %v1594
        %1623 = vmatprep.subr.mxu0 0.0
        %1624 = vmatpush1.msra.mxu0 %v1595
        %1625 = vmatprep.subr.mxu0 0.0
        %1626 = vmatpush1.msra.mxu0 %v1596
        %1627 = vmatprep.subr.mxu0 0.0
        %1628 = vmatpush1.msra.mxu0 %v1597
        %1629 = vmatprep.subr.mxu0 0.0
        %1630 = vmatpush1.msra.mxu0 %v1598
        %1631 = vmatprep.subr.mxu0 0.0
        %1632 = vmatpush1.msra.mxu0 0.0
        %1633 = vmatprep.subr.mxu0 0.0
        %1634 = vmatpush1.msra.mxu0 0.0
        %1635 = vmatprep.subr.mxu0 0.0
        %1636 = vmatpush1.msra.mxu0 0.0
        %1637 = vmatprep.subr.mxu0 0.0
        %1638 = vmatpush1.msra.mxu0 0.0
        %1639 = vmatprep.subr.mxu0 0.0
        %1640 = vmatpush1.msra.mxu0 0.0
        %1641 = vmatprep.subr.mxu0 0.0
        %1642 = vmatpush1.msra.mxu0 0.0
        %1643 = vmatprep.subr.mxu0 0.0
        %1644 = vmatpush1.msra.mxu0 0.0
        %1645 = vmatprep.subr.mxu0 0.0
        %1646 = vmatpush1.msra.mxu0 0.0
        %1647 = vmatprep.subr.mxu0 0.0
        %1648 = vmatpush1.msra.mxu0 0.0
        %1649 = vmatprep.subr.mxu0 0.0
        %1650 = vmatpush1.msra.mxu0 0.0
        %1651 = vmatprep.subr.mxu0 0.0
        %1652 = vmatpush1.msra.mxu0 0.0
        %1653 = vmatprep.subr.mxu0 0.0
        %1654 = vmatpush1.msra.mxu0 0.0
        %1655 = vmatprep.subr.mxu0 0.0
        %1656 = vmatpush1.msra.mxu0 0.0
        %1657 = vmatprep.subr.mxu0 0.0
        %1658 = vmatpush1.msra.mxu0 0.0
        %1659 = vmatprep.subr.mxu0 0.0
        %1660 = vmatpush1.msra.mxu0 0.0
        %1661 = vmatprep.subr.mxu0 0.0
        %1662 = vmatpush1.msra.mxu0 0.0
        %1663 = vmatprep.mubr.f32.mxu0 0.0
        %1664 = vmatmul.mubr.f32.gmra.mrb[0].mxu0 %v1580
        %v1665 = vpop.f32.mrb[0].mxu0
        %v1666 = vadd.f32 0.0, %v1665
        %v1667 = vpop.f32.mrb[0].mxu0
        %1668 = vmatprep.mubr.f32.mxu0 0.0
        %1669 = vmatmul.mubr.f32.gmra.mrb[0].mxu0 %v1581
        %v1670 = vpop.f32.mrb[0].mxu0
        %v1671 = vadd.f32 0.0, %v1670
        %v1672 = vpop.f32.mrb[0].mxu0
        %1673 = vdwg.mxu0
        %v1674 = vadd.f32 %v1572, %v1666
        %v1675 = vadd.f32 %v1577, %v1671
        %v1676 = vld [vmem:[#allocation6 + $0x2] sm:$0x1]
        %v1677 = vlaneseq
        %v1678 = vshrl.u32 %v1677, 7
        %v1679 = vsub.s32 0, %v1678
        %v1680 = vrot.slane %v1676, %v1679
        %v1681 = vadd.f32 %v1674, %v1680
        %v1682 = vadd.f32 %v1675, %v1680
        %v1683 = vadd.f32 %v1681, %v1682
        %v1684 = vrot.slane %v1683, 4
        %v1685 = vadd.f32 %v1683, %v1684
        %v1686 = vrot.slane %v1685, 2
        %v1687 = vadd.f32 %v1685, %v1686
        %v1688 = vrot.slane %v1687, 1
        %v1689 = vadd.f32 %v1687, %v1688
        %v1690 = vmul.f32 %v1681, %v1681
        %v1691 = vmul.f32 %v1682, %v1682
        %v1692 = vadd.f32 %v1690, %v1691
        %v1693 = vrot.slane %v1692, 4
        %v1694 = vadd.f32 %v1692, %v1693
        %v1695 = vrot.slane %v1694, 2
        %v1696 = vadd.f32 %v1694, %v1695
        %v1697 = vrot.slane %v1696, 1
        %v1698 = vadd.f32 %v1696, %v1697
        %v1699 = vsel %vm810, %v1689, %v1698
        %v1700 = vld [vmem:[#allocation14] sm:$0xff]
        %v1701 = vld [vmem:[#allocation14 + $0x8] sm:$0xff]
        %v1702 = vld [vmem:[#allocation14 + $0x10] sm:$0xff]
        %v1703 = vld [vmem:[#allocation14 + $0x18] sm:$0xff]
        %v1704 = vld [vmem:[#allocation14 + $0x20] sm:$0xff]
        %v1705 = vld [vmem:[#allocation14 + $0x28] sm:$0xff]
        %v1706 = vld [vmem:[#allocation14 + $0x30] sm:$0xff]
        %v1707 = vld [vmem:[#allocation14 + $0x38] sm:$0xff]
        %v1708 = vld [vmem:[#allocation14 + $0x40] sm:$0xff]
        %v1709 = vld [vmem:[#allocation14 + $0x48] sm:$0xff]
        %v1710 = vld [vmem:[#allocation14 + $0x50] sm:$0xff]
        %v1711 = vld [vmem:[#allocation14 + $0x58] sm:$0xff]
        %v1712 = vld [vmem:[#allocation14 + $0x60] sm:$0xff]
        %v1713 = vld [vmem:[#allocation14 + $0x68] sm:$0xff]
        %v1714 = vld [vmem:[#allocation14 + $0x70] sm:$0xff]
        %v1715 = vld [vmem:[#allocation14 + $0x78] sm:$0xff]
        %1716 = vmatprep.subr.mxu0 0.0
        %1717 = vmatpush1.msra.mxu0 %v1700
        %1718 = vmatprep.subr.mxu0 0.0
        %1719 = vmatpush1.msra.mxu0 %v1701
        %1720 = vmatprep.subr.mxu0 0.0
        %1721 = vmatpush1.msra.mxu0 %v1702
        %1722 = vmatprep.subr.mxu0 0.0
        %1723 = vmatpush1.msra.mxu0 %v1703
        %1724 = vmatprep.subr.mxu0 0.0
        %1725 = vmatpush1.msra.mxu0 %v1704
        %1726 = vmatprep.subr.mxu0 0.0
        %1727 = vmatpush1.msra.mxu0 %v1705
        %1728 = vmatprep.subr.mxu0 0.0
        %1729 = vmatpush1.msra.mxu0 %v1706
        %1730 = vmatprep.subr.mxu0 0.0
        %1731 = vmatpush1.msra.mxu0 %v1707
        %1732 = vmatprep.subr.mxu0 0.0
        %1733 = vmatpush1.msra.mxu0 %v1708
        %1734 = vmatprep.subr.mxu0 0.0
        %1735 = vmatpush1.msra.mxu0 %v1709
        %1736 = vmatprep.subr.mxu0 0.0
        %1737 = vmatpush1.msra.mxu0 %v1710
        %1738 = vmatprep.subr.mxu0 0.0
        %1739 = vmatpush1.msra.mxu0 %v1711
        %1740 = vmatprep.subr.mxu0 0.0
        %1741 = vmatpush1.msra.mxu0 %v1712
        %1742 = vmatprep.subr.mxu0 0.0
        %1743 = vmatpush1.msra.mxu0 %v1713
        %1744 = vmatprep.subr.mxu0 0.0
        %1745 = vmatpush1.msra.mxu0 %v1714
        %1746 = vmatprep.subr.mxu0 0.0
        %1747 = vmatpush1.msra.mxu0 %v1715
        %1748 = vmatprep.subr.mxu0 0.0
        %1749 = vmatpush1.msra.mxu0 0.0
        %1750 = vmatprep.subr.mxu0 0.0
        %1751 = vmatpush1.msra.mxu0 0.0
        %1752 = vmatprep.subr.mxu0 0.0
        %1753 = vmatpush1.msra.mxu0 0.0
        %1754 = vmatprep.subr.mxu0 0.0
        %1755 = vmatpush1.msra.mxu0 0.0
        %1756 = vmatprep.subr.mxu0 0.0
        %1757 = vmatpush1.msra.mxu0 0.0
        %1758 = vmatprep.subr.mxu0 0.0
        %1759 = vmatpush1.msra.mxu0 0.0
        %1760 = vmatprep.subr.mxu0 0.0
        %1761 = vmatpush1.msra.mxu0 0.0
        %1762 = vmatprep.subr.mxu0 0.0
        %1763 = vmatpush1.msra.mxu0 0.0
        %1764 = vmatprep.subr.mxu0 0.0
        %1765 = vmatpush1.msra.mxu0 0.0
        %1766 = vmatprep.subr.mxu0 0.0
        %1767 = vmatpush1.msra.mxu0 0.0
        %1768 = vmatprep.subr.mxu0 0.0
        %1769 = vmatpush1.msra.mxu0 0.0
        %1770 = vmatprep.subr.mxu0 0.0
        %1771 = vmatpush1.msra.mxu0 0.0
        %1772 = vmatprep.subr.mxu0 0.0
        %1773 = vmatpush1.msra.mxu0 0.0
        %1774 = vmatprep.subr.mxu0 0.0
        %1775 = vmatpush1.msra.mxu0 0.0
        %1776 = vmatprep.subr.mxu0 0.0
        %1777 = vmatpush1.msra.mxu0 0.0
        %1778 = vmatprep.subr.mxu0 0.0
        %1779 = vmatpush1.msra.mxu0 0.0
        %1780 = vmatprep.mubr.f32.mxu0 0.0
        %1781 = vmatmul.mubr.f32.gmra.mrb[0].mxu0 %v1699
        %v1782 = vpop.f32.mrb[0].mxu0
        %v1783 = vadd.f32 0.0, %v1782
        %v1784 = vpop.f32.mrb[0].mxu0
        %1785 = vdwg.mxu0
        %v1786 = vmul.f32 %v1783, %v1783
        %v1788 = vrot.slane %v1786, 7
        %v1790 = vsub.f32 %v1783, %v1788
        %v1791 = vlaneseq
        %v1792 = vshrl.u32 %v1791, 7
        %v1793 = vsub.s32 0, %v1792
        %v1794 = vrot.slane %v1783, %v1793
        %v1795 = vsub.f32 %v1681, %v1794
        %v1796 = vsub.f32 %v1682, %v1794
        %v1797 = vadd.f32 %v1790, 1e-05
        %v1798 = vrsqrt.pop %v1797
        %v1799 = vlaneseq
        %v1800 = vshrl.u32 %v1799, 7
        %v1801 = vsub.s32 1, %v1800
        %v1802 = vrot.slane %v1798, %v1801
        %v1803 = vmul.f32 %v1795, %v1802
        %v1804 = vmul.f32 %v1796, %v1802
        %v1805 = vld [vmem:[#allocation8 + $0x2] sm:$0x1]
        %v1806 = vlaneseq
        %v1807 = vshrl.u32 %v1806, 7
        %v1808 = vsub.s32 0, %v1807
        %v1809 = vrot.slane %v1805, %v1808
        %v1810 = vmul.f32 %v1803, %v1809
        %v1811 = vmul.f32 %v1804, %v1809
        %v1812 = vld [vmem:[#allocation9 + $0x2] sm:$0x1]
        %v1813 = vlaneseq
        %v1814 = vshrl.u32 %v1813, 7
        %v1815 = vsub.s32 0, %v1814
        %v1816 = vrot.slane %v1812, %v1815
        %v1817 = vadd.f32 %v1810, %v1816
        %v1818 = vadd.f32 %v1811, %v1816
        %v1819 = vxor.u32 %v1817, 2147483648
        %v1820 = vxor.u32 %v1818, 2147483648
        %v1821 = vmul.f32 %v1819, 1.442695
        %v1822 = vpow.pop %v1821
        %v1823 = vmul.f32 %v1820, 1.442695
        %v1824 = vpow.pop %v1823
        %v1825 = vadd.f32 %v1822, 1.0
        %v1826 = vadd.f32 %v1824, 1.0
        %v1827 = vrcp.pop %v1825
        %v1828 = vmul.f32 1.0, %v1827
        %v1829 = vrcp.pop %v1826
        %v1830 = vmul.f32 1.0, %v1829
        %v1831 = vmul.f32 %v1817, %v1828
        %v1832 = vmul.f32 %v1818, %v1830
        %1833 = vst [vmem:[#allocation2 + $0x1] sm:$0xff] %v1831
        %1834 = vst [vmem:[#allocation2 + $0x9] sm:$0xff] %v1832
        %v1835 = vld [vmem:[#allocation2] sm:$0xff]
        %v1836 = vld [vmem:[#allocation2 + $0x8] sm:$0xff]
        %s1837 = scalar_lea.vmem [#allocation4], 1152
        %v1838 = vld [vmem:[%s1837] sm:$0xff]
        %v1839 = vld [vmem:[%s1837 + $0x8] sm:$0xff]
        %v1840 = vld [vmem:[%s1837 + $0x10] sm:$0xff]
        %v1841 = vld [vmem:[%s1837 + $0x18] sm:$0xff]
        %v1842 = vld [vmem:[%s1837 + $0x20] sm:$0xff]
        %v1843 = vld [vmem:[%s1837 + $0x28] sm:$0xff]
        %v1844 = vld [vmem:[%s1837 + $0x30] sm:$0xff]
        %v1845 = vld [vmem:[%s1837 + $0x38] sm:$0xff]
        %v1846 = vld [vmem:[%s1837 + $0x40] sm:$0xff]
        %v1847 = vld [vmem:[%s1837 + $0x48] sm:$0xff]
        %v1848 = vld [vmem:[%s1837 + $0x50] sm:$0xff]
        %v1849 = vld [vmem:[%s1837 + $0x58] sm:$0xff]
        %v1850 = vld [vmem:[%s1837 + $0x60] sm:$0xff]
        %v1851 = vld [vmem:[%s1837 + $0x68] sm:$0xff]
        %v1852 = vld [vmem:[%s1837 + $0x70] sm:$0xff]
        %v1853 = vld [vmem:[%s1837 + $0x78] sm:$0xff]
        %v1854 = vld [vmem:[#allocation2 + $0x1] sm:$0xff]
        %v1855 = vld [vmem:[#allocation2 + $0x9] sm:$0xff]
        %s1856 = scalar_lea.vmem [#allocation4], 1280
        %v1857 = vld [vmem:[%s1856] sm:$0xff]
        %v1858 = vld [vmem:[%s1856 + $0x8] sm:$0xff]
        %v1859 = vld [vmem:[%s1856 + $0x10] sm:$0xff]
        %v1860 = vld [vmem:[%s1856 + $0x18] sm:$0xff]
        %v1861 = vld [vmem:[%s1856 + $0x20] sm:$0xff]
        %v1862 = vld [vmem:[%s1856 + $0x28] sm:$0xff]
        %v1863 = vld [vmem:[%s1856 + $0x30] sm:$0xff]
        %v1864 = vld [vmem:[%s1856 + $0x38] sm:$0xff]
        %v1865 = vld [vmem:[%s1856 + $0x40] sm:$0xff]
        %v1866 = vld [vmem:[%s1856 + $0x48] sm:$0xff]
        %v1867 = vld [vmem:[%s1856 + $0x50] sm:$0xff]
        %v1868 = vld [vmem:[%s1856 + $0x58] sm:$0xff]
        %v1869 = vld [vmem:[%s1856 + $0x60] sm:$0xff]
        %v1870 = vld [vmem:[%s1856 + $0x68] sm:$0xff]
        %v1871 = vld [vmem:[%s1856 + $0x70] sm:$0xff]
        %v1872 = vld [vmem:[%s1856 + $0x78] sm:$0xff]
        %1873 = vmatprep.subr.mxu0 0.0
        %1874 = vmatpush1.msra.mxu0 %v1857
        %1875 = vmatprep.subr.mxu0 0.0
        %1876 = vmatpush1.msra.mxu0 %v1858
        %1877 = vmatprep.subr.mxu0 0.0
        %1878 = vmatpush1.msra.mxu0 %v1859
        %1879 = vmatprep.subr.mxu0 0.0
        %1880 = vmatpush1.msra.mxu0 %v1860
        %1881 = vmatprep.subr.mxu0 0.0
        %1882 = vmatpush1.msra.mxu0 %v1861
        %1883 = vmatprep.subr.mxu0 0.0
        %1884 = vmatpush1.msra.mxu0 %v1862
        %1885 = vmatprep.subr.mxu0 0.0
        %1886 = vmatpush1.msra.mxu0 %v1863
        %1887 = vmatprep.subr.mxu0 0.0
        %1888 = vmatpush1.msra.mxu0 %v1864
        %1889 = vmatprep.subr.mxu0 0.0
        %1890 = vmatpush1.msra.mxu0 %v1865
        %1891 = vmatprep.subr.mxu0 0.0
        %1892 = vmatpush1.msra.mxu0 %v1866
        %1893 = vmatprep.subr.mxu0 0.0
        %1894 = vmatpush1.msra.mxu0 %v1867
        %1895 = vmatprep.subr.mxu0 0.0
        %1896 = vmatpush1.msra.mxu0 %v1868
        %1897 = vmatprep.subr.mxu0 0.0
        %1898 = vmatpush1.msra.mxu0 %v1869
        %1899 = vmatprep.subr.mxu0 0.0
        %1900 = vmatpush1.msra.mxu0 %v1870
        %1901 = vmatprep.subr.mxu0 0.0
        %1902 = vmatpush1.msra.mxu0 %v1871
        %1903 = vmatprep.subr.mxu0 0.0
        %1904 = vmatpush1.msra.mxu0 %v1872
        %1905 = vmatprep.subr.mxu0 0.0
        %1906 = vmatpush1.msra.mxu0 0.0
        %1907 = vmatprep.subr.mxu0 0.0
        %1908 = vmatpush1.msra.mxu0 0.0
        %1909 = vmatprep.subr.mxu0 0.0
        %1910 = vmatpush1.msra.mxu0 0.0
        %1911 = vmatprep.subr.mxu0 0.0
        %1912 = vmatpush1.msra.mxu0 0.0
        %1913 = vmatprep.subr.mxu0 0.0
        %1914 = vmatpush1.msra.mxu0 0.0
        %1915 = vmatprep.subr.mxu0 0.0
        %1916 = vmatpush1.msra.mxu0 0.0
        %1917 = vmatprep.subr.mxu0 0.0
        %1918 = vmatpush1.msra.mxu0 0.0
        %1919 = vmatprep.subr.mxu0 0.0
        %1920 = vmatpush1.msra.mxu0 0.0
        %1921 = vmatprep.subr.mxu0 0.0
        %1922 = vmatpush1.msra.mxu0 0.0
        %1923 = vmatprep.subr.mxu0 0.0
        %1924 = vmatpush1.msra.mxu0 0.0
        %1925 = vmatprep.subr.mxu0 0.0
        %1926 = vmatpush1.msra.mxu0 0.0
        %1927 = vmatprep.subr.mxu0 0.0
        %1928 = vmatpush1.msra.mxu0 0.0
        %1929 = vmatprep.subr.mxu0 0.0
        %1930 = vmatpush1.msra.mxu0 0.0
        %1931 = vmatprep.subr.mxu0 0.0
        %1932 = vmatpush1.msra.mxu0 0.0
        %1933 = vmatprep.subr.mxu0 0.0
        %1934 = vmatpush1.msra.mxu0 0.0
        %1935 = vmatprep.subr.mxu0 0.0
        %1936 = vmatpush1.msra.mxu0 0.0
        %1937 = vmatprep.mubr.f32.mxu0 0.0
        %1938 = vmatmul.mubr.f32.gmra.mrb[0].mxu0 %v1854
        %v1939 = vpop.f32.mrb[0].mxu0
        %v1940 = vadd.f32 0.0, %v1939
        %v1941 = vpop.f32.mrb[0].mxu0
        %1942 = vmatprep.mubr.f32.mxu0 0.0
        %1943 = vmatmul.mubr.f32.gmra.mrb[0].mxu0 %v1855
        %v1944 = vpop.f32.mrb[0].mxu0
        %v1945 = vadd.f32 0.0, %v1944
        %v1946 = vpop.f32.mrb[0].mxu0
        %1947 = vdwg.mxu0
        %1948 = vmatprep.subr.mxu0 0.0
        %1949 = vmatpush1.msra.mxu0 %v1838
        %1950 = vmatprep.subr.mxu0 0.0
        %1951 = vmatpush1.msra.mxu0 %v1839
        %1952 = vmatprep.subr.mxu0 0.0
        %1953 = vmatpush1.msra.mxu0 %v1840
        %1954 = vmatprep.subr.mxu0 0.0
        %1955 = vmatpush1.msra.mxu0 %v1841
        %1956 = vmatprep.subr.mxu0 0.0
        %1957 = vmatpush1.msra.mxu0 %v1842
        %1958 = vmatprep.subr.mxu0 0.0
        %1959 = vmatpush1.msra.mxu0 %v1843
        %1960 = vmatprep.subr.mxu0 0.0
        %1961 = vmatpush1.msra.mxu0 %v1844
        %1962 = vmatprep.subr.mxu0 0.0
        %1963 = vmatpush1.msra.mxu0 %v1845
        %1964 = vmatprep.subr.mxu0 0.0
        %1965 = vmatpush1.msra.mxu0 %v1846
        %1966 = vmatprep.subr.mxu0 0.0
        %1967 = vmatpush1.msra.mxu0 %v1847
        %1968 = vmatprep.subr.mxu0 0.0
        %1969 = vmatpush1.msra.mxu0 %v1848
        %1970 = vmatprep.subr.mxu0 0.0
        %1971 = vmatpush1.msra.mxu0 %v1849
        %1972 = vmatprep.subr.mxu0 0.0
        %1973 = vmatpush1.msra.mxu0 %v1850
        %1974 = vmatprep.subr.mxu0 0.0
        %1975 = vmatpush1.msra.mxu0 %v1851
        %1976 = vmatprep.subr.mxu0 0.0
        %1977 = vmatpush1.msra.mxu0 %v1852
        %1978 = vmatprep.subr.mxu0 0.0
        %1979 = vmatpush1.msra.mxu0 %v1853
        %1980 = vmatprep.subr.mxu0 0.0
        %1981 = vmatpush1.msra.mxu0 0.0
        %1982 = vmatprep.subr.mxu0 0.0
        %1983 = vmatpush1.msra.mxu0 0.0
        %1984 = vmatprep.subr.mxu0 0.0
        %1985 = vmatpush1.msra.mxu0 0.0
        %1986 = vmatprep.subr.mxu0 0.0
        %1987 = vmatpush1.msra.mxu0 0.0
        %1988 = vmatprep.subr.mxu0 0.0
        %1989 = vmatpush1.msra.mxu0 0.0
        %1990 = vmatprep.subr.mxu0 0.0
        %1991 = vmatpush1.msra.mxu0 0.0
        %1992 = vmatprep.subr.mxu0 0.0
        %1993 = vmatpush1.msra.mxu0 0.0
        %1994 = vmatprep.subr.mxu0 0.0
        %1995 = vmatpush1.msra.mxu0 0.0
        %1996 = vmatprep.subr.mxu0 0.0
        %1997 = vmatpush1.msra.mxu0 0.0
        %1998 = vmatprep.subr.mxu0 0.0
        %1999 = vmatpush1.msra.mxu0 0.0
        %2000 = vmatprep.subr.mxu0 0.0
        %2001 = vmatpush1.msra.mxu0 0.0
        %2002 = vmatprep.subr.mxu0 0.0
        %2003 = vmatpush1.msra.mxu0 0.0
        %2004 = vmatprep.subr.mxu0 0.0
        %2005 = vmatpush1.msra.mxu0 0.0
        %2006 = vmatprep.subr.mxu0 0.0
        %2007 = vmatpush1.msra.mxu0 0.0
        %2008 = vmatprep.subr.mxu0 0.0
        %2009 = vmatpush1.msra.mxu0 0.0
        %2010 = vmatprep.subr.mxu0 0.0
        %2011 = vmatpush1.msra.mxu0 0.0
        %2012 = vmatprep.mubr.f32.mxu0 0.0
        %2013 = vmatmul.mubr.f32.gmra.mrb[0].mxu0 %v1835
        %v2014 = vpop.f32.mrb[0].mxu0
        %v2015 = vadd.f32 %v1940, %v2014
        %v2016 = vpop.f32.mrb[0].mxu0
        %2017 = vmatprep.mubr.f32.mxu0 0.0
        %2018 = vmatmul.mubr.f32.gmra.mrb[0].mxu0 %v1836
        %v2019 = vpop.f32.mrb[0].mxu0
        %v2020 = vadd.f32 %v1945, %v2019
        %v2021 = vpop.f32.mrb[0].mxu0
        %2022 = vdwg.mxu0
        %v2023 = vld [vmem:[#allocation2 + $0x2] sm:$0xff]
        %v2024 = vld [vmem:[#allocation2 + $0xa] sm:$0xff]
        %s2025 = scalar_lea.vmem [#allocation4], 1408
        %v2026 = vld [vmem:[%s2025] sm:$0xff]
        %v2027 = vld [vmem:[%s2025 + $0x8] sm:$0xff]
        %v2028 = vld [vmem:[%s2025 + $0x10] sm:$0xff]
        %v2029 = vld [vmem:[%s2025 + $0x18] sm:$0xff]
        %v2030 = vld [vmem:[%s2025 + $0x20] sm:$0xff]
        %v2031 = vld [vmem:[%s2025 + $0x28] sm:$0xff]
        %v2032 = vld [vmem:[%s2025 + $0x30] sm:$0xff]
        %v2033 = vld [vmem:[%s2025 + $0x38] sm:$0xff]
        %v2034 = vld [vmem:[%s2025 + $0x40] sm:$0xff]
        %v2035 = vld [vmem:[%s2025 + $0x48] sm:$0xff]
        %v2036 = vld [vmem:[%s2025 + $0x50] sm:$0xff]
        %v2037 = vld [vmem:[%s2025 + $0x58] sm:$0xff]
        %v2038 = vld [vmem:[%s2025 + $0x60] sm:$0xff]
        %v2039 = vld [vmem:[%s2025 + $0x68] sm:$0xff]
        %v2040 = vld [vmem:[%s2025 + $0x70] sm:$0xff]
        %v2041 = vld [vmem:[%s2025 + $0x78] sm:$0xff]
        %2042 = vmatprep.subr.mxu0 0.0
        %2043 = vmatpush1.msra.mxu0 %v2026
        %2044 = vmatprep.subr.mxu0 0.0
        %2045 = vmatpush1.msra.mxu0 %v2027
        %2046 = vmatprep.subr.mxu0 0.0
        %2047 = vmatpush1.msra.mxu0 %v2028
        %2048 = vmatprep.subr.mxu0 0.0
        %2049 = vmatpush1.msra.mxu0 %v2029
        %2050 = vmatprep.subr.mxu0 0.0
        %2051 = vmatpush1.msra.mxu0 %v2030
        %2052 = vmatprep.subr.mxu0 0.0
        %2053 = vmatpush1.msra.mxu0 %v2031
        %2054 = vmatprep.subr.mxu0 0.0
        %2055 = vmatpush1.msra.mxu0 %v2032
        %2056 = vmatprep.subr.mxu0 0.0
        %2057 = vmatpush1.msra.mxu0 %v2033
        %2058 = vmatprep.subr.mxu0 0.0
        %2059 = vmatpush1.msra.mxu0 %v2034
        %2060 = vmatprep.subr.mxu0 0.0
        %2061 = vmatpush1.msra.mxu0 %v2035
        %2062 = vmatprep.subr.mxu0 0.0
        %2063 = vmatpush1.msra.mxu0 %v2036
        %2064 = vmatprep.subr.mxu0 0.0
        %2065 = vmatpush1.msra.mxu0 %v2037
        %2066 = vmatprep.subr.mxu0 0.0
        %2067 = vmatpush1.msra.mxu0 %v2038
        %2068 = vmatprep.subr.mxu0 0.0
        %2069 = vmatpush1.msra.mxu0 %v2039
        %2070 = vmatprep.subr.mxu0 0.0
        %2071 = vmatpush1.msra.mxu0 %v2040
        %2072 = vmatprep.subr.mxu0 0.0
        %2073 = vmatpush1.msra.mxu0 %v2041
        %2074 = vmatprep.subr.mxu0 0.0
        %2075 = vmatpush1.msra.mxu0 0.0
        %2076 = vmatprep.subr.mxu0 0.0
        %2077 = vmatpush1.msra.mxu0 0.0
        %2078 = vmatprep.subr.mxu0 0.0
        %2079 = vmatpush1.msra.mxu0 0.0
        %2080 = vmatprep.subr.mxu0 0.0
        %2081 = vmatpush1.msra.mxu0 0.0
        %2082 = vmatprep.subr.mxu0 0.0
        %2083 = vmatpush1.msra.mxu0 0.0
        %2084 = vmatprep.subr.mxu0 0.0
        %2085 = vmatpush1.msra.mxu0 0.0
        %2086 = vmatprep.subr.mxu0 0.0
        %2087 = vmatpush1.msra.mxu0 0.0
        %2088 = vmatprep.subr.mxu0 0.0
        %2089 = vmatpush1.msra.mxu0 0.0
        %2090 = vmatprep.subr.mxu0 0.0
        %2091 = vmatpush1.msra.mxu0 0.0
        %2092 = vmatprep.subr.mxu0 0.0
        %2093 = vmatpush1.msra.mxu0 0.0
        %2094 = vmatprep.subr.mxu0 0.0
        %2095 = vmatpush1.msra.mxu0 0.0
        %2096 = vmatprep.subr.mxu0 0.0
        %2097 = vmatpush1.msra.mxu0 0.0
        %2098 = vmatprep.subr.mxu0 0.0
        %2099 = vmatpush1.msra.mxu0 0.0
        %2100 = vmatprep.subr.mxu0 0.0
        %2101 = vmatpush1.msra.mxu0 0.0
        %2102 = vmatprep.subr.mxu0 0.0
        %2103 = vmatpush1.msra.mxu0 0.0
        %2104 = vmatprep.subr.mxu0 0.0
        %2105 = vmatpush1.msra.mxu0 0.0
        %2106 = vmatprep.mubr.f32.mxu0 0.0
        %2107 = vmatmul.mubr.f32.gmra.mrb[0].mxu0 %v2023
        %v2108 = vpop.f32.mrb[0].mxu0
        %v2109 = vadd.f32 0.0, %v2108
        %v2110 = vpop.f32.mrb[0].mxu0
        %2111 = vmatprep.mubr.f32.mxu0 0.0
        %2112 = vmatmul.mubr.f32.gmra.mrb[0].mxu0 %v2024
        %v2113 = vpop.f32.mrb[0].mxu0
        %v2114 = vadd.f32 0.0, %v2113
        %v2115 = vpop.f32.mrb[0].mxu0
        %2116 = vdwg.mxu0
        %v2117 = vadd.f32 %v2015, %v2109
        %v2118 = vadd.f32 %v2020, %v2114
        %v2119 = vld [vmem:[#allocation6 + $0x3] sm:$0x1]
        %v2120 = vlaneseq
        %v2121 = vshrl.u32 %v2120, 7
        %v2122 = vsub.s32 0, %v2121
        %v2123 = vrot.slane %v2119, %v2122
        %v2124 = vadd.f32 %v2117, %v2123
        %v2125 = vadd.f32 %v2118, %v2123
        %v2126 = vadd.f32 %v2124, %v2125
        %v2127 = vrot.slane %v2126, 4
        %v2128 = vadd.f32 %v2126, %v2127
        %v2129 = vrot.slane %v2128, 2
        %v2130 = vadd.f32 %v2128, %v2129
        %v2131 = vrot.slane %v2130, 1
        %v2132 = vadd.f32 %v2130, %v2131
        %v2133 = vmul.f32 %v2124, %v2124
        %v2134 = vmul.f32 %v2125, %v2125
        %v2135 = vadd.f32 %v2133, %v2134
        %v2136 = vrot.slane %v2135, 4
        %v2137 = vadd.f32 %v2135, %v2136
        %v2138 = vrot.slane %v2137, 2
        %v2139 = vadd.f32 %v2137, %v2138
        %v2140 = vrot.slane %v2139, 1
        %v2141 = vadd.f32 %v2139, %v2140
        %v2142 = vsel %vm810, %v2132, %v2141
        %v2143 = vld [vmem:[#allocation14] sm:$0xff]
        %v2144 = vld [vmem:[#allocation14 + $0x8] sm:$0xff]
        %v2145 = vld [vmem:[#allocation14 + $0x10] sm:$0xff]
        %v2146 = vld [vmem:[#allocation14 + $0x18] sm:$0xff]
        %v2147 = vld [vmem:[#allocation14 + $0x20] sm:$0xff]
        %v2148 = vld [vmem:[#allocation14 + $0x28] sm:$0xff]
        %v2149 = vld [vmem:[#allocation14 + $0x30] sm:$0xff]
        %v2150 = vld [vmem:[#allocation14 + $0x38] sm:$0xff]
        %v2151 = vld [vmem:[#allocation14 + $0x40] sm:$0xff]
        %v2152 = vld [vmem:[#allocation14 + $0x48] sm:$0xff]
        %v2153 = vld [vmem:[#allocation14 + $0x50] sm:$0xff]
        %v2154 = vld [vmem:[#allocation14 + $0x58] sm:$0xff]
        %v2155 = vld [vmem:[#allocation14 + $0x60] sm:$0xff]
        %v2156 = vld [vmem:[#allocation14 + $0x68] sm:$0xff]
        %v2157 = vld [vmem:[#allocation14 + $0x70] sm:$0xff]
        %v2158 = vld [vmem:[#allocation14 + $0x78] sm:$0xff]
        %2159 = vmatprep.subr.mxu0 0.0
        %2160 = vmatpush1.msra.mxu0 %v2143
        %2161 = vmatprep.subr.mxu0 0.0
        %2162 = vmatpush1.msra.mxu0 %v2144
        %2163 = vmatprep.subr.mxu0 0.0
        %2164 = vmatpush1.msra.mxu0 %v2145
        %2165 = vmatprep.subr.mxu0 0.0
        %2166 = vmatpush1.msra.mxu0 %v2146
        %2167 = vmatprep.subr.mxu0 0.0
        %2168 = vmatpush1.msra.mxu0 %v2147
        %2169 = vmatprep.subr.mxu0 0.0
        %2170 = vmatpush1.msra.mxu0 %v2148
        %2171 = vmatprep.subr.mxu0 0.0
        %2172 = vmatpush1.msra.mxu0 %v2149
        %2173 = vmatprep.subr.mxu0 0.0
        %2174 = vmatpush1.msra.mxu0 %v2150
        %2175 = vmatprep.subr.mxu0 0.0
        %2176 = vmatpush1.msra.mxu0 %v2151
        %2177 = vmatprep.subr.mxu0 0.0
        %2178 = vmatpush1.msra.mxu0 %v2152
        %2179 = vmatprep.subr.mxu0 0.0
        %2180 = vmatpush1.msra.mxu0 %v2153
        %2181 = vmatprep.subr.mxu0 0.0
        %2182 = vmatpush1.msra.mxu0 %v2154
        %2183 = vmatprep.subr.mxu0 0.0
        %2184 = vmatpush1.msra.mxu0 %v2155
        %2185 = vmatprep.subr.mxu0 0.0
        %2186 = vmatpush1.msra.mxu0 %v2156
        %2187 = vmatprep.subr.mxu0 0.0
        %2188 = vmatpush1.msra.mxu0 %v2157
        %2189 = vmatprep.subr.mxu0 0.0
        %2190 = vmatpush1.msra.mxu0 %v2158
        %2191 = vmatprep.subr.mxu0 0.0
        %2192 = vmatpush1.msra.mxu0 0.0
        %2193 = vmatprep.subr.mxu0 0.0
        %2194 = vmatpush1.msra.mxu0 0.0
        %2195 = vmatprep.subr.mxu0 0.0
        %2196 = vmatpush1.msra.mxu0 0.0
        %2197 = vmatprep.subr.mxu0 0.0
        %2198 = vmatpush1.msra.mxu0 0.0
        %2199 = vmatprep.subr.mxu0 0.0
        %2200 = vmatpush1.msra.mxu0 0.0
        %2201 = vmatprep.subr.mxu0 0.0
        %2202 = vmatpush1.msra.mxu0 0.0
        %2203 = vmatprep.subr.mxu0 0.0
        %2204 = vmatpush1.msra.mxu0 0.0
        %2205 = vmatprep.subr.mxu0 0.0
        %2206 = vmatpush1.msra.mxu0 0.0
        %2207 = vmatprep.subr.mxu0 0.0
        %2208 = vmatpush1.msra.mxu0 0.0
        %2209 = vmatprep.subr.mxu0 0.0
        %2210 = vmatpush1.msra.mxu0 0.0
        %2211 = vmatprep.subr.mxu0 0.0
        %2212 = vmatpush1.msra.mxu0 0.0
        %2213 = vmatprep.subr.mxu0 0.0
        %2214 = vmatpush1.msra.mxu0 0.0
        %2215 = vmatprep.subr.mxu0 0.0
        %2216 = vmatpush1.msra.mxu0 0.0
        %2217 = vmatprep.subr.mxu0 0.0
        %2218 = vmatpush1.msra.mxu0 0.0
        %2219 = vmatprep.subr.mxu0 0.0
        %2220 = vmatpush1.msra.mxu0 0.0
        %2221 = vmatprep.subr.mxu0 0.0
        %2222 = vmatpush1.msra.mxu0 0.0
        %2223 = vmatprep.mubr.f32.mxu0 0.0
        %2224 = vmatmul.mubr.f32.gmra.mrb[0].mxu0 %v2142
        %v2225 = vpop.f32.mrb[0].mxu0
        %v2226 = vadd.f32 0.0, %v2225
        %v2227 = vpop.f32.mrb[0].mxu0
        %2228 = vdwg.mxu0
        %v2229 = vmul.f32 %v2226, %v2226
        %v2231 = vrot.slane %v2229, 7
        %v2233 = vsub.f32 %v2226, %v2231
        %v2234 = vlaneseq
        %v2235 = vshrl.u32 %v2234, 7
        %v2236 = vsub.s32 0, %v2235
        %v2237 = vrot.slane %v2226, %v2236
        %v2238 = vsub.f32 %v2124, %v2237
        %v2239 = vsub.f32 %v2125, %v2237
        %v2240 = vadd.f32 %v2233, 1e-05
        %v2241 = vrsqrt.pop %v2240
        %v2242 = vlaneseq
        %v2243 = vshrl.u32 %v2242, 7
        %v2244 = vsub.s32 1, %v2243
        %v2245 = vrot.slane %v2241, %v2244
        %v2246 = vmul.f32 %v2238, %v2245
        %v2247 = vmul.f32 %v2239, %v2245
        %v2248 = vld [vmem:[#allocation8 + $0x3] sm:$0x1]
        %v2249 = vlaneseq
        %v2250 = vshrl.u32 %v2249, 7
        %v2251 = vsub.s32 0, %v2250
        %v2252 = vrot.slane %v2248, %v2251
        %v2253 = vmul.f32 %v2246, %v2252
        %v2254 = vmul.f32 %v2247, %v2252
        %v2255 = vld [vmem:[#allocation9 + $0x3] sm:$0x1]
        %v2256 = vlaneseq
        %v2257 = vshrl.u32 %v2256, 7
        %v2258 = vsub.s32 0, %v2257
        %v2259 = vrot.slane %v2255, %v2258
        %v2260 = vadd.f32 %v2253, %v2259
        %v2261 = vadd.f32 %v2254, %v2259
        %v2262 = vxor.u32 %v2260, 2147483648
        %v2263 = vxor.u32 %v2261, 2147483648
        %v2264 = vmul.f32 %v2262, 1.442695
        %v2265 = vpow.pop %v2264
        %v2266 = vmul.f32 %v2263, 1.442695
        %v2267 = vpow.pop %v2266
        %v2268 = vadd.f32 %v2265, 1.0
        %v2269 = vadd.f32 %v2267, 1.0
        %v2270 = vrcp.pop %v2268
        %v2271 = vmul.f32 1.0, %v2270
        %v2272 = vrcp.pop %v2269
        %v2273 = vmul.f32 1.0, %v2272
        %v2274 = vmul.f32 %v2260, %v2271
        %v2275 = vmul.f32 %v2261, %v2273
        %v2276 = vadd.f32 %v2274, %v1388
        %v2277 = vadd.f32 %v2275, %v1389
        %2278 = vst [vmem:[#allocation2 + $0x1] sm:$0xff] %v2276
        %2279 = vst [vmem:[#allocation2 + $0x9] sm:$0xff] %v2277
        %v2280 = vld [vmem:[#allocation2] sm:$0xff]
        %v2281 = vld [vmem:[#allocation2 + $0x8] sm:$0xff]
        %s2282 = scalar_lea.vmem [#allocation4], 1536
        %v2283 = vld [vmem:[%s2282] sm:$0xff]
        %v2284 = vld [vmem:[%s2282 + $0x8] sm:$0xff]
        %v2285 = vld [vmem:[%s2282 + $0x10] sm:$0xff]
        %v2286 = vld [vmem:[%s2282 + $0x18] sm:$0xff]
        %v2287 = vld [vmem:[%s2282 + $0x20] sm:$0xff]
        %v2288 = vld [vmem:[%s2282 + $0x28] sm:$0xff]
        %v2289 = vld [vmem:[%s2282 + $0x30] sm:$0xff]
        %v2290 = vld [vmem:[%s2282 + $0x38] sm:$0xff]
        %v2291 = vld [vmem:[%s2282 + $0x40] sm:$0xff]
        %v2292 = vld [vmem:[%s2282 + $0x48] sm:$0xff]
        %v2293 = vld [vmem:[%s2282 + $0x50] sm:$0xff]
        %v2294 = vld [vmem:[%s2282 + $0x58] sm:$0xff]
        %v2295 = vld [vmem:[%s2282 + $0x60] sm:$0xff]
        %v2296 = vld [vmem:[%s2282 + $0x68] sm:$0xff]
        %v2297 = vld [vmem:[%s2282 + $0x70] sm:$0xff]
        %v2298 = vld [vmem:[%s2282 + $0x78] sm:$0xff]
        %v2299 = vld [vmem:[#allocation2 + $0x1] sm:$0xff]
        %v2300 = vld [vmem:[#allocation2 + $0x9] sm:$0xff]
        %s2301 = scalar_lea.vmem [#allocation4], 1664
        %v2302 = vld [vmem:[%s2301] sm:$0xff]
        %v2303 = vld [vmem:[%s2301 + $0x8] sm:$0xff]
        %v2304 = vld [vmem:[%s2301 + $0x10] sm:$0xff]
        %v2305 = vld [vmem:[%s2301 + $0x18] sm:$0xff]
        %v2306 = vld [vmem:[%s2301 + $0x20] sm:$0xff]
        %v2307 = vld [vmem:[%s2301 + $0x28] sm:$0xff]
        %v2308 = vld [vmem:[%s2301 + $0x30] sm:$0xff]
        %v2309 = vld [vmem:[%s2301 + $0x38] sm:$0xff]
        %v2310 = vld [vmem:[%s2301 + $0x40] sm:$0xff]
        %v2311 = vld [vmem:[%s2301 + $0x48] sm:$0xff]
        %v2312 = vld [vmem:[%s2301 + $0x50] sm:$0xff]
        %v2313 = vld [vmem:[%s2301 + $0x58] sm:$0xff]
        %v2314 = vld [vmem:[%s2301 + $0x60] sm:$0xff]
        %v2315 = vld [vmem:[%s2301 + $0x68] sm:$0xff]
        %v2316 = vld [vmem:[%s2301 + $0x70] sm:$0xff]
        %v2317 = vld [vmem:[%s2301 + $0x78] sm:$0xff]
        %2318 = vmatprep.subr.mxu0 0.0
        %2319 = vmatpush1.msra.mxu0 %v2302
        %2320 = vmatprep.subr.mxu0 0.0
        %2321 = vmatpush1.msra.mxu0 %v2303
        %2322 = vmatprep.subr.mxu0 0.0
        %2323 = vmatpush1.msra.mxu0 %v2304
        %2324 = vmatprep.subr.mxu0 0.0
        %2325 = vmatpush1.msra.mxu0 %v2305
        %2326 = vmatprep.subr.mxu0 0.0
        %2327 = vmatpush1.msra.mxu0 %v2306
        %2328 = vmatprep.subr.mxu0 0.0
        %2329 = vmatpush1.msra.mxu0 %v2307
        %2330 = vmatprep.subr.mxu0 0.0
        %2331 = vmatpush1.msra.mxu0 %v2308
        %2332 = vmatprep.subr.mxu0 0.0
        %2333 = vmatpush1.msra.mxu0 %v2309
        %2334 = vmatprep.subr.mxu0 0.0
        %2335 = vmatpush1.msra.mxu0 %v2310
        %2336 = vmatprep.subr.mxu0 0.0
        %2337 = vmatpush1.msra.mxu0 %v2311
        %2338 = vmatprep.subr.mxu0 0.0
        %2339 = vmatpush1.msra.mxu0 %v2312
        %2340 = vmatprep.subr.mxu0 0.0
        %2341 = vmatpush1.msra.mxu0 %v2313
        %2342 = vmatprep.subr.mxu0 0.0
        %2343 = vmatpush1.msra.mxu0 %v2314
        %2344 = vmatprep.subr.mxu0 0.0
        %2345 = vmatpush1.msra.mxu0 %v2315
        %2346 = vmatprep.subr.mxu0 0.0
        %2347 = vmatpush1.msra.mxu0 %v2316
        %2348 = vmatprep.subr.mxu0 0.0
        %2349 = vmatpush1.msra.mxu0 %v2317
        %2350 = vmatprep.subr.mxu0 0.0
        %2351 = vmatpush1.msra.mxu0 0.0
        %2352 = vmatprep.subr.mxu0 0.0
        %2353 = vmatpush1.msra.mxu0 0.0
        %2354 = vmatprep.subr.mxu0 0.0
        %2355 = vmatpush1.msra.mxu0 0.0
        %2356 = vmatprep.subr.mxu0 0.0
        %2357 = vmatpush1.msra.mxu0 0.0
        %2358 = vmatprep.subr.mxu0 0.0
        %2359 = vmatpush1.msra.mxu0 0.0
        %2360 = vmatprep.subr.mxu0 0.0
        %2361 = vmatpush1.msra.mxu0 0.0
        %2362 = vmatprep.subr.mxu0 0.0
        %2363 = vmatpush1.msra.mxu0 0.0
        %2364 = vmatprep.subr.mxu0 0.0
        %2365 = vmatpush1.msra.mxu0 0.0
        %2366 = vmatprep.subr.mxu0 0.0
        %2367 = vmatpush1.msra.mxu0 0.0
        %2368 = vmatprep.subr.mxu0 0.0
        %2369 = vmatpush1.msra.mxu0 0.0
        %2370 = vmatprep.subr.mxu0 0.0
        %2371 = vmatpush1.msra.mxu0 0.0
        %2372 = vmatprep.subr.mxu0 0.0
        %2373 = vmatpush1.msra.mxu0 0.0
        %2374 = vmatprep.subr.mxu0 0.0
        %2375 = vmatpush1.msra.mxu0 0.0
        %2376 = vmatprep.subr.mxu0 0.0
        %2377 = vmatpush1.msra.mxu0 0.0
        %2378 = vmatprep.subr.mxu0 0.0
        %2379 = vmatpush1.msra.mxu0 0.0
        %2380 = vmatprep.subr.mxu0 0.0
        %2381 = vmatpush1.msra.mxu0 0.0
        %2382 = vmatprep.mubr.f32.mxu0 0.0
        %2383 = vmatmul.mubr.f32.gmra.mrb[0].mxu0 %v2299
        %v2384 = vpop.f32.mrb[0].mxu0
        %v2385 = vadd.f32 0.0, %v2384
        %v2386 = vpop.f32.mrb[0].mxu0
        %2387 = vmatprep.mubr.f32.mxu0 0.0
        %2388 = vmatmul.mubr.f32.gmra.mrb[0].mxu0 %v2300
        %v2389 = vpop.f32.mrb[0].mxu0
        %v2390 = vadd.f32 0.0, %v2389
        %v2391 = vpop.f32.mrb[0].mxu0
        %2392 = vdwg.mxu0
        %2393 = vmatprep.subr.mxu0 0.0
        %2394 = vmatpush1.msra.mxu0 %v2283
        %2395 = vmatprep.subr.mxu0 0.0
        %2396 = vmatpush1.msra.mxu0 %v2284
        %2397 = vmatprep.subr.mxu0 0.0
        %2398 = vmatpush1.msra.mxu0 %v2285
        %2399 = vmatprep.subr.mxu0 0.0
        %2400 = vmatpush1.msra.mxu0 %v2286
        %2401 = vmatprep.subr.mxu0 0.0
        %2402 = vmatpush1.msra.mxu0 %v2287
        %2403 = vmatprep.subr.mxu0 0.0
        %2404 = vmatpush1.msra.mxu0 %v2288
        %2405 = vmatprep.subr.mxu0 0.0
        %2406 = vmatpush1.msra.mxu0 %v2289
        %2407 = vmatprep.subr.mxu0 0.0
        %2408 = vmatpush1.msra.mxu0 %v2290
        %2409 = vmatprep.subr.mxu0 0.0
        %2410 = vmatpush1.msra.mxu0 %v2291
        %2411 = vmatprep.subr.mxu0 0.0
        %2412 = vmatpush1.msra.mxu0 %v2292
        %2413 = vmatprep.subr.mxu0 0.0
        %2414 = vmatpush1.msra.mxu0 %v2293
        %2415 = vmatprep.subr.mxu0 0.0
        %2416 = vmatpush1.msra.mxu0 %v2294
        %2417 = vmatprep.subr.mxu0 0.0
        %2418 = vmatpush1.msra.mxu0 %v2295
        %2419 = vmatprep.subr.mxu0 0.0
        %2420 = vmatpush1.msra.mxu0 %v2296
        %2421 = vmatprep.subr.mxu0 0.0
        %2422 = vmatpush1.msra.mxu0 %v2297
        %2423 = vmatprep.subr.mxu0 0.0
        %2424 = vmatpush1.msra.mxu0 %v2298
        %2425 = vmatprep.subr.mxu0 0.0
        %2426 = vmatpush1.msra.mxu0 0.0
        %2427 = vmatprep.subr.mxu0 0.0
        %2428 = vmatpush1.msra.mxu0 0.0
        %2429 = vmatprep.subr.mxu0 0.0
        %2430 = vmatpush1.msra.mxu0 0.0
        %2431 = vmatprep.subr.mxu0 0.0
        %2432 = vmatpush1.msra.mxu0 0.0
        %2433 = vmatprep.subr.mxu0 0.0
        %2434 = vmatpush1.msra.mxu0 0.0
        %2435 = vmatprep.subr.mxu0 0.0
        %2436 = vmatpush1.msra.mxu0 0.0
        %2437 = vmatprep.subr.mxu0 0.0
        %2438 = vmatpush1.msra.mxu0 0.0
        %2439 = vmatprep.subr.mxu0 0.0
        %2440 = vmatpush1.msra.mxu0 0.0
        %2441 = vmatprep.subr.mxu0 0.0
        %2442 = vmatpush1.msra.mxu0 0.0
        %2443 = vmatprep.subr.mxu0 0.0
        %2444 = vmatpush1.msra.mxu0 0.0
        %2445 = vmatprep.subr.mxu0 0.0
        %2446 = vmatpush1.msra.mxu0 0.0
        %2447 = vmatprep.subr.mxu0 0.0
        %2448 = vmatpush1.msra.mxu0 0.0
        %2449 = vmatprep.subr.mxu0 0.0
        %2450 = vmatpush1.msra.mxu0 0.0
        %2451 = vmatprep.subr.mxu0 0.0
        %2452 = vmatpush1.msra.mxu0 0.0
        %2453 = vmatprep.subr.mxu0 0.0
        %2454 = vmatpush1.msra.mxu0 0.0
        %2455 = vmatprep.subr.mxu0 0.0
        %2456 = vmatpush1.msra.mxu0 0.0
        %2457 = vmatprep.mubr.f32.mxu0 0.0
        %2458 = vmatmul.mubr.f32.gmra.mrb[0].mxu0 %v2280
        %v2459 = vpop.f32.mrb[0].mxu0
        %v2460 = vadd.f32 %v2385, %v2459
        %v2461 = vpop.f32.mrb[0].mxu0
        %2462 = vmatprep.mubr.f32.mxu0 0.0
        %2463 = vmatmul.mubr.f32.gmra.mrb[0].mxu0 %v2281
        %v2464 = vpop.f32.mrb[0].mxu0
        %v2465 = vadd.f32 %v2390, %v2464
        %v2466 = vpop.f32.mrb[0].mxu0
        %2467 = vdwg.mxu0
        %v2468 = vld [vmem:[#allocation2 + $0x2] sm:$0xff]
        %v2469 = vld [vmem:[#allocation2 + $0xa] sm:$0xff]
        %s2470 = scalar_lea.vmem [#allocation4], 1792
        %v2471 = vld [vmem:[%s2470] sm:$0xff]
        %v2472 = vld [vmem:[%s2470 + $0x8] sm:$0xff]
        %v2473 = vld [vmem:[%s2470 + $0x10] sm:$0xff]
        %v2474 = vld [vmem:[%s2470 + $0x18] sm:$0xff]
        %v2475 = vld [vmem:[%s2470 + $0x20] sm:$0xff]
        %v2476 = vld [vmem:[%s2470 + $0x28] sm:$0xff]
        %v2477 = vld [vmem:[%s2470 + $0x30] sm:$0xff]
        %v2478 = vld [vmem:[%s2470 + $0x38] sm:$0xff]
        %v2479 = vld [vmem:[%s2470 + $0x40] sm:$0xff]
        %v2480 = vld [vmem:[%s2470 + $0x48] sm:$0xff]
        %v2481 = vld [vmem:[%s2470 + $0x50] sm:$0xff]
        %v2482 = vld [vmem:[%s2470 + $0x58] sm:$0xff]
        %v2483 = vld [vmem:[%s2470 + $0x60] sm:$0xff]
        %v2484 = vld [vmem:[%s2470 + $0x68] sm:$0xff]
        %v2485 = vld [vmem:[%s2470 + $0x70] sm:$0xff]
        %v2486 = vld [vmem:[%s2470 + $0x78] sm:$0xff]
        %2487 = vmatprep.subr.mxu0 0.0
        %2488 = vmatpush1.msra.mxu0 %v2471
        %2489 = vmatprep.subr.mxu0 0.0
        %2490 = vmatpush1.msra.mxu0 %v2472
        %2491 = vmatprep.subr.mxu0 0.0
        %2492 = vmatpush1.msra.mxu0 %v2473
        %2493 = vmatprep.subr.mxu0 0.0
        %2494 = vmatpush1.msra.mxu0 %v2474
        %2495 = vmatprep.subr.mxu0 0.0
        %2496 = vmatpush1.msra.mxu0 %v2475
        %2497 = vmatprep.subr.mxu0 0.0
        %2498 = vmatpush1.msra.mxu0 %v2476
        %2499 = vmatprep.subr.mxu0 0.0
        %2500 = vmatpush1.msra.mxu0 %v2477
        %2501 = vmatprep.subr.mxu0 0.0
        %2502 = vmatpush1.msra.mxu0 %v2478
        %2503 = vmatprep.subr.mxu0 0.0
        %2504 = vmatpush1.msra.mxu0 %v2479
        %2505 = vmatprep.subr.mxu0 0.0
        %2506 = vmatpush1.msra.mxu0 %v2480
        %2507 = vmatprep.subr.mxu0 0.0
        %2508 = vmatpush1.msra.mxu0 %v2481
        %2509 = vmatprep.subr.mxu0 0.0
        %2510 = vmatpush1.msra.mxu0 %v2482
        %2511 = vmatprep.subr.mxu0 0.0
        %2512 = vmatpush1.msra.mxu0 %v2483
        %2513 = vmatprep.subr.mxu0 0.0
        %2514 = vmatpush1.msra.mxu0 %v2484
        %2515 = vmatprep.subr.mxu0 0.0
        %2516 = vmatpush1.msra.mxu0 %v2485
        %2517 = vmatprep.subr.mxu0 0.0
        %2518 = vmatpush1.msra.mxu0 %v2486
        %2519 = vmatprep.subr.mxu0 0.0
        %2520 = vmatpush1.msra.mxu0 0.0
        %2521 = vmatprep.subr.mxu0 0.0
        %2522 = vmatpush1.msra.mxu0 0.0
        %2523 = vmatprep.subr.mxu0 0.0
        %2524 = vmatpush1.msra.mxu0 0.0
        %2525 = vmatprep.subr.mxu0 0.0
        %2526 = vmatpush1.msra.mxu0 0.0
        %2527 = vmatprep.subr.mxu0 0.0
        %2528 = vmatpush1.msra.mxu0 0.0
        %2529 = vmatprep.subr.mxu0 0.0
        %2530 = vmatpush1.msra.mxu0 0.0
        %2531 = vmatprep.subr.mxu0 0.0
        %2532 = vmatpush1.msra.mxu0 0.0
        %2533 = vmatprep.subr.mxu0 0.0
        %2534 = vmatpush1.msra.mxu0 0.0
        %2535 = vmatprep.subr.mxu0 0.0
        %2536 = vmatpush1.msra.mxu0 0.0
        %2537 = vmatprep.subr.mxu0 0.0
        %2538 = vmatpush1.msra.mxu0 0.0
        %2539 = vmatprep.subr.mxu0 0.0
        %2540 = vmatpush1.msra.mxu0 0.0
        %2541 = vmatprep.subr.mxu0 0.0
        %2542 = vmatpush1.msra.mxu0 0.0
        %2543 = vmatprep.subr.mxu0 0.0
        %2544 = vmatpush1.msra.mxu0 0.0
        %2545 = vmatprep.subr.mxu0 0.0
        %2546 = vmatpush1.msra.mxu0 0.0
        %2547 = vmatprep.subr.mxu0 0.0
        %2548 = vmatpush1.msra.mxu0 0.0
        %2549 = vmatprep.subr.mxu0 0.0
        %2550 = vmatpush1.msra.mxu0 0.0
        %2551 = vmatprep.mubr.f32.mxu0 0.0
        %2552 = vmatmul.mubr.f32.gmra.mrb[0].mxu0 %v2468
        %v2553 = vpop.f32.mrb[0].mxu0
        %v2554 = vadd.f32 0.0, %v2553
        %v2555 = vpop.f32.mrb[0].mxu0
        %2556 = vmatprep.mubr.f32.mxu0 0.0
        %2557 = vmatmul.mubr.f32.gmra.mrb[0].mxu0 %v2469
        %v2558 = vpop.f32.mrb[0].mxu0
        %v2559 = vadd.f32 0.0, %v2558
        %v2560 = vpop.f32.mrb[0].mxu0
        %2561 = vdwg.mxu0
        %v2562 = vadd.f32 %v2460, %v2554
        %v2563 = vadd.f32 %v2465, %v2559
        %v2564 = vld [vmem:[#allocation6 + $0x4] sm:$0x1]
        %v2565 = vlaneseq
        %v2566 = vshrl.u32 %v2565, 7
        %v2567 = vsub.s32 0, %v2566
        %v2568 = vrot.slane %v2564, %v2567
        %v2569 = vadd.f32 %v2562, %v2568
        %v2570 = vadd.f32 %v2563, %v2568
        %v2571 = vadd.f32 %v2569, %v2570
        %v2572 = vrot.slane %v2571, 4
        %v2573 = vadd.f32 %v2571, %v2572
        %v2574 = vrot.slane %v2573, 2
        %v2575 = vadd.f32 %v2573, %v2574
        %v2576 = vrot.slane %v2575, 1
        %v2577 = vadd.f32 %v2575, %v2576
        %v2578 = vmul.f32 %v2569, %v2569
        %v2579 = vmul.f32 %v2570, %v2570
        %v2580 = vadd.f32 %v2578, %v2579
        %v2581 = vrot.slane %v2580, 4
        %v2582 = vadd.f32 %v2580, %v2581
        %v2583 = vrot.slane %v2582, 2
        %v2584 = vadd.f32 %v2582, %v2583
        %v2585 = vrot.slane %v2584, 1
        %v2586 = vadd.f32 %v2584, %v2585
        %v2587 = vsel %vm810, %v2577, %v2586
        %v2588 = vld [vmem:[#allocation14] sm:$0xff]
        %v2589 = vld [vmem:[#allocation14 + $0x8] sm:$0xff]
        %v2590 = vld [vmem:[#allocation14 + $0x10] sm:$0xff]
        %v2591 = vld [vmem:[#allocation14 + $0x18] sm:$0xff]
        %v2592 = vld [vmem:[#allocation14 + $0x20] sm:$0xff]
        %v2593 = vld [vmem:[#allocation14 + $0x28] sm:$0xff]
        %v2594 = vld [vmem:[#allocation14 + $0x30] sm:$0xff]
        %v2595 = vld [vmem:[#allocation14 + $0x38] sm:$0xff]
        %v2596 = vld [vmem:[#allocation14 + $0x40] sm:$0xff]
        %v2597 = vld [vmem:[#allocation14 + $0x48] sm:$0xff]
        %v2598 = vld [vmem:[#allocation14 + $0x50] sm:$0xff]
        %v2599 = vld [vmem:[#allocation14 + $0x58] sm:$0xff]
        %v2600 = vld [vmem:[#allocation14 + $0x60] sm:$0xff]
        %v2601 = vld [vmem:[#allocation14 + $0x68] sm:$0xff]
        %v2602 = vld [vmem:[#allocation14 + $0x70] sm:$0xff]
        %v2603 = vld [vmem:[#allocation14 + $0x78] sm:$0xff]
        %2604 = vmatprep.subr.mxu0 0.0
        %2605 = vmatpush1.msra.mxu0 %v2588
        %2606 = vmatprep.subr.mxu0 0.0
        %2607 = vmatpush1.msra.mxu0 %v2589
        %2608 = vmatprep.subr.mxu0 0.0
        %2609 = vmatpush1.msra.mxu0 %v2590
        %2610 = vmatprep.subr.mxu0 0.0
        %2611 = vmatpush1.msra.mxu0 %v2591
        %2612 = vmatprep.subr.mxu0 0.0
        %2613 = vmatpush1.msra.mxu0 %v2592
        %2614 = vmatprep.subr.mxu0 0.0
        %2615 = vmatpush1.msra.mxu0 %v2593
        %2616 = vmatprep.subr.mxu0 0.0
        %2617 = vmatpush1.msra.mxu0 %v2594
        %2618 = vmatprep.subr.mxu0 0.0
        %2619 = vmatpush1.msra.mxu0 %v2595
        %2620 = vmatprep.subr.mxu0 0.0
        %2621 = vmatpush1.msra.mxu0 %v2596
        %2622 = vmatprep.subr.mxu0 0.0
        %2623 = vmatpush1.msra.mxu0 %v2597
        %2624 = vmatprep.subr.mxu0 0.0
        %2625 = vmatpush1.msra.mxu0 %v2598
        %2626 = vmatprep.subr.mxu0 0.0
        %2627 = vmatpush1.msra.mxu0 %v2599
        %2628 = vmatprep.subr.mxu0 0.0
        %2629 = vmatpush1.msra.mxu0 %v2600
        %2630 = vmatprep.subr.mxu0 0.0
        %2631 = vmatpush1.msra.mxu0 %v2601
        %2632 = vmatprep.subr.mxu0 0.0
        %2633 = vmatpush1.msra.mxu0 %v2602
        %2634 = vmatprep.subr.mxu0 0.0
        %2635 = vmatpush1.msra.mxu0 %v2603
        %2636 = vmatprep.subr.mxu0 0.0
        %2637 = vmatpush1.msra.mxu0 0.0
        %2638 = vmatprep.subr.mxu0 0.0
        %2639 = vmatpush1.msra.mxu0 0.0
        %2640 = vmatprep.subr.mxu0 0.0
        %2641 = vmatpush1.msra.mxu0 0.0
        %2642 = vmatprep.subr.mxu0 0.0
        %2643 = vmatpush1.msra.mxu0 0.0
        %2644 = vmatprep.subr.mxu0 0.0
        %2645 = vmatpush1.msra.mxu0 0.0
        %2646 = vmatprep.subr.mxu0 0.0
        %2647 = vmatpush1.msra.mxu0 0.0
        %2648 = vmatprep.subr.mxu0 0.0
        %2649 = vmatpush1.msra.mxu0 0.0
        %2650 = vmatprep.subr.mxu0 0.0
        %2651 = vmatpush1.msra.mxu0 0.0
        %2652 = vmatprep.subr.mxu0 0.0
        %2653 = vmatpush1.msra.mxu0 0.0
        %2654 = vmatprep.subr.mxu0 0.0
        %2655 = vmatpush1.msra.mxu0 0.0
        %2656 = vmatprep.subr.mxu0 0.0
        %2657 = vmatpush1.msra.mxu0 0.0
        %2658 = vmatprep.subr.mxu0 0.0
        %2659 = vmatpush1.msra.mxu0 0.0
        %2660 = vmatprep.subr.mxu0 0.0
        %2661 = vmatpush1.msra.mxu0 0.0
        %2662 = vmatprep.subr.mxu0 0.0
        %2663 = vmatpush1.msra.mxu0 0.0
        %2664 = vmatprep.subr.mxu0 0.0
        %2665 = vmatpush1.msra.mxu0 0.0
        %2666 = vmatprep.subr.mxu0 0.0
        %2667 = vmatpush1.msra.mxu0 0.0
        %2668 = vmatprep.mubr.f32.mxu0 0.0
        %2669 = vmatmul.mubr.f32.gmra.mrb[0].mxu0 %v2587
        %v2670 = vpop.f32.mrb[0].mxu0
        %v2671 = vadd.f32 0.0, %v2670
        %v2672 = vpop.f32.mrb[0].mxu0
        %2673 = vdwg.mxu0
        %v2674 = vmul.f32 %v2671, %v2671
        %v2676 = vrot.slane %v2674, 7
        %v2678 = vsub.f32 %v2671, %v2676
        %v2679 = vlaneseq
        %v2680 = vshrl.u32 %v2679, 7
        %v2681 = vsub.s32 0, %v2680
        %v2682 = vrot.slane %v2671, %v2681
        %v2683 = vsub.f32 %v2569, %v2682
        %v2684 = vsub.f32 %v2570, %v2682
        %v2685 = vadd.f32 %v2678, 1e-05
        %v2686 = vrsqrt.pop %v2685
        %v2687 = vlaneseq
        %v2688 = vshrl.u32 %v2687, 7
        %v2689 = vsub.s32 1, %v2688
        %v2690 = vrot.slane %v2686, %v2689
        %v2691 = vmul.f32 %v2683, %v2690
        %v2692 = vmul.f32 %v2684, %v2690
        %v2693 = vld [vmem:[#allocation8 + $0x4] sm:$0x1]
        %v2694 = vlaneseq
        %v2695 = vshrl.u32 %v2694, 7
        %v2696 = vsub.s32 0, %v2695
        %v2697 = vrot.slane %v2693, %v2696
        %v2698 = vmul.f32 %v2691, %v2697
        %v2699 = vmul.f32 %v2692, %v2697
        %v2700 = vld [vmem:[#allocation9 + $0x4] sm:$0x1]
        %v2701 = vlaneseq
        %v2702 = vshrl.u32 %v2701, 7
        %v2703 = vsub.s32 0, %v2702
        %v2704 = vrot.slane %v2700, %v2703
        %v2705 = vadd.f32 %v2698, %v2704
        %v2706 = vadd.f32 %v2699, %v2704
        %v2707 = vxor.u32 %v2705, 2147483648
        %v2708 = vxor.u32 %v2706, 2147483648
        %v2709 = vmul.f32 %v2707, 1.442695
        %v2710 = vpow.pop %v2709
        %v2711 = vmul.f32 %v2708, 1.442695
        %v2712 = vpow.pop %v2711
        %v2713 = vadd.f32 %v2710, 1.0
        %v2714 = vadd.f32 %v2712, 1.0
        %v2715 = vrcp.pop %v2713
        %v2716 = vmul.f32 1.0, %v2715
        %v2717 = vrcp.pop %v2714
        %v2718 = vmul.f32 1.0, %v2717
        %v2719 = vmul.f32 %v2705, %v2716
        %v2720 = vmul.f32 %v2706, %v2718
        %2721 = vst [vmem:[#allocation2 + $0x1] sm:$0xff] %v2719
        %2722 = vst [vmem:[#allocation2 + $0x9] sm:$0xff] %v2720
        %v2723 = vld [vmem:[#allocation2] sm:$0xff]
        %v2724 = vld [vmem:[#allocation2 + $0x8] sm:$0xff]
        %s2725 = scalar_lea.vmem [#allocation4], 1920
        %v2726 = vld [vmem:[%s2725] sm:$0xff]
        %v2727 = vld [vmem:[%s2725 + $0x8] sm:$0xff]
        %v2728 = vld [vmem:[%s2725 + $0x10] sm:$0xff]
        %v2729 = vld [vmem:[%s2725 + $0x18] sm:$0xff]
        %v2730 = vld [vmem:[%s2725 + $0x20] sm:$0xff]
        %v2731 = vld [vmem:[%s2725 + $0x28] sm:$0xff]
        %v2732 = vld [vmem:[%s2725 + $0x30] sm:$0xff]
        %v2733 = vld [vmem:[%s2725 + $0x38] sm:$0xff]
        %v2734 = vld [vmem:[%s2725 + $0x40] sm:$0xff]
        %v2735 = vld [vmem:[%s2725 + $0x48] sm:$0xff]
        %v2736 = vld [vmem:[%s2725 + $0x50] sm:$0xff]
        %v2737 = vld [vmem:[%s2725 + $0x58] sm:$0xff]
        %v2738 = vld [vmem:[%s2725 + $0x60] sm:$0xff]
        %v2739 = vld [vmem:[%s2725 + $0x68] sm:$0xff]
        %v2740 = vld [vmem:[%s2725 + $0x70] sm:$0xff]
        %v2741 = vld [vmem:[%s2725 + $0x78] sm:$0xff]
        %v2742 = vld [vmem:[#allocation2 + $0x1] sm:$0xff]
        %v2743 = vld [vmem:[#allocation2 + $0x9] sm:$0xff]
        %s2744 = scalar_lea.vmem [#allocation4], 2048
        %v2745 = vld [vmem:[%s2744] sm:$0xff]
        %v2746 = vld [vmem:[%s2744 + $0x8] sm:$0xff]
        %v2747 = vld [vmem:[%s2744 + $0x10] sm:$0xff]
        %v2748 = vld [vmem:[%s2744 + $0x18] sm:$0xff]
        %v2749 = vld [vmem:[%s2744 + $0x20] sm:$0xff]
        %v2750 = vld [vmem:[%s2744 + $0x28] sm:$0xff]
        %v2751 = vld [vmem:[%s2744 + $0x30] sm:$0xff]
        %v2752 = vld [vmem:[%s2744 + $0x38] sm:$0xff]
        %v2753 = vld [vmem:[%s2744 + $0x40] sm:$0xff]
        %v2754 = vld [vmem:[%s2744 + $0x48] sm:$0xff]
        %v2755 = vld [vmem:[%s2744 + $0x50] sm:$0xff]
        %v2756 = vld [vmem:[%s2744 + $0x58] sm:$0xff]
        %v2757 = vld [vmem:[%s2744 + $0x60] sm:$0xff]
        %v2758 = vld [vmem:[%s2744 + $0x68] sm:$0xff]
        %v2759 = vld [vmem:[%s2744 + $0x70] sm:$0xff]
        %v2760 = vld [vmem:[%s2744 + $0x78] sm:$0xff]
        %2761 = vmatprep.subr.mxu0 0.0
        %2762 = vmatpush1.msra.mxu0 %v2745
        %2763 = vmatprep.subr.mxu0 0.0
        %2764 = vmatpush1.msra.mxu0 %v2746
        %2765 = vmatprep.subr.mxu0 0.0
        %2766 = vmatpush1.msra.mxu0 %v2747
        %2767 = vmatprep.subr.mxu0 0.0
        %2768 = vmatpush1.msra.mxu0 %v2748
        %2769 = vmatprep.subr.mxu0 0.0
        %2770 = vmatpush1.msra.mxu0 %v2749
        %2771 = vmatprep.subr.mxu0 0.0
        %2772 = vmatpush1.msra.mxu0 %v2750
        %2773 = vmatprep.subr.mxu0 0.0
        %2774 = vmatpush1.msra.mxu0 %v2751
        %2775 = vmatprep.subr.mxu0 0.0
        %2776 = vmatpush1.msra.mxu0 %v2752
        %2777 = vmatprep.subr.mxu0 0.0
        %2778 = vmatpush1.msra.mxu0 %v2753
        %2779 = vmatprep.subr.mxu0 0.0
        %2780 = vmatpush1.msra.mxu0 %v2754
        %2781 = vmatprep.subr.mxu0 0.0
        %2782 = vmatpush1.msra.mxu0 %v2755
        %2783 = vmatprep.subr.mxu0 0.0
        %2784 = vmatpush1.msra.mxu0 %v2756
        %2785 = vmatprep.subr.mxu0 0.0
        %2786 = vmatpush1.msra.mxu0 %v2757
        %2787 = vmatprep.subr.mxu0 0.0
        %2788 = vmatpush1.msra.mxu0 %v2758
        %2789 = vmatprep.subr.mxu0 0.0
        %2790 = vmatpush1.msra.mxu0 %v2759
        %2791 = vmatprep.subr.mxu0 0.0
        %2792 = vmatpush1.msra.mxu0 %v2760
        %2793 = vmatprep.subr.mxu0 0.0
        %2794 = vmatpush1.msra.mxu0 0.0
        %2795 = vmatprep.subr.mxu0 0.0
        %2796 = vmatpush1.msra.mxu0 0.0
        %2797 = vmatprep.subr.mxu0 0.0
        %2798 = vmatpush1.msra.mxu0 0.0
        %2799 = vmatprep.subr.mxu0 0.0
        %2800 = vmatpush1.msra.mxu0 0.0
        %2801 = vmatprep.subr.mxu0 0.0
        %2802 = vmatpush1.msra.mxu0 0.0
        %2803 = vmatprep.subr.mxu0 0.0
        %2804 = vmatpush1.msra.mxu0 0.0
        %2805 = vmatprep.subr.mxu0 0.0
        %2806 = vmatpush1.msra.mxu0 0.0
        %2807 = vmatprep.subr.mxu0 0.0
        %2808 = vmatpush1.msra.mxu0 0.0
        %2809 = vmatprep.subr.mxu0 0.0
        %2810 = vmatpush1.msra.mxu0 0.0
        %2811 = vmatprep.subr.mxu0 0.0
        %2812 = vmatpush1.msra.mxu0 0.0
        %2813 = vmatprep.subr.mxu0 0.0
        %2814 = vmatpush1.msra.mxu0 0.0
        %2815 = vmatprep.subr.mxu0 0.0
        %2816 = vmatpush1.msra.mxu0 0.0
        %2817 = vmatprep.subr.mxu0 0.0
        %2818 = vmatpush1.msra.mxu0 0.0
        %2819 = vmatprep.subr.mxu0 0.0
        %2820 = vmatpush1.msra.mxu0 0.0
        %2821 = vmatprep.subr.mxu0 0.0
        %2822 = vmatpush1.msra.mxu0 0.0
        %2823 = vmatprep.subr.mxu0 0.0
        %2824 = vmatpush1.msra.mxu0 0.0
        %2825 = vmatprep.mubr.f32.mxu0 0.0
        %2826 = vmatmul.mubr.f32.gmra.mrb[0].mxu0 %v2742
        %v2827 = vpop.f32.mrb[0].mxu0
        %v2828 = vadd.f32 0.0, %v2827
        %v2829 = vpop.f32.mrb[0].mxu0
        %2830 = vmatprep.mubr.f32.mxu0 0.0
        %2831 = vmatmul.mubr.f32.gmra.mrb[0].mxu0 %v2743
        %v2832 = vpop.f32.mrb[0].mxu0
        %v2833 = vadd.f32 0.0, %v2832
        %v2834 = vpop.f32.mrb[0].mxu0
        %2835 = vdwg.mxu0
        %2836 = vmatprep.subr.mxu0 0.0
        %2837 = vmatpush1.msra.mxu0 %v2726
        %2838 = vmatprep.subr.mxu0 0.0
        %2839 = vmatpush1.msra.mxu0 %v2727
        %2840 = vmatprep.subr.mxu0 0.0
        %2841 = vmatpush1.msra.mxu0 %v2728
        %2842 = vmatprep.subr.mxu0 0.0
        %2843 = vmatpush1.msra.mxu0 %v2729
        %2844 = vmatprep.subr.mxu0 0.0
        %2845 = vmatpush1.msra.mxu0 %v2730
        %2846 = vmatprep.subr.mxu0 0.0
        %2847 = vmatpush1.msra.mxu0 %v2731
        %2848 = vmatprep.subr.mxu0 0.0
        %2849 = vmatpush1.msra.mxu0 %v2732
        %2850 = vmatprep.subr.mxu0 0.0
        %2851 = vmatpush1.msra.mxu0 %v2733
        %2852 = vmatprep.subr.mxu0 0.0
        %2853 = vmatpush1.msra.mxu0 %v2734
        %2854 = vmatprep.subr.mxu0 0.0
        %2855 = vmatpush1.msra.mxu0 %v2735
        %2856 = vmatprep.subr.mxu0 0.0
        %2857 = vmatpush1.msra.mxu0 %v2736
        %2858 = vmatprep.subr.mxu0 0.0
        %2859 = vmatpush1.msra.mxu0 %v2737
        %2860 = vmatprep.subr.mxu0 0.0
        %2861 = vmatpush1.msra.mxu0 %v2738
        %2862 = vmatprep.subr.mxu0 0.0
        %2863 = vmatpush1.msra.mxu0 %v2739
        %2864 = vmatprep.subr.mxu0 0.0
        %2865 = vmatpush1.msra.mxu0 %v2740
        %2866 = vmatprep.subr.mxu0 0.0
        %2867 = vmatpush1.msra.mxu0 %v2741
        %2868 = vmatprep.subr.mxu0 0.0
        %2869 = vmatpush1.msra.mxu0 0.0
        %2870 = vmatprep.subr.mxu0 0.0
        %2871 = vmatpush1.msra.mxu0 0.0
        %2872 = vmatprep.subr.mxu0 0.0
        %2873 = vmatpush1.msra.mxu0 0.0
        %2874 = vmatprep.subr.mxu0 0.0
        %2875 = vmatpush1.msra.mxu0 0.0
        %2876 = vmatprep.subr.mxu0 0.0
        %2877 = vmatpush1.msra.mxu0 0.0
        %2878 = vmatprep.subr.mxu0 0.0
        %2879 = vmatpush1.msra.mxu0 0.0
        %2880 = vmatprep.subr.mxu0 0.0
        %2881 = vmatpush1.msra.mxu0 0.0
        %2882 = vmatprep.subr.mxu0 0.0
        %2883 = vmatpush1.msra.mxu0 0.0
        %2884 = vmatprep.subr.mxu0 0.0
        %2885 = vmatpush1.msra.mxu0 0.0
        %2886 = vmatprep.subr.mxu0 0.0
        %2887 = vmatpush1.msra.mxu0 0.0
        %2888 = vmatprep.subr.mxu0 0.0
        %2889 = vmatpush1.msra.mxu0 0.0
        %2890 = vmatprep.subr.mxu0 0.0
        %2891 = vmatpush1.msra.mxu0 0.0
        %2892 = vmatprep.subr.mxu0 0.0
        %2893 = vmatpush1.msra.mxu0 0.0
        %2894 = vmatprep.subr.mxu0 0.0
        %2895 = vmatpush1.msra.mxu0 0.0
        %2896 = vmatprep.subr.mxu0 0.0
        %2897 = vmatpush1.msra.mxu0 0.0
        %2898 = vmatprep.subr.mxu0 0.0
        %2899 = vmatpush1.msra.mxu0 0.0
        %2900 = vmatprep.mubr.f32.mxu0 0.0
        %2901 = vmatmul.mubr.f32.gmra.mrb[0].mxu0 %v2723
        %v2902 = vpop.f32.mrb[0].mxu0
        %v2903 = vadd.f32 %v2828, %v2902
        %v2904 = vpop.f32.mrb[0].mxu0
        %2905 = vmatprep.mubr.f32.mxu0 0.0
        %2906 = vmatmul.mubr.f32.gmra.mrb[0].mxu0 %v2724
        %v2907 = vpop.f32.mrb[0].mxu0
        %v2908 = vadd.f32 %v2833, %v2907
        %v2909 = vpop.f32.mrb[0].mxu0
        %2910 = vdwg.mxu0
        %v2911 = vld [vmem:[#allocation2 + $0x2] sm:$0xff]
        %v2912 = vld [vmem:[#allocation2 + $0xa] sm:$0xff]
        %s2913 = scalar_lea.vmem [#allocation4], 2176
        %v2914 = vld [vmem:[%s2913] sm:$0xff]
        %v2915 = vld [vmem:[%s2913 + $0x8] sm:$0xff]
        %v2916 = vld [vmem:[%s2913 + $0x10] sm:$0xff]
        %v2917 = vld [vmem:[%s2913 + $0x18] sm:$0xff]
        %v2918 = vld [vmem:[%s2913 + $0x20] sm:$0xff]
        %v2919 = vld [vmem:[%s2913 + $0x28] sm:$0xff]
        %v2920 = vld [vmem:[%s2913 + $0x30] sm:$0xff]
        %v2921 = vld [vmem:[%s2913 + $0x38] sm:$0xff]
        %v2922 = vld [vmem:[%s2913 + $0x40] sm:$0xff]
        %v2923 = vld [vmem:[%s2913 + $0x48] sm:$0xff]
        %v2924 = vld [vmem:[%s2913 + $0x50] sm:$0xff]
        %v2925 = vld [vmem:[%s2913 + $0x58] sm:$0xff]
        %v2926 = vld [vmem:[%s2913 + $0x60] sm:$0xff]
        %v2927 = vld [vmem:[%s2913 + $0x68] sm:$0xff]
        %v2928 = vld [vmem:[%s2913 + $0x70] sm:$0xff]
        %v2929 = vld [vmem:[%s2913 + $0x78] sm:$0xff]
        %2930 = vmatprep.subr.mxu0 0.0
        %2931 = vmatpush1.msra.mxu0 %v2914
        %2932 = vmatprep.subr.mxu0 0.0
        %2933 = vmatpush1.msra.mxu0 %v2915
        %2934 = vmatprep.subr.mxu0 0.0
        %2935 = vmatpush1.msra.mxu0 %v2916
        %2936 = vmatprep.subr.mxu0 0.0
        %2937 = vmatpush1.msra.mxu0 %v2917
        %2938 = vmatprep.subr.mxu0 0.0
        %2939 = vmatpush1.msra.mxu0 %v2918
        %2940 = vmatprep.subr.mxu0 0.0
        %2941 = vmatpush1.msra.mxu0 %v2919
        %2942 = vmatprep.subr.mxu0 0.0
        %2943 = vmatpush1.msra.mxu0 %v2920
        %2944 = vmatprep.subr.mxu0 0.0
        %2945 = vmatpush1.msra.mxu0 %v2921
        %2946 = vmatprep.subr.mxu0 0.0
        %2947 = vmatpush1.msra.mxu0 %v2922
        %2948 = vmatprep.subr.mxu0 0.0
        %2949 = vmatpush1.msra.mxu0 %v2923
        %2950 = vmatprep.subr.mxu0 0.0
        %2951 = vmatpush1.msra.mxu0 %v2924
        %2952 = vmatprep.subr.mxu0 0.0
        %2953 = vmatpush1.msra.mxu0 %v2925
        %2954 = vmatprep.subr.mxu0 0.0
        %2955 = vmatpush1.msra.mxu0 %v2926
        %2956 = vmatprep.subr.mxu0 0.0
        %2957 = vmatpush1.msra.mxu0 %v2927
        %2958 = vmatprep.subr.mxu0 0.0
        %2959 = vmatpush1.msra.mxu0 %v2928
        %2960 = vmatprep.subr.mxu0 0.0
        %2961 = vmatpush1.msra.mxu0 %v2929
        %2962 = vmatprep.subr.mxu0 0.0
        %2963 = vmatpush1.msra.mxu0 0.0
        %2964 = vmatprep.subr.mxu0 0.0
        %2965 = vmatpush1.msra.mxu0 0.0
        %2966 = vmatprep.subr.mxu0 0.0
        %2967 = vmatpush1.msra.mxu0 0.0
        %2968 = vmatprep.subr.mxu0 0.0
        %2969 = vmatpush1.msra.mxu0 0.0
        %2970 = vmatprep.subr.mxu0 0.0
        %2971 = vmatpush1.msra.mxu0 0.0
        %2972 = vmatprep.subr.mxu0 0.0
        %2973 = vmatpush1.msra.mxu0 0.0
        %2974 = vmatprep.subr.mxu0 0.0
        %2975 = vmatpush1.msra.mxu0 0.0
        %2976 = vmatprep.subr.mxu0 0.0
        %2977 = vmatpush1.msra.mxu0 0.0
        %2978 = vmatprep.subr.mxu0 0.0
        %2979 = vmatpush1.msra.mxu0 0.0
        %2980 = vmatprep.subr.mxu0 0.0
        %2981 = vmatpush1.msra.mxu0 0.0
        %2982 = vmatprep.subr.mxu0 0.0
        %2983 = vmatpush1.msra.mxu0 0.0
        %2984 = vmatprep.subr.mxu0 0.0
        %2985 = vmatpush1.msra.mxu0 0.0
        %2986 = vmatprep.subr.mxu0 0.0
        %2987 = vmatpush1.msra.mxu0 0.0
        %2988 = vmatprep.subr.mxu0 0.0
        %2989 = vmatpush1.msra.mxu0 0.0
        %2990 = vmatprep.subr.mxu0 0.0
        %2991 = vmatpush1.msra.mxu0 0.0
        %2992 = vmatprep.subr.mxu0 0.0
        %2993 = vmatpush1.msra.mxu0 0.0
        %2994 = vmatprep.mubr.f32.mxu0 0.0
        %2995 = vmatmul.mubr.f32.gmra.mrb[0].mxu0 %v2911
        %v2996 = vpop.f32.mrb[0].mxu0
        %v2997 = vadd.f32 0.0, %v2996
        %v2998 = vpop.f32.mrb[0].mxu0
        %2999 = vmatprep.mubr.f32.mxu0 0.0
        %3000 = vmatmul.mubr.f32.gmra.mrb[0].mxu0 %v2912
        %v3001 = vpop.f32.mrb[0].mxu0
        %v3002 = vadd.f32 0.0, %v3001
        %v3003 = vpop.f32.mrb[0].mxu0
        %3004 = vdwg.mxu0
        %v3005 = vadd.f32 %v2903, %v2997
        %v3006 = vadd.f32 %v2908, %v3002
        %v3007 = vld [vmem:[#allocation6 + $0x5] sm:$0x1]
        %v3008 = vlaneseq
        %v3009 = vshrl.u32 %v3008, 7
        %v3010 = vsub.s32 0, %v3009
        %v3011 = vrot.slane %v3007, %v3010
        %v3012 = vadd.f32 %v3005, %v3011
        %v3013 = vadd.f32 %v3006, %v3011
        %v3014 = vadd.f32 %v3012, %v3013
        %v3015 = vrot.slane %v3014, 4
        %v3016 = vadd.f32 %v3014, %v3015
        %v3017 = vrot.slane %v3016, 2
        %v3018 = vadd.f32 %v3016, %v3017
        %v3019 = vrot.slane %v3018, 1
        %v3020 = vadd.f32 %v3018, %v3019
        %v3021 = vmul.f32 %v3012, %v3012
        %v3022 = vmul.f32 %v3013, %v3013
        %v3023 = vadd.f32 %v3021, %v3022
        %v3024 = vrot.slane %v3023, 4
        %v3025 = vadd.f32 %v3023, %v3024
        %v3026 = vrot.slane %v3025, 2
        %v3027 = vadd.f32 %v3025, %v3026
        %v3028 = vrot.slane %v3027, 1
        %v3029 = vadd.f32 %v3027, %v3028
        %v3030 = vsel %vm810, %v3020, %v3029
        %v3031 = vld [vmem:[#allocation14] sm:$0xff]
        %v3032 = vld [vmem:[#allocation14 + $0x8] sm:$0xff]
        %v3033 = vld [vmem:[#allocation14 + $0x10] sm:$0xff]
        %v3034 = vld [vmem:[#allocation14 + $0x18] sm:$0xff]
        %v3035 = vld [vmem:[#allocation14 + $0x20] sm:$0xff]
        %v3036 = vld [vmem:[#allocation14 + $0x28] sm:$0xff]
        %v3037 = vld [vmem:[#allocation14 + $0x30] sm:$0xff]
        %v3038 = vld [vmem:[#allocation14 + $0x38] sm:$0xff]
        %v3039 = vld [vmem:[#allocation14 + $0x40] sm:$0xff]
        %v3040 = vld [vmem:[#allocation14 + $0x48] sm:$0xff]
        %v3041 = vld [vmem:[#allocation14 + $0x50] sm:$0xff]
        %v3042 = vld [vmem:[#allocation14 + $0x58] sm:$0xff]
        %v3043 = vld [vmem:[#allocation14 + $0x60] sm:$0xff]
        %v3044 = vld [vmem:[#allocation14 + $0x68] sm:$0xff]
        %v3045 = vld [vmem:[#allocation14 + $0x70] sm:$0xff]
        %v3046 = vld [vmem:[#allocation14 + $0x78] sm:$0xff]
        %3047 = vmatprep.subr.mxu0 0.0
        %3048 = vmatpush1.msra.mxu0 %v3031
        %3049 = vmatprep.subr.mxu0 0.0
        %3050 = vmatpush1.msra.mxu0 %v3032
        %3051 = vmatprep.subr.mxu0 0.0
        %3052 = vmatpush1.msra.mxu0 %v3033
        %3053 = vmatprep.subr.mxu0 0.0
        %3054 = vmatpush1.msra.mxu0 %v3034
        %3055 = vmatprep.subr.mxu0 0.0
        %3056 = vmatpush1.msra.mxu0 %v3035
        %3057 = vmatprep.subr.mxu0 0.0
        %3058 = vmatpush1.msra.mxu0 %v3036
        %3059 = vmatprep.subr.mxu0 0.0
        %3060 = vmatpush1.msra.mxu0 %v3037
        %3061 = vmatprep.subr.mxu0 0.0
        %3062 = vmatpush1.msra.mxu0 %v3038
        %3063 = vmatprep.subr.mxu0 0.0
        %3064 = vmatpush1.msra.mxu0 %v3039
        %3065 = vmatprep.subr.mxu0 0.0
        %3066 = vmatpush1.msra.mxu0 %v3040
        %3067 = vmatprep.subr.mxu0 0.0
        %3068 = vmatpush1.msra.mxu0 %v3041
        %3069 = vmatprep.subr.mxu0 0.0
        %3070 = vmatpush1.msra.mxu0 %v3042
        %3071 = vmatprep.subr.mxu0 0.0
        %3072 = vmatpush1.msra.mxu0 %v3043
        %3073 = vmatprep.subr.mxu0 0.0
        %3074 = vmatpush1.msra.mxu0 %v3044
        %3075 = vmatprep.subr.mxu0 0.0
        %3076 = vmatpush1.msra.mxu0 %v3045
        %3077 = vmatprep.subr.mxu0 0.0
        %3078 = vmatpush1.msra.mxu0 %v3046
        %3079 = vmatprep.subr.mxu0 0.0
        %3080 = vmatpush1.msra.mxu0 0.0
        %3081 = vmatprep.subr.mxu0 0.0
        %3082 = vmatpush1.msra.mxu0 0.0
        %3083 = vmatprep.subr.mxu0 0.0
        %3084 = vmatpush1.msra.mxu0 0.0
        %3085 = vmatprep.subr.mxu0 0.0
        %3086 = vmatpush1.msra.mxu0 0.0
        %3087 = vmatprep.subr.mxu0 0.0
        %3088 = vmatpush1.msra.mxu0 0.0
        %3089 = vmatprep.subr.mxu0 0.0
        %3090 = vmatpush1.msra.mxu0 0.0
        %3091 = vmatprep.subr.mxu0 0.0
        %3092 = vmatpush1.msra.mxu0 0.0
        %3093 = vmatprep.subr.mxu0 0.0
        %3094 = vmatpush1.msra.mxu0 0.0
        %3095 = vmatprep.subr.mxu0 0.0
        %3096 = vmatpush1.msra.mxu0 0.0
        %3097 = vmatprep.subr.mxu0 0.0
        %3098 = vmatpush1.msra.mxu0 0.0
        %3099 = vmatprep.subr.mxu0 0.0
        %3100 = vmatpush1.msra.mxu0 0.0
        %3101 = vmatprep.subr.mxu0 0.0
        %3102 = vmatpush1.msra.mxu0 0.0
        %3103 = vmatprep.subr.mxu0 0.0
        %3104 = vmatpush1.msra.mxu0 0.0
        %3105 = vmatprep.subr.mxu0 0.0
        %3106 = vmatpush1.msra.mxu0 0.0
        %3107 = vmatprep.subr.mxu0 0.0
        %3108 = vmatpush1.msra.mxu0 0.0
        %3109 = vmatprep.subr.mxu0 0.0
        %3110 = vmatpush1.msra.mxu0 0.0
        %3111 = vmatprep.mubr.f32.mxu0 0.0
        %3112 = vmatmul.mubr.f32.gmra.mrb[0].mxu0 %v3030
        %v3113 = vpop.f32.mrb[0].mxu0
        %v3114 = vadd.f32 0.0, %v3113
        %v3115 = vpop.f32.mrb[0].mxu0
        %3116 = vdwg.mxu0
        %v3117 = vmul.f32 %v3114, %v3114
        %v3119 = vrot.slane %v3117, 7
        %v3121 = vsub.f32 %v3114, %v3119
        %v3122 = vlaneseq
        %v3123 = vshrl.u32 %v3122, 7
        %v3124 = vsub.s32 0, %v3123
        %v3125 = vrot.slane %v3114, %v3124
        %v3126 = vsub.f32 %v3012, %v3125
        %v3127 = vsub.f32 %v3013, %v3125
        %v3128 = vadd.f32 %v3121, 1e-05
        %v3129 = vrsqrt.pop %v3128
        %v3130 = vlaneseq
        %v3131 = vshrl.u32 %v3130, 7
        %v3132 = vsub.s32 1, %v3131
        %v3133 = vrot.slane %v3129, %v3132
        %v3134 = vmul.f32 %v3126, %v3133
        %v3135 = vmul.f32 %v3127, %v3133
        %v3136 = vld [vmem:[#allocation8 + $0x5] sm:$0x1]
        %v3137 = vlaneseq
        %v3138 = vshrl.u32 %v3137, 7
        %v3139 = vsub.s32 0, %v3138
        %v3140 = vrot.slane %v3136, %v3139
        %v3141 = vmul.f32 %v3134, %v3140
        %v3142 = vmul.f32 %v3135, %v3140
        %v3143 = vld [vmem:[#allocation9 + $0x5] sm:$0x1]
        %v3144 = vlaneseq
        %v3145 = vshrl.u32 %v3144, 7
        %v3146 = vsub.s32 0, %v3145
        %v3147 = vrot.slane %v3143, %v3146
        %v3148 = vadd.f32 %v3141, %v3147
        %v3149 = vadd.f32 %v3142, %v3147
        %v3150 = vxor.u32 %v3148, 2147483648
        %v3151 = vxor.u32 %v3149, 2147483648
        %v3152 = vmul.f32 %v3150, 1.442695
        %v3153 = vpow.pop %v3152
        %v3154 = vmul.f32 %v3151, 1.442695
        %v3155 = vpow.pop %v3154
        %v3156 = vadd.f32 %v3153, 1.0
        %v3157 = vadd.f32 %v3155, 1.0
        %v3158 = vrcp.pop %v3156
        %v3159 = vmul.f32 1.0, %v3158
        %v3160 = vrcp.pop %v3157
        %v3161 = vmul.f32 1.0, %v3160
        %v3162 = vmul.f32 %v3148, %v3159
        %v3163 = vmul.f32 %v3149, %v3161
        %v3164 = vadd.f32 %v3162, %v2276
        %v3165 = vadd.f32 %v3163, %v2277
        %v3166 = vld [vmem:[%s5] sm:$0xff]
        %v3167 = vld [vmem:[%s5 + $0x8] sm:$0xff]
        %v3168 = vld [vmem:[%s5 + $0x10] sm:$0xff]
        %v3169 = vld [vmem:[%s5 + $0x18] sm:$0xff]
        %v3170 = vld [vmem:[%s5 + $0x20] sm:$0xff]
        %v3171 = vld [vmem:[%s5 + $0x28] sm:$0xff]
        %v3172 = vld [vmem:[%s5 + $0x30] sm:$0xff]
        %v3173 = vld [vmem:[%s5 + $0x38] sm:$0xff]
        %v3174 = vld [vmem:[%s5 + $0x40] sm:$0xff]
        %v3175 = vld [vmem:[%s5 + $0x48] sm:$0xff]
        %v3176 = vld [vmem:[%s5 + $0x50] sm:$0xff]
        %v3177 = vld [vmem:[%s5 + $0x58] sm:$0xff]
        %v3178 = vld [vmem:[%s5 + $0x60] sm:$0xff]
        %v3179 = vld [vmem:[%s5 + $0x68] sm:$0xff]
        %v3180 = vld [vmem:[%s5 + $0x70] sm:$0xff]
        %v3181 = vld [vmem:[%s5 + $0x78] sm:$0xff]
        %v3182 = vld [vmem:[#allocation11] sm:$0x1]
        %v3184 = vlaneseq
        %v3185 = vshrl.u32 %v3184, 7
        %v3186 = vsub.s32 0, %v3185
        %v3187 = vrot.slane %v3182, %v3186
        %3189 = vmatprep.subr.mxu0 0.0
        %3190 = vmatpush1.msra.mxu0 %v3166
        %3191 = vmatprep.subr.mxu0 0.0
        %3192 = vmatpush1.msra.mxu0 %v3167
        %3193 = vmatprep.subr.mxu0 0.0
        %3194 = vmatpush1.msra.mxu0 %v3168
        %3195 = vmatprep.subr.mxu0 0.0
        %3196 = vmatpush1.msra.mxu0 %v3169
        %3197 = vmatprep.subr.mxu0 0.0
        %3198 = vmatpush1.msra.mxu0 %v3170
        %3199 = vmatprep.subr.mxu0 0.0
        %3200 = vmatpush1.msra.mxu0 %v3171
        %3201 = vmatprep.subr.mxu0 0.0
        %3202 = vmatpush1.msra.mxu0 %v3172
        %3203 = vmatprep.subr.mxu0 0.0
        %3204 = vmatpush1.msra.mxu0 %v3173
        %3205 = vmatprep.subr.mxu0 0.0
        %3206 = vmatpush1.msra.mxu0 %v3174
        %3207 = vmatprep.subr.mxu0 0.0
        %3208 = vmatpush1.msra.mxu0 %v3175
        %3209 = vmatprep.subr.mxu0 0.0
        %3210 = vmatpush1.msra.mxu0 %v3176
        %3211 = vmatprep.subr.mxu0 0.0
        %3212 = vmatpush1.msra.mxu0 %v3177
        %3213 = vmatprep.subr.mxu0 0.0
        %3214 = vmatpush1.msra.mxu0 %v3178
        %3215 = vmatprep.subr.mxu0 0.0
        %3216 = vmatpush1.msra.mxu0 %v3179
        %3217 = vmatprep.subr.mxu0 0.0
        %3218 = vmatpush1.msra.mxu0 %v3180
        %3219 = vmatprep.subr.mxu0 0.0
        %3220 = vmatpush1.msra.mxu0 %v3181
        %3221 = vmatprep.subr.mxu0 0.0
        %3222 = vmatpush1.msra.mxu0 0.0
        %3223 = vmatprep.subr.mxu0 0.0
        %3224 = vmatpush1.msra.mxu0 0.0
        %3225 = vmatprep.subr.mxu0 0.0
        %3226 = vmatpush1.msra.mxu0 0.0
        %3227 = vmatprep.subr.mxu0 0.0
        %3228 = vmatpush1.msra.mxu0 0.0
        %3229 = vmatprep.subr.mxu0 0.0
        %3230 = vmatpush1.msra.mxu0 0.0
        %3231 = vmatprep.subr.mxu0 0.0
        %3232 = vmatpush1.msra.mxu0 0.0
        %3233 = vmatprep.subr.mxu0 0.0
        %3234 = vmatpush1.msra.mxu0 0.0
        %3235 = vmatprep.subr.mxu0 0.0
        %3236 = vmatpush1.msra.mxu0 0.0
        %3237 = vmatprep.subr.mxu0 0.0
        %3238 = vmatpush1.msra.mxu0 0.0
        %3239 = vmatprep.subr.mxu0 0.0
        %3240 = vmatpush1.msra.mxu0 0.0
        %3241 = vmatprep.subr.mxu0 0.0
        %3242 = vmatpush1.msra.mxu0 0.0
        %3243 = vmatprep.subr.mxu0 0.0
        %3244 = vmatpush1.msra.mxu0 0.0
        %3245 = vmatprep.subr.mxu0 0.0
        %3246 = vmatpush1.msra.mxu0 0.0
        %3247 = vmatprep.subr.mxu0 0.0
        %3248 = vmatpush1.msra.mxu0 0.0
        %3249 = vmatprep.subr.mxu0 0.0
        %3250 = vmatpush1.msra.mxu0 0.0
        %3251 = vmatprep.subr.mxu0 0.0
        %3252 = vmatpush1.msra.mxu0 0.0
        %3253 = vmatprep.mubr.f32.mxu0 0.0
        %3254 = vmatmul.mubr.f32.gmra.mrb[0].mxu0 %v3164
        %v3255 = vpop.f32.mrb[0].mxu0
        %v3256 = vadd.f32 %v3187, %v3255
        %v3257 = vpop.f32.mrb[0].mxu0
        %3258 = vmatprep.mubr.f32.mxu0 0.0
        %3259 = vmatmul.mubr.f32.gmra.mrb[0].mxu0 %v3165
        %v3260 = vpop.f32.mrb[0].mxu0
        %v3261 = vadd.f32 %v3187, %v3260
        %v3262 = vpop.f32.mrb[0].mxu0
        %3263 = vdwg.mxu0
        %v3264 = vxor.u32 %v3256, 2147483648
        %v3265 = vxor.u32 %v3261, 2147483648
        %v3266 = vmul.f32 %v3264, 1.442695
        %v3267 = vpow.pop %v3266
        %v3268 = vmul.f32 %v3265, 1.442695
        %v3269 = vpow.pop %v3268
        %v3270 = vadd.f32 %v3267, 1.0
        %v3271 = vadd.f32 %v3269, 1.0
        %v3272 = vrcp.pop %v3270
        %v3273 = vmul.f32 1.0, %v3272
        %v3274 = vrcp.pop %v3271
        %v3275 = vmul.f32 1.0, %v3274
        %v3276 = vmul.f32 %v3256, %v3273
        %v3277 = vmul.f32 %v3261, %v3275
        %v3278 = vld [vmem:[#allocation12] sm:$0xff]
        %v3279 = vld [vmem:[#allocation12 + $0x8] sm:$0xff]
        %v3280 = vld [vmem:[#allocation12 + $0x10] sm:$0xff]
        %v3281 = vld [vmem:[#allocation12 + $0x18] sm:$0xff]
        %v3282 = vld [vmem:[#allocation12 + $0x20] sm:$0xff]
        %v3283 = vld [vmem:[#allocation12 + $0x28] sm:$0xff]
        %v3284 = vld [vmem:[#allocation12 + $0x30] sm:$0xff]
        %v3285 = vld [vmem:[#allocation12 + $0x38] sm:$0xff]
        %v3286 = vld [vmem:[#allocation3] sm:$0x1]
        %v3288 = vlaneseq
        %v3289 = vshrl.u32 %v3288, 7
        %v3290 = vsub.s32 0, %v3289
        %v3291 = vrot.slane %v3286, %v3290
        %3292 = vset.pattern.permute.xlu0 0
        %3293 = vperm.xlu0 %3292, %v3291
        %v3294 = vpop.permute.xlu0 %3293
        %vm3296 = vcmask 523264
        %v3298 = vsel %vm3296, %v3276, 0
        %v3301 = vsel %vm3296, %v3277, 0
        %3303 = vmatprep.subr.mxu0 0.0
        %3304 = vmatpush1.msra.mxu0 %v3278
        %3305 = vmatprep.subr.mxu0 0.0
        %3306 = vmatpush1.msra.mxu0 %v3279
        %3307 = vmatprep.subr.mxu0 0.0
        %3308 = vmatpush1.msra.mxu0 %v3280
        %3309 = vmatprep.subr.mxu0 0.0
        %3310 = vmatpush1.msra.mxu0 %v3281
        %3311 = vmatprep.subr.mxu0 0.0
        %3312 = vmatpush1.msra.mxu0 %v3282
        %3313 = vmatprep.subr.mxu0 0.0
        %3314 = vmatpush1.msra.mxu0 %v3283
        %3315 = vmatprep.subr.mxu0 0.0
        %3316 = vmatpush1.msra.mxu0 %v3284
        %3317 = vmatprep.subr.mxu0 0.0
        %3318 = vmatpush1.msra.mxu0 %v3285
        %3319 = vmatprep.subr.mxu0 0.0
        %3320 = vmatpush1.msra.mxu0 0.0
        %3321 = vmatprep.subr.mxu0 0.0
        %3322 = vmatpush1.msra.mxu0 0.0
        %3323 = vmatprep.subr.mxu0 0.0
        %3324 = vmatpush1.msra.mxu0 0.0
        %3325 = vmatprep.subr.mxu0 0.0
        %3326 = vmatpush1.msra.mxu0 0.0
        %3327 = vmatprep.subr.mxu0 0.0
        %3328 = vmatpush1.msra.mxu0 0.0
        %3329 = vmatprep.subr.mxu0 0.0
        %3330 = vmatpush1.msra.mxu0 0.0
        %3331 = vmatprep.subr.mxu0 0.0
        %3332 = vmatpush1.msra.mxu0 0.0
        %3333 = vmatprep.subr.mxu0 0.0
        %3334 = vmatpush1.msra.mxu0 0.0
        %3335 = vmatprep.subr.mxu0 0.0
        %3336 = vmatpush1.msra.mxu0 0.0
        %3337 = vmatprep.subr.mxu0 0.0
        %3338 = vmatpush1.msra.mxu0 0.0
        %3339 = vmatprep.subr.mxu0 0.0
        %3340 = vmatpush1.msra.mxu0 0.0
        %3341 = vmatprep.subr.mxu0 0.0
        %3342 = vmatpush1.msra.mxu0 0.0
        %3343 = vmatprep.subr.mxu0 0.0
        %3344 = vmatpush1.msra.mxu0 0.0
        %3345 = vmatprep.subr.mxu0 0.0
        %3346 = vmatpush1.msra.mxu0 0.0
        %3347 = vmatprep.subr.mxu0 0.0
        %3348 = vmatpush1.msra.mxu0 0.0
        %3349 = vmatprep.subr.mxu0 0.0
        %3350 = vmatpush1.msra.mxu0 0.0
        %3351 = vmatprep.subr.mxu0 0.0
        %3352 = vmatpush1.msra.mxu0 0.0
        %3353 = vmatprep.subr.mxu0 0.0
        %3354 = vmatpush1.msra.mxu0 0.0
        %3355 = vmatprep.subr.mxu0 0.0
        %3356 = vmatpush1.msra.mxu0 0.0
        %3357 = vmatprep.subr.mxu0 0.0
        %3358 = vmatpush1.msra.mxu0 0.0
        %3359 = vmatprep.subr.mxu0 0.0
        %3360 = vmatpush1.msra.mxu0 0.0
        %3361 = vmatprep.subr.mxu0 0.0
        %3362 = vmatpush1.msra.mxu0 0.0
        %3363 = vmatprep.subr.mxu0 0.0
        %3364 = vmatpush1.msra.mxu0 0.0
        %3365 = vmatprep.subr.mxu0 0.0
        %3366 = vmatpush1.msra.mxu0 0.0
        %3367 = vmatprep.mubr.f32.mxu0 0.0
        %3368 = vmatmul.mubr.f32.gmra.mrb[0].mxu0 %v3298
        %v3369 = vpop.f32.mrb[0].mxu0
        %v3370 = vadd.f32 %v3294, %v3369
        %v3371 = vpop.f32.mrb[0].mxu0
        %3372 = vmatprep.mubr.f32.mxu0 0.0
        %3373 = vmatmul.mubr.f32.gmra.mrb[0].mxu0 %v3301
        %v3374 = vpop.f32.mrb[0].mxu0
        %v3375 = vadd.f32 %v3294, %v3374
        %v3376 = vpop.f32.mrb[0].mxu0
        %3377 = vdwg.mxu0
        %v3378 = vxor.u32 %v3370, 2147483648
        %v3379 = vxor.u32 %v3375, 2147483648
        %v3380 = vmul.f32 %v3378, 1.442695
        %v3381 = vpow.pop %v3380
        %v3382 = vmul.f32 %v3379, 1.442695
        %v3383 = vpow.pop %v3382
        %v3384 = vadd.f32 %v3381, 1.0
        %v3385 = vadd.f32 %v3383, 1.0
        %v3386 = vrcp.pop %v3384
        %v3387 = vmul.f32 1.0, %v3386
        %v3388 = vrcp.pop %v3385
        %v3389 = vmul.f32 1.0, %v3388
        %3392 = vrot.lane.b32.xlu0 %v3164, 8
        %v3393 = vpop.permute.xlu0 %3392
        %3394 = vrot.lane.b32.xlu0 %v3165, 8
        %v3395 = vpop.permute.xlu0 %3394
        %v3398 = vrot.slane %v3165, 7
        %v3400 = vrot.slane %v3164, 7
        %v3401 = vsel %vm810, %v3400, %v3398
        %v3404 = vsel %vm810, %v3398, %v3400
        %v3405 = vsub.f32 %v3164, %v3393
        %v3406 = vsub.f32 %v3165, %v3395
        %v3407 = vsub.f32 %v3164, %v3404
        %v3408 = vsub.f32 %v3165, %v3401
        %v3409 = vmul.f32 %v3405, %v3405
        %v3410 = vmul.f32 %v3406, %v3406
        %v3411 = vmul.f32 %v3407, %v3407
        %v3412 = vmul.f32 %v3408, %v3408
        %v3413 = vadd.f32 %v3409, %v3411
        %v3414 = vadd.f32 %v3410, %v3412
        %v3415 = vrsqrt.pop %v3413
        %v3416 = vmul.f32 %v3413, %v3415
        %vm3417 = vcmp.eq.f32.partialorder %v3413, inf
        %v3418 = vsel %vm3417, %v3413, %v3416
        %vm3419 = vcmp.eq.f32.partialorder %v3413, 0.0
        %v3420 = vand.u32 %v3413, 2147483648
        %v3421 = vsel %vm3419, %v3420, %v3418
        %v3422 = vrsqrt.pop %v3414
        %v3423 = vmul.f32 %v3414, %v3422
        %vm3424 = vcmp.eq.f32.partialorder %v3414, inf
        %v3425 = vsel %vm3424, %v3414, %v3423
        %vm3426 = vcmp.eq.f32.partialorder %v3414, 0.0
        %v3427 = vand.u32 %v3414, 2147483648
        %v3428 = vsel %vm3426, %v3427, %v3425
        %s3429 = scalar_lea.vmem [#allocation14], 128
        %v3430 = vld [vmem:[%s3429] sm:$0xff]
        %v3431 = vld [vmem:[%s3429 + $0x8] sm:$0xff]
        %v3432 = vld [vmem:[%s3429 + $0x10] sm:$0xff]
        %v3433 = vld [vmem:[%s3429 + $0x18] sm:$0xff]
        %v3434 = vld [vmem:[%s3429 + $0x20] sm:$0xff]
        %v3435 = vld [vmem:[%s3429 + $0x28] sm:$0xff]
        %v3436 = vld [vmem:[%s3429 + $0x30] sm:$0xff]
        %v3437 = vld [vmem:[%s3429 + $0x38] sm:$0xff]
        %v3438 = vld [vmem:[%s3429 + $0x40] sm:$0xff]
        %v3439 = vld [vmem:[%s3429 + $0x48] sm:$0xff]
        %v3440 = vld [vmem:[%s3429 + $0x50] sm:$0xff]
        %v3441 = vld [vmem:[%s3429 + $0x58] sm:$0xff]
        %v3442 = vld [vmem:[%s3429 + $0x60] sm:$0xff]
        %v3443 = vld [vmem:[%s3429 + $0x68] sm:$0xff]
        %v3444 = vld [vmem:[%s3429 + $0x70] sm:$0xff]
        %v3445 = vld [vmem:[%s3429 + $0x78] sm:$0xff]
        %3446 = vmatprep.subr.mxu0 0.0
        %3447 = vmatpush1.msra.mxu0 %v3430
        %3448 = vmatprep.subr.mxu0 0.0
        %3449 = vmatpush1.msra.mxu0 %v3431
        %3450 = vmatprep.subr.mxu0 0.0
        %3451 = vmatpush1.msra.mxu0 %v3432
        %3452 = vmatprep.subr.mxu0 0.0
        %3453 = vmatpush1.msra.mxu0 %v3433
        %3454 = vmatprep.subr.mxu0 0.0
        %3455 = vmatpush1.msra.mxu0 %v3434
        %3456 = vmatprep.subr.mxu0 0.0
        %3457 = vmatpush1.msra.mxu0 %v3435
        %3458 = vmatprep.subr.mxu0 0.0
        %3459 = vmatpush1.msra.mxu0 %v3436
        %3460 = vmatprep.subr.mxu0 0.0
        %3461 = vmatpush1.msra.mxu0 %v3437
        %3462 = vmatprep.subr.mxu0 0.0
        %3463 = vmatpush1.msra.mxu0 %v3438
        %3464 = vmatprep.subr.mxu0 0.0
        %3465 = vmatpush1.msra.mxu0 %v3439
        %3466 = vmatprep.subr.mxu0 0.0
        %3467 = vmatpush1.msra.mxu0 %v3440
        %3468 = vmatprep.subr.mxu0 0.0
        %3469 = vmatpush1.msra.mxu0 %v3441
        %3470 = vmatprep.subr.mxu0 0.0
        %3471 = vmatpush1.msra.mxu0 %v3442
        %3472 = vmatprep.subr.mxu0 0.0
        %3473 = vmatpush1.msra.mxu0 %v3443
        %3474 = vmatprep.subr.mxu0 0.0
        %3475 = vmatpush1.msra.mxu0 %v3444
        %3476 = vmatprep.subr.mxu0 0.0
        %3477 = vmatpush1.msra.mxu0 %v3445
        %3478 = vmatprep.subr.mxu0 0.0
        %3479 = vmatpush1.msra.mxu0 0.0
        %3480 = vmatprep.subr.mxu0 0.0
        %3481 = vmatpush1.msra.mxu0 0.0
        %3482 = vmatprep.subr.mxu0 0.0
        %3483 = vmatpush1.msra.mxu0 0.0
        %3484 = vmatprep.subr.mxu0 0.0
        %3485 = vmatpush1.msra.mxu0 0.0
        %3486 = vmatprep.subr.mxu0 0.0
        %3487 = vmatpush1.msra.mxu0 0.0
        %3488 = vmatprep.subr.mxu0 0.0
        %3489 = vmatpush1.msra.mxu0 0.0
        %3490 = vmatprep.subr.mxu0 0.0
        %3491 = vmatpush1.msra.mxu0 0.0
        %3492 = vmatprep.subr.mxu0 0.0
        %3493 = vmatpush1.msra.mxu0 0.0
        %3494 = vmatprep.subr.mxu0 0.0
        %3495 = vmatpush1.msra.mxu0 0.0
        %3496 = vmatprep.subr.mxu0 0.0
        %3497 = vmatpush1.msra.mxu0 0.0
        %3498 = vmatprep.subr.mxu0 0.0
        %3499 = vmatpush1.msra.mxu0 0.0
        %3500 = vmatprep.subr.mxu0 0.0
        %3501 = vmatpush1.msra.mxu0 0.0
        %3502 = vmatprep.subr.mxu0 0.0
        %3503 = vmatpush1.msra.mxu0 0.0
        %3504 = vmatprep.subr.mxu0 0.0
        %3505 = vmatpush1.msra.mxu0 0.0
        %3506 = vmatprep.subr.mxu0 0.0
        %3507 = vmatpush1.msra.mxu0 0.0
        %3508 = vmatprep.subr.mxu0 0.0
        %3509 = vmatpush1.msra.mxu0 0.0
        %3510 = vmatprep.mubr.f32.mxu0 0.0
        %3511 = vmatmul.mubr.f32.gmra.mrb[0].mxu0 %v3421
        %v3512 = vpop.f32.mrb[0].mxu0
        %v3513 = vadd.f32 0.0, %v3512
        %v3514 = vpop.f32.mrb[0].mxu0
        %3515 = vmatprep.mubr.f32.mxu0 0.0
        %3516 = vmatmul.mubr.f32.gmra.mrb[0].mxu0 %v3428
        %v3517 = vpop.f32.mrb[0].mxu0
        %v3518 = vadd.f32 0.0, %v3517
        %v3519 = vpop.f32.mrb[0].mxu0
        %3520 = vdwg.mxu0
        %v3521 = vsub.f32 %v3421, %v3513
        %v3522 = vsub.f32 %v3428, %v3518
        %v3523 = vmul.f32 %v3521, %v3521
        %v3524 = vmul.f32 %v3522, %v3522
        %3525 = vmatprep.subr.mxu0 0.0
        %3526 = vmatpush1.msra.mxu0 %v3430
        %3527 = vmatprep.subr.mxu0 0.0
        %3528 = vmatpush1.msra.mxu0 %v3431
        %3529 = vmatprep.subr.mxu0 0.0
        %3530 = vmatpush1.msra.mxu0 %v3432
        %3531 = vmatprep.subr.mxu0 0.0
        %3532 = vmatpush1.msra.mxu0 %v3433
        %3533 = vmatprep.subr.mxu0 0.0
        %3534 = vmatpush1.msra.mxu0 %v3434
        %3535 = vmatprep.subr.mxu0 0.0
        %3536 = vmatpush1.msra.mxu0 %v3435
        %3537 = vmatprep.subr.mxu0 0.0
        %3538 = vmatpush1.msra.mxu0 %v3436
        %3539 = vmatprep.subr.mxu0 0.0
        %3540 = vmatpush1.msra.mxu0 %v3437
        %3541 = vmatprep.subr.mxu0 0.0
        %3542 = vmatpush1.msra.mxu0 %v3438
        %3543 = vmatprep.subr.mxu0 0.0
        %3544 = vmatpush1.msra.mxu0 %v3439
        %3545 = vmatprep.subr.mxu0 0.0
        %3546 = vmatpush1.msra.mxu0 %v3440
        %3547 = vmatprep.subr.mxu0 0.0
        %3548 = vmatpush1.msra.mxu0 %v3441
        %3549 = vmatprep.subr.mxu0 0.0
        %3550 = vmatpush1.msra.mxu0 %v3442
        %3551 = vmatprep.subr.mxu0 0.0
        %3552 = vmatpush1.msra.mxu0 %v3443
        %3553 = vmatprep.subr.mxu0 0.0
        %3554 = vmatpush1.msra.mxu0 %v3444
        %3555 = vmatprep.subr.mxu0 0.0
        %3556 = vmatpush1.msra.mxu0 %v3445
        %3557 = vmatprep.subr.mxu0 0.0
        %3558 = vmatpush1.msra.mxu0 0.0
        %3559 = vmatprep.subr.mxu0 0.0
        %3560 = vmatpush1.msra.mxu0 0.0
        %3561 = vmatprep.subr.mxu0 0.0
        %3562 = vmatpush1.msra.mxu0 0.0
        %3563 = vmatprep.subr.mxu0 0.0
        %3564 = vmatpush1.msra.mxu0 0.0
        %3565 = vmatprep.subr.mxu0 0.0
        %3566 = vmatpush1.msra.mxu0 0.0
        %3567 = vmatprep.subr.mxu0 0.0
        %3568 = vmatpush1.msra.mxu0 0.0
        %3569 = vmatprep.subr.mxu0 0.0
        %3570 = vmatpush1.msra.mxu0 0.0
        %3571 = vmatprep.subr.mxu0 0.0
        %3572 = vmatpush1.msra.mxu0 0.0
        %3573 = vmatprep.subr.mxu0 0.0
        %3574 = vmatpush1.msra.mxu0 0.0
        %3575 = vmatprep.subr.mxu0 0.0
        %3576 = vmatpush1.msra.mxu0 0.0
        %3577 = vmatprep.subr.mxu0 0.0
        %3578 = vmatpush1.msra.mxu0 0.0
        %3579 = vmatprep.subr.mxu0 0.0
        %3580 = vmatpush1.msra.mxu0 0.0
        %3581 = vmatprep.subr.mxu0 0.0
        %3582 = vmatpush1.msra.mxu0 0.0
        %3583 = vmatprep.subr.mxu0 0.0
        %3584 = vmatpush1.msra.mxu0 0.0
        %3585 = vmatprep.subr.mxu0 0.0
        %3586 = vmatpush1.msra.mxu0 0.0
        %3587 = vmatprep.subr.mxu0 0.0
        %3588 = vmatpush1.msra.mxu0 0.0
        %3589 = vmatprep.mubr.f32.mxu0 0.0
        %3590 = vmatmul.mubr.f32.gmra.mrb[0].mxu0 %v3523
        %v3591 = vpop.f32.mrb[0].mxu0
        %v3592 = vadd.f32 0.0, %v3591
        %v3593 = vpop.f32.mrb[0].mxu0
        %3594 = vmatprep.mubr.f32.mxu0 0.0
        %3595 = vmatmul.mubr.f32.gmra.mrb[0].mxu0 %v3524
        %v3596 = vpop.f32.mrb[0].mxu0
        %v3597 = vadd.f32 0.0, %v3596
        %v3598 = vpop.f32.mrb[0].mxu0
        %3599 = vdwg.mxu0
        %v3600 = vmul.f32 %v3592, 1.1428572
        %v3601 = vmul.f32 %v3597, 1.1428572
        %v3602 = vrsqrt.pop %v3600
        %v3603 = vmul.f32 %v3600, %v3602
        %vm3604 = vcmp.eq.f32.partialorder %v3600, inf
        %v3605 = vsel %vm3604, %v3600, %v3603
        %vm3606 = vcmp.eq.f32.partialorder %v3600, 0.0
        %v3607 = vand.u32 %v3600, 2147483648
        %v3608 = vsel %vm3606, %v3607, %v3605
        %v3609 = vrsqrt.pop %v3601
        %v3610 = vmul.f32 %v3601, %v3609
        %vm3611 = vcmp.eq.f32.partialorder %v3601, inf
        %v3612 = vsel %vm3611, %v3601, %v3610
        %vm3613 = vcmp.eq.f32.partialorder %v3601, 0.0
        %v3614 = vand.u32 %v3601, 2147483648
        %v3615 = vsel %vm3613, %v3614, %v3612
        %v3616 = vadd.f32 %v3608, 1.0
        %v3617 = vadd.f32 %v3615, 1.0
        %v3618 = vrcp.pop %v3616
        %v3619 = vmul.f32 1.0, %v3618
        %v3620 = vrcp.pop %v3617
        %v3621 = vmul.f32 1.0, %v3620
        %3622 = vst [vmem:[#allocation2 + $0x1] sm:$0xff] %v3164
        %3623 = vst [vmem:[#allocation2 + $0x9] sm:$0xff] %v3165
        %v3624 = vld [vmem:[#allocation2] sm:$0xff]
        %v3625 = vld [vmem:[#allocation2 + $0x8] sm:$0xff]
        %v3626 = vld [vmem:[#allocation2 + $0x1] sm:$0xff]
        %v3627 = vld [vmem:[#allocation2 + $0x9] sm:$0xff]
        %v3628 = vadd.f32 %v3624, %v3626
        %v3629 = vadd.f32 %v3625, %v3627
        %v3630 = vld [vmem:[#allocation2 + $0x2] sm:$0xff]
        %v3631 = vld [vmem:[#allocation2 + $0xa] sm:$0xff]
        %v3632 = vadd.f32 %v3628, %v3630
        %v3633 = vadd.f32 %v3629, %v3631
        %s3634 = scalar_lea.vmem [#allocation4], 2304
        %v3635 = vld [vmem:[%s3634] sm:$0xff]
        %v3636 = vld [vmem:[%s3634 + $0x8] sm:$0xff]
        %v3637 = vld [vmem:[%s3634 + $0x10] sm:$0xff]
        %v3638 = vld [vmem:[%s3634 + $0x18] sm:$0xff]
        %v3639 = vld [vmem:[%s3634 + $0x20] sm:$0xff]
        %v3640 = vld [vmem:[%s3634 + $0x28] sm:$0xff]
        %v3641 = vld [vmem:[%s3634 + $0x30] sm:$0xff]
        %v3642 = vld [vmem:[%s3634 + $0x38] sm:$0xff]
        %v3643 = vld [vmem:[%s3634 + $0x40] sm:$0xff]
        %v3644 = vld [vmem:[%s3634 + $0x48] sm:$0xff]
        %v3645 = vld [vmem:[%s3634 + $0x50] sm:$0xff]
        %v3646 = vld [vmem:[%s3634 + $0x58] sm:$0xff]
        %v3647 = vld [vmem:[%s3634 + $0x60] sm:$0xff]
        %v3648 = vld [vmem:[%s3634 + $0x68] sm:$0xff]
        %v3649 = vld [vmem:[%s3634 + $0x70] sm:$0xff]
        %v3650 = vld [vmem:[%s3634 + $0x78] sm:$0xff]
        %s3651 = scalar_lea.vmem [#allocation4], 2432
        %v3652 = vld [vmem:[%s3651] sm:$0xff]
        %v3653 = vld [vmem:[%s3651 + $0x8] sm:$0xff]
        %v3654 = vld [vmem:[%s3651 + $0x10] sm:$0xff]
        %v3655 = vld [vmem:[%s3651 + $0x18] sm:$0xff]
        %v3656 = vld [vmem:[%s3651 + $0x20] sm:$0xff]
        %v3657 = vld [vmem:[%s3651 + $0x28] sm:$0xff]
        %v3658 = vld [vmem:[%s3651 + $0x30] sm:$0xff]
        %v3659 = vld [vmem:[%s3651 + $0x38] sm:$0xff]
        %v3660 = vld [vmem:[%s3651 + $0x40] sm:$0xff]
        %v3661 = vld [vmem:[%s3651 + $0x48] sm:$0xff]
        %v3662 = vld [vmem:[%s3651 + $0x50] sm:$0xff]
        %v3663 = vld [vmem:[%s3651 + $0x58] sm:$0xff]
        %v3664 = vld [vmem:[%s3651 + $0x60] sm:$0xff]
        %v3665 = vld [vmem:[%s3651 + $0x68] sm:$0xff]
        %v3666 = vld [vmem:[%s3651 + $0x70] sm:$0xff]
        %v3667 = vld [vmem:[%s3651 + $0x78] sm:$0xff]
        %3668 = vmatprep.subr.mxu0 0.0
        %3669 = vmatpush1.msra.mxu0 %v3652
        %3670 = vmatprep.subr.mxu0 0.0
        %3671 = vmatpush1.msra.mxu0 %v3653
        %3672 = vmatprep.subr.mxu0 0.0
        %3673 = vmatpush1.msra.mxu0 %v3654
        %3674 = vmatprep.subr.mxu0 0.0
        %3675 = vmatpush1.msra.mxu0 %v3655
        %3676 = vmatprep.subr.mxu0 0.0
        %3677 = vmatpush1.msra.mxu0 %v3656
        %3678 = vmatprep.subr.mxu0 0.0
        %3679 = vmatpush1.msra.mxu0 %v3657
        %3680 = vmatprep.subr.mxu0 0.0
        %3681 = vmatpush1.msra.mxu0 %v3658
        %3682 = vmatprep.subr.mxu0 0.0
        %3683 = vmatpush1.msra.mxu0 %v3659
        %3684 = vmatprep.subr.mxu0 0.0
        %3685 = vmatpush1.msra.mxu0 %v3660
        %3686 = vmatprep.subr.mxu0 0.0
        %3687 = vmatpush1.msra.mxu0 %v3661
        %3688 = vmatprep.subr.mxu0 0.0
        %3689 = vmatpush1.msra.mxu0 %v3662
        %3690 = vmatprep.subr.mxu0 0.0
        %3691 = vmatpush1.msra.mxu0 %v3663
        %3692 = vmatprep.subr.mxu0 0.0
        %3693 = vmatpush1.msra.mxu0 %v3664
        %3694 = vmatprep.subr.mxu0 0.0
        %3695 = vmatpush1.msra.mxu0 %v3665
        %3696 = vmatprep.subr.mxu0 0.0
        %3697 = vmatpush1.msra.mxu0 %v3666
        %3698 = vmatprep.subr.mxu0 0.0
        %3699 = vmatpush1.msra.mxu0 %v3667
        %3700 = vmatprep.subr.mxu0 0.0
        %3701 = vmatpush1.msra.mxu0 0.0
        %3702 = vmatprep.subr.mxu0 0.0
        %3703 = vmatpush1.msra.mxu0 0.0
        %3704 = vmatprep.subr.mxu0 0.0
        %3705 = vmatpush1.msra.mxu0 0.0
        %3706 = vmatprep.subr.mxu0 0.0
        %3707 = vmatpush1.msra.mxu0 0.0
        %3708 = vmatprep.subr.mxu0 0.0
        %3709 = vmatpush1.msra.mxu0 0.0
        %3710 = vmatprep.subr.mxu0 0.0
        %3711 = vmatpush1.msra.mxu0 0.0
        %3712 = vmatprep.subr.mxu0 0.0
        %3713 = vmatpush1.msra.mxu0 0.0
        %3714 = vmatprep.subr.mxu0 0.0
        %3715 = vmatpush1.msra.mxu0 0.0
        %3716 = vmatprep.subr.mxu0 0.0
        %3717 = vmatpush1.msra.mxu0 0.0
        %3718 = vmatprep.subr.mxu0 0.0
        %3719 = vmatpush1.msra.mxu0 0.0
        %3720 = vmatprep.subr.mxu0 0.0
        %3721 = vmatpush1.msra.mxu0 0.0
        %3722 = vmatprep.subr.mxu0 0.0
        %3723 = vmatpush1.msra.mxu0 0.0
        %3724 = vmatprep.subr.mxu0 0.0
        %3725 = vmatpush1.msra.mxu0 0.0
        %3726 = vmatprep.subr.mxu0 0.0
        %3727 = vmatpush1.msra.mxu0 0.0
        %3728 = vmatprep.subr.mxu0 0.0
        %3729 = vmatpush1.msra.mxu0 0.0
        %3730 = vmatprep.subr.mxu0 0.0
        %3731 = vmatpush1.msra.mxu0 0.0
        %3732 = vmatprep.mubr.f32.mxu0 0.0
        %3733 = vmatmul.mubr.f32.gmra.mrb[0].mxu0 %v3626
        %v3734 = vpop.f32.mrb[0].mxu0
        %v3735 = vadd.f32 0.0, %v3734
        %v3736 = vpop.f32.mrb[0].mxu0
        %3737 = vmatprep.mubr.f32.mxu0 0.0
        %3738 = vmatmul.mubr.f32.gmra.mrb[0].mxu0 %v3627
        %v3739 = vpop.f32.mrb[0].mxu0
        %v3740 = vadd.f32 0.0, %v3739
        %v3741 = vpop.f32.mrb[0].mxu0
        %3742 = vdwg.mxu0
        %3743 = vmatprep.subr.mxu0 0.0
        %3744 = vmatpush1.msra.mxu0 %v3635
        %3745 = vmatprep.subr.mxu0 0.0
        %3746 = vmatpush1.msra.mxu0 %v3636
        %3747 = vmatprep.subr.mxu0 0.0
        %3748 = vmatpush1.msra.mxu0 %v3637
        %3749 = vmatprep.subr.mxu0 0.0
        %3750 = vmatpush1.msra.mxu0 %v3638
        %3751 = vmatprep.subr.mxu0 0.0
        %3752 = vmatpush1.msra.mxu0 %v3639
        %3753 = vmatprep.subr.mxu0 0.0
        %3754 = vmatpush1.msra.mxu0 %v3640
        %3755 = vmatprep.subr.mxu0 0.0
        %3756 = vmatpush1.msra.mxu0 %v3641
        %3757 = vmatprep.subr.mxu0 0.0
        %3758 = vmatpush1.msra.mxu0 %v3642
        %3759 = vmatprep.subr.mxu0 0.0
        %3760 = vmatpush1.msra.mxu0 %v3643
        %3761 = vmatprep.subr.mxu0 0.0
        %3762 = vmatpush1.msra.mxu0 %v3644
        %3763 = vmatprep.subr.mxu0 0.0
        %3764 = vmatpush1.msra.mxu0 %v3645
        %3765 = vmatprep.subr.mxu0 0.0
        %3766 = vmatpush1.msra.mxu0 %v3646
        %3767 = vmatprep.subr.mxu0 0.0
        %3768 = vmatpush1.msra.mxu0 %v3647
        %3769 = vmatprep.subr.mxu0 0.0
        %3770 = vmatpush1.msra.mxu0 %v3648
        %3771 = vmatprep.subr.mxu0 0.0
        %3772 = vmatpush1.msra.mxu0 %v3649
        %3773 = vmatprep.subr.mxu0 0.0
        %3774 = vmatpush1.msra.mxu0 %v3650
        %3775 = vmatprep.subr.mxu0 0.0
        %3776 = vmatpush1.msra.mxu0 0.0
        %3777 = vmatprep.subr.mxu0 0.0
        %3778 = vmatpush1.msra.mxu0 0.0
        %3779 = vmatprep.subr.mxu0 0.0
        %3780 = vmatpush1.msra.mxu0 0.0
        %3781 = vmatprep.subr.mxu0 0.0
        %3782 = vmatpush1.msra.mxu0 0.0
        %3783 = vmatprep.subr.mxu0 0.0
        %3784 = vmatpush1.msra.mxu0 0.0
        %3785 = vmatprep.subr.mxu0 0.0
        %3786 = vmatpush1.msra.mxu0 0.0
        %3787 = vmatprep.subr.mxu0 0.0
        %3788 = vmatpush1.msra.mxu0 0.0
        %3789 = vmatprep.subr.mxu0 0.0
        %3790 = vmatpush1.msra.mxu0 0.0
        %3791 = vmatprep.subr.mxu0 0.0
        %3792 = vmatpush1.msra.mxu0 0.0
        %3793 = vmatprep.subr.mxu0 0.0
        %3794 = vmatpush1.msra.mxu0 0.0
        %3795 = vmatprep.subr.mxu0 0.0
        %3796 = vmatpush1.msra.mxu0 0.0
        %3797 = vmatprep.subr.mxu0 0.0
        %3798 = vmatpush1.msra.mxu0 0.0
        %3799 = vmatprep.subr.mxu0 0.0
        %3800 = vmatpush1.msra.mxu0 0.0
        %3801 = vmatprep.subr.mxu0 0.0
        %3802 = vmatpush1.msra.mxu0 0.0
        %3803 = vmatprep.subr.mxu0 0.0
        %3804 = vmatpush1.msra.mxu0 0.0
        %3805 = vmatprep.subr.mxu0 0.0
        %3806 = vmatpush1.msra.mxu0 0.0
        %3807 = vmatprep.mubr.f32.mxu0 0.0
        %3808 = vmatmul.mubr.f32.gmra.mrb[0].mxu0 %v3624
        %v3809 = vpop.f32.mrb[0].mxu0
        %v3810 = vadd.f32 %v3735, %v3809
        %v3811 = vpop.f32.mrb[0].mxu0
        %3812 = vmatprep.mubr.f32.mxu0 0.0
        %3813 = vmatmul.mubr.f32.gmra.mrb[0].mxu0 %v3625
        %v3814 = vpop.f32.mrb[0].mxu0
        %v3815 = vadd.f32 %v3740, %v3814
        %v3816 = vpop.f32.mrb[0].mxu0
        %3817 = vdwg.mxu0
        %s3818 = scalar_lea.vmem [#allocation4], 2560
        %v3819 = vld [vmem:[%s3818] sm:$0xff]
        %v3820 = vld [vmem:[%s3818 + $0x8] sm:$0xff]
        %v3821 = vld [vmem:[%s3818 + $0x10] sm:$0xff]
        %v3822 = vld [vmem:[%s3818 + $0x18] sm:$0xff]
        %v3823 = vld [vmem:[%s3818 + $0x20] sm:$0xff]
        %v3824 = vld [vmem:[%s3818 + $0x28] sm:$0xff]
        %v3825 = vld [vmem:[%s3818 + $0x30] sm:$0xff]
        %v3826 = vld [vmem:[%s3818 + $0x38] sm:$0xff]
        %v3827 = vld [vmem:[%s3818 + $0x40] sm:$0xff]
        %v3828 = vld [vmem:[%s3818 + $0x48] sm:$0xff]
        %v3829 = vld [vmem:[%s3818 + $0x50] sm:$0xff]
        %v3830 = vld [vmem:[%s3818 + $0x58] sm:$0xff]
        %v3831 = vld [vmem:[%s3818 + $0x60] sm:$0xff]
        %v3832 = vld [vmem:[%s3818 + $0x68] sm:$0xff]
        %v3833 = vld [vmem:[%s3818 + $0x70] sm:$0xff]
        %v3834 = vld [vmem:[%s3818 + $0x78] sm:$0xff]
        %3835 = vmatprep.subr.mxu0 0.0
        %3836 = vmatpush1.msra.mxu0 %v3819
        %3837 = vmatprep.subr.mxu0 0.0
        %3838 = vmatpush1.msra.mxu0 %v3820
        %3839 = vmatprep.subr.mxu0 0.0
        %3840 = vmatpush1.msra.mxu0 %v3821
        %3841 = vmatprep.subr.mxu0 0.0
        %3842 = vmatpush1.msra.mxu0 %v3822
        %3843 = vmatprep.subr.mxu0 0.0
        %3844 = vmatpush1.msra.mxu0 %v3823
        %3845 = vmatprep.subr.mxu0 0.0
        %3846 = vmatpush1.msra.mxu0 %v3824
        %3847 = vmatprep.subr.mxu0 0.0
        %3848 = vmatpush1.msra.mxu0 %v3825
        %3849 = vmatprep.subr.mxu0 0.0
        %3850 = vmatpush1.msra.mxu0 %v3826
        %3851 = vmatprep.subr.mxu0 0.0
        %3852 = vmatpush1.msra.mxu0 %v3827
        %3853 = vmatprep.subr.mxu0 0.0
        %3854 = vmatpush1.msra.mxu0 %v3828
        %3855 = vmatprep.subr.mxu0 0.0
        %3856 = vmatpush1.msra.mxu0 %v3829
        %3857 = vmatprep.subr.mxu0 0.0
        %3858 = vmatpush1.msra.mxu0 %v3830
        %3859 = vmatprep.subr.mxu0 0.0
        %3860 = vmatpush1.msra.mxu0 %v3831
        %3861 = vmatprep.subr.mxu0 0.0
        %3862 = vmatpush1.msra.mxu0 %v3832
        %3863 = vmatprep.subr.mxu0 0.0
        %3864 = vmatpush1.msra.mxu0 %v3833
        %3865 = vmatprep.subr.mxu0 0.0
        %3866 = vmatpush1.msra.mxu0 %v3834
        %3867 = vmatprep.subr.mxu0 0.0
        %3868 = vmatpush1.msra.mxu0 0.0
        %3869 = vmatprep.subr.mxu0 0.0
        %3870 = vmatpush1.msra.mxu0 0.0
        %3871 = vmatprep.subr.mxu0 0.0
        %3872 = vmatpush1.msra.mxu0 0.0
        %3873 = vmatprep.subr.mxu0 0.0
        %3874 = vmatpush1.msra.mxu0 0.0
        %3875 = vmatprep.subr.mxu0 0.0
        %3876 = vmatpush1.msra.mxu0 0.0
        %3877 = vmatprep.subr.mxu0 0.0
        %3878 = vmatpush1.msra.mxu0 0.0
        %3879 = vmatprep.subr.mxu0 0.0
        %3880 = vmatpush1.msra.mxu0 0.0
        %3881 = vmatprep.subr.mxu0 0.0
        %3882 = vmatpush1.msra.mxu0 0.0
        %3883 = vmatprep.subr.mxu0 0.0
        %3884 = vmatpush1.msra.mxu0 0.0
        %3885 = vmatprep.subr.mxu0 0.0
        %3886 = vmatpush1.msra.mxu0 0.0
        %3887 = vmatprep.subr.mxu0 0.0
        %3888 = vmatpush1.msra.mxu0 0.0
        %3889 = vmatprep.subr.mxu0 0.0
        %3890 = vmatpush1.msra.mxu0 0.0
        %3891 = vmatprep.subr.mxu0 0.0
        %3892 = vmatpush1.msra.mxu0 0.0
        %3893 = vmatprep.subr.mxu0 0.0
        %3894 = vmatpush1.msra.mxu0 0.0
        %3895 = vmatprep.subr.mxu0 0.0
        %3896 = vmatpush1.msra.mxu0 0.0
        %3897 = vmatprep.subr.mxu0 0.0
        %3898 = vmatpush1.msra.mxu0 0.0
        %3899 = vmatprep.mubr.f32.mxu0 0.0
        %3900 = vmatmul.mubr.f32.gmra.mrb[0].mxu0 %v3630
        %v3901 = vpop.f32.mrb[0].mxu0
        %v3902 = vadd.f32 0.0, %v3901
        %v3903 = vpop.f32.mrb[0].mxu0
        %3904 = vmatprep.mubr.f32.mxu0 0.0
        %3905 = vmatmul.mubr.f32.gmra.mrb[0].mxu0 %v3631
        %v3906 = vpop.f32.mrb[0].mxu0
        %v3907 = vadd.f32 0.0, %v3906
        %v3908 = vpop.f32.mrb[0].mxu0
        %3909 = vdwg.mxu0
        %v3910 = vadd.f32 %v3810, %v3902
        %v3911 = vadd.f32 %v3815, %v3907
        %v3912 = vld [vmem:[#allocation6 + $0x6] sm:$0x1]
        %v3913 = vlaneseq
        %v3914 = vshrl.u32 %v3913, 7
        %v3915 = vsub.s32 0, %v3914
        %v3916 = vrot.slane %v3912, %v3915
        %v3917 = vadd.f32 %v3910, %v3916
        %v3918 = vadd.f32 %v3911, %v3916
        %s3919 = scalar_lea.vmem [#allocation14], 256
        %v3920 = vld [vmem:[%s3919] sm:$0xff]
        %v3921 = vld [vmem:[%s3919 + $0x8] sm:$0xff]
        %v3922 = vld [vmem:[%s3919 + $0x10] sm:$0xff]
        %v3923 = vld [vmem:[%s3919 + $0x18] sm:$0xff]
        %v3924 = vld [vmem:[%s3919 + $0x20] sm:$0xff]
        %v3925 = vld [vmem:[%s3919 + $0x28] sm:$0xff]
        %v3926 = vld [vmem:[%s3919 + $0x30] sm:$0xff]
        %v3927 = vld [vmem:[%s3919 + $0x38] sm:$0xff]
        %v3928 = vld [vmem:[%s3919 + $0x40] sm:$0xff]
        %v3929 = vld [vmem:[%s3919 + $0x48] sm:$0xff]
        %v3930 = vld [vmem:[%s3919 + $0x50] sm:$0xff]
        %v3931 = vld [vmem:[%s3919 + $0x58] sm:$0xff]
        %v3932 = vld [vmem:[%s3919 + $0x60] sm:$0xff]
        %v3933 = vld [vmem:[%s3919 + $0x68] sm:$0xff]
        %v3934 = vld [vmem:[%s3919 + $0x70] sm:$0xff]
        %v3935 = vld [vmem:[%s3919 + $0x78] sm:$0xff]
        %3936 = vmatprep.subr.mxu0 0.0
        %3937 = vmatpush1.msra.mxu0 %v3920
        %3938 = vmatprep.subr.mxu0 0.0
        %3939 = vmatpush1.msra.mxu0 %v3921
        %3940 = vmatprep.subr.mxu0 0.0
        %3941 = vmatpush1.msra.mxu0 %v3922
        %3942 = vmatprep.subr.mxu0 0.0
        %3943 = vmatpush1.msra.mxu0 %v3923
        %3944 = vmatprep.subr.mxu0 0.0
        %3945 = vmatpush1.msra.mxu0 %v3924
        %3946 = vmatprep.subr.mxu0 0.0
        %3947 = vmatpush1.msra.mxu0 %v3925
        %3948 = vmatprep.subr.mxu0 0.0
        %3949 = vmatpush1.msra.mxu0 %v3926
        %3950 = vmatprep.subr.mxu0 0.0
        %3951 = vmatpush1.msra.mxu0 %v3927
        %3952 = vmatprep.subr.mxu0 0.0
        %3953 = vmatpush1.msra.mxu0 %v3928
        %3954 = vmatprep.subr.mxu0 0.0
        %3955 = vmatpush1.msra.mxu0 %v3929
        %3956 = vmatprep.subr.mxu0 0.0
        %3957 = vmatpush1.msra.mxu0 %v3930
        %3958 = vmatprep.subr.mxu0 0.0
        %3959 = vmatpush1.msra.mxu0 %v3931
        %3960 = vmatprep.subr.mxu0 0.0
        %3961 = vmatpush1.msra.mxu0 %v3932
        %3962 = vmatprep.subr.mxu0 0.0
        %3963 = vmatpush1.msra.mxu0 %v3933
        %3964 = vmatprep.subr.mxu0 0.0
        %3965 = vmatpush1.msra.mxu0 %v3934
        %3966 = vmatprep.subr.mxu0 0.0
        %3967 = vmatpush1.msra.mxu0 %v3935
        %3968 = vmatprep.subr.mxu0 0.0
        %3969 = vmatpush1.msra.mxu0 0.0
        %3970 = vmatprep.subr.mxu0 0.0
        %3971 = vmatpush1.msra.mxu0 0.0
        %3972 = vmatprep.subr.mxu0 0.0
        %3973 = vmatpush1.msra.mxu0 0.0
        %3974 = vmatprep.subr.mxu0 0.0
        %3975 = vmatpush1.msra.mxu0 0.0
        %3976 = vmatprep.subr.mxu0 0.0
        %3977 = vmatpush1.msra.mxu0 0.0
        %3978 = vmatprep.subr.mxu0 0.0
        %3979 = vmatpush1.msra.mxu0 0.0
        %3980 = vmatprep.subr.mxu0 0.0
        %3981 = vmatpush1.msra.mxu0 0.0
        %3982 = vmatprep.subr.mxu0 0.0
        %3983 = vmatpush1.msra.mxu0 0.0
        %3984 = vmatprep.subr.mxu0 0.0
        %3985 = vmatpush1.msra.mxu0 0.0
        %3986 = vmatprep.subr.mxu0 0.0
        %3987 = vmatpush1.msra.mxu0 0.0
        %3988 = vmatprep.subr.mxu0 0.0
        %3989 = vmatpush1.msra.mxu0 0.0
        %3990 = vmatprep.subr.mxu0 0.0
        %3991 = vmatpush1.msra.mxu0 0.0
        %3992 = vmatprep.subr.mxu0 0.0
        %3993 = vmatpush1.msra.mxu0 0.0
        %3994 = vmatprep.subr.mxu0 0.0
        %3995 = vmatpush1.msra.mxu0 0.0
        %3996 = vmatprep.subr.mxu0 0.0
        %3997 = vmatpush1.msra.mxu0 0.0
        %3998 = vmatprep.subr.mxu0 0.0
        %3999 = vmatpush1.msra.mxu0 0.0
        %4000 = vmatprep.mubr.f32.mxu0 0.0
        %4001 = vmatmul.mubr.f32.gmra.mrb[0].mxu0 %v3632
        %v4002 = vpop.f32.mrb[0].mxu0
        %v4003 = vadd.f32 0.0, %v4002
        %v4004 = vpop.f32.mrb[0].mxu0
        %4005 = vmatprep.mubr.f32.mxu0 0.0
        %4006 = vmatmul.mubr.f32.gmra.mrb[0].mxu0 %v3633
        %v4007 = vpop.f32.mrb[0].mxu0
        %v4008 = vadd.f32 0.0, %v4007
        %v4009 = vpop.f32.mrb[0].mxu0
        %4010 = vdwg.mxu0
        %v4011 = vsub.f32 %v3164, %v4003
        %v4012 = vsub.f32 %v3165, %v4008
        %v4013 = vmul.f32 %v4011, %v4011
        %v4014 = vmul.f32 %v4012, %v4012
        %4015 = vst [vmem:[#allocation2 + $0x1] sm:$0xff] %v4013
        %4016 = vst [vmem:[#allocation2 + $0x9] sm:$0xff] %v4014
        %v4017 = vld [vmem:[#allocation2] sm:$0xff]
        %v4018 = vld [vmem:[#allocation2 + $0x8] sm:$0xff]
        %v4019 = vld [vmem:[#allocation2 + $0x1] sm:$0xff]
        %v4020 = vld [vmem:[#allocation2 + $0x9] sm:$0xff]
        %v4021 = vadd.f32 %v4017, %v4019
        %v4022 = vadd.f32 %v4018, %v4020
        %v4023 = vld [vmem:[#allocation2 + $0x2] sm:$0xff]
        %v4024 = vld [vmem:[#allocation2 + $0xa] sm:$0xff]
        %v4025 = vadd.f32 %v4021, %v4023
        %v4026 = vadd.f32 %v4022, %v4024
        %s4027 = scalar_lea.vmem [#allocation14], 384
        %v4028 = vld [vmem:[%s4027] sm:$0xff]
        %v4029 = vld [vmem:[%s4027 + $0x8] sm:$0xff]
        %v4030 = vld [vmem:[%s4027 + $0x10] sm:$0xff]
        %v4031 = vld [vmem:[%s4027 + $0x18] sm:$0xff]
        %v4032 = vld [vmem:[%s4027 + $0x20] sm:$0xff]
        %v4033 = vld [vmem:[%s4027 + $0x28] sm:$0xff]
        %v4034 = vld [vmem:[%s4027 + $0x30] sm:$0xff]
        %v4035 = vld [vmem:[%s4027 + $0x38] sm:$0xff]
        %v4036 = vld [vmem:[%s4027 + $0x40] sm:$0xff]
        %v4037 = vld [vmem:[%s4027 + $0x48] sm:$0xff]
        %v4038 = vld [vmem:[%s4027 + $0x50] sm:$0xff]
        %v4039 = vld [vmem:[%s4027 + $0x58] sm:$0xff]
        %v4040 = vld [vmem:[%s4027 + $0x60] sm:$0xff]
        %v4041 = vld [vmem:[%s4027 + $0x68] sm:$0xff]
        %v4042 = vld [vmem:[%s4027 + $0x70] sm:$0xff]
        %v4043 = vld [vmem:[%s4027 + $0x78] sm:$0xff]
        %4044 = vmatprep.subr.mxu0 0.0
        %4045 = vmatpush1.msra.mxu0 %v4028
        %4046 = vmatprep.subr.mxu0 0.0
        %4047 = vmatpush1.msra.mxu0 %v4029
        %4048 = vmatprep.subr.mxu0 0.0
        %4049 = vmatpush1.msra.mxu0 %v4030
        %4050 = vmatprep.subr.mxu0 0.0
        %4051 = vmatpush1.msra.mxu0 %v4031
        %4052 = vmatprep.subr.mxu0 0.0
        %4053 = vmatpush1.msra.mxu0 %v4032
        %4054 = vmatprep.subr.mxu0 0.0
        %4055 = vmatpush1.msra.mxu0 %v4033
        %4056 = vmatprep.subr.mxu0 0.0
        %4057 = vmatpush1.msra.mxu0 %v4034
        %4058 = vmatprep.subr.mxu0 0.0
        %4059 = vmatpush1.msra.mxu0 %v4035
        %4060 = vmatprep.subr.mxu0 0.0
        %4061 = vmatpush1.msra.mxu0 %v4036
        %4062 = vmatprep.subr.mxu0 0.0
        %4063 = vmatpush1.msra.mxu0 %v4037
        %4064 = vmatprep.subr.mxu0 0.0
        %4065 = vmatpush1.msra.mxu0 %v4038
        %4066 = vmatprep.subr.mxu0 0.0
        %4067 = vmatpush1.msra.mxu0 %v4039
        %4068 = vmatprep.subr.mxu0 0.0
        %4069 = vmatpush1.msra.mxu0 %v4040
        %4070 = vmatprep.subr.mxu0 0.0
        %4071 = vmatpush1.msra.mxu0 %v4041
        %4072 = vmatprep.subr.mxu0 0.0
        %4073 = vmatpush1.msra.mxu0 %v4042
        %4074 = vmatprep.subr.mxu0 0.0
        %4075 = vmatpush1.msra.mxu0 %v4043
        %4076 = vmatprep.subr.mxu0 0.0
        %4077 = vmatpush1.msra.mxu0 0.0
        %4078 = vmatprep.subr.mxu0 0.0
        %4079 = vmatpush1.msra.mxu0 0.0
        %4080 = vmatprep.subr.mxu0 0.0
        %4081 = vmatpush1.msra.mxu0 0.0
        %4082 = vmatprep.subr.mxu0 0.0
        %4083 = vmatpush1.msra.mxu0 0.0
        %4084 = vmatprep.subr.mxu0 0.0
        %4085 = vmatpush1.msra.mxu0 0.0
        %4086 = vmatprep.subr.mxu0 0.0
        %4087 = vmatpush1.msra.mxu0 0.0
        %4088 = vmatprep.subr.mxu0 0.0
        %4089 = vmatpush1.msra.mxu0 0.0
        %4090 = vmatprep.subr.mxu0 0.0
        %4091 = vmatpush1.msra.mxu0 0.0
        %4092 = vmatprep.subr.mxu0 0.0
        %4093 = vmatpush1.msra.mxu0 0.0
        %4094 = vmatprep.subr.mxu0 0.0
        %4095 = vmatpush1.msra.mxu0 0.0
        %4096 = vmatprep.subr.mxu0 0.0
        %4097 = vmatpush1.msra.mxu0 0.0
        %4098 = vmatprep.subr.mxu0 0.0
        %4099 = vmatpush1.msra.mxu0 0.0
        %4100 = vmatprep.subr.mxu0 0.0
        %4101 = vmatpush1.msra.mxu0 0.0
        %4102 = vmatprep.subr.mxu0 0.0
        %4103 = vmatpush1.msra.mxu0 0.0
        %4104 = vmatprep.subr.mxu0 0.0
        %4105 = vmatpush1.msra.mxu0 0.0
        %4106 = vmatprep.subr.mxu0 0.0
        %4107 = vmatpush1.msra.mxu0 0.0
        %4108 = vmatprep.mubr.f32.mxu0 0.0
        %4109 = vmatmul.mubr.f32.gmra.mrb[0].mxu0 %v4025
        %v4110 = vpop.f32.mrb[0].mxu0
        %v4111 = vadd.f32 1.0, %v4110
        %v4112 = vpop.f32.mrb[0].mxu0
        %4113 = vmatprep.mubr.f32.mxu0 0.0
        %4114 = vmatmul.mubr.f32.gmra.mrb[0].mxu0 %v4026
        %v4115 = vpop.f32.mrb[0].mxu0
        %v4116 = vadd.f32 1.0, %v4115
        %v4117 = vpop.f32.mrb[0].mxu0
        %4118 = vdwg.mxu0
        %v4119 = vrcp.pop %v4111
        %v4120 = vmul.f32 1.0, %v4119
        %v4121 = vrcp.pop %v4116
        %v4122 = vmul.f32 1.0, %v4121
        %v4123 = vadd.f32 %v4120, %v3619
        %v4124 = vadd.f32 %v4122, %v3621
        %v4125 = vadd.f32 %v4123, %v3387
        %v4126 = vadd.f32 %v4124, %v3389
        %v4127 = vmul.f32 %v4125, 0.33333334
        %v4128 = vmul.f32 %v4126, 0.33333334
        %4129 = vadd.xlane.f32.xlu0 %v4127
        %v4130 = vpop.xlane.xlu0 %4129
        %4131 = vadd.xlane.f32.xlu0 %v4128
        %v4132 = vpop.xlane.xlu0 %4131
        %v4133 = vadd.f32 %v4130, %v4132
        %v4134 = vrot.slane %v4133, 4
        %v4135 = vadd.f32 %v4133, %v4134
        %v4136 = vrot.slane %v4135, 2
        %v4137 = vadd.f32 %v4135, %v4136
        %v4138 = vrot.slane %v4137, 1
        %v4139 = vadd.f32 %v4137, %v4138
        %v4140 = vmul.f32 %v4139, 0.00048828125
        %vm4141 = vcmask 0
        %4142 = vst.msk [vmem:[%s497] sm:$0x1] %vm4141, %v4140
        %v4143 = vadd.f32 %v3917, %v3918
        %v4144 = vrot.slane %v4143, 4
        %v4145 = vadd.f32 %v4143, %v4144
        %v4146 = vrot.slane %v4145, 2
        %v4147 = vadd.f32 %v4145, %v4146
        %v4148 = vrot.slane %v4147, 1
        %v4149 = vadd.f32 %v4147, %v4148
        %v4150 = vmul.f32 %v3917, %v3917
        %v4151 = vmul.f32 %v3918, %v3918
        %v4152 = vadd.f32 %v4150, %v4151
        %v4153 = vrot.slane %v4152, 4
        %v4154 = vadd.f32 %v4152, %v4153
        %v4155 = vrot.slane %v4154, 2
        %v4156 = vadd.f32 %v4154, %v4155
        %v4157 = vrot.slane %v4156, 1
        %v4158 = vadd.f32 %v4156, %v4157
        %v4159 = vsel %vm810, %v4149, %v4158
        %v4160 = vld [vmem:[#allocation14] sm:$0xff]
        %v4161 = vld [vmem:[#allocation14 + $0x8] sm:$0xff]
        %v4162 = vld [vmem:[#allocation14 + $0x10] sm:$0xff]
        %v4163 = vld [vmem:[#allocation14 + $0x18] sm:$0xff]
        %v4164 = vld [vmem:[#allocation14 + $0x20] sm:$0xff]
        %v4165 = vld [vmem:[#allocation14 + $0x28] sm:$0xff]
        %v4166 = vld [vmem:[#allocation14 + $0x30] sm:$0xff]
        %v4167 = vld [vmem:[#allocation14 + $0x38] sm:$0xff]
        %v4168 = vld [vmem:[#allocation14 + $0x40] sm:$0xff]
        %v4169 = vld [vmem:[#allocation14 + $0x48] sm:$0xff]
        %v4170 = vld [vmem:[#allocation14 + $0x50] sm:$0xff]
        %v4171 = vld [vmem:[#allocation14 + $0x58] sm:$0xff]
        %v4172 = vld [vmem:[#allocation14 + $0x60] sm:$0xff]
        %v4173 = vld [vmem:[#allocation14 + $0x68] sm:$0xff]
        %v4174 = vld [vmem:[#allocation14 + $0x70] sm:$0xff]
        %v4175 = vld [vmem:[#allocation14 + $0x78] sm:$0xff]
        %4176 = vmatprep.subr.mxu0 0.0
        %4177 = vmatpush1.msra.mxu0 %v4160
        %4178 = vmatprep.subr.mxu0 0.0
        %4179 = vmatpush1.msra.mxu0 %v4161
        %4180 = vmatprep.subr.mxu0 0.0
        %4181 = vmatpush1.msra.mxu0 %v4162
        %4182 = vmatprep.subr.mxu0 0.0
        %4183 = vmatpush1.msra.mxu0 %v4163
        %4184 = vmatprep.subr.mxu0 0.0
        %4185 = vmatpush1.msra.mxu0 %v4164
        %4186 = vmatprep.subr.mxu0 0.0
        %4187 = vmatpush1.msra.mxu0 %v4165
        %4188 = vmatprep.subr.mxu0 0.0
        %4189 = vmatpush1.msra.mxu0 %v4166
        %4190 = vmatprep.subr.mxu0 0.0
        %4191 = vmatpush1.msra.mxu0 %v4167
        %4192 = vmatprep.subr.mxu0 0.0
        %4193 = vmatpush1.msra.mxu0 %v4168
        %4194 = vmatprep.subr.mxu0 0.0
        %4195 = vmatpush1.msra.mxu0 %v4169
        %4196 = vmatprep.subr.mxu0 0.0
        %4197 = vmatpush1.msra.mxu0 %v4170
        %4198 = vmatprep.subr.mxu0 0.0
        %4199 = vmatpush1.msra.mxu0 %v4171
        %4200 = vmatprep.subr.mxu0 0.0
        %4201 = vmatpush1.msra.mxu0 %v4172
        %4202 = vmatprep.subr.mxu0 0.0
        %4203 = vmatpush1.msra.mxu0 %v4173
        %4204 = vmatprep.subr.mxu0 0.0
        %4205 = vmatpush1.msra.mxu0 %v4174
        %4206 = vmatprep.subr.mxu0 0.0
        %4207 = vmatpush1.msra.mxu0 %v4175
        %4208 = vmatprep.subr.mxu0 0.0
        %4209 = vmatpush1.msra.mxu0 0.0
        %4210 = vmatprep.subr.mxu0 0.0
        %4211 = vmatpush1.msra.mxu0 0.0
        %4212 = vmatprep.subr.mxu0 0.0
        %4213 = vmatpush1.msra.mxu0 0.0
        %4214 = vmatprep.subr.mxu0 0.0
        %4215 = vmatpush1.msra.mxu0 0.0
        %4216 = vmatprep.subr.mxu0 0.0
        %4217 = vmatpush1.msra.mxu0 0.0
        %4218 = vmatprep.subr.mxu0 0.0
        %4219 = vmatpush1.msra.mxu0 0.0
        %4220 = vmatprep.subr.mxu0 0.0
        %4221 = vmatpush1.msra.mxu0 0.0
        %4222 = vmatprep.subr.mxu0 0.0
        %4223 = vmatpush1.msra.mxu0 0.0
        %4224 = vmatprep.subr.mxu0 0.0
        %4225 = vmatpush1.msra.mxu0 0.0
        %4226 = vmatprep.subr.mxu0 0.0
        %4227 = vmatpush1.msra.mxu0 0.0
        %4228 = vmatprep.subr.mxu0 0.0
        %4229 = vmatpush1.msra.mxu0 0.0
        %4230 = vmatprep.subr.mxu0 0.0
        %4231 = vmatpush1.msra.mxu0 0.0
        %4232 = vmatprep.subr.mxu0 0.0
        %4233 = vmatpush1.msra.mxu0 0.0
        %4234 = vmatprep.subr.mxu0 0.0
        %4235 = vmatpush1.msra.mxu0 0.0
        %4236 = vmatprep.subr.mxu0 0.0
        %4237 = vmatpush1.msra.mxu0 0.0
        %4238 = vmatprep.subr.mxu0 0.0
        %4239 = vmatpush1.msra.mxu0 0.0
        %4240 = vmatprep.mubr.f32.mxu0 0.0
        %4241 = vmatmul.mubr.f32.gmra.mrb[0].mxu0 %v4159
        %v4242 = vpop.f32.mrb[0].mxu0
        %v4243 = vadd.f32 0.0, %v4242
        %v4244 = vpop.f32.mrb[0].mxu0
        %4245 = vdwg.mxu0
        %v4246 = vmul.f32 %v4243, %v4243
        %v4248 = vrot.slane %v4246, 7
        %v4250 = vsub.f32 %v4243, %v4248
        %v4251 = vlaneseq
        %v4252 = vshrl.u32 %v4251, 7
        %v4253 = vsub.s32 0, %v4252
        %v4254 = vrot.slane %v4243, %v4253
        %v4255 = vsub.f32 %v3917, %v4254
        %v4256 = vsub.f32 %v3918, %v4254
        %v4257 = vadd.f32 %v4250, 1e-05
        %v4258 = vrsqrt.pop %v4257
        %v4259 = vlaneseq
        %v4260 = vshrl.u32 %v4259, 7
        %v4261 = vsub.s32 1, %v4260
        %v4262 = vrot.slane %v4258, %v4261
        %v4263 = vmul.f32 %v4255, %v4262
        %v4264 = vmul.f32 %v4256, %v4262
        %v4265 = vld [vmem:[#allocation8 + $0x6] sm:$0x1]
        %v4266 = vlaneseq
        %v4267 = vshrl.u32 %v4266, 7
        %v4268 = vsub.s32 0, %v4267
        %v4269 = vrot.slane %v4265, %v4268
        %v4270 = vmul.f32 %v4263, %v4269
        %v4271 = vmul.f32 %v4264, %v4269
        %v4272 = vld [vmem:[#allocation9 + $0x6] sm:$0x1]
        %v4273 = vlaneseq
        %v4274 = vshrl.u32 %v4273, 7
        %v4275 = vsub.s32 0, %v4274
        %v4276 = vrot.slane %v4272, %v4275
        %v4277 = vadd.f32 %v4270, %v4276
        %v4278 = vadd.f32 %v4271, %v4276
        %v4279 = vxor.u32 %v4277, 2147483648
        %v4280 = vxor.u32 %v4278, 2147483648
        %v4281 = vmul.f32 %v4279, 1.442695
        %v4282 = vpow.pop %v4281
        %v4283 = vmul.f32 %v4280, 1.442695
        %v4284 = vpow.pop %v4283
        %v4285 = vadd.f32 %v4282, 1.0
        %v4286 = vadd.f32 %v4284, 1.0
        %v4287 = vrcp.pop %v4285
        %v4288 = vmul.f32 1.0, %v4287
        %v4289 = vrcp.pop %v4286
        %v4290 = vmul.f32 1.0, %v4289
        %v4291 = vmul.f32 %v4277, %v4288
        %v4292 = vmul.f32 %v4278, %v4290
        %4293 = vst [vmem:[#allocation2 + $0x1] sm:$0xff] %v4291
        %4294 = vst [vmem:[#allocation2 + $0x9] sm:$0xff] %v4292
        %v4295 = vld [vmem:[#allocation2] sm:$0xff]
        %v4296 = vld [vmem:[#allocation2 + $0x8] sm:$0xff]
        %s4297 = scalar_lea.vmem [#allocation4], 2688
        %v4298 = vld [vmem:[%s4297] sm:$0xff]
        %v4299 = vld [vmem:[%s4297 + $0x8] sm:$0xff]
        %v4300 = vld [vmem:[%s4297 + $0x10] sm:$0xff]
        %v4301 = vld [vmem:[%s4297 + $0x18] sm:$0xff]
        %v4302 = vld [vmem:[%s4297 + $0x20] sm:$0xff]
        %v4303 = vld [vmem:[%s4297 + $0x28] sm:$0xff]
        %v4304 = vld [vmem:[%s4297 + $0x30] sm:$0xff]
        %v4305 = vld [vmem:[%s4297 + $0x38] sm:$0xff]
        %v4306 = vld [vmem:[%s4297 + $0x40] sm:$0xff]
        %v4307 = vld [vmem:[%s4297 + $0x48] sm:$0xff]
        %v4308 = vld [vmem:[%s4297 + $0x50] sm:$0xff]
        %v4309 = vld [vmem:[%s4297 + $0x58] sm:$0xff]
        %v4310 = vld [vmem:[%s4297 + $0x60] sm:$0xff]
        %v4311 = vld [vmem:[%s4297 + $0x68] sm:$0xff]
        %v4312 = vld [vmem:[%s4297 + $0x70] sm:$0xff]
        %v4313 = vld [vmem:[%s4297 + $0x78] sm:$0xff]
        %v4314 = vld [vmem:[#allocation2 + $0x1] sm:$0xff]
        %v4315 = vld [vmem:[#allocation2 + $0x9] sm:$0xff]
        %s4316 = scalar_lea.vmem [#allocation4], 2816
        %v4317 = vld [vmem:[%s4316] sm:$0xff]
        %v4318 = vld [vmem:[%s4316 + $0x8] sm:$0xff]
        %v4319 = vld [vmem:[%s4316 + $0x10] sm:$0xff]
        %v4320 = vld [vmem:[%s4316 + $0x18] sm:$0xff]
        %v4321 = vld [vmem:[%s4316 + $0x20] sm:$0xff]
        %v4322 = vld [vmem:[%s4316 + $0x28] sm:$0xff]
        %v4323 = vld [vmem:[%s4316 + $0x30] sm:$0xff]
        %v4324 = vld [vmem:[%s4316 + $0x38] sm:$0xff]
        %v4325 = vld [vmem:[%s4316 + $0x40] sm:$0xff]
        %v4326 = vld [vmem:[%s4316 + $0x48] sm:$0xff]
        %v4327 = vld [vmem:[%s4316 + $0x50] sm:$0xff]
        %v4328 = vld [vmem:[%s4316 + $0x58] sm:$0xff]
        %v4329 = vld [vmem:[%s4316 + $0x60] sm:$0xff]
        %v4330 = vld [vmem:[%s4316 + $0x68] sm:$0xff]
        %v4331 = vld [vmem:[%s4316 + $0x70] sm:$0xff]
        %v4332 = vld [vmem:[%s4316 + $0x78] sm:$0xff]
        %4333 = vmatprep.subr.mxu0 0.0
        %4334 = vmatpush1.msra.mxu0 %v4317
        %4335 = vmatprep.subr.mxu0 0.0
        %4336 = vmatpush1.msra.mxu0 %v4318
        %4337 = vmatprep.subr.mxu0 0.0
        %4338 = vmatpush1.msra.mxu0 %v4319
        %4339 = vmatprep.subr.mxu0 0.0
        %4340 = vmatpush1.msra.mxu0 %v4320
        %4341 = vmatprep.subr.mxu0 0.0
        %4342 = vmatpush1.msra.mxu0 %v4321
        %4343 = vmatprep.subr.mxu0 0.0
        %4344 = vmatpush1.msra.mxu0 %v4322
        %4345 = vmatprep.subr.mxu0 0.0
        %4346 = vmatpush1.msra.mxu0 %v4323
        %4347 = vmatprep.subr.mxu0 0.0
        %4348 = vmatpush1.msra.mxu0 %v4324
        %4349 = vmatprep.subr.mxu0 0.0
        %4350 = vmatpush1.msra.mxu0 %v4325
        %4351 = vmatprep.subr.mxu0 0.0
        %4352 = vmatpush1.msra.mxu0 %v4326
        %4353 = vmatprep.subr.mxu0 0.0
        %4354 = vmatpush1.msra.mxu0 %v4327
        %4355 = vmatprep.subr.mxu0 0.0
        %4356 = vmatpush1.msra.mxu0 %v4328
        %4357 = vmatprep.subr.mxu0 0.0
        %4358 = vmatpush1.msra.mxu0 %v4329
        %4359 = vmatprep.subr.mxu0 0.0
        %4360 = vmatpush1.msra.mxu0 %v4330
        %4361 = vmatprep.subr.mxu0 0.0
        %4362 = vmatpush1.msra.mxu0 %v4331
        %4363 = vmatprep.subr.mxu0 0.0
        %4364 = vmatpush1.msra.mxu0 %v4332
        %4365 = vmatprep.subr.mxu0 0.0
        %4366 = vmatpush1.msra.mxu0 0.0
        %4367 = vmatprep.subr.mxu0 0.0
        %4368 = vmatpush1.msra.mxu0 0.0
        %4369 = vmatprep.subr.mxu0 0.0
        %4370 = vmatpush1.msra.mxu0 0.0
        %4371 = vmatprep.subr.mxu0 0.0
        %4372 = vmatpush1.msra.mxu0 0.0
        %4373 = vmatprep.subr.mxu0 0.0
        %4374 = vmatpush1.msra.mxu0 0.0
        %4375 = vmatprep.subr.mxu0 0.0
        %4376 = vmatpush1.msra.mxu0 0.0
        %4377 = vmatprep.subr.mxu0 0.0
        %4378 = vmatpush1.msra.mxu0 0.0
        %4379 = vmatprep.subr.mxu0 0.0
        %4380 = vmatpush1.msra.mxu0 0.0
        %4381 = vmatprep.subr.mxu0 0.0
        %4382 = vmatpush1.msra.mxu0 0.0
        %4383 = vmatprep.subr.mxu0 0.0
        %4384 = vmatpush1.msra.mxu0 0.0
        %4385 = vmatprep.subr.mxu0 0.0
        %4386 = vmatpush1.msra.mxu0 0.0
        %4387 = vmatprep.subr.mxu0 0.0
        %4388 = vmatpush1.msra.mxu0 0.0
        %4389 = vmatprep.subr.mxu0 0.0
        %4390 = vmatpush1.msra.mxu0 0.0
        %4391 = vmatprep.subr.mxu0 0.0
        %4392 = vmatpush1.msra.mxu0 0.0
        %4393 = vmatprep.subr.mxu0 0.0
        %4394 = vmatpush1.msra.mxu0 0.0
        %4395 = vmatprep.subr.mxu0 0.0
        %4396 = vmatpush1.msra.mxu0 0.0
        %4397 = vmatprep.mubr.f32.mxu0 0.0
        %4398 = vmatmul.mubr.f32.gmra.mrb[0].mxu0 %v4314
        %v4399 = vpop.f32.mrb[0].mxu0
        %v4400 = vadd.f32 0.0, %v4399
        %v4401 = vpop.f32.mrb[0].mxu0
        %4402 = vmatprep.mubr.f32.mxu0 0.0
        %4403 = vmatmul.mubr.f32.gmra.mrb[0].mxu0 %v4315
        %v4404 = vpop.f32.mrb[0].mxu0
        %v4405 = vadd.f32 0.0, %v4404
        %v4406 = vpop.f32.mrb[0].mxu0
        %4407 = vdwg.mxu0
        %4408 = vmatprep.subr.mxu0 0.0
        %4409 = vmatpush1.msra.mxu0 %v4298
        %4410 = vmatprep.subr.mxu0 0.0
        %4411 = vmatpush1.msra.mxu0 %v4299
        %4412 = vmatprep.subr.mxu0 0.0
        %4413 = vmatpush1.msra.mxu0 %v4300
        %4414 = vmatprep.subr.mxu0 0.0
        %4415 = vmatpush1.msra.mxu0 %v4301
        %4416 = vmatprep.subr.mxu0 0.0
        %4417 = vmatpush1.msra.mxu0 %v4302
        %4418 = vmatprep.subr.mxu0 0.0
        %4419 = vmatpush1.msra.mxu0 %v4303
        %4420 = vmatprep.subr.mxu0 0.0
        %4421 = vmatpush1.msra.mxu0 %v4304
        %4422 = vmatprep.subr.mxu0 0.0
        %4423 = vmatpush1.msra.mxu0 %v4305
        %4424 = vmatprep.subr.mxu0 0.0
        %4425 = vmatpush1.msra.mxu0 %v4306
        %4426 = vmatprep.subr.mxu0 0.0
        %4427 = vmatpush1.msra.mxu0 %v4307
        %4428 = vmatprep.subr.mxu0 0.0
        %4429 = vmatpush1.msra.mxu0 %v4308
        %4430 = vmatprep.subr.mxu0 0.0
        %4431 = vmatpush1.msra.mxu0 %v4309
        %4432 = vmatprep.subr.mxu0 0.0
        %4433 = vmatpush1.msra.mxu0 %v4310
        %4434 = vmatprep.subr.mxu0 0.0
        %4435 = vmatpush1.msra.mxu0 %v4311
        %4436 = vmatprep.subr.mxu0 0.0
        %4437 = vmatpush1.msra.mxu0 %v4312
        %4438 = vmatprep.subr.mxu0 0.0
        %4439 = vmatpush1.msra.mxu0 %v4313
        %4440 = vmatprep.subr.mxu0 0.0
        %4441 = vmatpush1.msra.mxu0 0.0
        %4442 = vmatprep.subr.mxu0 0.0
        %4443 = vmatpush1.msra.mxu0 0.0
        %4444 = vmatprep.subr.mxu0 0.0
        %4445 = vmatpush1.msra.mxu0 0.0
        %4446 = vmatprep.subr.mxu0 0.0
        %4447 = vmatpush1.msra.mxu0 0.0
        %4448 = vmatprep.subr.mxu0 0.0
        %4449 = vmatpush1.msra.mxu0 0.0
        %4450 = vmatprep.subr.mxu0 0.0
        %4451 = vmatpush1.msra.mxu0 0.0
        %4452 = vmatprep.subr.mxu0 0.0
        %4453 = vmatpush1.msra.mxu0 0.0
        %4454 = vmatprep.subr.mxu0 0.0
        %4455 = vmatpush1.msra.mxu0 0.0
        %4456 = vmatprep.subr.mxu0 0.0
        %4457 = vmatpush1.msra.mxu0 0.0
        %4458 = vmatprep.subr.mxu0 0.0
        %4459 = vmatpush1.msra.mxu0 0.0
        %4460 = vmatprep.subr.mxu0 0.0
        %4461 = vmatpush1.msra.mxu0 0.0
        %4462 = vmatprep.subr.mxu0 0.0
        %4463 = vmatpush1.msra.mxu0 0.0
        %4464 = vmatprep.subr.mxu0 0.0
        %4465 = vmatpush1.msra.mxu0 0.0
        %4466 = vmatprep.subr.mxu0 0.0
        %4467 = vmatpush1.msra.mxu0 0.0
        %4468 = vmatprep.subr.mxu0 0.0
        %4469 = vmatpush1.msra.mxu0 0.0
        %4470 = vmatprep.subr.mxu0 0.0
        %4471 = vmatpush1.msra.mxu0 0.0
        %4472 = vmatprep.mubr.f32.mxu0 0.0
        %4473 = vmatmul.mubr.f32.gmra.mrb[0].mxu0 %v4295
        %v4474 = vpop.f32.mrb[0].mxu0
        %v4475 = vadd.f32 %v4400, %v4474
        %v4476 = vpop.f32.mrb[0].mxu0
        %4477 = vmatprep.mubr.f32.mxu0 0.0
        %4478 = vmatmul.mubr.f32.gmra.mrb[0].mxu0 %v4296
        %v4479 = vpop.f32.mrb[0].mxu0
        %v4480 = vadd.f32 %v4405, %v4479
        %v4481 = vpop.f32.mrb[0].mxu0
        %4482 = vdwg.mxu0
        %v4483 = vld [vmem:[#allocation2 + $0x2] sm:$0xff]
        %v4484 = vld [vmem:[#allocation2 + $0xa] sm:$0xff]
        %s4485 = scalar_lea.vmem [#allocation4], 2944
        %v4486 = vld [vmem:[%s4485] sm:$0xff]
        %v4487 = vld [vmem:[%s4485 + $0x8] sm:$0xff]
        %v4488 = vld [vmem:[%s4485 + $0x10] sm:$0xff]
        %v4489 = vld [vmem:[%s4485 + $0x18] sm:$0xff]
        %v4490 = vld [vmem:[%s4485 + $0x20] sm:$0xff]
        %v4491 = vld [vmem:[%s4485 + $0x28] sm:$0xff]
        %v4492 = vld [vmem:[%s4485 + $0x30] sm:$0xff]
        %v4493 = vld [vmem:[%s4485 + $0x38] sm:$0xff]
        %v4494 = vld [vmem:[%s4485 + $0x40] sm:$0xff]
        %v4495 = vld [vmem:[%s4485 + $0x48] sm:$0xff]
        %v4496 = vld [vmem:[%s4485 + $0x50] sm:$0xff]
        %v4497 = vld [vmem:[%s4485 + $0x58] sm:$0xff]
        %v4498 = vld [vmem:[%s4485 + $0x60] sm:$0xff]
        %v4499 = vld [vmem:[%s4485 + $0x68] sm:$0xff]
        %v4500 = vld [vmem:[%s4485 + $0x70] sm:$0xff]
        %v4501 = vld [vmem:[%s4485 + $0x78] sm:$0xff]
        %4502 = vmatprep.subr.mxu0 0.0
        %4503 = vmatpush1.msra.mxu0 %v4486
        %4504 = vmatprep.subr.mxu0 0.0
        %4505 = vmatpush1.msra.mxu0 %v4487
        %4506 = vmatprep.subr.mxu0 0.0
        %4507 = vmatpush1.msra.mxu0 %v4488
        %4508 = vmatprep.subr.mxu0 0.0
        %4509 = vmatpush1.msra.mxu0 %v4489
        %4510 = vmatprep.subr.mxu0 0.0
        %4511 = vmatpush1.msra.mxu0 %v4490
        %4512 = vmatprep.subr.mxu0 0.0
        %4513 = vmatpush1.msra.mxu0 %v4491
        %4514 = vmatprep.subr.mxu0 0.0
        %4515 = vmatpush1.msra.mxu0 %v4492
        %4516 = vmatprep.subr.mxu0 0.0
        %4517 = vmatpush1.msra.mxu0 %v4493
        %4518 = vmatprep.subr.mxu0 0.0
        %4519 = vmatpush1.msra.mxu0 %v4494
        %4520 = vmatprep.subr.mxu0 0.0
        %4521 = vmatpush1.msra.mxu0 %v4495
        %4522 = vmatprep.subr.mxu0 0.0
        %4523 = vmatpush1.msra.mxu0 %v4496
        %4524 = vmatprep.subr.mxu0 0.0
        %4525 = vmatpush1.msra.mxu0 %v4497
        %4526 = vmatprep.subr.mxu0 0.0
        %4527 = vmatpush1.msra.mxu0 %v4498
        %4528 = vmatprep.subr.mxu0 0.0
        %4529 = vmatpush1.msra.mxu0 %v4499
        %4530 = vmatprep.subr.mxu0 0.0
        %4531 = vmatpush1.msra.mxu0 %v4500
        %4532 = vmatprep.subr.mxu0 0.0
        %4533 = vmatpush1.msra.mxu0 %v4501
        %4534 = vmatprep.subr.mxu0 0.0
        %4535 = vmatpush1.msra.mxu0 0.0
        %4536 = vmatprep.subr.mxu0 0.0
        %4537 = vmatpush1.msra.mxu0 0.0
        %4538 = vmatprep.subr.mxu0 0.0
        %4539 = vmatpush1.msra.mxu0 0.0
        %4540 = vmatprep.subr.mxu0 0.0
        %4541 = vmatpush1.msra.mxu0 0.0
        %4542 = vmatprep.subr.mxu0 0.0
        %4543 = vmatpush1.msra.mxu0 0.0
        %4544 = vmatprep.subr.mxu0 0.0
        %4545 = vmatpush1.msra.mxu0 0.0
        %4546 = vmatprep.subr.mxu0 0.0
        %4547 = vmatpush1.msra.mxu0 0.0
        %4548 = vmatprep.subr.mxu0 0.0
        %4549 = vmatpush1.msra.mxu0 0.0
        %4550 = vmatprep.subr.mxu0 0.0
        %4551 = vmatpush1.msra.mxu0 0.0
        %4552 = vmatprep.subr.mxu0 0.0
        %4553 = vmatpush1.msra.mxu0 0.0
        %4554 = vmatprep.subr.mxu0 0.0
        %4555 = vmatpush1.msra.mxu0 0.0
        %4556 = vmatprep.subr.mxu0 0.0
        %4557 = vmatpush1.msra.mxu0 0.0
        %4558 = vmatprep.subr.mxu0 0.0
        %4559 = vmatpush1.msra.mxu0 0.0
        %4560 = vmatprep.subr.mxu0 0.0
        %4561 = vmatpush1.msra.mxu0 0.0
        %4562 = vmatprep.subr.mxu0 0.0
        %4563 = vmatpush1.msra.mxu0 0.0
        %4564 = vmatprep.subr.mxu0 0.0
        %4565 = vmatpush1.msra.mxu0 0.0
        %4566 = vmatprep.mubr.f32.mxu0 0.0
        %4567 = vmatmul.mubr.f32.gmra.mrb[0].mxu0 %v4483
        %v4568 = vpop.f32.mrb[0].mxu0
        %v4569 = vadd.f32 0.0, %v4568
        %v4570 = vpop.f32.mrb[0].mxu0
        %4571 = vmatprep.mubr.f32.mxu0 0.0
        %4572 = vmatmul.mubr.f32.gmra.mrb[0].mxu0 %v4484
        %v4573 = vpop.f32.mrb[0].mxu0
        %v4574 = vadd.f32 0.0, %v4573
        %v4575 = vpop.f32.mrb[0].mxu0
        %4576 = vdwg.mxu0
        %v4577 = vadd.f32 %v4475, %v4569
        %v4578 = vadd.f32 %v4480, %v4574
        %v4579 = vld [vmem:[#allocation6 + $0x7] sm:$0x1]
        %v4580 = vlaneseq
        %v4581 = vshrl.u32 %v4580, 7
        %v4582 = vsub.s32 0, %v4581
        %v4583 = vrot.slane %v4579, %v4582
        %v4584 = vadd.f32 %v4577, %v4583
        %v4585 = vadd.f32 %v4578, %v4583
        %v4586 = vsub.f32 1.0, %v4127
        %v4587 = vsub.f32 1.0, %v4128
        %v4588 = vmul.f32 %v4584, %v4586
        %v4589 = vmul.f32 %v4585, %v4587
        %4590 = vst [vmem:[#allocation2 + $0x1] sm:$0xff] %v500
        %4591 = vst [vmem:[#allocation2 + $0x9] sm:$0xff] %v501
        %v4592 = vld [vmem:[#allocation2] sm:$0xff]
        %v4593 = vld [vmem:[#allocation2 + $0x8] sm:$0xff]
        %s4594 = scalar_lea.vmem [#allocation4], 3072
        %v4595 = vld [vmem:[%s4594] sm:$0xff]
        %v4596 = vld [vmem:[%s4594 + $0x8] sm:$0xff]
        %v4597 = vld [vmem:[%s4594 + $0x10] sm:$0xff]
        %v4598 = vld [vmem:[%s4594 + $0x18] sm:$0xff]
        %v4599 = vld [vmem:[%s4594 + $0x20] sm:$0xff]
        %v4600 = vld [vmem:[%s4594 + $0x28] sm:$0xff]
        %v4601 = vld [vmem:[%s4594 + $0x30] sm:$0xff]
        %v4602 = vld [vmem:[%s4594 + $0x38] sm:$0xff]
        %v4603 = vld [vmem:[%s4594 + $0x40] sm:$0xff]
        %v4604 = vld [vmem:[%s4594 + $0x48] sm:$0xff]
        %v4605 = vld [vmem:[%s4594 + $0x50] sm:$0xff]
        %v4606 = vld [vmem:[%s4594 + $0x58] sm:$0xff]
        %v4607 = vld [vmem:[%s4594 + $0x60] sm:$0xff]
        %v4608 = vld [vmem:[%s4594 + $0x68] sm:$0xff]
        %v4609 = vld [vmem:[%s4594 + $0x70] sm:$0xff]
        %v4610 = vld [vmem:[%s4594 + $0x78] sm:$0xff]
        %v4611 = vld [vmem:[#allocation2 + $0x1] sm:$0xff]
        %v4612 = vld [vmem:[#allocation2 + $0x9] sm:$0xff]
        %s4613 = scalar_lea.vmem [#allocation4], 3200
        %v4614 = vld [vmem:[%s4613] sm:$0xff]
        %v4615 = vld [vmem:[%s4613 + $0x8] sm:$0xff]
        %v4616 = vld [vmem:[%s4613 + $0x10] sm:$0xff]
        %v4617 = vld [vmem:[%s4613 + $0x18] sm:$0xff]
        %v4618 = vld [vmem:[%s4613 + $0x20] sm:$0xff]
        %v4619 = vld [vmem:[%s4613 + $0x28] sm:$0xff]
        %v4620 = vld [vmem:[%s4613 + $0x30] sm:$0xff]
        %v4621 = vld [vmem:[%s4613 + $0x38] sm:$0xff]
        %v4622 = vld [vmem:[%s4613 + $0x40] sm:$0xff]
        %v4623 = vld [vmem:[%s4613 + $0x48] sm:$0xff]
        %v4624 = vld [vmem:[%s4613 + $0x50] sm:$0xff]
        %v4625 = vld [vmem:[%s4613 + $0x58] sm:$0xff]
        %v4626 = vld [vmem:[%s4613 + $0x60] sm:$0xff]
        %v4627 = vld [vmem:[%s4613 + $0x68] sm:$0xff]
        %v4628 = vld [vmem:[%s4613 + $0x70] sm:$0xff]
        %v4629 = vld [vmem:[%s4613 + $0x78] sm:$0xff]
        %4630 = vmatprep.subr.mxu0 0.0
        %4631 = vmatpush1.msra.mxu0 %v4614
        %4632 = vmatprep.subr.mxu0 0.0
        %4633 = vmatpush1.msra.mxu0 %v4615
        %4634 = vmatprep.subr.mxu0 0.0
        %4635 = vmatpush1.msra.mxu0 %v4616
        %4636 = vmatprep.subr.mxu0 0.0
        %4637 = vmatpush1.msra.mxu0 %v4617
        %4638 = vmatprep.subr.mxu0 0.0
        %4639 = vmatpush1.msra.mxu0 %v4618
        %4640 = vmatprep.subr.mxu0 0.0
        %4641 = vmatpush1.msra.mxu0 %v4619
        %4642 = vmatprep.subr.mxu0 0.0
        %4643 = vmatpush1.msra.mxu0 %v4620
        %4644 = vmatprep.subr.mxu0 0.0
        %4645 = vmatpush1.msra.mxu0 %v4621
        %4646 = vmatprep.subr.mxu0 0.0
        %4647 = vmatpush1.msra.mxu0 %v4622
        %4648 = vmatprep.subr.mxu0 0.0
        %4649 = vmatpush1.msra.mxu0 %v4623
        %4650 = vmatprep.subr.mxu0 0.0
        %4651 = vmatpush1.msra.mxu0 %v4624
        %4652 = vmatprep.subr.mxu0 0.0
        %4653 = vmatpush1.msra.mxu0 %v4625
        %4654 = vmatprep.subr.mxu0 0.0
        %4655 = vmatpush1.msra.mxu0 %v4626
        %4656 = vmatprep.subr.mxu0 0.0
        %4657 = vmatpush1.msra.mxu0 %v4627
        %4658 = vmatprep.subr.mxu0 0.0
        %4659 = vmatpush1.msra.mxu0 %v4628
        %4660 = vmatprep.subr.mxu0 0.0
        %4661 = vmatpush1.msra.mxu0 %v4629
        %4662 = vmatprep.subr.mxu0 0.0
        %4663 = vmatpush1.msra.mxu0 0.0
        %4664 = vmatprep.subr.mxu0 0.0
        %4665 = vmatpush1.msra.mxu0 0.0
        %4666 = vmatprep.subr.mxu0 0.0
        %4667 = vmatpush1.msra.mxu0 0.0
        %4668 = vmatprep.subr.mxu0 0.0
        %4669 = vmatpush1.msra.mxu0 0.0
        %4670 = vmatprep.subr.mxu0 0.0
        %4671 = vmatpush1.msra.mxu0 0.0
        %4672 = vmatprep.subr.mxu0 0.0
        %4673 = vmatpush1.msra.mxu0 0.0
        %4674 = vmatprep.subr.mxu0 0.0
        %4675 = vmatpush1.msra.mxu0 0.0
        %4676 = vmatprep.subr.mxu0 0.0
        %4677 = vmatpush1.msra.mxu0 0.0
        %4678 = vmatprep.subr.mxu0 0.0
        %4679 = vmatpush1.msra.mxu0 0.0
        %4680 = vmatprep.subr.mxu0 0.0
        %4681 = vmatpush1.msra.mxu0 0.0
        %4682 = vmatprep.subr.mxu0 0.0
        %4683 = vmatpush1.msra.mxu0 0.0
        %4684 = vmatprep.subr.mxu0 0.0
        %4685 = vmatpush1.msra.mxu0 0.0
        %4686 = vmatprep.subr.mxu0 0.0
        %4687 = vmatpush1.msra.mxu0 0.0
        %4688 = vmatprep.subr.mxu0 0.0
        %4689 = vmatpush1.msra.mxu0 0.0
        %4690 = vmatprep.subr.mxu0 0.0
        %4691 = vmatpush1.msra.mxu0 0.0
        %4692 = vmatprep.subr.mxu0 0.0
        %4693 = vmatpush1.msra.mxu0 0.0
        %4694 = vmatprep.mubr.f32.mxu0 0.0
        %4695 = vmatmul.mubr.f32.gmra.mrb[0].mxu0 %v4611
        %v4696 = vpop.f32.mrb[0].mxu0
        %v4697 = vadd.f32 0.0, %v4696
        %v4698 = vpop.f32.mrb[0].mxu0
        %4699 = vmatprep.mubr.f32.mxu0 0.0
        %4700 = vmatmul.mubr.f32.gmra.mrb[0].mxu0 %v4612
        %v4701 = vpop.f32.mrb[0].mxu0
        %v4702 = vadd.f32 0.0, %v4701
        %v4703 = vpop.f32.mrb[0].mxu0
        %4704 = vdwg.mxu0
        %4705 = vmatprep.subr.mxu0 0.0
        %4706 = vmatpush1.msra.mxu0 %v4595
        %4707 = vmatprep.subr.mxu0 0.0
        %4708 = vmatpush1.msra.mxu0 %v4596
        %4709 = vmatprep.subr.mxu0 0.0
        %4710 = vmatpush1.msra.mxu0 %v4597
        %4711 = vmatprep.subr.mxu0 0.0
        %4712 = vmatpush1.msra.mxu0 %v4598
        %4713 = vmatprep.subr.mxu0 0.0
        %4714 = vmatpush1.msra.mxu0 %v4599
        %4715 = vmatprep.subr.mxu0 0.0
        %4716 = vmatpush1.msra.mxu0 %v4600
        %4717 = vmatprep.subr.mxu0 0.0
        %4718 = vmatpush1.msra.mxu0 %v4601
        %4719 = vmatprep.subr.mxu0 0.0
        %4720 = vmatpush1.msra.mxu0 %v4602
        %4721 = vmatprep.subr.mxu0 0.0
        %4722 = vmatpush1.msra.mxu0 %v4603
        %4723 = vmatprep.subr.mxu0 0.0
        %4724 = vmatpush1.msra.mxu0 %v4604
        %4725 = vmatprep.subr.mxu0 0.0
        %4726 = vmatpush1.msra.mxu0 %v4605
        %4727 = vmatprep.subr.mxu0 0.0
        %4728 = vmatpush1.msra.mxu0 %v4606
        %4729 = vmatprep.subr.mxu0 0.0
        %4730 = vmatpush1.msra.mxu0 %v4607
        %4731 = vmatprep.subr.mxu0 0.0
        %4732 = vmatpush1.msra.mxu0 %v4608
        %4733 = vmatprep.subr.mxu0 0.0
        %4734 = vmatpush1.msra.mxu0 %v4609
        %4735 = vmatprep.subr.mxu0 0.0
        %4736 = vmatpush1.msra.mxu0 %v4610
        %4737 = vmatprep.subr.mxu0 0.0
        %4738 = vmatpush1.msra.mxu0 0.0
        %4739 = vmatprep.subr.mxu0 0.0
        %4740 = vmatpush1.msra.mxu0 0.0
        %4741 = vmatprep.subr.mxu0 0.0
        %4742 = vmatpush1.msra.mxu0 0.0
        %4743 = vmatprep.subr.mxu0 0.0
        %4744 = vmatpush1.msra.mxu0 0.0
        %4745 = vmatprep.subr.mxu0 0.0
        %4746 = vmatpush1.msra.mxu0 0.0
        %4747 = vmatprep.subr.mxu0 0.0
        %4748 = vmatpush1.msra.mxu0 0.0
        %4749 = vmatprep.subr.mxu0 0.0
        %4750 = vmatpush1.msra.mxu0 0.0
        %4751 = vmatprep.subr.mxu0 0.0
        %4752 = vmatpush1.msra.mxu0 0.0
        %4753 = vmatprep.subr.mxu0 0.0
        %4754 = vmatpush1.msra.mxu0 0.0
        %4755 = vmatprep.subr.mxu0 0.0
        %4756 = vmatpush1.msra.mxu0 0.0
        %4757 = vmatprep.subr.mxu0 0.0
        %4758 = vmatpush1.msra.mxu0 0.0
        %4759 = vmatprep.subr.mxu0 0.0
        %4760 = vmatpush1.msra.mxu0 0.0
        %4761 = vmatprep.subr.mxu0 0.0
        %4762 = vmatpush1.msra.mxu0 0.0
        %4763 = vmatprep.subr.mxu0 0.0
        %4764 = vmatpush1.msra.mxu0 0.0
        %4765 = vmatprep.subr.mxu0 0.0
        %4766 = vmatpush1.msra.mxu0 0.0
        %4767 = vmatprep.subr.mxu0 0.0
        %4768 = vmatpush1.msra.mxu0 0.0
        %4769 = vmatprep.mubr.f32.mxu0 0.0
        %4770 = vmatmul.mubr.f32.gmra.mrb[0].mxu0 %v4592
        %v4771 = vpop.f32.mrb[0].mxu0
        %v4772 = vadd.f32 %v4697, %v4771
        %v4773 = vpop.f32.mrb[0].mxu0
        %4774 = vmatprep.mubr.f32.mxu0 0.0
        %4775 = vmatmul.mubr.f32.gmra.mrb[0].mxu0 %v4593
        %v4776 = vpop.f32.mrb[0].mxu0
        %v4777 = vadd.f32 %v4702, %v4776
        %v4778 = vpop.f32.mrb[0].mxu0
        %4779 = vdwg.mxu0
        %v4780 = vld [vmem:[#allocation2 + $0x2] sm:$0xff]
        %v4781 = vld [vmem:[#allocation2 + $0xa] sm:$0xff]
        %s4782 = scalar_lea.vmem [#allocation4], 3328
        %v4783 = vld [vmem:[%s4782] sm:$0xff]
        %v4784 = vld [vmem:[%s4782 + $0x8] sm:$0xff]
        %v4785 = vld [vmem:[%s4782 + $0x10] sm:$0xff]
        %v4786 = vld [vmem:[%s4782 + $0x18] sm:$0xff]
        %v4787 = vld [vmem:[%s4782 + $0x20] sm:$0xff]
        %v4788 = vld [vmem:[%s4782 + $0x28] sm:$0xff]
        %v4789 = vld [vmem:[%s4782 + $0x30] sm:$0xff]
        %v4790 = vld [vmem:[%s4782 + $0x38] sm:$0xff]
        %v4791 = vld [vmem:[%s4782 + $0x40] sm:$0xff]
        %v4792 = vld [vmem:[%s4782 + $0x48] sm:$0xff]
        %v4793 = vld [vmem:[%s4782 + $0x50] sm:$0xff]
        %v4794 = vld [vmem:[%s4782 + $0x58] sm:$0xff]
        %v4795 = vld [vmem:[%s4782 + $0x60] sm:$0xff]
        %v4796 = vld [vmem:[%s4782 + $0x68] sm:$0xff]
        %v4797 = vld [vmem:[%s4782 + $0x70] sm:$0xff]
        %v4798 = vld [vmem:[%s4782 + $0x78] sm:$0xff]
        %4799 = vmatprep.subr.mxu0 0.0
        %4800 = vmatpush1.msra.mxu0 %v4783
        %4801 = vmatprep.subr.mxu0 0.0
        %4802 = vmatpush1.msra.mxu0 %v4784
        %4803 = vmatprep.subr.mxu0 0.0
        %4804 = vmatpush1.msra.mxu0 %v4785
        %4805 = vmatprep.subr.mxu0 0.0
        %4806 = vmatpush1.msra.mxu0 %v4786
        %4807 = vmatprep.subr.mxu0 0.0
        %4808 = vmatpush1.msra.mxu0 %v4787
        %4809 = vmatprep.subr.mxu0 0.0
        %4810 = vmatpush1.msra.mxu0 %v4788
        %4811 = vmatprep.subr.mxu0 0.0
        %4812 = vmatpush1.msra.mxu0 %v4789
        %4813 = vmatprep.subr.mxu0 0.0
        %4814 = vmatpush1.msra.mxu0 %v4790
        %4815 = vmatprep.subr.mxu0 0.0
        %4816 = vmatpush1.msra.mxu0 %v4791
        %4817 = vmatprep.subr.mxu0 0.0
        %4818 = vmatpush1.msra.mxu0 %v4792
        %4819 = vmatprep.subr.mxu0 0.0
        %4820 = vmatpush1.msra.mxu0 %v4793
        %4821 = vmatprep.subr.mxu0 0.0
        %4822 = vmatpush1.msra.mxu0 %v4794
        %4823 = vmatprep.subr.mxu0 0.0
        %4824 = vmatpush1.msra.mxu0 %v4795
        %4825 = vmatprep.subr.mxu0 0.0
        %4826 = vmatpush1.msra.mxu0 %v4796
        %4827 = vmatprep.subr.mxu0 0.0
        %4828 = vmatpush1.msra.mxu0 %v4797
        %4829 = vmatprep.subr.mxu0 0.0
        %4830 = vmatpush1.msra.mxu0 %v4798
        %4831 = vmatprep.subr.mxu0 0.0
        %4832 = vmatpush1.msra.mxu0 0.0
        %4833 = vmatprep.subr.mxu0 0.0
        %4834 = vmatpush1.msra.mxu0 0.0
        %4835 = vmatprep.subr.mxu0 0.0
        %4836 = vmatpush1.msra.mxu0 0.0
        %4837 = vmatprep.subr.mxu0 0.0
        %4838 = vmatpush1.msra.mxu0 0.0
        %4839 = vmatprep.subr.mxu0 0.0
        %4840 = vmatpush1.msra.mxu0 0.0
        %4841 = vmatprep.subr.mxu0 0.0
        %4842 = vmatpush1.msra.mxu0 0.0
        %4843 = vmatprep.subr.mxu0 0.0
        %4844 = vmatpush1.msra.mxu0 0.0
        %4845 = vmatprep.subr.mxu0 0.0
        %4846 = vmatpush1.msra.mxu0 0.0
        %4847 = vmatprep.subr.mxu0 0.0
        %4848 = vmatpush1.msra.mxu0 0.0
        %4849 = vmatprep.subr.mxu0 0.0
        %4850 = vmatpush1.msra.mxu0 0.0
        %4851 = vmatprep.subr.mxu0 0.0
        %4852 = vmatpush1.msra.mxu0 0.0
        %4853 = vmatprep.subr.mxu0 0.0
        %4854 = vmatpush1.msra.mxu0 0.0
        %4855 = vmatprep.subr.mxu0 0.0
        %4856 = vmatpush1.msra.mxu0 0.0
        %4857 = vmatprep.subr.mxu0 0.0
        %4858 = vmatpush1.msra.mxu0 0.0
        %4859 = vmatprep.subr.mxu0 0.0
        %4860 = vmatpush1.msra.mxu0 0.0
        %4861 = vmatprep.subr.mxu0 0.0
        %4862 = vmatpush1.msra.mxu0 0.0
        %4863 = vmatprep.mubr.f32.mxu0 0.0
        %4864 = vmatmul.mubr.f32.gmra.mrb[0].mxu0 %v4780
        %v4865 = vpop.f32.mrb[0].mxu0
        %v4866 = vadd.f32 0.0, %v4865
        %v4867 = vpop.f32.mrb[0].mxu0
        %4868 = vmatprep.mubr.f32.mxu0 0.0
        %4869 = vmatmul.mubr.f32.gmra.mrb[0].mxu0 %v4781
        %v4870 = vpop.f32.mrb[0].mxu0
        %v4871 = vadd.f32 0.0, %v4870
        %v4872 = vpop.f32.mrb[0].mxu0
        %4873 = vdwg.mxu0
        %v4874 = vadd.f32 %v4772, %v4866
        %v4875 = vadd.f32 %v4777, %v4871
        %4876 = vst [vmem:[#allocation2 + $0x1] sm:$0xff] %v4588
        %4877 = vst [vmem:[#allocation2 + $0x9] sm:$0xff] %v4589
        %v4878 = vld [vmem:[#allocation2] sm:$0xff]
        %v4879 = vld [vmem:[#allocation2 + $0x8] sm:$0xff]
        %s4880 = scalar_lea.vmem [#allocation4], 3456
        %v4881 = vld [vmem:[%s4880] sm:$0xff]
        %v4882 = vld [vmem:[%s4880 + $0x8] sm:$0xff]
        %v4883 = vld [vmem:[%s4880 + $0x10] sm:$0xff]
        %v4884 = vld [vmem:[%s4880 + $0x18] sm:$0xff]
        %v4885 = vld [vmem:[%s4880 + $0x20] sm:$0xff]
        %v4886 = vld [vmem:[%s4880 + $0x28] sm:$0xff]
        %v4887 = vld [vmem:[%s4880 + $0x30] sm:$0xff]
        %v4888 = vld [vmem:[%s4880 + $0x38] sm:$0xff]
        %v4889 = vld [vmem:[%s4880 + $0x40] sm:$0xff]
        %v4890 = vld [vmem:[%s4880 + $0x48] sm:$0xff]
        %v4891 = vld [vmem:[%s4880 + $0x50] sm:$0xff]
        %v4892 = vld [vmem:[%s4880 + $0x58] sm:$0xff]
        %v4893 = vld [vmem:[%s4880 + $0x60] sm:$0xff]
        %v4894 = vld [vmem:[%s4880 + $0x68] sm:$0xff]
        %v4895 = vld [vmem:[%s4880 + $0x70] sm:$0xff]
        %v4896 = vld [vmem:[%s4880 + $0x78] sm:$0xff]
        %v4897 = vld [vmem:[#allocation2 + $0x1] sm:$0xff]
        %v4898 = vld [vmem:[#allocation2 + $0x9] sm:$0xff]
        %s4899 = scalar_lea.vmem [#allocation4], 3584
        %v4900 = vld [vmem:[%s4899] sm:$0xff]
        %v4901 = vld [vmem:[%s4899 + $0x8] sm:$0xff]
        %v4902 = vld [vmem:[%s4899 + $0x10] sm:$0xff]
        %v4903 = vld [vmem:[%s4899 + $0x18] sm:$0xff]
        %v4904 = vld [vmem:[%s4899 + $0x20] sm:$0xff]
        %v4905 = vld [vmem:[%s4899 + $0x28] sm:$0xff]
        %v4906 = vld [vmem:[%s4899 + $0x30] sm:$0xff]
        %v4907 = vld [vmem:[%s4899 + $0x38] sm:$0xff]
        %v4908 = vld [vmem:[%s4899 + $0x40] sm:$0xff]
        %v4909 = vld [vmem:[%s4899 + $0x48] sm:$0xff]
        %v4910 = vld [vmem:[%s4899 + $0x50] sm:$0xff]
        %v4911 = vld [vmem:[%s4899 + $0x58] sm:$0xff]
        %v4912 = vld [vmem:[%s4899 + $0x60] sm:$0xff]
        %v4913 = vld [vmem:[%s4899 + $0x68] sm:$0xff]
        %v4914 = vld [vmem:[%s4899 + $0x70] sm:$0xff]
        %v4915 = vld [vmem:[%s4899 + $0x78] sm:$0xff]
        %4916 = vmatprep.subr.mxu0 0.0
        %4917 = vmatpush1.msra.mxu0 %v4900
        %4918 = vmatprep.subr.mxu0 0.0
        %4919 = vmatpush1.msra.mxu0 %v4901
        %4920 = vmatprep.subr.mxu0 0.0
        %4921 = vmatpush1.msra.mxu0 %v4902
        %4922 = vmatprep.subr.mxu0 0.0
        %4923 = vmatpush1.msra.mxu0 %v4903
        %4924 = vmatprep.subr.mxu0 0.0
        %4925 = vmatpush1.msra.mxu0 %v4904
        %4926 = vmatprep.subr.mxu0 0.0
        %4927 = vmatpush1.msra.mxu0 %v4905
        %4928 = vmatprep.subr.mxu0 0.0
        %4929 = vmatpush1.msra.mxu0 %v4906
        %4930 = vmatprep.subr.mxu0 0.0
        %4931 = vmatpush1.msra.mxu0 %v4907
        %4932 = vmatprep.subr.mxu0 0.0
        %4933 = vmatpush1.msra.mxu0 %v4908
        %4934 = vmatprep.subr.mxu0 0.0
        %4935 = vmatpush1.msra.mxu0 %v4909
        %4936 = vmatprep.subr.mxu0 0.0
        %4937 = vmatpush1.msra.mxu0 %v4910
        %4938 = vmatprep.subr.mxu0 0.0
        %4939 = vmatpush1.msra.mxu0 %v4911
        %4940 = vmatprep.subr.mxu0 0.0
        %4941 = vmatpush1.msra.mxu0 %v4912
        %4942 = vmatprep.subr.mxu0 0.0
        %4943 = vmatpush1.msra.mxu0 %v4913
        %4944 = vmatprep.subr.mxu0 0.0
        %4945 = vmatpush1.msra.mxu0 %v4914
        %4946 = vmatprep.subr.mxu0 0.0
        %4947 = vmatpush1.msra.mxu0 %v4915
        %4948 = vmatprep.subr.mxu0 0.0
        %4949 = vmatpush1.msra.mxu0 0.0
        %4950 = vmatprep.subr.mxu0 0.0
        %4951 = vmatpush1.msra.mxu0 0.0
        %4952 = vmatprep.subr.mxu0 0.0
        %4953 = vmatpush1.msra.mxu0 0.0
        %4954 = vmatprep.subr.mxu0 0.0
        %4955 = vmatpush1.msra.mxu0 0.0
        %4956 = vmatprep.subr.mxu0 0.0
        %4957 = vmatpush1.msra.mxu0 0.0
        %4958 = vmatprep.subr.mxu0 0.0
        %4959 = vmatpush1.msra.mxu0 0.0
        %4960 = vmatprep.subr.mxu0 0.0
        %4961 = vmatpush1.msra.mxu0 0.0
        %4962 = vmatprep.subr.mxu0 0.0
        %4963 = vmatpush1.msra.mxu0 0.0
        %4964 = vmatprep.subr.mxu0 0.0
        %4965 = vmatpush1.msra.mxu0 0.0
        %4966 = vmatprep.subr.mxu0 0.0
        %4967 = vmatpush1.msra.mxu0 0.0
        %4968 = vmatprep.subr.mxu0 0.0
        %4969 = vmatpush1.msra.mxu0 0.0
        %4970 = vmatprep.subr.mxu0 0.0
        %4971 = vmatpush1.msra.mxu0 0.0
        %4972 = vmatprep.subr.mxu0 0.0
        %4973 = vmatpush1.msra.mxu0 0.0
        %4974 = vmatprep.subr.mxu0 0.0
        %4975 = vmatpush1.msra.mxu0 0.0
        %4976 = vmatprep.subr.mxu0 0.0
        %4977 = vmatpush1.msra.mxu0 0.0
        %4978 = vmatprep.subr.mxu0 0.0
        %4979 = vmatpush1.msra.mxu0 0.0
        %4980 = vmatprep.mubr.f32.mxu0 0.0
        %4981 = vmatmul.mubr.f32.gmra.mrb[0].mxu0 %v4897
        %v4982 = vpop.f32.mrb[0].mxu0
        %v4983 = vadd.f32 0.0, %v4982
        %v4984 = vpop.f32.mrb[0].mxu0
        %4985 = vmatprep.mubr.f32.mxu0 0.0
        %4986 = vmatmul.mubr.f32.gmra.mrb[0].mxu0 %v4898
        %v4987 = vpop.f32.mrb[0].mxu0
        %v4988 = vadd.f32 0.0, %v4987
        %v4989 = vpop.f32.mrb[0].mxu0
        %4990 = vdwg.mxu0
        %4991 = vmatprep.subr.mxu0 0.0
        %4992 = vmatpush1.msra.mxu0 %v4881
        %4993 = vmatprep.subr.mxu0 0.0
        %4994 = vmatpush1.msra.mxu0 %v4882
        %4995 = vmatprep.subr.mxu0 0.0
        %4996 = vmatpush1.msra.mxu0 %v4883
        %4997 = vmatprep.subr.mxu0 0.0
        %4998 = vmatpush1.msra.mxu0 %v4884
        %4999 = vmatprep.subr.mxu0 0.0
        %5000 = vmatpush1.msra.mxu0 %v4885
        %5001 = vmatprep.subr.mxu0 0.0
        %5002 = vmatpush1.msra.mxu0 %v4886
        %5003 = vmatprep.subr.mxu0 0.0
        %5004 = vmatpush1.msra.mxu0 %v4887
        %5005 = vmatprep.subr.mxu0 0.0
        %5006 = vmatpush1.msra.mxu0 %v4888
        %5007 = vmatprep.subr.mxu0 0.0
        %5008 = vmatpush1.msra.mxu0 %v4889
        %5009 = vmatprep.subr.mxu0 0.0
        %5010 = vmatpush1.msra.mxu0 %v4890
        %5011 = vmatprep.subr.mxu0 0.0
        %5012 = vmatpush1.msra.mxu0 %v4891
        %5013 = vmatprep.subr.mxu0 0.0
        %5014 = vmatpush1.msra.mxu0 %v4892
        %5015 = vmatprep.subr.mxu0 0.0
        %5016 = vmatpush1.msra.mxu0 %v4893
        %5017 = vmatprep.subr.mxu0 0.0
        %5018 = vmatpush1.msra.mxu0 %v4894
        %5019 = vmatprep.subr.mxu0 0.0
        %5020 = vmatpush1.msra.mxu0 %v4895
        %5021 = vmatprep.subr.mxu0 0.0
        %5022 = vmatpush1.msra.mxu0 %v4896
        %5023 = vmatprep.subr.mxu0 0.0
        %5024 = vmatpush1.msra.mxu0 0.0
        %5025 = vmatprep.subr.mxu0 0.0
        %5026 = vmatpush1.msra.mxu0 0.0
        %5027 = vmatprep.subr.mxu0 0.0
        %5028 = vmatpush1.msra.mxu0 0.0
        %5029 = vmatprep.subr.mxu0 0.0
        %5030 = vmatpush1.msra.mxu0 0.0
        %5031 = vmatprep.subr.mxu0 0.0
        %5032 = vmatpush1.msra.mxu0 0.0
        %5033 = vmatprep.subr.mxu0 0.0
        %5034 = vmatpush1.msra.mxu0 0.0
        %5035 = vmatprep.subr.mxu0 0.0
        %5036 = vmatpush1.msra.mxu0 0.0
        %5037 = vmatprep.subr.mxu0 0.0
        %5038 = vmatpush1.msra.mxu0 0.0
        %5039 = vmatprep.subr.mxu0 0.0
        %5040 = vmatpush1.msra.mxu0 0.0
        %5041 = vmatprep.subr.mxu0 0.0
        %5042 = vmatpush1.msra.mxu0 0.0
        %5043 = vmatprep.subr.mxu0 0.0
        %5044 = vmatpush1.msra.mxu0 0.0
        %5045 = vmatprep.subr.mxu0 0.0
        %5046 = vmatpush1.msra.mxu0 0.0
        %5047 = vmatprep.subr.mxu0 0.0
        %5048 = vmatpush1.msra.mxu0 0.0
        %5049 = vmatprep.subr.mxu0 0.0
        %5050 = vmatpush1.msra.mxu0 0.0
        %5051 = vmatprep.subr.mxu0 0.0
        %5052 = vmatpush1.msra.mxu0 0.0
        %5053 = vmatprep.subr.mxu0 0.0
        %5054 = vmatpush1.msra.mxu0 0.0
        %5055 = vmatprep.mubr.f32.mxu0 0.0
        %5056 = vmatmul.mubr.f32.gmra.mrb[0].mxu0 %v4878
        %v5057 = vpop.f32.mrb[0].mxu0
        %v5058 = vadd.f32 %v4983, %v5057
        %v5059 = vpop.f32.mrb[0].mxu0
        %5060 = vmatprep.mubr.f32.mxu0 0.0
        %5061 = vmatmul.mubr.f32.gmra.mrb[0].mxu0 %v4879
        %v5062 = vpop.f32.mrb[0].mxu0
        %v5063 = vadd.f32 %v4988, %v5062
        %v5064 = vpop.f32.mrb[0].mxu0
        %5065 = vdwg.mxu0
        %v5066 = vld [vmem:[#allocation2 + $0x2] sm:$0xff]
        %v5067 = vld [vmem:[#allocation2 + $0xa] sm:$0xff]
        %s5068 = scalar_lea.vmem [#allocation4], 3712
        %v5069 = vld [vmem:[%s5068] sm:$0xff]
        %v5070 = vld [vmem:[%s5068 + $0x8] sm:$0xff]
        %v5071 = vld [vmem:[%s5068 + $0x10] sm:$0xff]
        %v5072 = vld [vmem:[%s5068 + $0x18] sm:$0xff]
        %v5073 = vld [vmem:[%s5068 + $0x20] sm:$0xff]
        %v5074 = vld [vmem:[%s5068 + $0x28] sm:$0xff]
        %v5075 = vld [vmem:[%s5068 + $0x30] sm:$0xff]
        %v5076 = vld [vmem:[%s5068 + $0x38] sm:$0xff]
        %v5077 = vld [vmem:[%s5068 + $0x40] sm:$0xff]
        %v5078 = vld [vmem:[%s5068 + $0x48] sm:$0xff]
        %v5079 = vld [vmem:[%s5068 + $0x50] sm:$0xff]
        %v5080 = vld [vmem:[%s5068 + $0x58] sm:$0xff]
        %v5081 = vld [vmem:[%s5068 + $0x60] sm:$0xff]
        %v5082 = vld [vmem:[%s5068 + $0x68] sm:$0xff]
        %v5083 = vld [vmem:[%s5068 + $0x70] sm:$0xff]
        %v5084 = vld [vmem:[%s5068 + $0x78] sm:$0xff]
        %5085 = vmatprep.subr.mxu0 0.0
        %5086 = vmatpush1.msra.mxu0 %v5069
        %5087 = vmatprep.subr.mxu0 0.0
        %5088 = vmatpush1.msra.mxu0 %v5070
        %5089 = vmatprep.subr.mxu0 0.0
        %5090 = vmatpush1.msra.mxu0 %v5071
        %5091 = vmatprep.subr.mxu0 0.0
        %5092 = vmatpush1.msra.mxu0 %v5072
        %5093 = vmatprep.subr.mxu0 0.0
        %5094 = vmatpush1.msra.mxu0 %v5073
        %5095 = vmatprep.subr.mxu0 0.0
        %5096 = vmatpush1.msra.mxu0 %v5074
        %5097 = vmatprep.subr.mxu0 0.0
        %5098 = vmatpush1.msra.mxu0 %v5075
        %5099 = vmatprep.subr.mxu0 0.0
        %5100 = vmatpush1.msra.mxu0 %v5076
        %5101 = vmatprep.subr.mxu0 0.0
        %5102 = vmatpush1.msra.mxu0 %v5077
        %5103 = vmatprep.subr.mxu0 0.0
        %5104 = vmatpush1.msra.mxu0 %v5078
        %5105 = vmatprep.subr.mxu0 0.0
        %5106 = vmatpush1.msra.mxu0 %v5079
        %5107 = vmatprep.subr.mxu0 0.0
        %5108 = vmatpush1.msra.mxu0 %v5080
        %5109 = vmatprep.subr.mxu0 0.0
        %5110 = vmatpush1.msra.mxu0 %v5081
        %5111 = vmatprep.subr.mxu0 0.0
        %5112 = vmatpush1.msra.mxu0 %v5082
        %5113 = vmatprep.subr.mxu0 0.0
        %5114 = vmatpush1.msra.mxu0 %v5083
        %5115 = vmatprep.subr.mxu0 0.0
        %5116 = vmatpush1.msra.mxu0 %v5084
        %5117 = vmatprep.subr.mxu0 0.0
        %5118 = vmatpush1.msra.mxu0 0.0
        %5119 = vmatprep.subr.mxu0 0.0
        %5120 = vmatpush1.msra.mxu0 0.0
        %5121 = vmatprep.subr.mxu0 0.0
        %5122 = vmatpush1.msra.mxu0 0.0
        %5123 = vmatprep.subr.mxu0 0.0
        %5124 = vmatpush1.msra.mxu0 0.0
        %5125 = vmatprep.subr.mxu0 0.0
        %5126 = vmatpush1.msra.mxu0 0.0
        %5127 = vmatprep.subr.mxu0 0.0
        %5128 = vmatpush1.msra.mxu0 0.0
        %5129 = vmatprep.subr.mxu0 0.0
        %5130 = vmatpush1.msra.mxu0 0.0
        %5131 = vmatprep.subr.mxu0 0.0
        %5132 = vmatpush1.msra.mxu0 0.0
        %5133 = vmatprep.subr.mxu0 0.0
        %5134 = vmatpush1.msra.mxu0 0.0
        %5135 = vmatprep.subr.mxu0 0.0
        %5136 = vmatpush1.msra.mxu0 0.0
        %5137 = vmatprep.subr.mxu0 0.0
        %5138 = vmatpush1.msra.mxu0 0.0
        %5139 = vmatprep.subr.mxu0 0.0
        %5140 = vmatpush1.msra.mxu0 0.0
        %5141 = vmatprep.subr.mxu0 0.0
        %5142 = vmatpush1.msra.mxu0 0.0
        %5143 = vmatprep.subr.mxu0 0.0
        %5144 = vmatpush1.msra.mxu0 0.0
        %5145 = vmatprep.subr.mxu0 0.0
        %5146 = vmatpush1.msra.mxu0 0.0
        %5147 = vmatprep.subr.mxu0 0.0
        %5148 = vmatpush1.msra.mxu0 0.0
        %5149 = vmatprep.mubr.f32.mxu0 0.0
        %5150 = vmatmul.mubr.f32.gmra.mrb[0].mxu0 %v5066
        %v5151 = vpop.f32.mrb[0].mxu0
        %v5152 = vadd.f32 0.0, %v5151
        %v5153 = vpop.f32.mrb[0].mxu0
        %5154 = vmatprep.mubr.f32.mxu0 0.0
        %5155 = vmatmul.mubr.f32.gmra.mrb[0].mxu0 %v5067
        %v5156 = vpop.f32.mrb[0].mxu0
        %v5157 = vadd.f32 0.0, %v5156
        %v5158 = vpop.f32.mrb[0].mxu0
        %5159 = vdwg.mxu0
        %v5160 = vadd.f32 %v5058, %v5152
        %v5161 = vadd.f32 %v5063, %v5157
        %v5162 = vadd.f32 %v4874, %v5160
        %v5163 = vadd.f32 %v4875, %v5161
        %v5164 = vld [vmem:[#allocation6 + $0x8] sm:$0x1]
        %v5165 = vlaneseq
        %v5166 = vshrl.u32 %v5165, 7
        %v5167 = vsub.s32 0, %v5166
        %v5168 = vrot.slane %v5164, %v5167
        %v5169 = vadd.f32 %v5162, %v5168
        %v5170 = vadd.f32 %v5163, %v5168
        %v5171 = vadd.f32 %v5169, %v5170
        %v5172 = vrot.slane %v5171, 4
        %v5173 = vadd.f32 %v5171, %v5172
        %v5174 = vrot.slane %v5173, 2
        %v5175 = vadd.f32 %v5173, %v5174
        %v5176 = vrot.slane %v5175, 1
        %v5177 = vadd.f32 %v5175, %v5176
        %v5178 = vmul.f32 %v5169, %v5169
        %v5179 = vmul.f32 %v5170, %v5170
        %v5180 = vadd.f32 %v5178, %v5179
        %v5181 = vrot.slane %v5180, 4
        %v5182 = vadd.f32 %v5180, %v5181
        %v5183 = vrot.slane %v5182, 2
        %v5184 = vadd.f32 %v5182, %v5183
        %v5185 = vrot.slane %v5184, 1
        %v5186 = vadd.f32 %v5184, %v5185
        %v5187 = vsel %vm810, %v5177, %v5186
        %v5188 = vld [vmem:[#allocation14] sm:$0xff]
        %v5189 = vld [vmem:[#allocation14 + $0x8] sm:$0xff]
        %v5190 = vld [vmem:[#allocation14 + $0x10] sm:$0xff]
        %v5191 = vld [vmem:[#allocation14 + $0x18] sm:$0xff]
        %v5192 = vld [vmem:[#allocation14 + $0x20] sm:$0xff]
        %v5193 = vld [vmem:[#allocation14 + $0x28] sm:$0xff]
        %v5194 = vld [vmem:[#allocation14 + $0x30] sm:$0xff]
        %v5195 = vld [vmem:[#allocation14 + $0x38] sm:$0xff]
        %v5196 = vld [vmem:[#allocation14 + $0x40] sm:$0xff]
        %v5197 = vld [vmem:[#allocation14 + $0x48] sm:$0xff]
        %v5198 = vld [vmem:[#allocation14 + $0x50] sm:$0xff]
        %v5199 = vld [vmem:[#allocation14 + $0x58] sm:$0xff]
        %v5200 = vld [vmem:[#allocation14 + $0x60] sm:$0xff]
        %v5201 = vld [vmem:[#allocation14 + $0x68] sm:$0xff]
        %v5202 = vld [vmem:[#allocation14 + $0x70] sm:$0xff]
        %v5203 = vld [vmem:[#allocation14 + $0x78] sm:$0xff]
        %5204 = vmatprep.subr.mxu0 0.0
        %5205 = vmatpush1.msra.mxu0 %v5188
        %5206 = vmatprep.subr.mxu0 0.0
        %5207 = vmatpush1.msra.mxu0 %v5189
        %5208 = vmatprep.subr.mxu0 0.0
        %5209 = vmatpush1.msra.mxu0 %v5190
        %5210 = vmatprep.subr.mxu0 0.0
        %5211 = vmatpush1.msra.mxu0 %v5191
        %5212 = vmatprep.subr.mxu0 0.0
        %5213 = vmatpush1.msra.mxu0 %v5192
        %5214 = vmatprep.subr.mxu0 0.0
        %5215 = vmatpush1.msra.mxu0 %v5193
        %5216 = vmatprep.subr.mxu0 0.0
        %5217 = vmatpush1.msra.mxu0 %v5194
        %5218 = vmatprep.subr.mxu0 0.0
        %5219 = vmatpush1.msra.mxu0 %v5195
        %5220 = vmatprep.subr.mxu0 0.0
        %5221 = vmatpush1.msra.mxu0 %v5196
        %5222 = vmatprep.subr.mxu0 0.0
        %5223 = vmatpush1.msra.mxu0 %v5197
        %5224 = vmatprep.subr.mxu0 0.0
        %5225 = vmatpush1.msra.mxu0 %v5198
        %5226 = vmatprep.subr.mxu0 0.0
        %5227 = vmatpush1.msra.mxu0 %v5199
        %5228 = vmatprep.subr.mxu0 0.0
        %5229 = vmatpush1.msra.mxu0 %v5200
        %5230 = vmatprep.subr.mxu0 0.0
        %5231 = vmatpush1.msra.mxu0 %v5201
        %5232 = vmatprep.subr.mxu0 0.0
        %5233 = vmatpush1.msra.mxu0 %v5202
        %5234 = vmatprep.subr.mxu0 0.0
        %5235 = vmatpush1.msra.mxu0 %v5203
        %5236 = vmatprep.subr.mxu0 0.0
        %5237 = vmatpush1.msra.mxu0 0.0
        %5238 = vmatprep.subr.mxu0 0.0
        %5239 = vmatpush1.msra.mxu0 0.0
        %5240 = vmatprep.subr.mxu0 0.0
        %5241 = vmatpush1.msra.mxu0 0.0
        %5242 = vmatprep.subr.mxu0 0.0
        %5243 = vmatpush1.msra.mxu0 0.0
        %5244 = vmatprep.subr.mxu0 0.0
        %5245 = vmatpush1.msra.mxu0 0.0
        %5246 = vmatprep.subr.mxu0 0.0
        %5247 = vmatpush1.msra.mxu0 0.0
        %5248 = vmatprep.subr.mxu0 0.0
        %5249 = vmatpush1.msra.mxu0 0.0
        %5250 = vmatprep.subr.mxu0 0.0
        %5251 = vmatpush1.msra.mxu0 0.0
        %5252 = vmatprep.subr.mxu0 0.0
        %5253 = vmatpush1.msra.mxu0 0.0
        %5254 = vmatprep.subr.mxu0 0.0
        %5255 = vmatpush1.msra.mxu0 0.0
        %5256 = vmatprep.subr.mxu0 0.0
        %5257 = vmatpush1.msra.mxu0 0.0
        %5258 = vmatprep.subr.mxu0 0.0
        %5259 = vmatpush1.msra.mxu0 0.0
        %5260 = vmatprep.subr.mxu0 0.0
        %5261 = vmatpush1.msra.mxu0 0.0
        %5262 = vmatprep.subr.mxu0 0.0
        %5263 = vmatpush1.msra.mxu0 0.0
        %5264 = vmatprep.subr.mxu0 0.0
        %5265 = vmatpush1.msra.mxu0 0.0
        %5266 = vmatprep.subr.mxu0 0.0
        %5267 = vmatpush1.msra.mxu0 0.0
        %5268 = vmatprep.mubr.f32.mxu0 0.0
        %5269 = vmatmul.mubr.f32.gmra.mrb[0].mxu0 %v5187
        %v5270 = vpop.f32.mrb[0].mxu0
        %v5271 = vadd.f32 0.0, %v5270
        %v5272 = vpop.f32.mrb[0].mxu0
        %5273 = vdwg.mxu0
        %v5274 = vmul.f32 %v5271, %v5271
        %v5276 = vrot.slane %v5274, 7
        %v5278 = vsub.f32 %v5271, %v5276
        %v5279 = vlaneseq
        %v5280 = vshrl.u32 %v5279, 7
        %v5281 = vsub.s32 0, %v5280
        %v5282 = vrot.slane %v5271, %v5281
        %v5283 = vsub.f32 %v5169, %v5282
        %v5284 = vsub.f32 %v5170, %v5282
        %v5285 = vadd.f32 %v5278, 1e-05
        %v5286 = vrsqrt.pop %v5285
        %v5287 = vlaneseq
        %v5288 = vshrl.u32 %v5287, 7
        %v5289 = vsub.s32 1, %v5288
        %v5290 = vrot.slane %v5286, %v5289
        %v5291 = vmul.f32 %v5283, %v5290
        %v5292 = vmul.f32 %v5284, %v5290
        %v5293 = vld [vmem:[#allocation8 + $0x7] sm:$0x1]
        %v5294 = vlaneseq
        %v5295 = vshrl.u32 %v5294, 7
        %v5296 = vsub.s32 0, %v5295
        %v5297 = vrot.slane %v5293, %v5296
        %v5298 = vmul.f32 %v5291, %v5297
        %v5299 = vmul.f32 %v5292, %v5297
        %v5300 = vld [vmem:[#allocation9 + $0x7] sm:$0x1]
        %v5301 = vlaneseq
        %v5302 = vshrl.u32 %v5301, 7
        %v5303 = vsub.s32 0, %v5302
        %v5304 = vrot.slane %v5300, %v5303
        %v5305 = vadd.f32 %v5298, %v5304
        %v5306 = vadd.f32 %v5299, %v5304
        %v5307 = vxor.u32 %v5305, 2147483648
        %v5308 = vxor.u32 %v5306, 2147483648
        %v5309 = vmul.f32 %v5307, 1.442695
        %v5310 = vpow.pop %v5309
        %v5311 = vmul.f32 %v5308, 1.442695
        %v5312 = vpow.pop %v5311
        %v5313 = vadd.f32 %v5310, 1.0
        %v5314 = vadd.f32 %v5312, 1.0
        %v5315 = vrcp.pop %v5313
        %v5316 = vmul.f32 1.0, %v5315
        %v5317 = vrcp.pop %v5314
        %v5318 = vmul.f32 1.0, %v5317
        %v5319 = vmul.f32 %v5305, %v5316
        %v5320 = vmul.f32 %v5306, %v5318
        %5321 = vst [vmem:[#allocation2 + $0x1] sm:$0xff] %v5319
        %5322 = vst [vmem:[#allocation2 + $0x9] sm:$0xff] %v5320
        %v5323 = vld [vmem:[#allocation2] sm:$0xff]
        %v5324 = vld [vmem:[#allocation2 + $0x8] sm:$0xff]
        %s5325 = scalar_lea.vmem [#allocation4], 3840
        %v5326 = vld [vmem:[%s5325] sm:$0xff]
        %v5327 = vld [vmem:[%s5325 + $0x8] sm:$0xff]
        %v5328 = vld [vmem:[%s5325 + $0x10] sm:$0xff]
        %v5329 = vld [vmem:[%s5325 + $0x18] sm:$0xff]
        %v5330 = vld [vmem:[%s5325 + $0x20] sm:$0xff]
        %v5331 = vld [vmem:[%s5325 + $0x28] sm:$0xff]
        %v5332 = vld [vmem:[%s5325 + $0x30] sm:$0xff]
        %v5333 = vld [vmem:[%s5325 + $0x38] sm:$0xff]
        %v5334 = vld [vmem:[%s5325 + $0x40] sm:$0xff]
        %v5335 = vld [vmem:[%s5325 + $0x48] sm:$0xff]
        %v5336 = vld [vmem:[%s5325 + $0x50] sm:$0xff]
        %v5337 = vld [vmem:[%s5325 + $0x58] sm:$0xff]
        %v5338 = vld [vmem:[%s5325 + $0x60] sm:$0xff]
        %v5339 = vld [vmem:[%s5325 + $0x68] sm:$0xff]
        %v5340 = vld [vmem:[%s5325 + $0x70] sm:$0xff]
        %v5341 = vld [vmem:[%s5325 + $0x78] sm:$0xff]
        %v5342 = vld [vmem:[#allocation2 + $0x1] sm:$0xff]
        %v5343 = vld [vmem:[#allocation2 + $0x9] sm:$0xff]
        %s5344 = scalar_lea.vmem [#allocation4], 3968
        %v5345 = vld [vmem:[%s5344] sm:$0xff]
        %v5346 = vld [vmem:[%s5344 + $0x8] sm:$0xff]
        %v5347 = vld [vmem:[%s5344 + $0x10] sm:$0xff]
        %v5348 = vld [vmem:[%s5344 + $0x18] sm:$0xff]
        %v5349 = vld [vmem:[%s5344 + $0x20] sm:$0xff]
        %v5350 = vld [vmem:[%s5344 + $0x28] sm:$0xff]
        %v5351 = vld [vmem:[%s5344 + $0x30] sm:$0xff]
        %v5352 = vld [vmem:[%s5344 + $0x38] sm:$0xff]
        %v5353 = vld [vmem:[%s5344 + $0x40] sm:$0xff]
        %v5354 = vld [vmem:[%s5344 + $0x48] sm:$0xff]
        %v5355 = vld [vmem:[%s5344 + $0x50] sm:$0xff]
        %v5356 = vld [vmem:[%s5344 + $0x58] sm:$0xff]
        %v5357 = vld [vmem:[%s5344 + $0x60] sm:$0xff]
        %v5358 = vld [vmem:[%s5344 + $0x68] sm:$0xff]
        %v5359 = vld [vmem:[%s5344 + $0x70] sm:$0xff]
        %v5360 = vld [vmem:[%s5344 + $0x78] sm:$0xff]
        %5361 = vmatprep.subr.mxu0 0.0
        %5362 = vmatpush1.msra.mxu0 %v5345
        %5363 = vmatprep.subr.mxu0 0.0
        %5364 = vmatpush1.msra.mxu0 %v5346
        %5365 = vmatprep.subr.mxu0 0.0
        %5366 = vmatpush1.msra.mxu0 %v5347
        %5367 = vmatprep.subr.mxu0 0.0
        %5368 = vmatpush1.msra.mxu0 %v5348
        %5369 = vmatprep.subr.mxu0 0.0
        %5370 = vmatpush1.msra.mxu0 %v5349
        %5371 = vmatprep.subr.mxu0 0.0
        %5372 = vmatpush1.msra.mxu0 %v5350
        %5373 = vmatprep.subr.mxu0 0.0
        %5374 = vmatpush1.msra.mxu0 %v5351
        %5375 = vmatprep.subr.mxu0 0.0
        %5376 = vmatpush1.msra.mxu0 %v5352
        %5377 = vmatprep.subr.mxu0 0.0
        %5378 = vmatpush1.msra.mxu0 %v5353
        %5379 = vmatprep.subr.mxu0 0.0
        %5380 = vmatpush1.msra.mxu0 %v5354
        %5381 = vmatprep.subr.mxu0 0.0
        %5382 = vmatpush1.msra.mxu0 %v5355
        %5383 = vmatprep.subr.mxu0 0.0
        %5384 = vmatpush1.msra.mxu0 %v5356
        %5385 = vmatprep.subr.mxu0 0.0
        %5386 = vmatpush1.msra.mxu0 %v5357
        %5387 = vmatprep.subr.mxu0 0.0
        %5388 = vmatpush1.msra.mxu0 %v5358
        %5389 = vmatprep.subr.mxu0 0.0
        %5390 = vmatpush1.msra.mxu0 %v5359
        %5391 = vmatprep.subr.mxu0 0.0
        %5392 = vmatpush1.msra.mxu0 %v5360
        %5393 = vmatprep.subr.mxu0 0.0
        %5394 = vmatpush1.msra.mxu0 0.0
        %5395 = vmatprep.subr.mxu0 0.0
        %5396 = vmatpush1.msra.mxu0 0.0
        %5397 = vmatprep.subr.mxu0 0.0
        %5398 = vmatpush1.msra.mxu0 0.0
        %5399 = vmatprep.subr.mxu0 0.0
        %5400 = vmatpush1.msra.mxu0 0.0
        %5401 = vmatprep.subr.mxu0 0.0
        %5402 = vmatpush1.msra.mxu0 0.0
        %5403 = vmatprep.subr.mxu0 0.0
        %5404 = vmatpush1.msra.mxu0 0.0
        %5405 = vmatprep.subr.mxu0 0.0
        %5406 = vmatpush1.msra.mxu0 0.0
        %5407 = vmatprep.subr.mxu0 0.0
        %5408 = vmatpush1.msra.mxu0 0.0
        %5409 = vmatprep.subr.mxu0 0.0
        %5410 = vmatpush1.msra.mxu0 0.0
        %5411 = vmatprep.subr.mxu0 0.0
        %5412 = vmatpush1.msra.mxu0 0.0
        %5413 = vmatprep.subr.mxu0 0.0
        %5414 = vmatpush1.msra.mxu0 0.0
        %5415 = vmatprep.subr.mxu0 0.0
        %5416 = vmatpush1.msra.mxu0 0.0
        %5417 = vmatprep.subr.mxu0 0.0
        %5418 = vmatpush1.msra.mxu0 0.0
        %5419 = vmatprep.subr.mxu0 0.0
        %5420 = vmatpush1.msra.mxu0 0.0
        %5421 = vmatprep.subr.mxu0 0.0
        %5422 = vmatpush1.msra.mxu0 0.0
        %5423 = vmatprep.subr.mxu0 0.0
        %5424 = vmatpush1.msra.mxu0 0.0
        %5425 = vmatprep.mubr.f32.mxu0 0.0
        %5426 = vmatmul.mubr.f32.gmra.mrb[0].mxu0 %v5342
        %v5427 = vpop.f32.mrb[0].mxu0
        %v5428 = vadd.f32 0.0, %v5427
        %v5429 = vpop.f32.mrb[0].mxu0
        %5430 = vmatprep.mubr.f32.mxu0 0.0
        %5431 = vmatmul.mubr.f32.gmra.mrb[0].mxu0 %v5343
        %v5432 = vpop.f32.mrb[0].mxu0
        %v5433 = vadd.f32 0.0, %v5432
        %v5434 = vpop.f32.mrb[0].mxu0
        %5435 = vdwg.mxu0
        %5436 = vmatprep.subr.mxu0 0.0
        %5437 = vmatpush1.msra.mxu0 %v5326
        %5438 = vmatprep.subr.mxu0 0.0
        %5439 = vmatpush1.msra.mxu0 %v5327
        %5440 = vmatprep.subr.mxu0 0.0
        %5441 = vmatpush1.msra.mxu0 %v5328
        %5442 = vmatprep.subr.mxu0 0.0
        %5443 = vmatpush1.msra.mxu0 %v5329
        %5444 = vmatprep.subr.mxu0 0.0
        %5445 = vmatpush1.msra.mxu0 %v5330
        %5446 = vmatprep.subr.mxu0 0.0
        %5447 = vmatpush1.msra.mxu0 %v5331
        %5448 = vmatprep.subr.mxu0 0.0
        %5449 = vmatpush1.msra.mxu0 %v5332
        %5450 = vmatprep.subr.mxu0 0.0
        %5451 = vmatpush1.msra.mxu0 %v5333
        %5452 = vmatprep.subr.mxu0 0.0
        %5453 = vmatpush1.msra.mxu0 %v5334
        %5454 = vmatprep.subr.mxu0 0.0
        %5455 = vmatpush1.msra.mxu0 %v5335
        %5456 = vmatprep.subr.mxu0 0.0
        %5457 = vmatpush1.msra.mxu0 %v5336
        %5458 = vmatprep.subr.mxu0 0.0
        %5459 = vmatpush1.msra.mxu0 %v5337
        %5460 = vmatprep.subr.mxu0 0.0
        %5461 = vmatpush1.msra.mxu0 %v5338
        %5462 = vmatprep.subr.mxu0 0.0
        %5463 = vmatpush1.msra.mxu0 %v5339
        %5464 = vmatprep.subr.mxu0 0.0
        %5465 = vmatpush1.msra.mxu0 %v5340
        %5466 = vmatprep.subr.mxu0 0.0
        %5467 = vmatpush1.msra.mxu0 %v5341
        %5468 = vmatprep.subr.mxu0 0.0
        %5469 = vmatpush1.msra.mxu0 0.0
        %5470 = vmatprep.subr.mxu0 0.0
        %5471 = vmatpush1.msra.mxu0 0.0
        %5472 = vmatprep.subr.mxu0 0.0
        %5473 = vmatpush1.msra.mxu0 0.0
        %5474 = vmatprep.subr.mxu0 0.0
        %5475 = vmatpush1.msra.mxu0 0.0
        %5476 = vmatprep.subr.mxu0 0.0
        %5477 = vmatpush1.msra.mxu0 0.0
        %5478 = vmatprep.subr.mxu0 0.0
        %5479 = vmatpush1.msra.mxu0 0.0
        %5480 = vmatprep.subr.mxu0 0.0
        %5481 = vmatpush1.msra.mxu0 0.0
        %5482 = vmatprep.subr.mxu0 0.0
        %5483 = vmatpush1.msra.mxu0 0.0
        %5484 = vmatprep.subr.mxu0 0.0
        %5485 = vmatpush1.msra.mxu0 0.0
        %5486 = vmatprep.subr.mxu0 0.0
        %5487 = vmatpush1.msra.mxu0 0.0
        %5488 = vmatprep.subr.mxu0 0.0
        %5489 = vmatpush1.msra.mxu0 0.0
        %5490 = vmatprep.subr.mxu0 0.0
        %5491 = vmatpush1.msra.mxu0 0.0
        %5492 = vmatprep.subr.mxu0 0.0
        %5493 = vmatpush1.msra.mxu0 0.0
        %5494 = vmatprep.subr.mxu0 0.0
        %5495 = vmatpush1.msra.mxu0 0.0
        %5496 = vmatprep.subr.mxu0 0.0
        %5497 = vmatpush1.msra.mxu0 0.0
        %5498 = vmatprep.subr.mxu0 0.0
        %5499 = vmatpush1.msra.mxu0 0.0
        %5500 = vmatprep.mubr.f32.mxu0 0.0
        %5501 = vmatmul.mubr.f32.gmra.mrb[0].mxu0 %v5323
        %v5502 = vpop.f32.mrb[0].mxu0
        %v5503 = vadd.f32 %v5428, %v5502
        %v5504 = vpop.f32.mrb[0].mxu0
        %5505 = vmatprep.mubr.f32.mxu0 0.0
        %5506 = vmatmul.mubr.f32.gmra.mrb[0].mxu0 %v5324
        %v5507 = vpop.f32.mrb[0].mxu0
        %v5508 = vadd.f32 %v5433, %v5507
        %v5509 = vpop.f32.mrb[0].mxu0
        %5510 = vdwg.mxu0
        %v5511 = vld [vmem:[#allocation2 + $0x2] sm:$0xff]
        %v5512 = vld [vmem:[#allocation2 + $0xa] sm:$0xff]
        %s5513 = scalar_lea.vmem [#allocation4], 4096
        %v5514 = vld [vmem:[%s5513] sm:$0xff]
        %v5515 = vld [vmem:[%s5513 + $0x8] sm:$0xff]
        %v5516 = vld [vmem:[%s5513 + $0x10] sm:$0xff]
        %v5517 = vld [vmem:[%s5513 + $0x18] sm:$0xff]
        %v5518 = vld [vmem:[%s5513 + $0x20] sm:$0xff]
        %v5519 = vld [vmem:[%s5513 + $0x28] sm:$0xff]
        %v5520 = vld [vmem:[%s5513 + $0x30] sm:$0xff]
        %v5521 = vld [vmem:[%s5513 + $0x38] sm:$0xff]
        %v5522 = vld [vmem:[%s5513 + $0x40] sm:$0xff]
        %v5523 = vld [vmem:[%s5513 + $0x48] sm:$0xff]
        %v5524 = vld [vmem:[%s5513 + $0x50] sm:$0xff]
        %v5525 = vld [vmem:[%s5513 + $0x58] sm:$0xff]
        %v5526 = vld [vmem:[%s5513 + $0x60] sm:$0xff]
        %v5527 = vld [vmem:[%s5513 + $0x68] sm:$0xff]
        %v5528 = vld [vmem:[%s5513 + $0x70] sm:$0xff]
        %v5529 = vld [vmem:[%s5513 + $0x78] sm:$0xff]
        %5530 = vmatprep.subr.mxu0 0.0
        %5531 = vmatpush1.msra.mxu0 %v5514
        %5532 = vmatprep.subr.mxu0 0.0
        %5533 = vmatpush1.msra.mxu0 %v5515
        %5534 = vmatprep.subr.mxu0 0.0
        %5535 = vmatpush1.msra.mxu0 %v5516
        %5536 = vmatprep.subr.mxu0 0.0
        %5537 = vmatpush1.msra.mxu0 %v5517
        %5538 = vmatprep.subr.mxu0 0.0
        %5539 = vmatpush1.msra.mxu0 %v5518
        %5540 = vmatprep.subr.mxu0 0.0
        %5541 = vmatpush1.msra.mxu0 %v5519
        %5542 = vmatprep.subr.mxu0 0.0
        %5543 = vmatpush1.msra.mxu0 %v5520
        %5544 = vmatprep.subr.mxu0 0.0
        %5545 = vmatpush1.msra.mxu0 %v5521
        %5546 = vmatprep.subr.mxu0 0.0
        %5547 = vmatpush1.msra.mxu0 %v5522
        %5548 = vmatprep.subr.mxu0 0.0
        %5549 = vmatpush1.msra.mxu0 %v5523
        %5550 = vmatprep.subr.mxu0 0.0
        %5551 = vmatpush1.msra.mxu0 %v5524
        %5552 = vmatprep.subr.mxu0 0.0
        %5553 = vmatpush1.msra.mxu0 %v5525
        %5554 = vmatprep.subr.mxu0 0.0
        %5555 = vmatpush1.msra.mxu0 %v5526
        %5556 = vmatprep.subr.mxu0 0.0
        %5557 = vmatpush1.msra.mxu0 %v5527
        %5558 = vmatprep.subr.mxu0 0.0
        %5559 = vmatpush1.msra.mxu0 %v5528
        %5560 = vmatprep.subr.mxu0 0.0
        %5561 = vmatpush1.msra.mxu0 %v5529
        %5562 = vmatprep.subr.mxu0 0.0
        %5563 = vmatpush1.msra.mxu0 0.0
        %5564 = vmatprep.subr.mxu0 0.0
        %5565 = vmatpush1.msra.mxu0 0.0
        %5566 = vmatprep.subr.mxu0 0.0
        %5567 = vmatpush1.msra.mxu0 0.0
        %5568 = vmatprep.subr.mxu0 0.0
        %5569 = vmatpush1.msra.mxu0 0.0
        %5570 = vmatprep.subr.mxu0 0.0
        %5571 = vmatpush1.msra.mxu0 0.0
        %5572 = vmatprep.subr.mxu0 0.0
        %5573 = vmatpush1.msra.mxu0 0.0
        %5574 = vmatprep.subr.mxu0 0.0
        %5575 = vmatpush1.msra.mxu0 0.0
        %5576 = vmatprep.subr.mxu0 0.0
        %5577 = vmatpush1.msra.mxu0 0.0
        %5578 = vmatprep.subr.mxu0 0.0
        %5579 = vmatpush1.msra.mxu0 0.0
        %5580 = vmatprep.subr.mxu0 0.0
        %5581 = vmatpush1.msra.mxu0 0.0
        %5582 = vmatprep.subr.mxu0 0.0
        %5583 = vmatpush1.msra.mxu0 0.0
        %5584 = vmatprep.subr.mxu0 0.0
        %5585 = vmatpush1.msra.mxu0 0.0
        %5586 = vmatprep.subr.mxu0 0.0
        %5587 = vmatpush1.msra.mxu0 0.0
        %5588 = vmatprep.subr.mxu0 0.0
        %5589 = vmatpush1.msra.mxu0 0.0
        %5590 = vmatprep.subr.mxu0 0.0
        %5591 = vmatpush1.msra.mxu0 0.0
        %5592 = vmatprep.subr.mxu0 0.0
        %5593 = vmatpush1.msra.mxu0 0.0
        %5594 = vmatprep.mubr.f32.mxu0 0.0
        %5595 = vmatmul.mubr.f32.gmra.mrb[0].mxu0 %v5511
        %v5596 = vpop.f32.mrb[0].mxu0
        %v5597 = vadd.f32 0.0, %v5596
        %v5598 = vpop.f32.mrb[0].mxu0
        %5599 = vmatprep.mubr.f32.mxu0 0.0
        %5600 = vmatmul.mubr.f32.gmra.mrb[0].mxu0 %v5512
        %v5601 = vpop.f32.mrb[0].mxu0
        %v5602 = vadd.f32 0.0, %v5601
        %v5603 = vpop.f32.mrb[0].mxu0
        %5604 = vdwg.mxu0
        %v5605 = vadd.f32 %v5503, %v5597
        %v5606 = vadd.f32 %v5508, %v5602
        %v5607 = vld [vmem:[#allocation6 + $0x9] sm:$0x1]
        %v5608 = vlaneseq
        %v5609 = vshrl.u32 %v5608, 7
        %v5610 = vsub.s32 0, %v5609
        %v5611 = vrot.slane %v5607, %v5610
        %v5612 = vadd.f32 %v5605, %v5611
        %v5613 = vadd.f32 %v5606, %v5611
        %v5614 = vadd.f32 %v5612, %v5613
        %v5615 = vrot.slane %v5614, 4
        %v5616 = vadd.f32 %v5614, %v5615
        %v5617 = vrot.slane %v5616, 2
        %v5618 = vadd.f32 %v5616, %v5617
        %v5619 = vrot.slane %v5618, 1
        %v5620 = vadd.f32 %v5618, %v5619
        %v5621 = vmul.f32 %v5612, %v5612
        %v5622 = vmul.f32 %v5613, %v5613
        %v5623 = vadd.f32 %v5621, %v5622
        %v5624 = vrot.slane %v5623, 4
        %v5625 = vadd.f32 %v5623, %v5624
        %v5626 = vrot.slane %v5625, 2
        %v5627 = vadd.f32 %v5625, %v5626
        %v5628 = vrot.slane %v5627, 1
        %v5629 = vadd.f32 %v5627, %v5628
        %v5630 = vsel %vm810, %v5620, %v5629
        %v5631 = vld [vmem:[#allocation14] sm:$0xff]
        %v5632 = vld [vmem:[#allocation14 + $0x8] sm:$0xff]
        %v5633 = vld [vmem:[#allocation14 + $0x10] sm:$0xff]
        %v5634 = vld [vmem:[#allocation14 + $0x18] sm:$0xff]
        %v5635 = vld [vmem:[#allocation14 + $0x20] sm:$0xff]
        %v5636 = vld [vmem:[#allocation14 + $0x28] sm:$0xff]
        %v5637 = vld [vmem:[#allocation14 + $0x30] sm:$0xff]
        %v5638 = vld [vmem:[#allocation14 + $0x38] sm:$0xff]
        %v5639 = vld [vmem:[#allocation14 + $0x40] sm:$0xff]
        %v5640 = vld [vmem:[#allocation14 + $0x48] sm:$0xff]
        %v5641 = vld [vmem:[#allocation14 + $0x50] sm:$0xff]
        %v5642 = vld [vmem:[#allocation14 + $0x58] sm:$0xff]
        %v5643 = vld [vmem:[#allocation14 + $0x60] sm:$0xff]
        %v5644 = vld [vmem:[#allocation14 + $0x68] sm:$0xff]
        %v5645 = vld [vmem:[#allocation14 + $0x70] sm:$0xff]
        %v5646 = vld [vmem:[#allocation14 + $0x78] sm:$0xff]
        %5647 = vmatprep.subr.mxu0 0.0
        %5648 = vmatpush1.msra.mxu0 %v5631
        %5649 = vmatprep.subr.mxu0 0.0
        %5650 = vmatpush1.msra.mxu0 %v5632
        %5651 = vmatprep.subr.mxu0 0.0
        %5652 = vmatpush1.msra.mxu0 %v5633
        %5653 = vmatprep.subr.mxu0 0.0
        %5654 = vmatpush1.msra.mxu0 %v5634
        %5655 = vmatprep.subr.mxu0 0.0
        %5656 = vmatpush1.msra.mxu0 %v5635
        %5657 = vmatprep.subr.mxu0 0.0
        %5658 = vmatpush1.msra.mxu0 %v5636
        %5659 = vmatprep.subr.mxu0 0.0
        %5660 = vmatpush1.msra.mxu0 %v5637
        %5661 = vmatprep.subr.mxu0 0.0
        %5662 = vmatpush1.msra.mxu0 %v5638
        %5663 = vmatprep.subr.mxu0 0.0
        %5664 = vmatpush1.msra.mxu0 %v5639
        %5665 = vmatprep.subr.mxu0 0.0
        %5666 = vmatpush1.msra.mxu0 %v5640
        %5667 = vmatprep.subr.mxu0 0.0
        %5668 = vmatpush1.msra.mxu0 %v5641
        %5669 = vmatprep.subr.mxu0 0.0
        %5670 = vmatpush1.msra.mxu0 %v5642
        %5671 = vmatprep.subr.mxu0 0.0
        %5672 = vmatpush1.msra.mxu0 %v5643
        %5673 = vmatprep.subr.mxu0 0.0
        %5674 = vmatpush1.msra.mxu0 %v5644
        %5675 = vmatprep.subr.mxu0 0.0
        %5676 = vmatpush1.msra.mxu0 %v5645
        %5677 = vmatprep.subr.mxu0 0.0
        %5678 = vmatpush1.msra.mxu0 %v5646
        %5679 = vmatprep.subr.mxu0 0.0
        %5680 = vmatpush1.msra.mxu0 0.0
        %5681 = vmatprep.subr.mxu0 0.0
        %5682 = vmatpush1.msra.mxu0 0.0
        %5683 = vmatprep.subr.mxu0 0.0
        %5684 = vmatpush1.msra.mxu0 0.0
        %5685 = vmatprep.subr.mxu0 0.0
        %5686 = vmatpush1.msra.mxu0 0.0
        %5687 = vmatprep.subr.mxu0 0.0
        %5688 = vmatpush1.msra.mxu0 0.0
        %5689 = vmatprep.subr.mxu0 0.0
        %5690 = vmatpush1.msra.mxu0 0.0
        %5691 = vmatprep.subr.mxu0 0.0
        %5692 = vmatpush1.msra.mxu0 0.0
        %5693 = vmatprep.subr.mxu0 0.0
        %5694 = vmatpush1.msra.mxu0 0.0
        %5695 = vmatprep.subr.mxu0 0.0
        %5696 = vmatpush1.msra.mxu0 0.0
        %5697 = vmatprep.subr.mxu0 0.0
        %5698 = vmatpush1.msra.mxu0 0.0
        %5699 = vmatprep.subr.mxu0 0.0
        %5700 = vmatpush1.msra.mxu0 0.0
        %5701 = vmatprep.subr.mxu0 0.0
        %5702 = vmatpush1.msra.mxu0 0.0
        %5703 = vmatprep.subr.mxu0 0.0
        %5704 = vmatpush1.msra.mxu0 0.0
        %5705 = vmatprep.subr.mxu0 0.0
        %5706 = vmatpush1.msra.mxu0 0.0
        %5707 = vmatprep.subr.mxu0 0.0
        %5708 = vmatpush1.msra.mxu0 0.0
        %5709 = vmatprep.subr.mxu0 0.0
        %5710 = vmatpush1.msra.mxu0 0.0
        %5711 = vmatprep.mubr.f32.mxu0 0.0
        %5712 = vmatmul.mubr.f32.gmra.mrb[0].mxu0 %v5630
        %v5713 = vpop.f32.mrb[0].mxu0
        %v5714 = vadd.f32 0.0, %v5713
        %v5715 = vpop.f32.mrb[0].mxu0
        %5716 = vdwg.mxu0
        %v5717 = vmul.f32 %v5714, %v5714
        %v5719 = vrot.slane %v5717, 7
        %v5721 = vsub.f32 %v5714, %v5719
        %v5722 = vlaneseq
        %v5723 = vshrl.u32 %v5722, 7
        %v5724 = vsub.s32 0, %v5723
        %v5725 = vrot.slane %v5714, %v5724
        %v5726 = vsub.f32 %v5612, %v5725
        %v5727 = vsub.f32 %v5613, %v5725
        %v5728 = vadd.f32 %v5721, 1e-05
        %v5729 = vrsqrt.pop %v5728
        %v5730 = vlaneseq
        %v5731 = vshrl.u32 %v5730, 7
        %v5732 = vsub.s32 1, %v5731
        %v5733 = vrot.slane %v5729, %v5732
        %v5734 = vmul.f32 %v5726, %v5733
        %v5735 = vmul.f32 %v5727, %v5733
        %v5736 = vld [vmem:[#allocation8 + $0x8] sm:$0x1]
        %v5737 = vlaneseq
        %v5738 = vshrl.u32 %v5737, 7
        %v5739 = vsub.s32 0, %v5738
        %v5740 = vrot.slane %v5736, %v5739
        %v5741 = vmul.f32 %v5734, %v5740
        %v5742 = vmul.f32 %v5735, %v5740
        %v5743 = vld [vmem:[#allocation9 + $0x8] sm:$0x1]
        %v5744 = vlaneseq
        %v5745 = vshrl.u32 %v5744, 7
        %v5746 = vsub.s32 0, %v5745
        %v5747 = vrot.slane %v5743, %v5746
        %v5748 = vadd.f32 %v5741, %v5747
        %v5749 = vadd.f32 %v5742, %v5747
        %v5750 = vxor.u32 %v5748, 2147483648
        %v5751 = vxor.u32 %v5749, 2147483648
        %v5752 = vmul.f32 %v5750, 1.442695
        %v5753 = vpow.pop %v5752
        %v5754 = vmul.f32 %v5751, 1.442695
        %v5755 = vpow.pop %v5754
        %v5756 = vadd.f32 %v5753, 1.0
        %v5757 = vadd.f32 %v5755, 1.0
        %v5758 = vrcp.pop %v5756
        %v5759 = vmul.f32 1.0, %v5758
        %v5760 = vrcp.pop %v5757
        %v5761 = vmul.f32 1.0, %v5760
        %v5762 = vmul.f32 %v5748, %v5759
        %v5763 = vmul.f32 %v5749, %v5761
        %5764 = vst [vmem:[#allocation2 + $0x1] sm:$0xff] %v5762
        %5765 = vst [vmem:[#allocation2 + $0x9] sm:$0xff] %v5763
        %v5766 = vld [vmem:[#allocation2] sm:$0xff]
        %v5767 = vld [vmem:[#allocation2 + $0x8] sm:$0xff]
        %s5768 = scalar_lea.vmem [#allocation4], 4224
        %v5769 = vld [vmem:[%s5768] sm:$0xff]
        %v5770 = vld [vmem:[%s5768 + $0x8] sm:$0xff]
        %v5771 = vld [vmem:[%s5768 + $0x10] sm:$0xff]
        %v5772 = vld [vmem:[%s5768 + $0x18] sm:$0xff]
        %v5773 = vld [vmem:[%s5768 + $0x20] sm:$0xff]
        %v5774 = vld [vmem:[%s5768 + $0x28] sm:$0xff]
        %v5775 = vld [vmem:[%s5768 + $0x30] sm:$0xff]
        %v5776 = vld [vmem:[%s5768 + $0x38] sm:$0xff]
        %v5777 = vld [vmem:[%s5768 + $0x40] sm:$0xff]
        %v5778 = vld [vmem:[%s5768 + $0x48] sm:$0xff]
        %v5779 = vld [vmem:[%s5768 + $0x50] sm:$0xff]
        %v5780 = vld [vmem:[%s5768 + $0x58] sm:$0xff]
        %v5781 = vld [vmem:[%s5768 + $0x60] sm:$0xff]
        %v5782 = vld [vmem:[%s5768 + $0x68] sm:$0xff]
        %v5783 = vld [vmem:[%s5768 + $0x70] sm:$0xff]
        %v5784 = vld [vmem:[%s5768 + $0x78] sm:$0xff]
        %v5785 = vld [vmem:[#allocation2 + $0x1] sm:$0xff]
        %v5786 = vld [vmem:[#allocation2 + $0x9] sm:$0xff]
        %s5787 = scalar_lea.vmem [#allocation4], 4352
        %v5788 = vld [vmem:[%s5787] sm:$0xff]
        %v5789 = vld [vmem:[%s5787 + $0x8] sm:$0xff]
        %v5790 = vld [vmem:[%s5787 + $0x10] sm:$0xff]
        %v5791 = vld [vmem:[%s5787 + $0x18] sm:$0xff]
        %v5792 = vld [vmem:[%s5787 + $0x20] sm:$0xff]
        %v5793 = vld [vmem:[%s5787 + $0x28] sm:$0xff]
        %v5794 = vld [vmem:[%s5787 + $0x30] sm:$0xff]
        %v5795 = vld [vmem:[%s5787 + $0x38] sm:$0xff]
        %v5796 = vld [vmem:[%s5787 + $0x40] sm:$0xff]
        %v5797 = vld [vmem:[%s5787 + $0x48] sm:$0xff]
        %v5798 = vld [vmem:[%s5787 + $0x50] sm:$0xff]
        %v5799 = vld [vmem:[%s5787 + $0x58] sm:$0xff]
        %v5800 = vld [vmem:[%s5787 + $0x60] sm:$0xff]
        %v5801 = vld [vmem:[%s5787 + $0x68] sm:$0xff]
        %v5802 = vld [vmem:[%s5787 + $0x70] sm:$0xff]
        %v5803 = vld [vmem:[%s5787 + $0x78] sm:$0xff]
        %5804 = vmatprep.subr.mxu0 0.0
        %5805 = vmatpush1.msra.mxu0 %v5788
        %5806 = vmatprep.subr.mxu0 0.0
        %5807 = vmatpush1.msra.mxu0 %v5789
        %5808 = vmatprep.subr.mxu0 0.0
        %5809 = vmatpush1.msra.mxu0 %v5790
        %5810 = vmatprep.subr.mxu0 0.0
        %5811 = vmatpush1.msra.mxu0 %v5791
        %5812 = vmatprep.subr.mxu0 0.0
        %5813 = vmatpush1.msra.mxu0 %v5792
        %5814 = vmatprep.subr.mxu0 0.0
        %5815 = vmatpush1.msra.mxu0 %v5793
        %5816 = vmatprep.subr.mxu0 0.0
        %5817 = vmatpush1.msra.mxu0 %v5794
        %5818 = vmatprep.subr.mxu0 0.0
        %5819 = vmatpush1.msra.mxu0 %v5795
        %5820 = vmatprep.subr.mxu0 0.0
        %5821 = vmatpush1.msra.mxu0 %v5796
        %5822 = vmatprep.subr.mxu0 0.0
        %5823 = vmatpush1.msra.mxu0 %v5797
        %5824 = vmatprep.subr.mxu0 0.0
        %5825 = vmatpush1.msra.mxu0 %v5798
        %5826 = vmatprep.subr.mxu0 0.0
        %5827 = vmatpush1.msra.mxu0 %v5799
        %5828 = vmatprep.subr.mxu0 0.0
        %5829 = vmatpush1.msra.mxu0 %v5800
        %5830 = vmatprep.subr.mxu0 0.0
        %5831 = vmatpush1.msra.mxu0 %v5801
        %5832 = vmatprep.subr.mxu0 0.0
        %5833 = vmatpush1.msra.mxu0 %v5802
        %5834 = vmatprep.subr.mxu0 0.0
        %5835 = vmatpush1.msra.mxu0 %v5803
        %5836 = vmatprep.subr.mxu0 0.0
        %5837 = vmatpush1.msra.mxu0 0.0
        %5838 = vmatprep.subr.mxu0 0.0
        %5839 = vmatpush1.msra.mxu0 0.0
        %5840 = vmatprep.subr.mxu0 0.0
        %5841 = vmatpush1.msra.mxu0 0.0
        %5842 = vmatprep.subr.mxu0 0.0
        %5843 = vmatpush1.msra.mxu0 0.0
        %5844 = vmatprep.subr.mxu0 0.0
        %5845 = vmatpush1.msra.mxu0 0.0
        %5846 = vmatprep.subr.mxu0 0.0
        %5847 = vmatpush1.msra.mxu0 0.0
        %5848 = vmatprep.subr.mxu0 0.0
        %5849 = vmatpush1.msra.mxu0 0.0
        %5850 = vmatprep.subr.mxu0 0.0
        %5851 = vmatpush1.msra.mxu0 0.0
        %5852 = vmatprep.subr.mxu0 0.0
        %5853 = vmatpush1.msra.mxu0 0.0
        %5854 = vmatprep.subr.mxu0 0.0
        %5855 = vmatpush1.msra.mxu0 0.0
        %5856 = vmatprep.subr.mxu0 0.0
        %5857 = vmatpush1.msra.mxu0 0.0
        %5858 = vmatprep.subr.mxu0 0.0
        %5859 = vmatpush1.msra.mxu0 0.0
        %5860 = vmatprep.subr.mxu0 0.0
        %5861 = vmatpush1.msra.mxu0 0.0
        %5862 = vmatprep.subr.mxu0 0.0
        %5863 = vmatpush1.msra.mxu0 0.0
        %5864 = vmatprep.subr.mxu0 0.0
        %5865 = vmatpush1.msra.mxu0 0.0
        %5866 = vmatprep.subr.mxu0 0.0
        %5867 = vmatpush1.msra.mxu0 0.0
        %5868 = vmatprep.mubr.f32.mxu0 0.0
        %5869 = vmatmul.mubr.f32.gmra.mrb[0].mxu0 %v5785
        %v5870 = vpop.f32.mrb[0].mxu0
        %v5871 = vadd.f32 0.0, %v5870
        %v5872 = vpop.f32.mrb[0].mxu0
        %5873 = vmatprep.mubr.f32.mxu0 0.0
        %5874 = vmatmul.mubr.f32.gmra.mrb[0].mxu0 %v5786
        %v5875 = vpop.f32.mrb[0].mxu0
        %v5876 = vadd.f32 0.0, %v5875
        %v5877 = vpop.f32.mrb[0].mxu0
        %5878 = vdwg.mxu0
        %5879 = vmatprep.subr.mxu0 0.0
        %5880 = vmatpush1.msra.mxu0 %v5769
        %5881 = vmatprep.subr.mxu0 0.0
        %5882 = vmatpush1.msra.mxu0 %v5770
        %5883 = vmatprep.subr.mxu0 0.0
        %5884 = vmatpush1.msra.mxu0 %v5771
        %5885 = vmatprep.subr.mxu0 0.0
        %5886 = vmatpush1.msra.mxu0 %v5772
        %5887 = vmatprep.subr.mxu0 0.0
        %5888 = vmatpush1.msra.mxu0 %v5773
        %5889 = vmatprep.subr.mxu0 0.0
        %5890 = vmatpush1.msra.mxu0 %v5774
        %5891 = vmatprep.subr.mxu0 0.0
        %5892 = vmatpush1.msra.mxu0 %v5775
        %5893 = vmatprep.subr.mxu0 0.0
        %5894 = vmatpush1.msra.mxu0 %v5776
        %5895 = vmatprep.subr.mxu0 0.0
        %5896 = vmatpush1.msra.mxu0 %v5777
        %5897 = vmatprep.subr.mxu0 0.0
        %5898 = vmatpush1.msra.mxu0 %v5778
        %5899 = vmatprep.subr.mxu0 0.0
        %5900 = vmatpush1.msra.mxu0 %v5779
        %5901 = vmatprep.subr.mxu0 0.0
        %5902 = vmatpush1.msra.mxu0 %v5780
        %5903 = vmatprep.subr.mxu0 0.0
        %5904 = vmatpush1.msra.mxu0 %v5781
        %5905 = vmatprep.subr.mxu0 0.0
        %5906 = vmatpush1.msra.mxu0 %v5782
        %5907 = vmatprep.subr.mxu0 0.0
        %5908 = vmatpush1.msra.mxu0 %v5783
        %5909 = vmatprep.subr.mxu0 0.0
        %5910 = vmatpush1.msra.mxu0 %v5784
        %5911 = vmatprep.subr.mxu0 0.0
        %5912 = vmatpush1.msra.mxu0 0.0
        %5913 = vmatprep.subr.mxu0 0.0
        %5914 = vmatpush1.msra.mxu0 0.0
        %5915 = vmatprep.subr.mxu0 0.0
        %5916 = vmatpush1.msra.mxu0 0.0
        %5917 = vmatprep.subr.mxu0 0.0
        %5918 = vmatpush1.msra.mxu0 0.0
        %5919 = vmatprep.subr.mxu0 0.0
        %5920 = vmatpush1.msra.mxu0 0.0
        %5921 = vmatprep.subr.mxu0 0.0
        %5922 = vmatpush1.msra.mxu0 0.0
        %5923 = vmatprep.subr.mxu0 0.0
        %5924 = vmatpush1.msra.mxu0 0.0
        %5925 = vmatprep.subr.mxu0 0.0
        %5926 = vmatpush1.msra.mxu0 0.0
        %5927 = vmatprep.subr.mxu0 0.0
        %5928 = vmatpush1.msra.mxu0 0.0
        %5929 = vmatprep.subr.mxu0 0.0
        %5930 = vmatpush1.msra.mxu0 0.0
        %5931 = vmatprep.subr.mxu0 0.0
        %5932 = vmatpush1.msra.mxu0 0.0
        %5933 = vmatprep.subr.mxu0 0.0
        %5934 = vmatpush1.msra.mxu0 0.0
        %5935 = vmatprep.subr.mxu0 0.0
        %5936 = vmatpush1.msra.mxu0 0.0
        %5937 = vmatprep.subr.mxu0 0.0
        %5938 = vmatpush1.msra.mxu0 0.0
        %5939 = vmatprep.subr.mxu0 0.0
        %5940 = vmatpush1.msra.mxu0 0.0
        %5941 = vmatprep.subr.mxu0 0.0
        %5942 = vmatpush1.msra.mxu0 0.0
        %5943 = vmatprep.mubr.f32.mxu0 0.0
        %5944 = vmatmul.mubr.f32.gmra.mrb[0].mxu0 %v5766
        %v5945 = vpop.f32.mrb[0].mxu0
        %v5946 = vadd.f32 %v5871, %v5945
        %v5947 = vpop.f32.mrb[0].mxu0
        %5948 = vmatprep.mubr.f32.mxu0 0.0
        %5949 = vmatmul.mubr.f32.gmra.mrb[0].mxu0 %v5767
        %v5950 = vpop.f32.mrb[0].mxu0
        %v5951 = vadd.f32 %v5876, %v5950
        %v5952 = vpop.f32.mrb[0].mxu0
        %5953 = vdwg.mxu0
        %v5954 = vld [vmem:[#allocation2 + $0x2] sm:$0xff]
        %v5955 = vld [vmem:[#allocation2 + $0xa] sm:$0xff]
        %s5956 = scalar_lea.vmem [#allocation4], 4480
        %v5957 = vld [vmem:[%s5956] sm:$0xff]
        %v5958 = vld [vmem:[%s5956 + $0x8] sm:$0xff]
        %v5959 = vld [vmem:[%s5956 + $0x10] sm:$0xff]
        %v5960 = vld [vmem:[%s5956 + $0x18] sm:$0xff]
        %v5961 = vld [vmem:[%s5956 + $0x20] sm:$0xff]
        %v5962 = vld [vmem:[%s5956 + $0x28] sm:$0xff]
        %v5963 = vld [vmem:[%s5956 + $0x30] sm:$0xff]
        %v5964 = vld [vmem:[%s5956 + $0x38] sm:$0xff]
        %v5965 = vld [vmem:[%s5956 + $0x40] sm:$0xff]
        %v5966 = vld [vmem:[%s5956 + $0x48] sm:$0xff]
        %v5967 = vld [vmem:[%s5956 + $0x50] sm:$0xff]
        %v5968 = vld [vmem:[%s5956 + $0x58] sm:$0xff]
        %v5969 = vld [vmem:[%s5956 + $0x60] sm:$0xff]
        %v5970 = vld [vmem:[%s5956 + $0x68] sm:$0xff]
        %v5971 = vld [vmem:[%s5956 + $0x70] sm:$0xff]
        %v5972 = vld [vmem:[%s5956 + $0x78] sm:$0xff]
        %5973 = vmatprep.subr.mxu0 0.0
        %5974 = vmatpush1.msra.mxu0 %v5957
        %5975 = vmatprep.subr.mxu0 0.0
        %5976 = vmatpush1.msra.mxu0 %v5958
        %5977 = vmatprep.subr.mxu0 0.0
        %5978 = vmatpush1.msra.mxu0 %v5959
        %5979 = vmatprep.subr.mxu0 0.0
        %5980 = vmatpush1.msra.mxu0 %v5960
        %5981 = vmatprep.subr.mxu0 0.0
        %5982 = vmatpush1.msra.mxu0 %v5961
        %5983 = vmatprep.subr.mxu0 0.0
        %5984 = vmatpush1.msra.mxu0 %v5962
        %5985 = vmatprep.subr.mxu0 0.0
        %5986 = vmatpush1.msra.mxu0 %v5963
        %5987 = vmatprep.subr.mxu0 0.0
        %5988 = vmatpush1.msra.mxu0 %v5964
        %5989 = vmatprep.subr.mxu0 0.0
        %5990 = vmatpush1.msra.mxu0 %v5965
        %5991 = vmatprep.subr.mxu0 0.0
        %5992 = vmatpush1.msra.mxu0 %v5966
        %5993 = vmatprep.subr.mxu0 0.0
        %5994 = vmatpush1.msra.mxu0 %v5967
        %5995 = vmatprep.subr.mxu0 0.0
        %5996 = vmatpush1.msra.mxu0 %v5968
        %5997 = vmatprep.subr.mxu0 0.0
        %5998 = vmatpush1.msra.mxu0 %v5969
        %5999 = vmatprep.subr.mxu0 0.0
        %6000 = vmatpush1.msra.mxu0 %v5970
        %6001 = vmatprep.subr.mxu0 0.0
        %6002 = vmatpush1.msra.mxu0 %v5971
        %6003 = vmatprep.subr.mxu0 0.0
        %6004 = vmatpush1.msra.mxu0 %v5972
        %6005 = vmatprep.subr.mxu0 0.0
        %6006 = vmatpush1.msra.mxu0 0.0
        %6007 = vmatprep.subr.mxu0 0.0
        %6008 = vmatpush1.msra.mxu0 0.0
        %6009 = vmatprep.subr.mxu0 0.0
        %6010 = vmatpush1.msra.mxu0 0.0
        %6011 = vmatprep.subr.mxu0 0.0
        %6012 = vmatpush1.msra.mxu0 0.0
        %6013 = vmatprep.subr.mxu0 0.0
        %6014 = vmatpush1.msra.mxu0 0.0
        %6015 = vmatprep.subr.mxu0 0.0
        %6016 = vmatpush1.msra.mxu0 0.0
        %6017 = vmatprep.subr.mxu0 0.0
        %6018 = vmatpush1.msra.mxu0 0.0
        %6019 = vmatprep.subr.mxu0 0.0
        %6020 = vmatpush1.msra.mxu0 0.0
        %6021 = vmatprep.subr.mxu0 0.0
        %6022 = vmatpush1.msra.mxu0 0.0
        %6023 = vmatprep.subr.mxu0 0.0
        %6024 = vmatpush1.msra.mxu0 0.0
        %6025 = vmatprep.subr.mxu0 0.0
        %6026 = vmatpush1.msra.mxu0 0.0
        %6027 = vmatprep.subr.mxu0 0.0
        %6028 = vmatpush1.msra.mxu0 0.0
        %6029 = vmatprep.subr.mxu0 0.0
        %6030 = vmatpush1.msra.mxu0 0.0
        %6031 = vmatprep.subr.mxu0 0.0
        %6032 = vmatpush1.msra.mxu0 0.0
        %6033 = vmatprep.subr.mxu0 0.0
        %6034 = vmatpush1.msra.mxu0 0.0
        %6035 = vmatprep.subr.mxu0 0.0
        %6036 = vmatpush1.msra.mxu0 0.0
        %6037 = vmatprep.mubr.f32.mxu0 0.0
        %6038 = vmatmul.mubr.f32.gmra.mrb[0].mxu0 %v5954
        %v6039 = vpop.f32.mrb[0].mxu0
        %v6040 = vadd.f32 0.0, %v6039
        %v6041 = vpop.f32.mrb[0].mxu0
        %6042 = vmatprep.mubr.f32.mxu0 0.0
        %6043 = vmatmul.mubr.f32.gmra.mrb[0].mxu0 %v5955
        %v6044 = vpop.f32.mrb[0].mxu0
        %v6045 = vadd.f32 0.0, %v6044
        %v6046 = vpop.f32.mrb[0].mxu0
        %6047 = vdwg.mxu0
        %v6048 = vadd.f32 %v5946, %v6040
        %v6049 = vadd.f32 %v5951, %v6045
        %v6050 = vld [vmem:[#allocation6 + $0xa] sm:$0x1]
        %v6051 = vlaneseq
        %v6052 = vshrl.u32 %v6051, 7
        %v6053 = vsub.s32 0, %v6052
        %v6054 = vrot.slane %v6050, %v6053
        %v6055 = vadd.f32 %v6048, %v6054
        %v6056 = vadd.f32 %v6049, %v6054
        %v6057 = vadd.f32 %v500, %v6055
        %v6058 = vadd.f32 %v501, %v6056
        %6059 = vst [vmem:[%s494] sm:$0xff] %v6057
        %6060 = vst [vmem:[%s494 + $0x8] sm:$0xff] %v6058
        %p6061 = scmp.lt.s32.totalorder %s29, 1
        %s6062 = scalar_select %p6061, %s29, 1
        %s6063 = smul.addr %s6062, 2
        %s6064 = smul.addr %s6063, 8
        %s6065 = scalar_lea.vmem %s10, %s6064
        %p6066 = scmp.lt.s32.totalorder %s29, 1
        %s6067 = scalar_select %p6066, %s29, 1
        %s6068 = scalar_lea.vmem %s11, %s6067
        // Predicated region
        $region89: #{body.3} parent=59 // pred_check
          %p6069 = pneg %p262
        $region90: #{body.3} parent=59 // pred_check_branch
          %6071 = sbr.rel (%p6069) target = $region92
        $region91: #{body.3} parent=59 // pred_region
          _
        $region92: #{body.3} parent=59 // pred_fallthru
          _
        // Predicated region
        $region93: #{body.3} parent=59 // pred_check
          %p6072 = pneg %p288
        $region94: #{body.3} parent=59 // pred_check_branch
          %6074 = sbr.rel (%p6072) target = $region96
        $region95: #{body.3} parent=59 // pred_region
          _
        $region96: #{body.3} parent=59 // pred_fallthru
          _
      $region60: #{body.3} parent=5 // pred_fallthru
        _
      %p6075 = scmp.le.s32.totalorder 2, %s24
      // Predicated region
      $region97: #{body.3} parent=5 // pred_check
        %p6076 = pneg %p6075
      $region98: #{body.3} parent=5 // pred_check_branch
        %6078 = sbr.rel (%p6076) target = $region100
      $region99: #{body.3} parent=5 // pred_region
        %s6079 = ssub.s32 %s24, 2
        // Predicated region
        $region101: #{body.3} parent=99 // pred_check
          %p6080 = pneg %p268
        $region102: #{body.3} parent=99 // pred_check_branch
          %6082 = sbr.rel (%p6080) target = $region104
        $region103: #{body.3} parent=99 // pred_region
          %p6083 = scmp.lt.s32.totalorder %s30, 1
          %s6084 = scalar_select %p6083, %s30, 1
          %s6085 = smul.addr %s6084, 2
          %s6086 = smul.addr %s6085, 8
          %s6087 = scalar_lea.vmem %s10, %s6086
        $region104: #{body.3} parent=99 // pred_fallthru
          _
        // Predicated region
        $region105: #{body.3} parent=99 // pred_check
          %p6088 = pneg %p294
        $region106: #{body.3} parent=99 // pred_check_branch
          %6090 = sbr.rel (%p6088) target = $region108
        $region107: #{body.3} parent=99 // pred_region
          %p6091 = scmp.lt.s32.totalorder %s30, 1
          %s6092 = scalar_select %p6091, %s30, 1
          %s6093 = scalar_lea.vmem %s11, %s6092
        $region108: #{body.3} parent=99 // pred_fallthru
          _
      $region100: #{body.3} parent=5 // pred_fallthru
        _
    $region6: #{body.3} parent=1 // loop_footer
      %s28 = sadd.s32 1, %s24
    $region7: #{body.3} parent=1 // loop_footer_branch
      %23 = sbr.rel target = $region3
    $region8: #{body.3} parent=1 // loop_exit
      _
    %6094 = vsyncpa [#allocation5], 1
    %s6095 = scalar_lea.sflag [#allocation5], 1
    %6096 = vsyncpa %s6095, 1
    %6097 = vsyncpa [#allocation7], 1
    %6098 = vsyncpa [#allocation10], 1
    %6099 = vsyncpa [#allocation13], 1

</llo_original>
